<compile_context>
chip_gen: v6e
topology: v6e:2x2x1
jax: 0.10.0
libtpu: 0.0.40
codegen_flags: <defaults>
</compile_context>

<pallas_src>
import functools
import math

import jax
import jax.numpy as jnp
import numpy as np
from jax import lax
from jax.experimental import pallas as pl
from jax.experimental.pallas import tpu as pltpu

SB = 8  # rows per inner sub-band (sublane-aligned); tH is a multiple of SB


def _round_up(v, m):
    return ((v + m - 1) // m) * m


def _vmem_limit_bytes():
    """Scoped-VMEM limit: ~75% of physical (96 MiB on v5e/v6e, 48 MiB on v7x);
    conservative 48 MiB fallback if the hardware query is unavailable."""
    cap = None
    try:
        info = pltpu.get_tpu_info()
        for name in ("vmem_capacity_bytes", "vmem_bytes", "vmem_size_bytes"):
            v = getattr(info, name, None)
            if v:
                cap = int(v)
                break
    except Exception:
        cap = None
    if not cap:
        cap = 64 * 1024 * 1024
    return min(100 * 1024 * 1024, int(0.75 * cap))


def _choose_tile_rows(H, W, Cp, vmem_limit, tile_rows=None):
    """Largest row tile that fits the VMEM budget (double-buffered input window
    + double-buffered output block + sub-band MLP temporaries), multiple of 8,
    capped at 128 and at the (rounded-up) image height."""
    if tile_rows is not None:
        return max(SB, _round_up(int(tile_rows), SB))
    budget = int(0.6 * vmem_limit)                      # headroom for weights/temps
    fixed = 2 * 6 * (W + 6) * Cp * 4                    # halo rows of both slots
    fixed += 3 * SB * W * (4 * Cp) * 4                  # sub-band hidden temporaries
    per_row = 2 * (W + 6) * Cp * 4 + 2 * W * Cp * 4     # 2-slot input + dbuf output
    tH = max(SB, (budget - fixed) // max(per_row, 1))
    tH = (int(tH) // SB) * SB
    return int(max(SB, min(tH, 128, _round_up(H, SB))))


def _convnext_block_kernel(xpad_hbm, dww_ref, dwb_ref, w1_ref, b1_ref,
                           w2_ref, b2_ref, o_ref, xtile_ref, dma_sem,
                           *, tH, W, C, Cp, eps):
    # xpad_hbm : (B, Hp+6, W+6, Cp) zero-padded image, left in HBM (pl.ANY)
    # dww      : (56, Cp) depthwise taps, row 7*dh+dw (rows 49..55 are zero pad)
    # dwb/b2   : (1, Cp) f32      b1 : (1, 4Cp) f32
    # w1 : (Cp, 4Cp) bf16 (LN affine folded)   w2 : (4Cp, Cp) bf16 (gamma folded)
    # o_ref    : (1, tH, W, Cp)
    # xtile_ref: (2, tH+6, W+6, Cp) double-buffered halo'd input window
    b = pl.program_id(0)
    rt = pl.program_id(1)
    nRT = pl.num_programs(1)
    slot = lax.rem(rt, 2)

    def window_copy(row_tile, dst_slot):
        row0 = pl.multiple_of(row_tile * tH, SB)
        return pltpu.make_async_copy(
            xpad_hbm.at[b, pl.ds(row0, tH + 6)],
            xtile_ref.at[dst_slot],
            dma_sem.at[dst_slot])

    # Prime the pipeline at the first row tile of this batch element (the row
    # tile axis is "arbitrary", i.e. sequential per core, so rt==0 always runs
    # before rt>0 on the same core -> every later wait has a matching start).
    @pl.when(rt == 0)
    def _():
        window_copy(rt, slot).start()

    # Hoisted parameter loads / constants (issued while the DMA is in flight).
    dww = dww_ref[...]                                   # (56, Cp) f32
    dwb = dwb_ref[...]                                   # (1, Cp)
    b1 = b1_ref[...]                                     # (1, 4Cp)
    b2 = b2_ref[...]                                     # (1, Cp)
    inv_c = jnp.float32(1.0 / C)
    inv_sqrt2 = jnp.float32(1.0 / math.sqrt(2.0))
    acc0 = jnp.broadcast_to(dwb.reshape(1, 1, Cp), (SB, W, Cp)).astype(jnp.float32)
    if Cp != C:
        ch = lax.broadcasted_iota(jnp.int32, (1, 1, Cp), 2)
        cmask = (ch < C).astype(jnp.float32)
    else:
        cmask = None

    # Prefetch the next row tile's window into the other slot, then wait for
    # the current one.  No cross-batch prefetch (would unbalance the sems with
    # the rt==0 priming).  TODO(synk): prefetch across the batch boundary too.
    @pl.when(rt + 1 < nRT)
    def _():
        window_copy(rt + 1, 1 - slot).start()

    window_copy(rt, slot).wait()

    # Process the tile in 8-row sub-bands: conv accumulator, LN stats and the
    # f32 MLP hidden all stay O(8 * W * Cp) regardless of tH.
    @pl.loop(0, tH // SB)
    def _(sb):
        r0 = pl.multiple_of(sb * SB, SB)

        # ---- depthwise 7x7 conv: 7 band loads, horizontal taps sliced from
        # the resident band; accumulator initialized with the conv bias ----
        acc = acc0
        for dh in range(7):
            band = xtile_ref[slot, pl.ds(r0 + dh, SB), :, :].astype(jnp.float32)
            for dw in range(7):
                acc = acc + band[:, dw:dw + W, :] * dww[7 * dh + dw].reshape(1, 1, Cp)

        # ---- LayerNorm statistics over the true C channels (padded lanes of
        # the conv output are exactly zero; variance masks the -mean leakage).
        # The LN affine itself is folded into w1/b1. ----
        mean = jnp.sum(acc, axis=-1, keepdims=True) * inv_c
        centered = acc - mean
        if cmask is not None:
            var = jnp.sum(jnp.square(centered * cmask), axis=-1, keepdims=True) * inv_c
        else:
            var = jnp.sum(jnp.square(centered), axis=-1, keepdims=True) * inv_c
        xn = centered * lax.rsqrt(var + eps)

        # ---- pointwise MLP: bf16 MXU operands, f32 accumulation ----
        x2 = xn.reshape(SB * W, Cp).astype(jnp.bfloat16)
        h = jnp.dot(x2, w1_ref[...], preferred_element_type=jnp.float32) + b1
        h = 0.5 * h * (1.0 + lax.erf(h * inv_sqrt2))     # exact GELU (torch default)
        y = jnp.dot(h.astype(jnp.bfloat16), w2_ref[...],
                    preferred_element_type=jnp.float32) + b2
        y = y.reshape(SB, W, Cp)

        # ---- residual from the centre of the same window, lane-dense store ----
        resid = xtile_ref[slot, pl.ds(r0 + 3, SB), pl.ds(3, W), :].astype(jnp.float32)
        o_ref[0, pl.ds(r0, SB)] = (resid + y).astype(o_ref.dtype)


def convnext_context_block(x_nchw, params, *, eps=1e-6, tile_rows=None):
    """x_nchw: (B, C, H, W) float32.  Returns (B, C, H, W)."""
    B, C, H, W = x_nchw.shape
    Cp = _round_up(C, 128)                       # lane-dense channel dim
    vmem_limit = _vmem_limit_bytes()
    tH = _choose_tile_rows(H, W, Cp, vmem_limit, tile_rows)
    nRT = -(-H // tH)
    Hp = nRT * tH

    x = jnp.transpose(x_nchw, (0, 2, 3, 1))      # NHWC
    # Zero pad: 3-row/col halo for the 7x7 conv, rows up to a multiple of tH,
    # channels up to Cp.  Single image stream into the kernel (the residual is
    # read back from the centre of the same window).
    # TODO(synk): stream the un-channel-padded NHWC image and do the halo /
    # channel padding with clamped DMAs into a zeroed scratch, so this padded
    # copy is never materialized in HBM.
    xpad = jnp.pad(x, ((0, 0), (3, 3 + Hp - H), (3, 3), (0, Cp - C)))

    # Fold the LayerNorm affine into pwconv1 and the layer-scale gamma into
    # pwconv2: (xn*lnw+lnb)@w1+b1 == xn@(lnw[:,None]*w1) + (lnb@w1+b1), and
    # gamma*(h@w2+b2) == h@(w2*gamma) + b2*gamma.
    w1_eff = params["ln_w"].reshape(C, 1) * params["w1"]
    b1_eff = params["ln_b"] @ params["w1"] + params["b1"]
    w2_eff = params["w2"] * params["gamma"]
    b2_eff = params["b2"] * params["gamma"]

    dww = jnp.pad(params["dw_w"].reshape(49, C), ((0, 7), (0, Cp - C)))   # (56, Cp)
    dwb = jnp.pad(params["dw_b"], ((0, 0), (0, Cp - C)))
    w1 = jnp.pad(w1_eff, ((0, Cp - C), (0, 4 * (Cp - C)))).astype(jnp.bfloat16)
    b1 = jnp.pad(b1_eff, ((0, 0), (0, 4 * (Cp - C)))).astype(jnp.float32)
    w2 = jnp.pad(w2_eff, ((0, 4 * (Cp - C)), (0, Cp - C))).astype(jnp.bfloat16)
    b2 = jnp.pad(b2_eff, ((0, 0), (0, Cp - C))).astype(jnp.float32)

    kernel = functools.partial(_convnext_block_kernel,
                               tH=tH, W=W, C=C, Cp=Cp, eps=eps)
    const2 = lambda b, rt: (0, 0)

    out = pl.pallas_call(
        kernel,
        out_shape=jax.ShapeDtypeStruct((B, Hp, W, Cp), x.dtype),
        grid_spec=pltpu.PrefetchScalarGridSpec(
            num_scalar_prefetch=0,
            grid=(B, nRT),
            in_specs=[
                pl.BlockSpec(memory_space=pl.ANY),     # padded image, stays in HBM
                pl.BlockSpec((56, Cp), const2),        # depthwise taps (49, padded)
                pl.BlockSpec((1, Cp), const2),         # depthwise bias
                pl.BlockSpec((Cp, 4 * Cp), const2),    # pwconv1 weight (LN folded, bf16)
                pl.BlockSpec((1, 4 * Cp), const2),     # pwconv1 bias (LN folded)
                pl.BlockSpec((4 * Cp, Cp), const2),    # pwconv2 weight (gamma folded, bf16)
                pl.BlockSpec((1, Cp), const2),         # pwconv2 bias (gamma folded)
            ],
            out_specs=pl.BlockSpec((1, tH, W, Cp), lambda b, rt: (b, rt, 0, 0)),
            scratch_shapes=[
                pltpu.VMEM((2, tH + 6, W + 6, Cp), x.dtype),  # 2-slot input window
                pltpu.SemaphoreType.DMA((2,)),
            ],
        ),
        compiler_params=pltpu.CompilerParams(
            # batch axis sharded across TensorCores; the row-tile axis must be
            # sequential ("arbitrary") so the manual double-buffering can be
            # primed at rt == 0 on whichever core runs that batch element.
            dimension_semantics=("parallel", "arbitrary"),
            vmem_limit_bytes=vmem_limit,
        ),
    )(xpad, dww, dwb, w1, b1, w2, b2)

    out = out[:, :H, :, :C]                      # drop row / channel padding
    return jnp.transpose(out, (0, 3, 1, 2))      # back to NCHW


def reference_convnext_block(x_nchw, params, *, eps=1e-6):
    """Pure-JAX f32 reference (same math, lax conv) for verification."""
    x = jnp.transpose(x_nchw, (0, 2, 3, 1))      # NHWC
    rhs = params["dw_w"][:, :, None, :]          # HWIO (7,7,1,C)
    y = lax.conv_general_dilated(
        x, rhs, window_strides=(1, 1), padding=((3, 3), (3, 3)),
        dimension_numbers=("NHWC", "HWIO", "NHWC"),
        feature_group_count=x.shape[-1])
    y = y + params["dw_b"][0]
    mean = jnp.mean(y, axis=-1, keepdims=True)
    var = jnp.mean((y - mean) ** 2, axis=-1, keepdims=True)
    y = (y - mean) / jnp.sqrt(var + eps)
    y = y * params["ln_w"][0] + params["ln_b"][0]
    y = jnp.dot(y, params["w1"]) + params["b1"][0]
    y = jax.nn.gelu(y, approximate=False)
    y = jnp.dot(y, params["w2"]) + params["b2"][0]
    y = y * params["gamma"][0]
    out = x + y
    return jnp.transpose(out, (0, 3, 1, 2))


def init_params(key, C, layer_scale_init_value=0.5):
    ks = jax.random.split(key, 6)
    return {
        # nn.Conv2d(C, C, 7, groups=C).weight (C,1,7,7) stored here as (7,7,C)
        "dw_w": 0.1 * jax.random.normal(ks[0], (7, 7, C), jnp.float32),
        "dw_b": 0.1 * jax.random.normal(ks[1], (1, C), jnp.float32),
        "ln_w": jnp.ones((1, C), jnp.float32),
        "ln_b": jnp.zeros((1, C), jnp.float32),
        # nn.Linear stored as (in, out) so forward is x @ w + b
        "w1": 0.1 * jax.random.normal(ks[2], (C, 4 * C), jnp.float32),
        "b1": 0.1 * jax.random.normal(ks[3], (1, 4 * C), jnp.float32),
        "w2": 0.1 * jax.random.normal(ks[4], (4 * C, C), jnp.float32),
        "b2": 0.1 * jax.random.normal(ks[5], (1, C), jnp.float32),
        "gamma": layer_scale_init_value * jnp.ones((1, C), jnp.float32),
    }


if __name__ == "__main__":
    key = jax.random.PRNGKey(0)
    kx, kp = jax.random.split(key)
    params = init_params(kp, 8)

    # Case 1: default tiling (single row tile here, 2 sub-bands in-kernel).
    B, C, H, W = 2, 8, 16, 16
    x = jax.random.normal(kx, (B, C, H, W), jnp.float32)          # NCHW like PyTorch
    out = jax.block_until_ready(convnext_context_block(x, params))
    ref = jax.block_until_ready(reference_convnext_block(x, params))
    # bf16 MXU operands with f32 accumulation -> loosened tolerance vs f32 ref.
    np.testing.assert_allclose(np.asarray(out), np.asarray(ref), rtol=2e-2, atol=2e-2)

    # Case 2: force several row tiles (H=20, tile_rows=8 -> 3 tiles incl. a
    # padded one) so the DMA double-buffering steady state and the row-padding
    # path are exercised as well.
    x2 = jax.random.normal(jax.random.fold_in(kx, 1), (2, 8, 20, 16), jnp.float32)
    out2 = jax.block_until_ready(convnext_context_block(x2, params, tile_rows=8))
    ref2 = jax.block_until_ready(reference_convnext_block(x2, params))
    np.testing.assert_allclose(np.asarray(out2), np.asarray(ref2), rtol=2e-2, atol=2e-2)

    print("KERNEL_OK")
</pallas_src>

<mosaic_0001>
module attributes {stable_mosaic.version = 11 : i64} {
  func.func @_convnext_block_kernel(%arg0: i32, %arg1: i32, %arg2: memref<2x22x22x128xf32, #tpu.memory_space<any>>, %arg3: memref<56x128xf32, #tpu.memory_space<vmem>>, %arg4: memref<1x128xf32, #tpu.memory_space<vmem>>, %arg5: memref<128x512xbf16, #tpu.memory_space<vmem>>, %arg6: memref<1x512xf32, #tpu.memory_space<vmem>>, %arg7: memref<512x128xbf16, #tpu.memory_space<vmem>>, %arg8: memref<1x128xf32, #tpu.memory_space<vmem>>, %arg9: memref<1x16x16x128xf32, #tpu.memory_space<vmem>>, %arg10: memref<2x22x22x128xf32, #tpu.memory_space<vmem>>, %arg11: memref<2x!tpu.dma_semaphore, #tpu.memory_space<semaphore_mem>>) attributes {dimension_semantics = [#tpu.dimension_semantics<parallel>, #tpu.dimension_semantics<arbitrary>], iteration_bounds = array<i64: 2, 1>, scalar_prefetch = 0 : i64, scratch_operands = 2 : i64, tpu.core_type = #tpu.core_type<tc>, window_params = [{}, {pipeline_mode = #tpu.pipeline_mode<synchronous>, transform_indices = @transform_1, window_bounds = array<i64: 56, 128>}, {pipeline_mode = #tpu.pipeline_mode<synchronous>, transform_indices = @transform_2, window_bounds = array<i64: 1, 128>}, {pipeline_mode = #tpu.pipeline_mode<synchronous>, transform_indices = @transform_3, window_bounds = array<i64: 128, 512>}, {pipeline_mode = #tpu.pipeline_mode<synchronous>, transform_indices = @transform_4, window_bounds = array<i64: 1, 512>}, {pipeline_mode = #tpu.pipeline_mode<synchronous>, transform_indices = @transform_5, window_bounds = array<i64: 512, 128>}, {pipeline_mode = #tpu.pipeline_mode<synchronous>, transform_indices = @transform_6, window_bounds = array<i64: 1, 128>}, {transform_indices = @transform_7, window_bounds = array<i64: 1, 16, 16, 128>}]} {
    %c2_i32 = arith.constant 2 : i32
    %0 = arith.remsi %arg1, %c2_i32 : i32
    %c0_i32 = arith.constant 0 : i32
    %1 = arith.cmpi eq, %arg1, %c0_i32 : i32
    %2 = arith.extui %1 : i1 to i32
    %c0_i32_0 = arith.constant 0 : i32
    %3 = arith.cmpi ne, %2, %c0_i32_0 : i32
    scf.if %3 {
      %c16_i32_20 = arith.constant 16 : i32
      %29 = arith.muli %arg1, %c16_i32_20 : i32
      %30 = tpu.assume_multiple %29, 8 : i32
      %c0_i32_21 = arith.constant 0 : i32
      %c0_i32_22 = arith.constant 0 : i32
      %31 = tpu.memref_slice %arg2[%arg0, %30, %c0_i32_21, %c0_i32_22] : memref<2x22x22x128xf32, #tpu.memory_space<any>> -> memref<1x22x22x128xf32, #tpu.memory_space<any>>
      %32 = tpu.memref_squeeze %31 : memref<1x22x22x128xf32, #tpu.memory_space<any>> -> memref<22x22x128xf32, #tpu.memory_space<any>>
      %c0_i32_23 = arith.constant 0 : i32
      %c0_i32_24 = arith.constant 0 : i32
      %c0_i32_25 = arith.constant 0 : i32
      %33 = tpu.memref_slice %arg10[%0, %c0_i32_23, %c0_i32_24, %c0_i32_25] : memref<2x22x22x128xf32, #tpu.memory_space<vmem>> -> memref<1x22x22x128xf32, #tpu.memory_space<vmem>>
      %34 = tpu.memref_squeeze %33 : memref<1x22x22x128xf32, #tpu.memory_space<vmem>> -> memref<22x22x128xf32, #tpu.memory_space<vmem>>
      %35 = tpu.memref_slice %arg11[%0] : memref<2x!tpu.dma_semaphore, #tpu.memory_space<semaphore_mem>> -> memref<1x!tpu.dma_semaphore, #tpu.memory_space<semaphore_mem>>
      %36 = tpu.memref_squeeze %35 : memref<1x!tpu.dma_semaphore, #tpu.memory_space<semaphore_mem>> -> memref<!tpu.dma_semaphore, #tpu.memory_space<semaphore_mem>>
      tpu.enqueue_dma source(%32 : memref<22x22x128xf32, #tpu.memory_space<any>>) target(%34 : memref<22x22x128xf32, #tpu.memory_space<vmem>>) target_semaphore(%36 : memref<!tpu.dma_semaphore, #tpu.memory_space<semaphore_mem>>)
    } else {
    }
    %c0 = arith.constant 0 : index
    %c0_1 = arith.constant 0 : index
    %4 = vector.load %arg3[%c0, %c0_1] : memref<56x128xf32, #tpu.memory_space<vmem>>, vector<56x128xf32>
    %c0_2 = arith.constant 0 : index
    %c0_3 = arith.constant 0 : index
    %5 = vector.load %arg4[%c0_2, %c0_3] : memref<1x128xf32, #tpu.memory_space<vmem>>, vector<1x128xf32>
    %c0_4 = arith.constant 0 : index
    %c0_5 = arith.constant 0 : index
    %6 = vector.load %arg6[%c0_4, %c0_5] : memref<1x512xf32, #tpu.memory_space<vmem>>, vector<1x512xf32>
    %c0_6 = arith.constant 0 : index
    %c0_7 = arith.constant 0 : index
    %7 = vector.load %arg8[%c0_6, %c0_7] : memref<1x128xf32, #tpu.memory_space<vmem>>, vector<1x128xf32>
    %8 = vector.shape_cast %5 : vector<1x128xf32> to vector<1x1x128xf32>
    %9 = vector.shape_cast %8 : vector<1x1x128xf32> to vector<1x1x128xf32>
    %10 = vector.broadcast %9 : vector<1x1x128xf32> to vector<8x16x128xf32>
    %11 = tpu.iota {dimensions = array<i32: 2>} : vector<1x1x128xi32>
    %c8_i32 = arith.constant 8 : i32
    %12 = vector.broadcast %c8_i32 : i32 to vector<1x1x128xi32>
    %13 = arith.cmpi slt, %11, %12 : vector<1x1x128xi32>
    %14 = arith.extui %13 : vector<1x1x128xi1> to vector<1x1x128xi32>
    %15 = arith.sitofp %14 : vector<1x1x128xi32> to vector<1x1x128xf32>
    %c1_i32 = arith.constant 1 : i32
    %16 = arith.addi %arg1, %c1_i32 : i32
    %c1_i32_8 = arith.constant 1 : i32
    %17 = arith.cmpi slt, %16, %c1_i32_8 : i32
    %18 = arith.extui %17 : i1 to i32
    %c0_i32_9 = arith.constant 0 : i32
    %19 = arith.cmpi ne, %18, %c0_i32_9 : i32
    scf.if %19 {
      %c1_i32_20 = arith.constant 1 : i32
      %29 = arith.addi %arg1, %c1_i32_20 : i32
      %c1_i32_21 = arith.constant 1 : i32
      %30 = arith.subi %c1_i32_21, %0 : i32
      %c16_i32_22 = arith.constant 16 : i32
      %31 = arith.muli %29, %c16_i32_22 : i32
      %32 = tpu.assume_multiple %31, 8 : i32
      %c0_i32_23 = arith.constant 0 : i32
      %c0_i32_24 = arith.constant 0 : i32
      %33 = tpu.memref_slice %arg2[%arg0, %32, %c0_i32_23, %c0_i32_24] : memref<2x22x22x128xf32, #tpu.memory_space<any>> -> memref<1x22x22x128xf32, #tpu.memory_space<any>>
      %34 = tpu.memref_squeeze %33 : memref<1x22x22x128xf32, #tpu.memory_space<any>> -> memref<22x22x128xf32, #tpu.memory_space<any>>
      %c0_i32_25 = arith.constant 0 : i32
      %c0_i32_26 = arith.constant 0 : i32
      %c0_i32_27 = arith.constant 0 : i32
      %35 = tpu.memref_slice %arg10[%30, %c0_i32_25, %c0_i32_26, %c0_i32_27] : memref<2x22x22x128xf32, #tpu.memory_space<vmem>> -> memref<1x22x22x128xf32, #tpu.memory_space<vmem>>
      %36 = tpu.memref_squeeze %35 : memref<1x22x22x128xf32, #tpu.memory_space<vmem>> -> memref<22x22x128xf32, #tpu.memory_space<vmem>>
      %37 = tpu.memref_slice %arg11[%30] : memref<2x!tpu.dma_semaphore, #tpu.memory_space<semaphore_mem>> -> memref<1x!tpu.dma_semaphore, #tpu.memory_space<semaphore_mem>>
      %38 = tpu.memref_squeeze %37 : memref<1x!tpu.dma_semaphore, #tpu.memory_space<semaphore_mem>> -> memref<!tpu.dma_semaphore, #tpu.memory_space<semaphore_mem>>
      tpu.enqueue_dma source(%34 : memref<22x22x128xf32, #tpu.memory_space<any>>) target(%36 : memref<22x22x128xf32, #tpu.memory_space<vmem>>) target_semaphore(%38 : memref<!tpu.dma_semaphore, #tpu.memory_space<semaphore_mem>>)
    } else {
    }
    %c16_i32 = arith.constant 16 : i32
    %20 = arith.muli %arg1, %c16_i32 : i32
    %21 = tpu.assume_multiple %20, 8 : i32
    %c0_i32_10 = arith.constant 0 : i32
    %c0_i32_11 = arith.constant 0 : i32
    %22 = tpu.memref_slice %arg2[%arg0, %21, %c0_i32_10, %c0_i32_11] : memref<2x22x22x128xf32, #tpu.memory_space<any>> -> memref<1x22x22x128xf32, #tpu.memory_space<any>>
    %23 = tpu.memref_squeeze %22 : memref<1x22x22x128xf32, #tpu.memory_space<any>> -> memref<22x22x128xf32, #tpu.memory_space<any>>
    %c0_i32_12 = arith.constant 0 : i32
    %c0_i32_13 = arith.constant 0 : i32
    %c0_i32_14 = arith.constant 0 : i32
    %24 = tpu.memref_slice %arg10[%0, %c0_i32_12, %c0_i32_13, %c0_i32_14] : memref<2x22x22x128xf32, #tpu.memory_space<vmem>> -> memref<1x22x22x128xf32, #tpu.memory_space<vmem>>
    %25 = tpu.memref_squeeze %24 : memref<1x22x22x128xf32, #tpu.memory_space<vmem>> -> memref<22x22x128xf32, #tpu.memory_space<vmem>>
    %26 = tpu.memref_slice %arg11[%0] : memref<2x!tpu.dma_semaphore, #tpu.memory_space<semaphore_mem>> -> memref<1x!tpu.dma_semaphore, #tpu.memory_space<semaphore_mem>>
    %27 = tpu.memref_squeeze %26 : memref<1x!tpu.dma_semaphore, #tpu.memory_space<semaphore_mem>> -> memref<!tpu.dma_semaphore, #tpu.memory_space<semaphore_mem>>
    tpu.wait_dma2 semaphore(%27 : memref<!tpu.dma_semaphore, #tpu.memory_space<semaphore_mem>>) src(%23 : memref<22x22x128xf32, #tpu.memory_space<any>>) dst(%25 : memref<22x22x128xf32, #tpu.memory_space<vmem>>)
    %cst = arith.constant 1.250000e-01 : f32
    %cst_15 = arith.constant 0.707106769 : f32
    %c0_i32_16 = arith.constant 0 : i32
    %c2_i32_17 = arith.constant 2 : i32
    %28 = arith.addi %c0_i32_16, %c2_i32_17 : i32
    %c1_i32_18 = arith.constant 1 : i32
    scf.for %arg12 = %c0_i32_16 to %28 step %c1_i32_18  : i32 {
      %c1_i32_20 = arith.constant 1 : i32
      %29 = arith.muli %arg12, %c1_i32_20 : i32
      %c0_i32_21 = arith.constant 0 : i32
      %30 = arith.addi %c0_i32_21, %29 : i32
      %c8_i32_22 = arith.constant 8 : i32
      %31 = arith.muli %30, %c8_i32_22 : i32
      %32 = tpu.assume_multiple %31, 8 : i32
      %c0_i32_23 = arith.constant 0 : i32
      %33 = arith.addi %32, %c0_i32_23 : i32
      %34 = arith.index_cast %0 : i32 to index
      %35 = arith.index_cast %33 : i32 to index
      %c0_24 = arith.constant 0 : index
      %c0_25 = arith.constant 0 : index
      %36 = vector.load %arg10[%34, %35, %c0_24, %c0_25] : memref<2x22x22x128xf32, #tpu.memory_space<vmem>>, vector<1x8x22x128xf32>
      %37 = vector.shape_cast %36 : vector<1x8x22x128xf32> to vector<8x22x128xf32>
      %38 = vector.extract_strided_slice %37 {offsets = [0, 0, 0], sizes = [8, 16, 128], strides = [1, 1, 1]} : vector<8x22x128xf32> to vector<8x16x128xf32>
      %39 = vector.extract_strided_slice %4 {offsets = [0, 0], sizes = [1, 128], strides = [1, 1]} : vector<56x128xf32> to vector<1x128xf32>
      %40 = vector.shape_cast %39 : vector<1x128xf32> to vector<128xf32>
      %41 = vector.shape_cast %40 : vector<128xf32> to vector<1x1x128xf32>
      %42 = vector.broadcast %41 : vector<1x1x128xf32> to vector<8x16x128xf32>
      %43 = arith.mulf %38, %42 : vector<8x16x128xf32>
      %44 = arith.addf %10, %43 : vector<8x16x128xf32>
      %45 = vector.extract_strided_slice %37 {offsets = [0, 1, 0], sizes = [8, 16, 128], strides = [1, 1, 1]} : vector<8x22x128xf32> to vector<8x16x128xf32>
      %46 = vector.extract_strided_slice %4 {offsets = [1, 0], sizes = [1, 128], strides = [1, 1]} : vector<56x128xf32> to vector<1x128xf32>
      %47 = vector.shape_cast %46 : vector<1x128xf32> to vector<128xf32>
      %48 = vector.shape_cast %47 : vector<128xf32> to vector<1x1x128xf32>
      %49 = vector.broadcast %48 : vector<1x1x128xf32> to vector<8x16x128xf32>
      %50 = arith.mulf %45, %49 : vector<8x16x128xf32>
      %51 = arith.addf %44, %50 : vector<8x16x128xf32>
      %52 = vector.extract_strided_slice %37 {offsets = [0, 2, 0], sizes = [8, 16, 128], strides = [1, 1, 1]} : vector<8x22x128xf32> to vector<8x16x128xf32>
      %53 = vector.extract_strided_slice %4 {offsets = [2, 0], sizes = [1, 128], strides = [1, 1]} : vector<56x128xf32> to vector<1x128xf32>
      %54 = vector.shape_cast %53 : vector<1x128xf32> to vector<128xf32>
      %55 = vector.shape_cast %54 : vector<128xf32> to vector<1x1x128xf32>
      %56 = vector.broadcast %55 : vector<1x1x128xf32> to vector<8x16x128xf32>
      %57 = arith.mulf %52, %56 : vector<8x16x128xf32>
      %58 = arith.addf %51, %57 : vector<8x16x128xf32>
      %59 = vector.extract_strided_slice %37 {offsets = [0, 3, 0], sizes = [8, 16, 128], strides = [1, 1, 1]} : vector<8x22x128xf32> to vector<8x16x128xf32>
      %60 = vector.extract_strided_slice %4 {offsets = [3, 0], sizes = [1, 128], strides = [1, 1]} : vector<56x128xf32> to vector<1x128xf32>
      %61 = vector.shape_cast %60 : vector<1x128xf32> to vector<128xf32>
      %62 = vector.shape_cast %61 : vector<128xf32> to vector<1x1x128xf32>
      %63 = vector.broadcast %62 : vector<1x1x128xf32> to vector<8x16x128xf32>
      %64 = arith.mulf %59, %63 : vector<8x16x128xf32>
      %65 = arith.addf %58, %64 : vector<8x16x128xf32>
      %66 = vector.extract_strided_slice %37 {offsets = [0, 4, 0], sizes = [8, 16, 128], strides = [1, 1, 1]} : vector<8x22x128xf32> to vector<8x16x128xf32>
      %67 = vector.extract_strided_slice %4 {offsets = [4, 0], sizes = [1, 128], strides = [1, 1]} : vector<56x128xf32> to vector<1x128xf32>
      %68 = vector.shape_cast %67 : vector<1x128xf32> to vector<128xf32>
      %69 = vector.shape_cast %68 : vector<128xf32> to vector<1x1x128xf32>
      %70 = vector.broadcast %69 : vector<1x1x128xf32> to vector<8x16x128xf32>
      %71 = arith.mulf %66, %70 : vector<8x16x128xf32>
      %72 = arith.addf %65, %71 : vector<8x16x128xf32>
      %73 = vector.extract_strided_slice %37 {offsets = [0, 5, 0], sizes = [8, 16, 128], strides = [1, 1, 1]} : vector<8x22x128xf32> to vector<8x16x128xf32>
      %74 = vector.extract_strided_slice %4 {offsets = [5, 0], sizes = [1, 128], strides = [1, 1]} : vector<56x128xf32> to vector<1x128xf32>
      %75 = vector.shape_cast %74 : vector<1x128xf32> to vector<128xf32>
      %76 = vector.shape_cast %75 : vector<128xf32> to vector<1x1x128xf32>
      %77 = vector.broadcast %76 : vector<1x1x128xf32> to vector<8x16x128xf32>
      %78 = arith.mulf %73, %77 : vector<8x16x128xf32>
      %79 = arith.addf %72, %78 : vector<8x16x128xf32>
      %80 = vector.extract_strided_slice %37 {offsets = [0, 6, 0], sizes = [8, 16, 128], strides = [1, 1, 1]} : vector<8x22x128xf32> to vector<8x16x128xf32>
      %81 = vector.extract_strided_slice %4 {offsets = [6, 0], sizes = [1, 128], strides = [1, 1]} : vector<56x128xf32> to vector<1x128xf32>
      %82 = vector.shape_cast %81 : vector<1x128xf32> to vector<128xf32>
      %83 = vector.shape_cast %82 : vector<128xf32> to vector<1x1x128xf32>
      %84 = vector.broadcast %83 : vector<1x1x128xf32> to vector<8x16x128xf32>
      %85 = arith.mulf %80, %84 : vector<8x16x128xf32>
      %86 = arith.addf %79, %85 : vector<8x16x128xf32>
      %c1_i32_26 = arith.constant 1 : i32
      %87 = arith.addi %32, %c1_i32_26 : i32
      %88 = arith.index_cast %0 : i32 to index
      %89 = arith.index_cast %87 : i32 to index
      %c0_27 = arith.constant 0 : index
      %c0_28 = arith.constant 0 : index
      %90 = vector.load %arg10[%88, %89, %c0_27, %c0_28] : memref<2x22x22x128xf32, #tpu.memory_space<vmem>>, vector<1x8x22x128xf32>
      %91 = vector.shape_cast %90 : vector<1x8x22x128xf32> to vector<8x22x128xf32>
      %92 = vector.extract_strided_slice %91 {offsets = [0, 0, 0], sizes = [8, 16, 128], strides = [1, 1, 1]} : vector<8x22x128xf32> to vector<8x16x128xf32>
      %93 = vector.extract_strided_slice %4 {offsets = [7, 0], sizes = [1, 128], strides = [1, 1]} : vector<56x128xf32> to vector<1x128xf32>
      %94 = vector.shape_cast %93 : vector<1x128xf32> to vector<128xf32>
      %95 = vector.shape_cast %94 : vector<128xf32> to vector<1x1x128xf32>
      %96 = vector.broadcast %95 : vector<1x1x128xf32> to vector<8x16x128xf32>
      %97 = arith.mulf %92, %96 : vector<8x16x128xf32>
      %98 = arith.addf %86, %97 : vector<8x16x128xf32>
      %99 = vector.extract_strided_slice %91 {offsets = [0, 1, 0], sizes = [8, 16, 128], strides = [1, 1, 1]} : vector<8x22x128xf32> to vector<8x16x128xf32>
      %100 = vector.extract_strided_slice %4 {offsets = [8, 0], sizes = [1, 128], strides = [1, 1]} : vector<56x128xf32> to vector<1x128xf32>
      %101 = vector.shape_cast %100 : vector<1x128xf32> to vector<128xf32>
      %102 = vector.shape_cast %101 : vector<128xf32> to vector<1x1x128xf32>
      %103 = vector.broadcast %102 : vector<1x1x128xf32> to vector<8x16x128xf32>
      %104 = arith.mulf %99, %103 : vector<8x16x128xf32>
      %105 = arith.addf %98, %104 : vector<8x16x128xf32>
      %106 = vector.extract_strided_slice %91 {offsets = [0, 2, 0], sizes = [8, 16, 128], strides = [1, 1, 1]} : vector<8x22x128xf32> to vector<8x16x128xf32>
      %107 = vector.extract_strided_slice %4 {offsets = [9, 0], sizes = [1, 128], strides = [1, 1]} : vector<56x128xf32> to vector<1x128xf32>
      %108 = vector.shape_cast %107 : vector<1x128xf32> to vector<128xf32>
      %109 = vector.shape_cast %108 : vector<128xf32> to vector<1x1x128xf32>
      %110 = vector.broadcast %109 : vector<1x1x128xf32> to vector<8x16x128xf32>
      %111 = arith.mulf %106, %110 : vector<8x16x128xf32>
      %112 = arith.addf %105, %111 : vector<8x16x128xf32>
      %113 = vector.extract_strided_slice %91 {offsets = [0, 3, 0], sizes = [8, 16, 128], strides = [1, 1, 1]} : vector<8x22x128xf32> to vector<8x16x128xf32>
      %114 = vector.extract_strided_slice %4 {offsets = [10, 0], sizes = [1, 128], strides = [1, 1]} : vector<56x128xf32> to vector<1x128xf32>
      %115 = vector.shape_cast %114 : vector<1x128xf32> to vector<128xf32>
      %116 = vector.shape_cast %115 : vector<128xf32> to vector<1x1x128xf32>
      %117 = vector.broadcast %116 : vector<1x1x128xf32> to vector<8x16x128xf32>
      %118 = arith.mulf %113, %117 : vector<8x16x128xf32>
      %119 = arith.addf %112, %118 : vector<8x16x128xf32>
      %120 = vector.extract_strided_slice %91 {offsets = [0, 4, 0], sizes = [8, 16, 128], strides = [1, 1, 1]} : vector<8x22x128xf32> to vector<8x16x128xf32>
      %121 = vector.extract_strided_slice %4 {offsets = [11, 0], sizes = [1, 128], strides = [1, 1]} : vector<56x128xf32> to vector<1x128xf32>
      %122 = vector.shape_cast %121 : vector<1x128xf32> to vector<128xf32>
      %123 = vector.shape_cast %122 : vector<128xf32> to vector<1x1x128xf32>
      %124 = vector.broadcast %123 : vector<1x1x128xf32> to vector<8x16x128xf32>
      %125 = arith.mulf %120, %124 : vector<8x16x128xf32>
      %126 = arith.addf %119, %125 : vector<8x16x128xf32>
      %127 = vector.extract_strided_slice %91 {offsets = [0, 5, 0], sizes = [8, 16, 128], strides = [1, 1, 1]} : vector<8x22x128xf32> to vector<8x16x128xf32>
      %128 = vector.extract_strided_slice %4 {offsets = [12, 0], sizes = [1, 128], strides = [1, 1]} : vector<56x128xf32> to vector<1x128xf32>
      %129 = vector.shape_cast %128 : vector<1x128xf32> to vector<128xf32>
      %130 = vector.shape_cast %129 : vector<128xf32> to vector<1x1x128xf32>
      %131 = vector.broadcast %130 : vector<1x1x128xf32> to vector<8x16x128xf32>
      %132 = arith.mulf %127, %131 : vector<8x16x128xf32>
      %133 = arith.addf %126, %132 : vector<8x16x128xf32>
      %134 = vector.extract_strided_slice %91 {offsets = [0, 6, 0], sizes = [8, 16, 128], strides = [1, 1, 1]} : vector<8x22x128xf32> to vector<8x16x128xf32>
      %135 = vector.extract_strided_slice %4 {offsets = [13, 0], sizes = [1, 128], strides = [1, 1]} : vector<56x128xf32> to vector<1x128xf32>
      %136 = vector.shape_cast %135 : vector<1x128xf32> to vector<128xf32>
      %137 = vector.shape_cast %136 : vector<128xf32> to vector<1x1x128xf32>
      %138 = vector.broadcast %137 : vector<1x1x128xf32> to vector<8x16x128xf32>
      %139 = arith.mulf %134, %138 : vector<8x16x128xf32>
      %140 = arith.addf %133, %139 : vector<8x16x128xf32>
      %c2_i32_29 = arith.constant 2 : i32
      %141 = arith.addi %32, %c2_i32_29 : i32
      %142 = arith.index_cast %0 : i32 to index
      %143 = arith.index_cast %141 : i32 to index
      %c0_30 = arith.constant 0 : index
      %c0_31 = arith.constant 0 : index
      %144 = vector.load %arg10[%142, %143, %c0_30, %c0_31] : memref<2x22x22x128xf32, #tpu.memory_space<vmem>>, vector<1x8x22x128xf32>
      %145 = vector.shape_cast %144 : vector<1x8x22x128xf32> to vector<8x22x128xf32>
      %146 = vector.extract_strided_slice %145 {offsets = [0, 0, 0], sizes = [8, 16, 128], strides = [1, 1, 1]} : vector<8x22x128xf32> to vector<8x16x128xf32>
      %147 = vector.extract_strided_slice %4 {offsets = [14, 0], sizes = [1, 128], strides = [1, 1]} : vector<56x128xf32> to vector<1x128xf32>
      %148 = vector.shape_cast %147 : vector<1x128xf32> to vector<128xf32>
      %149 = vector.shape_cast %148 : vector<128xf32> to vector<1x1x128xf32>
      %150 = vector.broadcast %149 : vector<1x1x128xf32> to vector<8x16x128xf32>
      %151 = arith.mulf %146, %150 : vector<8x16x128xf32>
      %152 = arith.addf %140, %151 : vector<8x16x128xf32>
      %153 = vector.extract_strided_slice %145 {offsets = [0, 1, 0], sizes = [8, 16, 128], strides = [1, 1, 1]} : vector<8x22x128xf32> to vector<8x16x128xf32>
      %154 = vector.extract_strided_slice %4 {offsets = [15, 0], sizes = [1, 128], strides = [1, 1]} : vector<56x128xf32> to vector<1x128xf32>
      %155 = vector.shape_cast %154 : vector<1x128xf32> to vector<128xf32>
      %156 = vector.shape_cast %155 : vector<128xf32> to vector<1x1x128xf32>
      %157 = vector.broadcast %156 : vector<1x1x128xf32> to vector<8x16x128xf32>
      %158 = arith.mulf %153, %157 : vector<8x16x128xf32>
      %159 = arith.addf %152, %158 : vector<8x16x128xf32>
      %160 = vector.extract_strided_slice %145 {offsets = [0, 2, 0], sizes = [8, 16, 128], strides = [1, 1, 1]} : vector<8x22x128xf32> to vector<8x16x128xf32>
      %161 = vector.extract_strided_slice %4 {offsets = [16, 0], sizes = [1, 128], strides = [1, 1]} : vector<56x128xf32> to vector<1x128xf32>
      %162 = vector.shape_cast %161 : vector<1x128xf32> to vector<128xf32>
      %163 = vector.shape_cast %162 : vector<128xf32> to vector<1x1x128xf32>
      %164 = vector.broadcast %163 : vector<1x1x128xf32> to vector<8x16x128xf32>
      %165 = arith.mulf %160, %164 : vector<8x16x128xf32>
      %166 = arith.addf %159, %165 : vector<8x16x128xf32>
      %167 = vector.extract_strided_slice %145 {offsets = [0, 3, 0], sizes = [8, 16, 128], strides = [1, 1, 1]} : vector<8x22x128xf32> to vector<8x16x128xf32>
      %168 = vector.extract_strided_slice %4 {offsets = [17, 0], sizes = [1, 128], strides = [1, 1]} : vector<56x128xf32> to vector<1x128xf32>
      %169 = vector.shape_cast %168 : vector<1x128xf32> to vector<128xf32>
      %170 = vector.shape_cast %169 : vector<128xf32> to vector<1x1x128xf32>
      %171 = vector.broadcast %170 : vector<1x1x128xf32> to vector<8x16x128xf32>
      %172 = arith.mulf %167, %171 : vector<8x16x128xf32>
      %173 = arith.addf %166, %172 : vector<8x16x128xf32>
      %174 = vector.extract_strided_slice %145 {offsets = [0, 4, 0], sizes = [8, 16, 128], strides = [1, 1, 1]} : vector<8x22x128xf32> to vector<8x16x128xf32>
      %175 = vector.extract_strided_slice %4 {offsets = [18, 0], sizes = [1, 128], strides = [1, 1]} : vector<56x128xf32> to vector<1x128xf32>
      %176 = vector.shape_cast %175 : vector<1x128xf32> to vector<128xf32>
      %177 = vector.shape_cast %176 : vector<128xf32> to vector<1x1x128xf32>
      %178 = vector.broadcast %177 : vector<1x1x128xf32> to vector<8x16x128xf32>
      %179 = arith.mulf %174, %178 : vector<8x16x128xf32>
      %180 = arith.addf %173, %179 : vector<8x16x128xf32>
      %181 = vector.extract_strided_slice %145 {offsets = [0, 5, 0], sizes = [8, 16, 128], strides = [1, 1, 1]} : vector<8x22x128xf32> to vector<8x16x128xf32>
      %182 = vector.extract_strided_slice %4 {offsets = [19, 0], sizes = [1, 128], strides = [1, 1]} : vector<56x128xf32> to vector<1x128xf32>
      %183 = vector.shape_cast %182 : vector<1x128xf32> to vector<128xf32>
      %184 = vector.shape_cast %183 : vector<128xf32> to vector<1x1x128xf32>
      %185 = vector.broadcast %184 : vector<1x1x128xf32> to vector<8x16x128xf32>
      %186 = arith.mulf %181, %185 : vector<8x16x128xf32>
      %187 = arith.addf %180, %186 : vector<8x16x128xf32>
      %188 = vector.extract_strided_slice %145 {offsets = [0, 6, 0], sizes = [8, 16, 128], strides = [1, 1, 1]} : vector<8x22x128xf32> to vector<8x16x128xf32>
      %189 = vector.extract_strided_slice %4 {offsets = [20, 0], sizes = [1, 128], strides = [1, 1]} : vector<56x128xf32> to vector<1x128xf32>
      %190 = vector.shape_cast %189 : vector<1x128xf32> to vector<128xf32>
      %191 = vector.shape_cast %190 : vector<128xf32> to vector<1x1x128xf32>
      %192 = vector.broadcast %191 : vector<1x1x128xf32> to vector<8x16x128xf32>
      %193 = arith.mulf %188, %192 : vector<8x16x128xf32>
      %194 = arith.addf %187, %193 : vector<8x16x128xf32>
      %c3_i32 = arith.constant 3 : i32
      %195 = arith.addi %32, %c3_i32 : i32
      %196 = arith.index_cast %0 : i32 to index
      %197 = arith.index_cast %195 : i32 to index
      %c0_32 = arith.constant 0 : index
      %c0_33 = arith.constant 0 : index
      %198 = vector.load %arg10[%196, %197, %c0_32, %c0_33] : memref<2x22x22x128xf32, #tpu.memory_space<vmem>>, vector<1x8x22x128xf32>
      %199 = vector.shape_cast %198 : vector<1x8x22x128xf32> to vector<8x22x128xf32>
      %200 = vector.extract_strided_slice %199 {offsets = [0, 0, 0], sizes = [8, 16, 128], strides = [1, 1, 1]} : vector<8x22x128xf32> to vector<8x16x128xf32>
      %201 = vector.extract_strided_slice %4 {offsets = [21, 0], sizes = [1, 128], strides = [1, 1]} : vector<56x128xf32> to vector<1x128xf32>
      %202 = vector.shape_cast %201 : vector<1x128xf32> to vector<128xf32>
      %203 = vector.shape_cast %202 : vector<128xf32> to vector<1x1x128xf32>
      %204 = vector.broadcast %203 : vector<1x1x128xf32> to vector<8x16x128xf32>
      %205 = arith.mulf %200, %204 : vector<8x16x128xf32>
      %206 = arith.addf %194, %205 : vector<8x16x128xf32>
      %207 = vector.extract_strided_slice %199 {offsets = [0, 1, 0], sizes = [8, 16, 128], strides = [1, 1, 1]} : vector<8x22x128xf32> to vector<8x16x128xf32>
      %208 = vector.extract_strided_slice %4 {offsets = [22, 0], sizes = [1, 128], strides = [1, 1]} : vector<56x128xf32> to vector<1x128xf32>
      %209 = vector.shape_cast %208 : vector<1x128xf32> to vector<128xf32>
      %210 = vector.shape_cast %209 : vector<128xf32> to vector<1x1x128xf32>
      %211 = vector.broadcast %210 : vector<1x1x128xf32> to vector<8x16x128xf32>
      %212 = arith.mulf %207, %211 : vector<8x16x128xf32>
      %213 = arith.addf %206, %212 : vector<8x16x128xf32>
      %214 = vector.extract_strided_slice %199 {offsets = [0, 2, 0], sizes = [8, 16, 128], strides = [1, 1, 1]} : vector<8x22x128xf32> to vector<8x16x128xf32>
      %215 = vector.extract_strided_slice %4 {offsets = [23, 0], sizes = [1, 128], strides = [1, 1]} : vector<56x128xf32> to vector<1x128xf32>
      %216 = vector.shape_cast %215 : vector<1x128xf32> to vector<128xf32>
      %217 = vector.shape_cast %216 : vector<128xf32> to vector<1x1x128xf32>
      %218 = vector.broadcast %217 : vector<1x1x128xf32> to vector<8x16x128xf32>
      %219 = arith.mulf %214, %218 : vector<8x16x128xf32>
      %220 = arith.addf %213, %219 : vector<8x16x128xf32>
      %221 = vector.extract_strided_slice %199 {offsets = [0, 3, 0], sizes = [8, 16, 128], strides = [1, 1, 1]} : vector<8x22x128xf32> to vector<8x16x128xf32>
      %222 = vector.extract_strided_slice %4 {offsets = [24, 0], sizes = [1, 128], strides = [1, 1]} : vector<56x128xf32> to vector<1x128xf32>
      %223 = vector.shape_cast %222 : vector<1x128xf32> to vector<128xf32>
      %224 = vector.shape_cast %223 : vector<128xf32> to vector<1x1x128xf32>
      %225 = vector.broadcast %224 : vector<1x1x128xf32> to vector<8x16x128xf32>
      %226 = arith.mulf %221, %225 : vector<8x16x128xf32>
      %227 = arith.addf %220, %226 : vector<8x16x128xf32>
      %228 = vector.extract_strided_slice %199 {offsets = [0, 4, 0], sizes = [8, 16, 128], strides = [1, 1, 1]} : vector<8x22x128xf32> to vector<8x16x128xf32>
      %229 = vector.extract_strided_slice %4 {offsets = [25, 0], sizes = [1, 128], strides = [1, 1]} : vector<56x128xf32> to vector<1x128xf32>
      %230 = vector.shape_cast %229 : vector<1x128xf32> to vector<128xf32>
      %231 = vector.shape_cast %230 : vector<128xf32> to vector<1x1x128xf32>
      %232 = vector.broadcast %231 : vector<1x1x128xf32> to vector<8x16x128xf32>
      %233 = arith.mulf %228, %232 : vector<8x16x128xf32>
      %234 = arith.addf %227, %233 : vector<8x16x128xf32>
      %235 = vector.extract_strided_slice %199 {offsets = [0, 5, 0], sizes = [8, 16, 128], strides = [1, 1, 1]} : vector<8x22x128xf32> to vector<8x16x128xf32>
      %236 = vector.extract_strided_slice %4 {offsets = [26, 0], sizes = [1, 128], strides = [1, 1]} : vector<56x128xf32> to vector<1x128xf32>
      %237 = vector.shape_cast %236 : vector<1x128xf32> to vector<128xf32>
      %238 = vector.shape_cast %237 : vector<128xf32> to vector<1x1x128xf32>
      %239 = vector.broadcast %238 : vector<1x1x128xf32> to vector<8x16x128xf32>
      %240 = arith.mulf %235, %239 : vector<8x16x128xf32>
      %241 = arith.addf %234, %240 : vector<8x16x128xf32>
      %242 = vector.extract_strided_slice %199 {offsets = [0, 6, 0], sizes = [8, 16, 128], strides = [1, 1, 1]} : vector<8x22x128xf32> to vector<8x16x128xf32>
      %243 = vector.extract_strided_slice %4 {offsets = [27, 0], sizes = [1, 128], strides = [1, 1]} : vector<56x128xf32> to vector<1x128xf32>
      %244 = vector.shape_cast %243 : vector<1x128xf32> to vector<128xf32>
      %245 = vector.shape_cast %244 : vector<128xf32> to vector<1x1x128xf32>
      %246 = vector.broadcast %245 : vector<1x1x128xf32> to vector<8x16x128xf32>
      %247 = arith.mulf %242, %246 : vector<8x16x128xf32>
      %248 = arith.addf %241, %247 : vector<8x16x128xf32>
      %c4_i32 = arith.constant 4 : i32
      %249 = arith.addi %32, %c4_i32 : i32
      %250 = arith.index_cast %0 : i32 to index
      %251 = arith.index_cast %249 : i32 to index
      %c0_34 = arith.constant 0 : index
      %c0_35 = arith.constant 0 : index
      %252 = vector.load %arg10[%250, %251, %c0_34, %c0_35] : memref<2x22x22x128xf32, #tpu.memory_space<vmem>>, vector<1x8x22x128xf32>
      %253 = vector.shape_cast %252 : vector<1x8x22x128xf32> to vector<8x22x128xf32>
      %254 = vector.extract_strided_slice %253 {offsets = [0, 0, 0], sizes = [8, 16, 128], strides = [1, 1, 1]} : vector<8x22x128xf32> to vector<8x16x128xf32>
      %255 = vector.extract_strided_slice %4 {offsets = [28, 0], sizes = [1, 128], strides = [1, 1]} : vector<56x128xf32> to vector<1x128xf32>
      %256 = vector.shape_cast %255 : vector<1x128xf32> to vector<128xf32>
      %257 = vector.shape_cast %256 : vector<128xf32> to vector<1x1x128xf32>
      %258 = vector.broadcast %257 : vector<1x1x128xf32> to vector<8x16x128xf32>
      %259 = arith.mulf %254, %258 : vector<8x16x128xf32>
      %260 = arith.addf %248, %259 : vector<8x16x128xf32>
      %261 = vector.extract_strided_slice %253 {offsets = [0, 1, 0], sizes = [8, 16, 128], strides = [1, 1, 1]} : vector<8x22x128xf32> to vector<8x16x128xf32>
      %262 = vector.extract_strided_slice %4 {offsets = [29, 0], sizes = [1, 128], strides = [1, 1]} : vector<56x128xf32> to vector<1x128xf32>
      %263 = vector.shape_cast %262 : vector<1x128xf32> to vector<128xf32>
      %264 = vector.shape_cast %263 : vector<128xf32> to vector<1x1x128xf32>
      %265 = vector.broadcast %264 : vector<1x1x128xf32> to vector<8x16x128xf32>
      %266 = arith.mulf %261, %265 : vector<8x16x128xf32>
      %267 = arith.addf %260, %266 : vector<8x16x128xf32>
      %268 = vector.extract_strided_slice %253 {offsets = [0, 2, 0], sizes = [8, 16, 128], strides = [1, 1, 1]} : vector<8x22x128xf32> to vector<8x16x128xf32>
      %269 = vector.extract_strided_slice %4 {offsets = [30, 0], sizes = [1, 128], strides = [1, 1]} : vector<56x128xf32> to vector<1x128xf32>
      %270 = vector.shape_cast %269 : vector<1x128xf32> to vector<128xf32>
      %271 = vector.shape_cast %270 : vector<128xf32> to vector<1x1x128xf32>
      %272 = vector.broadcast %271 : vector<1x1x128xf32> to vector<8x16x128xf32>
      %273 = arith.mulf %268, %272 : vector<8x16x128xf32>
      %274 = arith.addf %267, %273 : vector<8x16x128xf32>
      %275 = vector.extract_strided_slice %253 {offsets = [0, 3, 0], sizes = [8, 16, 128], strides = [1, 1, 1]} : vector<8x22x128xf32> to vector<8x16x128xf32>
      %276 = vector.extract_strided_slice %4 {offsets = [31, 0], sizes = [1, 128], strides = [1, 1]} : vector<56x128xf32> to vector<1x128xf32>
      %277 = vector.shape_cast %276 : vector<1x128xf32> to vector<128xf32>
      %278 = vector.shape_cast %277 : vector<128xf32> to vector<1x1x128xf32>
      %279 = vector.broadcast %278 : vector<1x1x128xf32> to vector<8x16x128xf32>
      %280 = arith.mulf %275, %279 : vector<8x16x128xf32>
      %281 = arith.addf %274, %280 : vector<8x16x128xf32>
      %282 = vector.extract_strided_slice %253 {offsets = [0, 4, 0], sizes = [8, 16, 128], strides = [1, 1, 1]} : vector<8x22x128xf32> to vector<8x16x128xf32>
      %283 = vector.extract_strided_slice %4 {offsets = [32, 0], sizes = [1, 128], strides = [1, 1]} : vector<56x128xf32> to vector<1x128xf32>
      %284 = vector.shape_cast %283 : vector<1x128xf32> to vector<128xf32>
      %285 = vector.shape_cast %284 : vector<128xf32> to vector<1x1x128xf32>
      %286 = vector.broadcast %285 : vector<1x1x128xf32> to vector<8x16x128xf32>
      %287 = arith.mulf %282, %286 : vector<8x16x128xf32>
      %288 = arith.addf %281, %287 : vector<8x16x128xf32>
      %289 = vector.extract_strided_slice %253 {offsets = [0, 5, 0], sizes = [8, 16, 128], strides = [1, 1, 1]} : vector<8x22x128xf32> to vector<8x16x128xf32>
      %290 = vector.extract_strided_slice %4 {offsets = [33, 0], sizes = [1, 128], strides = [1, 1]} : vector<56x128xf32> to vector<1x128xf32>
      %291 = vector.shape_cast %290 : vector<1x128xf32> to vector<128xf32>
      %292 = vector.shape_cast %291 : vector<128xf32> to vector<1x1x128xf32>
      %293 = vector.broadcast %292 : vector<1x1x128xf32> to vector<8x16x128xf32>
      %294 = arith.mulf %289, %293 : vector<8x16x128xf32>
      %295 = arith.addf %288, %294 : vector<8x16x128xf32>
      %296 = vector.extract_strided_slice %253 {offsets = [0, 6, 0], sizes = [8, 16, 128], strides = [1, 1, 1]} : vector<8x22x128xf32> to vector<8x16x128xf32>
      %297 = vector.extract_strided_slice %4 {offsets = [34, 0], sizes = [1, 128], strides = [1, 1]} : vector<56x128xf32> to vector<1x128xf32>
      %298 = vector.shape_cast %297 : vector<1x128xf32> to vector<128xf32>
      %299 = vector.shape_cast %298 : vector<128xf32> to vector<1x1x128xf32>
      %300 = vector.broadcast %299 : vector<1x1x128xf32> to vector<8x16x128xf32>
      %301 = arith.mulf %296, %300 : vector<8x16x128xf32>
      %302 = arith.addf %295, %301 : vector<8x16x128xf32>
      %c5_i32 = arith.constant 5 : i32
      %303 = arith.addi %32, %c5_i32 : i32
      %304 = arith.index_cast %0 : i32 to index
      %305 = arith.index_cast %303 : i32 to index
      %c0_36 = arith.constant 0 : index
      %c0_37 = arith.constant 0 : index
      %306 = vector.load %arg10[%304, %305, %c0_36, %c0_37] : memref<2x22x22x128xf32, #tpu.memory_space<vmem>>, vector<1x8x22x128xf32>
      %307 = vector.shape_cast %306 : vector<1x8x22x128xf32> to vector<8x22x128xf32>
      %308 = vector.extract_strided_slice %307 {offsets = [0, 0, 0], sizes = [8, 16, 128], strides = [1, 1, 1]} : vector<8x22x128xf32> to vector<8x16x128xf32>
      %309 = vector.extract_strided_slice %4 {offsets = [35, 0], sizes = [1, 128], strides = [1, 1]} : vector<56x128xf32> to vector<1x128xf32>
      %310 = vector.shape_cast %309 : vector<1x128xf32> to vector<128xf32>
      %311 = vector.shape_cast %310 : vector<128xf32> to vector<1x1x128xf32>
      %312 = vector.broadcast %311 : vector<1x1x128xf32> to vector<8x16x128xf32>
      %313 = arith.mulf %308, %312 : vector<8x16x128xf32>
      %314 = arith.addf %302, %313 : vector<8x16x128xf32>
      %315 = vector.extract_strided_slice %307 {offsets = [0, 1, 0], sizes = [8, 16, 128], strides = [1, 1, 1]} : vector<8x22x128xf32> to vector<8x16x128xf32>
      %316 = vector.extract_strided_slice %4 {offsets = [36, 0], sizes = [1, 128], strides = [1, 1]} : vector<56x128xf32> to vector<1x128xf32>
      %317 = vector.shape_cast %316 : vector<1x128xf32> to vector<128xf32>
      %318 = vector.shape_cast %317 : vector<128xf32> to vector<1x1x128xf32>
      %319 = vector.broadcast %318 : vector<1x1x128xf32> to vector<8x16x128xf32>
      %320 = arith.mulf %315, %319 : vector<8x16x128xf32>
      %321 = arith.addf %314, %320 : vector<8x16x128xf32>
      %322 = vector.extract_strided_slice %307 {offsets = [0, 2, 0], sizes = [8, 16, 128], strides = [1, 1, 1]} : vector<8x22x128xf32> to vector<8x16x128xf32>
      %323 = vector.extract_strided_slice %4 {offsets = [37, 0], sizes = [1, 128], strides = [1, 1]} : vector<56x128xf32> to vector<1x128xf32>
      %324 = vector.shape_cast %323 : vector<1x128xf32> to vector<128xf32>
      %325 = vector.shape_cast %324 : vector<128xf32> to vector<1x1x128xf32>
      %326 = vector.broadcast %325 : vector<1x1x128xf32> to vector<8x16x128xf32>
      %327 = arith.mulf %322, %326 : vector<8x16x128xf32>
      %328 = arith.addf %321, %327 : vector<8x16x128xf32>
      %329 = vector.extract_strided_slice %307 {offsets = [0, 3, 0], sizes = [8, 16, 128], strides = [1, 1, 1]} : vector<8x22x128xf32> to vector<8x16x128xf32>
      %330 = vector.extract_strided_slice %4 {offsets = [38, 0], sizes = [1, 128], strides = [1, 1]} : vector<56x128xf32> to vector<1x128xf32>
      %331 = vector.shape_cast %330 : vector<1x128xf32> to vector<128xf32>
      %332 = vector.shape_cast %331 : vector<128xf32> to vector<1x1x128xf32>
      %333 = vector.broadcast %332 : vector<1x1x128xf32> to vector<8x16x128xf32>
      %334 = arith.mulf %329, %333 : vector<8x16x128xf32>
      %335 = arith.addf %328, %334 : vector<8x16x128xf32>
      %336 = vector.extract_strided_slice %307 {offsets = [0, 4, 0], sizes = [8, 16, 128], strides = [1, 1, 1]} : vector<8x22x128xf32> to vector<8x16x128xf32>
      %337 = vector.extract_strided_slice %4 {offsets = [39, 0], sizes = [1, 128], strides = [1, 1]} : vector<56x128xf32> to vector<1x128xf32>
      %338 = vector.shape_cast %337 : vector<1x128xf32> to vector<128xf32>
      %339 = vector.shape_cast %338 : vector<128xf32> to vector<1x1x128xf32>
      %340 = vector.broadcast %339 : vector<1x1x128xf32> to vector<8x16x128xf32>
      %341 = arith.mulf %336, %340 : vector<8x16x128xf32>
      %342 = arith.addf %335, %341 : vector<8x16x128xf32>
      %343 = vector.extract_strided_slice %307 {offsets = [0, 5, 0], sizes = [8, 16, 128], strides = [1, 1, 1]} : vector<8x22x128xf32> to vector<8x16x128xf32>
      %344 = vector.extract_strided_slice %4 {offsets = [40, 0], sizes = [1, 128], strides = [1, 1]} : vector<56x128xf32> to vector<1x128xf32>
      %345 = vector.shape_cast %344 : vector<1x128xf32> to vector<128xf32>
      %346 = vector.shape_cast %345 : vector<128xf32> to vector<1x1x128xf32>
      %347 = vector.broadcast %346 : vector<1x1x128xf32> to vector<8x16x128xf32>
      %348 = arith.mulf %343, %347 : vector<8x16x128xf32>
      %349 = arith.addf %342, %348 : vector<8x16x128xf32>
      %350 = vector.extract_strided_slice %307 {offsets = [0, 6, 0], sizes = [8, 16, 128], strides = [1, 1, 1]} : vector<8x22x128xf32> to vector<8x16x128xf32>
      %351 = vector.extract_strided_slice %4 {offsets = [41, 0], sizes = [1, 128], strides = [1, 1]} : vector<56x128xf32> to vector<1x128xf32>
      %352 = vector.shape_cast %351 : vector<1x128xf32> to vector<128xf32>
      %353 = vector.shape_cast %352 : vector<128xf32> to vector<1x1x128xf32>
      %354 = vector.broadcast %353 : vector<1x1x128xf32> to vector<8x16x128xf32>
      %355 = arith.mulf %350, %354 : vector<8x16x128xf32>
      %356 = arith.addf %349, %355 : vector<8x16x128xf32>
      %c6_i32 = arith.constant 6 : i32
      %357 = arith.addi %32, %c6_i32 : i32
      %358 = arith.index_cast %0 : i32 to index
      %359 = arith.index_cast %357 : i32 to index
      %c0_38 = arith.constant 0 : index
      %c0_39 = arith.constant 0 : index
      %360 = vector.load %arg10[%358, %359, %c0_38, %c0_39] : memref<2x22x22x128xf32, #tpu.memory_space<vmem>>, vector<1x8x22x128xf32>
      %361 = vector.shape_cast %360 : vector<1x8x22x128xf32> to vector<8x22x128xf32>
      %362 = vector.extract_strided_slice %361 {offsets = [0, 0, 0], sizes = [8, 16, 128], strides = [1, 1, 1]} : vector<8x22x128xf32> to vector<8x16x128xf32>
      %363 = vector.extract_strided_slice %4 {offsets = [42, 0], sizes = [1, 128], strides = [1, 1]} : vector<56x128xf32> to vector<1x128xf32>
      %364 = vector.shape_cast %363 : vector<1x128xf32> to vector<128xf32>
      %365 = vector.shape_cast %364 : vector<128xf32> to vector<1x1x128xf32>
      %366 = vector.broadcast %365 : vector<1x1x128xf32> to vector<8x16x128xf32>
      %367 = arith.mulf %362, %366 : vector<8x16x128xf32>
      %368 = arith.addf %356, %367 : vector<8x16x128xf32>
      %369 = vector.extract_strided_slice %361 {offsets = [0, 1, 0], sizes = [8, 16, 128], strides = [1, 1, 1]} : vector<8x22x128xf32> to vector<8x16x128xf32>
      %370 = vector.extract_strided_slice %4 {offsets = [43, 0], sizes = [1, 128], strides = [1, 1]} : vector<56x128xf32> to vector<1x128xf32>
      %371 = vector.shape_cast %370 : vector<1x128xf32> to vector<128xf32>
      %372 = vector.shape_cast %371 : vector<128xf32> to vector<1x1x128xf32>
      %373 = vector.broadcast %372 : vector<1x1x128xf32> to vector<8x16x128xf32>
      %374 = arith.mulf %369, %373 : vector<8x16x128xf32>
      %375 = arith.addf %368, %374 : vector<8x16x128xf32>
      %376 = vector.extract_strided_slice %361 {offsets = [0, 2, 0], sizes = [8, 16, 128], strides = [1, 1, 1]} : vector<8x22x128xf32> to vector<8x16x128xf32>
      %377 = vector.extract_strided_slice %4 {offsets = [44, 0], sizes = [1, 128], strides = [1, 1]} : vector<56x128xf32> to vector<1x128xf32>
      %378 = vector.shape_cast %377 : vector<1x128xf32> to vector<128xf32>
      %379 = vector.shape_cast %378 : vector<128xf32> to vector<1x1x128xf32>
      %380 = vector.broadcast %379 : vector<1x1x128xf32> to vector<8x16x128xf32>
      %381 = arith.mulf %376, %380 : vector<8x16x128xf32>
      %382 = arith.addf %375, %381 : vector<8x16x128xf32>
      %383 = vector.extract_strided_slice %361 {offsets = [0, 3, 0], sizes = [8, 16, 128], strides = [1, 1, 1]} : vector<8x22x128xf32> to vector<8x16x128xf32>
      %384 = vector.extract_strided_slice %4 {offsets = [45, 0], sizes = [1, 128], strides = [1, 1]} : vector<56x128xf32> to vector<1x128xf32>
      %385 = vector.shape_cast %384 : vector<1x128xf32> to vector<128xf32>
      %386 = vector.shape_cast %385 : vector<128xf32> to vector<1x1x128xf32>
      %387 = vector.broadcast %386 : vector<1x1x128xf32> to vector<8x16x128xf32>
      %388 = arith.mulf %383, %387 : vector<8x16x128xf32>
      %389 = arith.addf %382, %388 : vector<8x16x128xf32>
      %390 = vector.extract_strided_slice %361 {offsets = [0, 4, 0], sizes = [8, 16, 128], strides = [1, 1, 1]} : vector<8x22x128xf32> to vector<8x16x128xf32>
      %391 = vector.extract_strided_slice %4 {offsets = [46, 0], sizes = [1, 128], strides = [1, 1]} : vector<56x128xf32> to vector<1x128xf32>
      %392 = vector.shape_cast %391 : vector<1x128xf32> to vector<128xf32>
      %393 = vector.shape_cast %392 : vector<128xf32> to vector<1x1x128xf32>
      %394 = vector.broadcast %393 : vector<1x1x128xf32> to vector<8x16x128xf32>
      %395 = arith.mulf %390, %394 : vector<8x16x128xf32>
      %396 = arith.addf %389, %395 : vector<8x16x128xf32>
      %397 = vector.extract_strided_slice %361 {offsets = [0, 5, 0], sizes = [8, 16, 128], strides = [1, 1, 1]} : vector<8x22x128xf32> to vector<8x16x128xf32>
      %398 = vector.extract_strided_slice %4 {offsets = [47, 0], sizes = [1, 128], strides = [1, 1]} : vector<56x128xf32> to vector<1x128xf32>
      %399 = vector.shape_cast %398 : vector<1x128xf32> to vector<128xf32>
      %400 = vector.shape_cast %399 : vector<128xf32> to vector<1x1x128xf32>
      %401 = vector.broadcast %400 : vector<1x1x128xf32> to vector<8x16x128xf32>
      %402 = arith.mulf %397, %401 : vector<8x16x128xf32>
      %403 = arith.addf %396, %402 : vector<8x16x128xf32>
      %404 = vector.extract_strided_slice %361 {offsets = [0, 6, 0], sizes = [8, 16, 128], strides = [1, 1, 1]} : vector<8x22x128xf32> to vector<8x16x128xf32>
      %405 = vector.extract_strided_slice %4 {offsets = [48, 0], sizes = [1, 128], strides = [1, 1]} : vector<56x128xf32> to vector<1x128xf32>
      %406 = vector.shape_cast %405 : vector<1x128xf32> to vector<128xf32>
      %407 = vector.shape_cast %406 : vector<128xf32> to vector<1x1x128xf32>
      %408 = vector.broadcast %407 : vector<1x1x128xf32> to vector<8x16x128xf32>
      %409 = arith.mulf %404, %408 : vector<8x16x128xf32>
      %410 = arith.addf %403, %409 : vector<8x16x128xf32>
      %cst_40 = arith.constant dense<0.000000e+00> : vector<8x16xf32>
      %411 = vector.multi_reduction <add>, %410, %cst_40 [2] : vector<8x16x128xf32> to vector<8x16xf32>
      %412 = vector.shape_cast %411 : vector<8x16xf32> to vector<8x16x1xf32>
      %413 = vector.broadcast %cst : f32 to vector<8x16x1xf32>
      %414 = arith.mulf %412, %413 : vector<8x16x1xf32>
      %415 = vector.broadcast %414 : vector<8x16x1xf32> to vector<8x16x128xf32>
      %416 = arith.subf %410, %415 : vector<8x16x128xf32>
      %417 = vector.broadcast %15 : vector<1x1x128xf32> to vector<8x16x128xf32>
      %418 = arith.mulf %416, %417 : vector<8x16x128xf32>
      %419 = arith.mulf %418, %418 : vector<8x16x128xf32>
      %cst_41 = arith.constant dense<0.000000e+00> : vector<8x16xf32>
      %420 = vector.multi_reduction <add>, %419, %cst_41 [2] : vector<8x16x128xf32> to vector<8x16xf32>
      %421 = vector.shape_cast %420 : vector<8x16xf32> to vector<8x16x1xf32>
      %422 = vector.broadcast %cst : f32 to vector<8x16x1xf32>
      %423 = arith.mulf %421, %422 : vector<8x16x1xf32>
      %cst_42 = arith.constant 9.99999997E-7 : f32
      %424 = vector.broadcast %cst_42 : f32 to vector<8x16x1xf32>
      %425 = arith.addf %423, %424 : vector<8x16x1xf32>
      %426 = math.rsqrt %425 : vector<8x16x1xf32>
      %427 = vector.broadcast %426 : vector<8x16x1xf32> to vector<8x16x128xf32>
      %428 = arith.mulf %416, %427 : vector<8x16x128xf32>
      %429 = vector.shape_cast %428 : vector<8x16x128xf32> to vector<128x128xf32>
      %430 = arith.truncf %429 : vector<128x128xf32> to vector<128x128xbf16>
      %c0_43 = arith.constant 0 : index
      %c0_44 = arith.constant 0 : index
      %431 = vector.load %arg5[%c0_43, %c0_44] : memref<128x512xbf16, #tpu.memory_space<vmem>>, vector<128x512xbf16>
      %cst_45 = arith.constant dense<0.000000e+00> : vector<128x512xf32>
      %432 = tpu.matmul %430, %431, %cst_45 {dimension_numbers = #tpu.dot_dimension_numbers<[1], [0], [0], [1], [0, 0, 1, 1], [], []>} : vector<128x128xbf16>, vector<128x512xbf16>, vector<128x512xf32> -> vector<128x512xf32>
      %433 = vector.broadcast %6 : vector<1x512xf32> to vector<128x512xf32>
      %434 = arith.addf %432, %433 : vector<128x512xf32>
      %cst_46 = arith.constant 5.000000e-01 : f32
      %435 = vector.broadcast %cst_46 : f32 to vector<128x512xf32>
      %436 = arith.mulf %435, %434 : vector<128x512xf32>
      %437 = vector.broadcast %cst_15 : f32 to vector<128x512xf32>
      %438 = arith.mulf %434, %437 : vector<128x512xf32>
      %439 = math.erf %438 : vector<128x512xf32>
      %cst_47 = arith.constant 1.000000e+00 : f32
      %440 = vector.broadcast %cst_47 : f32 to vector<128x512xf32>
      %441 = arith.addf %440, %439 : vector<128x512xf32>
      %442 = arith.mulf %436, %441 : vector<128x512xf32>
      %443 = arith.truncf %442 : vector<128x512xf32> to vector<128x512xbf16>
      %c0_48 = arith.constant 0 : index
      %c0_49 = arith.constant 0 : index
      %444 = vector.load %arg7[%c0_48, %c0_49] : memref<512x128xbf16, #tpu.memory_space<vmem>>, vector<512x128xbf16>
      %cst_50 = arith.constant dense<0.000000e+00> : vector<128x128xf32>
      %445 = tpu.matmul %443, %444, %cst_50 {dimension_numbers = #tpu.dot_dimension_numbers<[1], [0], [0], [1], [0, 0, 1, 1], [], []>} : vector<128x512xbf16>, vector<512x128xbf16>, vector<128x128xf32> -> vector<128x128xf32>
      %446 = vector.broadcast %7 : vector<1x128xf32> to vector<128x128xf32>
      %447 = arith.addf %445, %446 : vector<128x128xf32>
      %448 = vector.shape_cast %447 : vector<128x128xf32> to vector<8x16x128xf32>
      %c3_i32_51 = arith.constant 3 : i32
      %449 = arith.addi %32, %c3_i32_51 : i32
      %450 = arith.index_cast %0 : i32 to index
      %451 = arith.index_cast %449 : i32 to index
      %c3 = arith.constant 3 : index
      %c0_52 = arith.constant 0 : index
      %452 = vector.load %arg10[%450, %451, %c3, %c0_52] : memref<2x22x22x128xf32, #tpu.memory_space<vmem>>, vector<1x8x16x128xf32>
      %453 = vector.shape_cast %452 : vector<1x8x16x128xf32> to vector<8x16x128xf32>
      %454 = arith.addf %453, %448 : vector<8x16x128xf32>
      %c0_53 = arith.constant 0 : index
      %455 = arith.index_cast %32 : i32 to index
      %c0_54 = arith.constant 0 : index
      %c0_55 = arith.constant 0 : index
      %456 = vector.load %arg9[%c0_53, %455, %c0_54, %c0_55] : memref<1x16x16x128xf32, #tpu.memory_space<vmem>>, vector<1x8x16x128xf32>
      %457 = vector.shape_cast %456 : vector<1x8x16x128xf32> to vector<8x16x128xf32>
      %458 = vector.shape_cast %454 : vector<8x16x128xf32> to vector<1x8x16x128xf32>
      tpu.vector_store %arg9[%c0_53, %455, %c0_54, %c0_55], %458 {strides = array<i32>} : memref<1x16x16x128xf32, #tpu.memory_space<vmem>>, vector<1x8x16x128xf32>,
    }
    %c2_i32_19 = arith.constant 2 : i32
    return
  }
  func.func @transform_1(%arg0: i32, %arg1: i32) -> (i32, i32) {
    %c0_i32 = arith.constant 0 : i32
    %c0_i32_0 = arith.constant 0 : i32
    %c0_i32_1 = arith.constant 0 : i32
    return %c0_i32, %c0_i32_0 : i32, i32
  }
  func.func @transform_2(%arg0: i32, %arg1: i32) -> (i32, i32) {
    %c0_i32 = arith.constant 0 : i32
    %c0_i32_0 = arith.constant 0 : i32
    %c0_i32_1 = arith.constant 0 : i32
    return %c0_i32, %c0_i32_0 : i32, i32
  }
  func.func @transform_3(%arg0: i32, %arg1: i32) -> (i32, i32) {
    %c0_i32 = arith.constant 0 : i32
    %c0_i32_0 = arith.constant 0 : i32
    %c0_i32_1 = arith.constant 0 : i32
    return %c0_i32, %c0_i32_0 : i32, i32
  }
  func.func @transform_4(%arg0: i32, %arg1: i32) -> (i32, i32) {
    %c0_i32 = arith.constant 0 : i32
    %c0_i32_0 = arith.constant 0 : i32
    %c0_i32_1 = arith.constant 0 : i32
    return %c0_i32, %c0_i32_0 : i32, i32
  }
  func.func @transform_5(%arg0: i32, %arg1: i32) -> (i32, i32) {
    %c0_i32 = arith.constant 0 : i32
    %c0_i32_0 = arith.constant 0 : i32
    %c0_i32_1 = arith.constant 0 : i32
    return %c0_i32, %c0_i32_0 : i32, i32
  }
  func.func @transform_6(%arg0: i32, %arg1: i32) -> (i32, i32) {
    %c0_i32 = arith.constant 0 : i32
    %c0_i32_0 = arith.constant 0 : i32
    %c0_i32_1 = arith.constant 0 : i32
    return %c0_i32, %c0_i32_0 : i32, i32
  }
  func.func @transform_7(%arg0: i32, %arg1: i32) -> (i32, i32, i32, i32) {
    %c0_i32 = arith.constant 0 : i32
    %c0_i32_0 = arith.constant 0 : i32
    %c0_i32_1 = arith.constant 0 : i32
    return %arg0, %arg1, %c0_i32, %c0_i32_0 : i32, i32, i32, i32
  }
}

</mosaic_0001>

<llo_original>
// kernel: tpu_custom_call.1
$region0: #{tpu_custom_call.1}
  #allocation0 [shape = 'u32[]', space=smem, size = 0x4, offset = 0x4, fixed_abs, tag = 'smem constant byte address 0x4 - core index']
  #allocation1 [shape = 'u32[144,128]{1,0:T(1,128)}', space=vmem, size = 0x12000, scoped, tag = 'internal scratch']
  #allocation2 [shape = 'f32[2,22,22,128]{3,2,1,0:T(8,128)}', space=vmem, size = 0x84000, scoped, tag = 'scratch operand']
  #allocation3 [shape = 's32[2]{0}', space=sflag, size = 0x8, scoped, tag = 'scratch operand']
  #allocation6 [shape = 's32[]', space=sflag, size = 0x4, offset = 0, fixed_abs, tag = 'sflag constant byte address 0x0 - dummy sync flag']
  #allocation7 [shape = 's32[]', space=sflag, size = 0x4, offset = 0, fixed_abs, tag = 'sflag constant byte address 0x0 - dummy sync flag']
  %s0 = inlined_call_operand.vmem [shape: f32[2,22,22,128], index: 0, kind: input, shape index: {}]
  %s1 = inlined_call_operand.vmem [shape: f32[56,128], index: 1, kind: input, shape index: {}]
  %s2 = inlined_call_operand.vmem [shape: f32[1,128], index: 2, kind: input, shape index: {}]
  %s3 = inlined_call_operand.vmem [shape: bf16[128,512], index: 3, kind: input, shape index: {}]
  %s4 = inlined_call_operand.vmem [shape: f32[1,512], index: 4, kind: input, shape index: {}]
  %s5 = inlined_call_operand.vmem [shape: bf16[512,128], index: 5, kind: input, shape index: {}]
  %s6 = inlined_call_operand.vmem [shape: f32[1,128], index: 6, kind: input, shape index: {}]
  %s7 = inlined_call_operand.hbm [shape: f32[2,16,16,128], index: 7, kind: output, shape index: {}]
  %s8 = sld [smem:[#allocation0]]
  $region146: #{tpu_custom_call.1} parent=0
    _
  %s10 = ssub.s32 1, %s8
  %s11 = scalar_select 0, %s10, %s8
  $region1: #{tpu_custom_call.1} parent=0
    #allocation4 [shape = 'u8[262144]{0}', space=vmem, size = 0x40000, scoped, tag = 'output window, operand 0']
    #allocation5 [shape = 's32[2]{0}', space=sflag, size = 0x8, scoped, tag = 'scoped memory for tpu_custom_call.1']
    %12 = vsyncpa [#allocation5], 0
    %s13 = scalar_lea.sflag [#allocation5], 1
    %14 = vsyncpa %s13, 0
    loop: start=0, step=1, limit=4
    $region2: #{tpu_custom_call.1} parent=1 // loop_pre_header
      _
    $region3: #{tpu_custom_call.1} parent=1 // loop_header
      %s16 = sphi 0, %s20
      %p17 = scmp.ge.s32.totalorder %s16, 4
      %s23 = sphi 0, %s35
      %s24 = sphi 0, %s31
      %s25 = sphi 0, %s23
      %s26 = sphi 0, %s24
      %s27 = sphi 0, %s25
      %s28 = sphi 0, %s26
      %s36 = sphi 0, %s36
      %s38 = sphi 0, %s36
      %s39 = sphi 0, %s38
      %s53 = sphi 0, %s39
      %s57 = sphi 0, %s57
      %s59 = sphi 0, %s57
      %s60 = sphi 0, %s59
      %s74 = sphi 0, %s60
      %s78 = sphi 0, %s78
      %s80 = sphi 0, %s78
      %s81 = sphi 0, %s80
      %s95 = sphi 0, %s81
      %s99 = sphi 0, %s99
      %s101 = sphi 0, %s99
      %s102 = sphi 0, %s101
      %s116 = sphi 0, %s102
      %s120 = sphi 0, %s120
      %s122 = sphi 0, %s120
      %s123 = sphi 0, %s122
      %s137 = sphi 0, %s123
      %s141 = sphi 0, %s141
      %s143 = sphi 0, %s141
      %s144 = sphi 0, %s143
      %s158 = sphi 0, %s144
      %s166 = sphi 0, %s168
      %s169 = sphi 0, %s166
      %s170 = sphi 0, %s169
      %s186 = sphi 0, %s170
    $region4: #{tpu_custom_call.1} parent=1 // loop_header_branch
      %19 = sbr.rel (%p17) target = $region8
    $region5: #{tpu_custom_call.1} parent=1 // loop_body
      %s21 = ssub.s32 %s16, 1
      %s22 = ssub.s32 %s16, 2
      %s29 = sadd.s32 1, %s24
      %p30 = scmp.ge.s32.totalorder %s29, 1
      %s31 = scalar_select %p30, 0, %s29
      %s32 = sadd.s32 1, %s23
      %s33 = scalar_select %p30, %s32, %s23
      %p34 = scmp.ge.s32.totalorder %s33, 2
      %s35 = scalar_select %p34, 0, %s33
      %s37 = sadd.s32 %s36, 1
      %p40 = scmp.eq.s32.totalorder %s16, 1
      %p41 = scmp.ne.s32.totalorder %s36, %s38
      %p42 = scmp.eq.s32.totalorder %s16, 0
      %p43 = por %p41, %p42
      %p44 = scmp.ne.s32.totalorder %s36, %s38
      %p45 = scmp.eq.s32.totalorder %s21, 1
      %p46 = por %p44, %p45
      %p47 = scmp.ne.s32.totalorder %s38, %s39
      %p48 = scmp.eq.s32.totalorder %s21, 0
      %p49 = por %p47, %p48
      %p50 = scmp.ne.s32.totalorder %s38, %s39
      %p51 = scmp.eq.s32.totalorder %s22, 1
      %p52 = por %p50, %p51
      %p54 = scmp.ne.s32.totalorder %s39, %s53
      %p55 = scmp.eq.s32.totalorder %s22, 0
      %p56 = por %p54, %p55
      %s58 = sadd.s32 %s57, 1
      %p61 = scmp.eq.s32.totalorder %s16, 1
      %p62 = scmp.ne.s32.totalorder %s57, %s59
      %p63 = scmp.eq.s32.totalorder %s16, 0
      %p64 = por %p62, %p63
      %p65 = scmp.ne.s32.totalorder %s57, %s59
      %p66 = scmp.eq.s32.totalorder %s21, 1
      %p67 = por %p65, %p66
      %p68 = scmp.ne.s32.totalorder %s59, %s60
      %p69 = scmp.eq.s32.totalorder %s21, 0
      %p70 = por %p68, %p69
      %p71 = scmp.ne.s32.totalorder %s59, %s60
      %p72 = scmp.eq.s32.totalorder %s22, 1
      %p73 = por %p71, %p72
      %p75 = scmp.ne.s32.totalorder %s60, %s74
      %p76 = scmp.eq.s32.totalorder %s22, 0
      %p77 = por %p75, %p76
      %s79 = sadd.s32 %s78, 1
      %p82 = scmp.eq.s32.totalorder %s16, 1
      %p83 = scmp.ne.s32.totalorder %s78, %s80
      %p84 = scmp.eq.s32.totalorder %s16, 0
      %p85 = por %p83, %p84
      %p86 = scmp.ne.s32.totalorder %s78, %s80
      %p87 = scmp.eq.s32.totalorder %s21, 1
      %p88 = por %p86, %p87
      %p89 = scmp.ne.s32.totalorder %s80, %s81
      %p90 = scmp.eq.s32.totalorder %s21, 0
      %p91 = por %p89, %p90
      %p92 = scmp.ne.s32.totalorder %s80, %s81
      %p93 = scmp.eq.s32.totalorder %s22, 1
      %p94 = por %p92, %p93
      %p96 = scmp.ne.s32.totalorder %s81, %s95
      %p97 = scmp.eq.s32.totalorder %s22, 0
      %p98 = por %p96, %p97
      %s100 = sadd.s32 %s99, 1
      %p103 = scmp.eq.s32.totalorder %s16, 1
      %p104 = scmp.ne.s32.totalorder %s99, %s101
      %p105 = scmp.eq.s32.totalorder %s16, 0
      %p106 = por %p104, %p105
      %p107 = scmp.ne.s32.totalorder %s99, %s101
      %p108 = scmp.eq.s32.totalorder %s21, 1
      %p109 = por %p107, %p108
      %p110 = scmp.ne.s32.totalorder %s101, %s102
      %p111 = scmp.eq.s32.totalorder %s21, 0
      %p112 = por %p110, %p111
      %p113 = scmp.ne.s32.totalorder %s101, %s102
      %p114 = scmp.eq.s32.totalorder %s22, 1
      %p115 = por %p113, %p114
      %p117 = scmp.ne.s32.totalorder %s102, %s116
      %p118 = scmp.eq.s32.totalorder %s22, 0
      %p119 = por %p117, %p118
      %s121 = sadd.s32 %s120, 1
      %p124 = scmp.eq.s32.totalorder %s16, 1
      %p125 = scmp.ne.s32.totalorder %s120, %s122
      %p126 = scmp.eq.s32.totalorder %s16, 0
      %p127 = por %p125, %p126
      %p128 = scmp.ne.s32.totalorder %s120, %s122
      %p129 = scmp.eq.s32.totalorder %s21, 1
      %p130 = por %p128, %p129
      %p131 = scmp.ne.s32.totalorder %s122, %s123
      %p132 = scmp.eq.s32.totalorder %s21, 0
      %p133 = por %p131, %p132
      %p134 = scmp.ne.s32.totalorder %s122, %s123
      %p135 = scmp.eq.s32.totalorder %s22, 1
      %p136 = por %p134, %p135
      %p138 = scmp.ne.s32.totalorder %s123, %s137
      %p139 = scmp.eq.s32.totalorder %s22, 0
      %p140 = por %p138, %p139
      %s142 = sadd.s32 %s141, 1
      %p145 = scmp.eq.s32.totalorder %s16, 1
      %p146 = scmp.ne.s32.totalorder %s141, %s143
      %p147 = scmp.eq.s32.totalorder %s16, 0
      %p148 = por %p146, %p147
      %p149 = scmp.ne.s32.totalorder %s141, %s143
      %p150 = scmp.eq.s32.totalorder %s21, 1
      %p151 = por %p149, %p150
      %p152 = scmp.ne.s32.totalorder %s143, %s144
      %p153 = scmp.eq.s32.totalorder %s21, 0
      %p154 = por %p152, %p153
      %p155 = scmp.ne.s32.totalorder %s143, %s144
      %p156 = scmp.eq.s32.totalorder %s22, 1
      %p157 = por %p155, %p156
      %p159 = scmp.ne.s32.totalorder %s144, %s158
      %p160 = scmp.eq.s32.totalorder %s22, 0
      %p161 = por %p159, %p160
      %s162 = ssub.s32 %s23, %s35
      %s163 = ssub.s32 %s24, %s31
      %s164 = sor.u32 %s162, %s163
      %p165 = scmp.eq.s32.totalorder %s164, 0
      %s167 = sadd.s32 %s166, 1
      %s168 = scalar_select %p165, %s166, %s167
      %p171 = pneg %p165
      %p172 = scmp.eq.s32.totalorder %s16, 1
      %p173 = por %p171, %p172
      %p174 = scmp.ne.s32.totalorder %s166, %s169
      %p175 = scmp.eq.s32.totalorder %s16, 0
      %p176 = por %p174, %p175
      %p177 = scmp.ne.s32.totalorder %s166, %s169
      %p178 = scmp.eq.s32.totalorder %s21, 1
      %p179 = por %p177, %p178
      %p180 = scmp.ne.s32.totalorder %s169, %s170
      %p181 = scmp.eq.s32.totalorder %s21, 0
      %p182 = por %p180, %p181
      %p183 = scmp.ne.s32.totalorder %s169, %s170
      %p184 = scmp.eq.s32.totalorder %s22, 1
      %p185 = por %p183, %p184
      %p187 = scmp.ne.s32.totalorder %s170, %s186
      %p188 = scmp.eq.s32.totalorder %s22, 0
      %p189 = por %p187, %p188
      %p190 = scmp.le.s32.totalorder 1, %s16
      %p191 = scmp.lt.s32.totalorder %s16, 3
      %p192 = pnand %p190, %p191
      %p193 = pneg %p192
      // Predicated region
      $region9: #{tpu_custom_call.1} parent=5 // pred_check
        _
      $region10: #{tpu_custom_call.1} parent=5 // pred_check_branch
        %195 = sbr.rel (%p192) target = $region12
      $region11: #{tpu_custom_call.1} parent=5 // pred_region
        %s196 = ssub.s32 %s16, 1
        // Predicated region
        $region13: #{tpu_custom_call.1} parent=11 // pred_check
          %p197 = pneg %p49
        $region14: #{tpu_custom_call.1} parent=11 // pred_check_branch
          %199 = sbr.rel (%p197) target = $region16
        $region15: #{tpu_custom_call.1} parent=11 // pred_region
          _
        $region16: #{tpu_custom_call.1} parent=11 // pred_fallthru
          _
        // Predicated region
        $region17: #{tpu_custom_call.1} parent=11 // pred_check
          %p200 = pneg %p70
        $region18: #{tpu_custom_call.1} parent=11 // pred_check_branch
          %202 = sbr.rel (%p200) target = $region20
        $region19: #{tpu_custom_call.1} parent=11 // pred_region
          _
        $region20: #{tpu_custom_call.1} parent=11 // pred_fallthru
          _
        // Predicated region
        $region21: #{tpu_custom_call.1} parent=11 // pred_check
          %p203 = pneg %p91
        $region22: #{tpu_custom_call.1} parent=11 // pred_check_branch
          %205 = sbr.rel (%p203) target = $region24
        $region23: #{tpu_custom_call.1} parent=11 // pred_region
          _
        $region24: #{tpu_custom_call.1} parent=11 // pred_fallthru
          _
        // Predicated region
        $region25: #{tpu_custom_call.1} parent=11 // pred_check
          %p206 = pneg %p112
        $region26: #{tpu_custom_call.1} parent=11 // pred_check_branch
          %208 = sbr.rel (%p206) target = $region28
        $region27: #{tpu_custom_call.1} parent=11 // pred_region
          _
        $region28: #{tpu_custom_call.1} parent=11 // pred_fallthru
          _
        // Predicated region
        $region29: #{tpu_custom_call.1} parent=11 // pred_check
          %p209 = pneg %p133
        $region30: #{tpu_custom_call.1} parent=11 // pred_check_branch
          %211 = sbr.rel (%p209) target = $region32
        $region31: #{tpu_custom_call.1} parent=11 // pred_region
          _
        $region32: #{tpu_custom_call.1} parent=11 // pred_fallthru
          _
        // Predicated region
        $region33: #{tpu_custom_call.1} parent=11 // pred_check
          %p212 = pneg %p154
        $region34: #{tpu_custom_call.1} parent=11 // pred_check_branch
          %214 = sbr.rel (%p212) target = $region36
        $region35: #{tpu_custom_call.1} parent=11 // pred_region
          _
        $region36: #{tpu_custom_call.1} parent=11 // pred_fallthru
          _
      $region12: #{tpu_custom_call.1} parent=5 // pred_fallthru
        _
      %p215 = scmp.lt.s32.totalorder %s16, 2
      // Predicated region
      $region37: #{tpu_custom_call.1} parent=5 // pred_check
        %p216 = pneg %p215
      $region38: #{tpu_custom_call.1} parent=5 // pred_check_branch
        %218 = sbr.rel (%p216) target = $region40
      $region39: #{tpu_custom_call.1} parent=5 // pred_region
        _
      $region40: #{tpu_custom_call.1} parent=5 // pred_fallthru
        _
      %p219 = scmp.le.s32.totalorder 1, %s16
      %p220 = scmp.lt.s32.totalorder %s16, 3
      %p221 = pnand %p219, %p220
      %p222 = pneg %p221
      // Predicated region
      $region41: #{tpu_custom_call.1} parent=5 // pred_check
        _
      $region42: #{tpu_custom_call.1} parent=5 // pred_check_branch
        %224 = sbr.rel (%p221) target = $region44
      $region43: #{tpu_custom_call.1} parent=5 // pred_region
        %s225 = ssub.s32 %s16, 1
        %p226 = pneg %p49
        %p227 = pneg %p46
        %p228 = pneg %p70
        %p229 = pneg %p67
        %p230 = pneg %p91
        %p231 = pneg %p88
        %p232 = pneg %p112
        %p233 = pneg %p109
        %p234 = pneg %p133
        %p235 = pneg %p130
        %p236 = pneg %p154
        %p237 = pneg %p151
        %p238 = pneg %p182
        %p239 = pneg %p179
        %s240 = sand.u32 %s169, 1
        %s241 = scalar_lea.sflag [#allocation5], %s240
        %s242 = sand.u32 %s169, 1
        %s243 = smul.addr %s242, 256
        %s244 = scalar_lea.vmem [#allocation4], %s243
        %s245 = smul.u32 16, %s26
        %p247 = scmp.lt.s32.totalorder %s26, 0
        %s248 = ssub.s32 0, %s26
        %s249 = scalar_select %p247, %s248, %s26
        %s250 = sand.u32 %s249, 1
        %s251 = ssub.s32 0, %s250
        %s252 = scalar_select %p247, %s251, %s250
        %p253 = scmp.eq.s32.totalorder %s26, 0
        // Predicated region
        $region45: #{tpu_custom_call.1} parent=43 // pred_check
          %p254 = pneg %p253
        $region46: #{tpu_custom_call.1} parent=43 // pred_check_branch
          %256 = sbr.rel (%p254) target = $region48
        $region47: #{tpu_custom_call.1} parent=43 // pred_region
          %s257 = smul.u32 %s26, 16
          %s258 = smul.u32 %s257, 24
          %s259 = smul.u32 %s25, 528
          %s260 = sadd.s32 %s258, %s259
          %s261 = scalar_lea.vmem %s0, %s260
          %s262 = smul.u32 %s252, 528
          %s263 = scalar_lea.vmem [#allocation2], %s262
          %s264 = scalar_lea.sflag [#allocation3], %s252
          %p266 = scmp.lt.u32.totalorder 22, 8
          %p267 = pneg %p266
          // Predicated region
          $region49: #{tpu_custom_call.1} parent=47 // pred_check
            _
          $region50: #{tpu_custom_call.1} parent=47 // pred_check_branch
            %269 = sbr.rel (%p266) target = $region52
          $region51: #{tpu_custom_call.1} parent=47 // pred_region
            %s327 = sand.u32 22, 7
            %p328 = scmp.eq.s32.totalorder %s327, 0
            %p329 = pneg %p328
            // Predicated region
            $region64: #{tpu_custom_call.1} parent=51 // pred_check
              _
            $region65: #{tpu_custom_call.1} parent=51 // pred_check_branch
              %331 = sbr.rel (%p328) target = $region67
            $region66: #{tpu_custom_call.1} parent=51 // pred_region
              %s332 = sand.u32 22, 7
              %s333 = ssub.s32 22, %s332
              %s334 = scalar_lea.vmem %s261, %s333
              %s335 = ssub.s32 22, %s332
              %s336 = scalar_lea.vmem %s263, %s335 [#allocation2]
              loop: start=0, step=1, limit=1
              $region68: #{tpu_custom_call.1} parent=66 // loop_pre_header
                _
              $region69: #{tpu_custom_call.1} parent=66 // loop_header
                %s338 = sphi 0, %s342
                %p339 = scmp.ge.s32.totalorder %s338, 1
                %s343 = sphi %s261, %s261
                %s344 = sphi %s263, %s263
              $region70: #{tpu_custom_call.1} parent=66 // loop_header_branch
                %341 = sbr.rel (%p339) target = $region74
              $region71: #{tpu_custom_call.1} parent=66 // loop_body
                %v345 = vld [vmem:[%s343] sm:$0xff]
                %346 = vst [vmem:[%s344] sm:$0xff] %v345
                %v347 = vld [vmem:[%s343 + $0x8] sm:$0xff]
                %348 = vst [vmem:[%s344 + $0x8] sm:$0xff] %v347
                %v349 = vld [vmem:[%s343 + $0x18] sm:$0xff]
                %350 = vst [vmem:[%s344 + $0x18] sm:$0xff] %v349
                %v351 = vld [vmem:[%s343 + $0x20] sm:$0xff]
                %352 = vst [vmem:[%s344 + $0x20] sm:$0xff] %v351
                %v353 = vld [vmem:[%s343 + $0x30] sm:$0xff]
                %354 = vst [vmem:[%s344 + $0x30] sm:$0xff] %v353
                %v355 = vld [vmem:[%s343 + $0x38] sm:$0xff]
                %356 = vst [vmem:[%s344 + $0x38] sm:$0xff] %v355
                %v357 = vld [vmem:[%s343 + $0x48] sm:$0xff]
                %358 = vst [vmem:[%s344 + $0x48] sm:$0xff] %v357
                %v359 = vld [vmem:[%s343 + $0x50] sm:$0xff]
                %360 = vst [vmem:[%s344 + $0x50] sm:$0xff] %v359
                %v361 = vld [vmem:[%s343 + $0x60] sm:$0xff]
                %362 = vst [vmem:[%s344 + $0x60] sm:$0xff] %v361
                %v363 = vld [vmem:[%s343 + $0x68] sm:$0xff]
                %364 = vst [vmem:[%s344 + $0x68] sm:$0xff] %v363
                %v365 = vld [vmem:[%s343 + $0x78] sm:$0xff]
                %366 = vst [vmem:[%s344 + $0x78] sm:$0xff] %v365
                %v367 = vld [vmem:[%s343 + $0x80] sm:$0xff]
                %368 = vst [vmem:[%s344 + $0x80] sm:$0xff] %v367
                %v369 = vld [vmem:[%s343 + $0x90] sm:$0xff]
                %370 = vst [vmem:[%s344 + $0x90] sm:$0xff] %v369
                %v371 = vld [vmem:[%s343 + $0x98] sm:$0xff]
                %372 = vst [vmem:[%s344 + $0x98] sm:$0xff] %v371
                %v373 = vld [vmem:[%s343 + $0xa8] sm:$0xff]
                %374 = vst [vmem:[%s344 + $0xa8] sm:$0xff] %v373
                %v375 = vld [vmem:[%s343 + $0xb0] sm:$0xff]
                %376 = vst [vmem:[%s344 + $0xb0] sm:$0xff] %v375
                %v377 = vld [vmem:[%s343 + $0xc0] sm:$0xff]
                %378 = vst [vmem:[%s344 + $0xc0] sm:$0xff] %v377
                %v379 = vld [vmem:[%s343 + $0xc8] sm:$0xff]
                %380 = vst [vmem:[%s344 + $0xc8] sm:$0xff] %v379
                %v381 = vld [vmem:[%s343 + $0xd8] sm:$0xff]
                %382 = vst [vmem:[%s344 + $0xd8] sm:$0xff] %v381
                %v383 = vld [vmem:[%s343 + $0xe0] sm:$0xff]
                %384 = vst [vmem:[%s344 + $0xe0] sm:$0xff] %v383
                %v385 = vld [vmem:[%s343 + $0xf0] sm:$0xff]
                %386 = vst [vmem:[%s344 + $0xf0] sm:$0xff] %v385
                %v387 = vld [vmem:[%s343 + $0xf8] sm:$0xff]
                %388 = vst [vmem:[%s344 + $0xf8] sm:$0xff] %v387
                %v389 = vld [vmem:[%s343 + $0x108] sm:$0xff]
                %390 = vst [vmem:[%s344 + $0x108] sm:$0xff] %v389
                %v391 = vld [vmem:[%s343 + $0x110] sm:$0xff]
                %392 = vst [vmem:[%s344 + $0x110] sm:$0xff] %v391
                %v393 = vld [vmem:[%s343 + $0x120] sm:$0xff]
                %394 = vst [vmem:[%s344 + $0x120] sm:$0xff] %v393
                %v395 = vld [vmem:[%s343 + $0x128] sm:$0xff]
                %396 = vst [vmem:[%s344 + $0x128] sm:$0xff] %v395
                %v397 = vld [vmem:[%s343 + $0x138] sm:$0xff]
                %398 = vst [vmem:[%s344 + $0x138] sm:$0xff] %v397
                %v399 = vld [vmem:[%s343 + $0x140] sm:$0xff]
                %400 = vst [vmem:[%s344 + $0x140] sm:$0xff] %v399
                %v401 = vld [vmem:[%s343 + $0x150] sm:$0xff]
                %402 = vst [vmem:[%s344 + $0x150] sm:$0xff] %v401
                %v403 = vld [vmem:[%s343 + $0x158] sm:$0xff]
                %404 = vst [vmem:[%s344 + $0x158] sm:$0xff] %v403
                %v405 = vld [vmem:[%s343 + $0x168] sm:$0xff]
                %406 = vst [vmem:[%s344 + $0x168] sm:$0xff] %v405
                %v407 = vld [vmem:[%s343 + $0x170] sm:$0xff]
                %408 = vst [vmem:[%s344 + $0x170] sm:$0xff] %v407
                %v409 = vld [vmem:[%s343 + $0x180] sm:$0xff]
                %410 = vst [vmem:[%s344 + $0x180] sm:$0xff] %v409
                %v411 = vld [vmem:[%s343 + $0x188] sm:$0xff]
                %412 = vst [vmem:[%s344 + $0x188] sm:$0xff] %v411
                %v413 = vld [vmem:[%s343 + $0x198] sm:$0xff]
                %414 = vst [vmem:[%s344 + $0x198] sm:$0xff] %v413
                %v415 = vld [vmem:[%s343 + $0x1a0] sm:$0xff]
                %416 = vst [vmem:[%s344 + $0x1a0] sm:$0xff] %v415
                %v417 = vld [vmem:[%s343 + $0x1b0] sm:$0xff]
                %418 = vst [vmem:[%s344 + $0x1b0] sm:$0xff] %v417
                %v419 = vld [vmem:[%s343 + $0x1b8] sm:$0xff]
                %420 = vst [vmem:[%s344 + $0x1b8] sm:$0xff] %v419
                %v421 = vld [vmem:[%s343 + $0x1c8] sm:$0xff]
                %422 = vst [vmem:[%s344 + $0x1c8] sm:$0xff] %v421
                %v423 = vld [vmem:[%s343 + $0x1d0] sm:$0xff]
                %424 = vst [vmem:[%s344 + $0x1d0] sm:$0xff] %v423
                %v425 = vld [vmem:[%s343 + $0x1e0] sm:$0xff]
                %426 = vst [vmem:[%s344 + $0x1e0] sm:$0xff] %v425
                %v427 = vld [vmem:[%s343 + $0x1e8] sm:$0xff]
                %428 = vst [vmem:[%s344 + $0x1e8] sm:$0xff] %v427
                %v429 = vld [vmem:[%s343 + $0x1f8] sm:$0xff]
                %430 = vst [vmem:[%s344 + $0x1f8] sm:$0xff] %v429
                %v431 = vld [vmem:[%s343 + $0x200] sm:$0xff]
                %432 = vst [vmem:[%s344 + $0x200] sm:$0xff] %v431
              $region72: #{tpu_custom_call.1} parent=66 // loop_footer
                %s342 = sadd.s32 1, %s338
              $region73: #{tpu_custom_call.1} parent=66 // loop_footer_branch
                %337 = sbr.rel target = $region69
              $region74: #{tpu_custom_call.1} parent=66 // loop_exit
                _
              %s433 = sshll.u32 1, %s332
              %s434 = ssub.s32 %s433, 1
              loop: start=0, step=1, limit=1
              $region75: #{tpu_custom_call.1} parent=66 // loop_pre_header
                _
              $region76: #{tpu_custom_call.1} parent=66 // loop_header
                %s436 = sphi 0, %s440
                %p437 = scmp.ge.s32.totalorder %s436, 1
                %s441 = sphi %s334, %s334
                %s442 = sphi %s336, %s336
              $region77: #{tpu_custom_call.1} parent=66 // loop_header_branch
                %439 = sbr.rel (%p437) target = $region81
              $region78: #{tpu_custom_call.1} parent=66 // loop_body
                %v443 = vld [vmem:[%s441] sm:%s434]
                %444 = vst [vmem:[%s442] sm:%s434] %v443
                %v445 = vld [vmem:[%s441 + $0x18] sm:%s434]
                %446 = vst [vmem:[%s442 + $0x18] sm:%s434] %v445
                %v447 = vld [vmem:[%s441 + $0x30] sm:%s434]
                %448 = vst [vmem:[%s442 + $0x30] sm:%s434] %v447
                %v449 = vld [vmem:[%s441 + $0x48] sm:%s434]
                %450 = vst [vmem:[%s442 + $0x48] sm:%s434] %v449
                %v451 = vld [vmem:[%s441 + $0x60] sm:%s434]
                %452 = vst [vmem:[%s442 + $0x60] sm:%s434] %v451
                %v453 = vld [vmem:[%s441 + $0x78] sm:%s434]
                %454 = vst [vmem:[%s442 + $0x78] sm:%s434] %v453
                %v455 = vld [vmem:[%s441 + $0x90] sm:%s434]
                %456 = vst [vmem:[%s442 + $0x90] sm:%s434] %v455
                %v457 = vld [vmem:[%s441 + $0xa8] sm:%s434]
                %458 = vst [vmem:[%s442 + $0xa8] sm:%s434] %v457
                %v459 = vld [vmem:[%s441 + $0xc0] sm:%s434]
                %460 = vst [vmem:[%s442 + $0xc0] sm:%s434] %v459
                %v461 = vld [vmem:[%s441 + $0xd8] sm:%s434]
                %462 = vst [vmem:[%s442 + $0xd8] sm:%s434] %v461
                %v463 = vld [vmem:[%s441 + $0xf0] sm:%s434]
                %464 = vst [vmem:[%s442 + $0xf0] sm:%s434] %v463
                %v465 = vld [vmem:[%s441 + $0x108] sm:%s434]
                %466 = vst [vmem:[%s442 + $0x108] sm:%s434] %v465
                %v467 = vld [vmem:[%s441 + $0x120] sm:%s434]
                %468 = vst [vmem:[%s442 + $0x120] sm:%s434] %v467
                %v469 = vld [vmem:[%s441 + $0x138] sm:%s434]
                %470 = vst [vmem:[%s442 + $0x138] sm:%s434] %v469
                %v471 = vld [vmem:[%s441 + $0x150] sm:%s434]
                %472 = vst [vmem:[%s442 + $0x150] sm:%s434] %v471
                %v473 = vld [vmem:[%s441 + $0x168] sm:%s434]
                %474 = vst [vmem:[%s442 + $0x168] sm:%s434] %v473
                %v475 = vld [vmem:[%s441 + $0x180] sm:%s434]
                %476 = vst [vmem:[%s442 + $0x180] sm:%s434] %v475
                %v477 = vld [vmem:[%s441 + $0x198] sm:%s434]
                %478 = vst [vmem:[%s442 + $0x198] sm:%s434] %v477
                %v479 = vld [vmem:[%s441 + $0x1b0] sm:%s434]
                %480 = vst [vmem:[%s442 + $0x1b0] sm:%s434] %v479
                %v481 = vld [vmem:[%s441 + $0x1c8] sm:%s434]
                %482 = vst [vmem:[%s442 + $0x1c8] sm:%s434] %v481
                %v483 = vld [vmem:[%s441 + $0x1e0] sm:%s434]
                %484 = vst [vmem:[%s442 + $0x1e0] sm:%s434] %v483
                %v485 = vld [vmem:[%s441 + $0x1f8] sm:%s434]
                %486 = vst [vmem:[%s442 + $0x1f8] sm:%s434] %v485
              $region79: #{tpu_custom_call.1} parent=66 // loop_footer
                %s440 = sadd.s32 1, %s436
              $region80: #{tpu_custom_call.1} parent=66 // loop_footer_branch
                %435 = sbr.rel target = $region76
              $region81: #{tpu_custom_call.1} parent=66 // loop_exit
                _
            $region67: #{tpu_custom_call.1} parent=51 // pred_fallthru
              _
          $region52: #{tpu_custom_call.1} parent=47 // pred_fallthru
            _
          // Predicated region
          $region53: #{tpu_custom_call.1} parent=47 // pred_check
            %p270 = pneg %p266
          $region54: #{tpu_custom_call.1} parent=47 // pred_check_branch
            %272 = sbr.rel (%p270) target = $region56
          $region55: #{tpu_custom_call.1} parent=47 // pred_region
            %s273 = sshll.u32 1, 22
            %s274 = ssub.s32 %s273, 1
            loop: start=0, step=1, limit=1
            $region57: #{tpu_custom_call.1} parent=55 // loop_pre_header
              _
            $region58: #{tpu_custom_call.1} parent=55 // loop_header
              %s276 = sphi 0, %s280
              %p277 = scmp.ge.s32.totalorder %s276, 1
              %s281 = sphi %s261, %s261
              %s282 = sphi %s263, %s263
            $region59: #{tpu_custom_call.1} parent=55 // loop_header_branch
              %279 = sbr.rel (%p277) target = $region63
            $region60: #{tpu_custom_call.1} parent=55 // loop_body
              %v283 = vld [vmem:[%s281] sm:%s274]
              %284 = vst [vmem:[%s282] sm:%s274] %v283
              %v285 = vld [vmem:[%s281 + $0x18] sm:%s274]
              %286 = vst [vmem:[%s282 + $0x18] sm:%s274] %v285
              %v287 = vld [vmem:[%s281 + $0x30] sm:%s274]
              %288 = vst [vmem:[%s282 + $0x30] sm:%s274] %v287
              %v289 = vld [vmem:[%s281 + $0x48] sm:%s274]
              %290 = vst [vmem:[%s282 + $0x48] sm:%s274] %v289
              %v291 = vld [vmem:[%s281 + $0x60] sm:%s274]
              %292 = vst [vmem:[%s282 + $0x60] sm:%s274] %v291
              %v293 = vld [vmem:[%s281 + $0x78] sm:%s274]
              %294 = vst [vmem:[%s282 + $0x78] sm:%s274] %v293
              %v295 = vld [vmem:[%s281 + $0x90] sm:%s274]
              %296 = vst [vmem:[%s282 + $0x90] sm:%s274] %v295
              %v297 = vld [vmem:[%s281 + $0xa8] sm:%s274]
              %298 = vst [vmem:[%s282 + $0xa8] sm:%s274] %v297
              %v299 = vld [vmem:[%s281 + $0xc0] sm:%s274]
              %300 = vst [vmem:[%s282 + $0xc0] sm:%s274] %v299
              %v301 = vld [vmem:[%s281 + $0xd8] sm:%s274]
              %302 = vst [vmem:[%s282 + $0xd8] sm:%s274] %v301
              %v303 = vld [vmem:[%s281 + $0xf0] sm:%s274]
              %304 = vst [vmem:[%s282 + $0xf0] sm:%s274] %v303
              %v305 = vld [vmem:[%s281 + $0x108] sm:%s274]
              %306 = vst [vmem:[%s282 + $0x108] sm:%s274] %v305
              %v307 = vld [vmem:[%s281 + $0x120] sm:%s274]
              %308 = vst [vmem:[%s282 + $0x120] sm:%s274] %v307
              %v309 = vld [vmem:[%s281 + $0x138] sm:%s274]
              %310 = vst [vmem:[%s282 + $0x138] sm:%s274] %v309
              %v311 = vld [vmem:[%s281 + $0x150] sm:%s274]
              %312 = vst [vmem:[%s282 + $0x150] sm:%s274] %v311
              %v313 = vld [vmem:[%s281 + $0x168] sm:%s274]
              %314 = vst [vmem:[%s282 + $0x168] sm:%s274] %v313
              %v315 = vld [vmem:[%s281 + $0x180] sm:%s274]
              %316 = vst [vmem:[%s282 + $0x180] sm:%s274] %v315
              %v317 = vld [vmem:[%s281 + $0x198] sm:%s274]
              %318 = vst [vmem:[%s282 + $0x198] sm:%s274] %v317
              %v319 = vld [vmem:[%s281 + $0x1b0] sm:%s274]
              %320 = vst [vmem:[%s282 + $0x1b0] sm:%s274] %v319
              %v321 = vld [vmem:[%s281 + $0x1c8] sm:%s274]
              %322 = vst [vmem:[%s282 + $0x1c8] sm:%s274] %v321
              %v323 = vld [vmem:[%s281 + $0x1e0] sm:%s274]
              %324 = vst [vmem:[%s282 + $0x1e0] sm:%s274] %v323
              %v325 = vld [vmem:[%s281 + $0x1f8] sm:%s274]
              %326 = vst [vmem:[%s282 + $0x1f8] sm:%s274] %v325
            $region61: #{tpu_custom_call.1} parent=55 // loop_footer
              %s280 = sadd.s32 1, %s276
            $region62: #{tpu_custom_call.1} parent=55 // loop_footer_branch
              %275 = sbr.rel target = $region58
            $region63: #{tpu_custom_call.1} parent=55 // loop_exit
              _
          $region56: #{tpu_custom_call.1} parent=47 // pred_fallthru
            _
          // Predicated region
          $region82: #{tpu_custom_call.1} parent=47 // pred_check
            _
          $region83: #{tpu_custom_call.1} parent=47 // pred_check_branch
            %489 = sbr.rel (0) target = $region85
          $region84: #{tpu_custom_call.1} parent=47 // pred_region
            %490 = vsyncadd %s264, 7744
          $region85: #{tpu_custom_call.1} parent=47 // pred_fallthru
            _
        $region48: #{tpu_custom_call.1} parent=43 // pred_fallthru
          _
        %v491 = vld [vmem:[%s1] sm:$0xff]
        %v492 = vld [vmem:[%s1 + $0x8] sm:$0xff]
        %v493 = vld [vmem:[%s1 + $0x10] sm:$0xff]
        %v494 = vld [vmem:[%s1 + $0x18] sm:$0xff]
        %v495 = vld [vmem:[%s1 + $0x20] sm:$0xff]
        %v496 = vld [vmem:[%s1 + $0x28] sm:$0xff]
        %v497 = vld [vmem:[%s1 + $0x30] sm:$0xff]
        %v498 = vld [vmem:[%s2] sm:$0x1]
        %v499 = vld [vmem:[%s4] sm:$0xf]
        %v500 = vld [vmem:[%s6] sm:$0x1]
        %v502 = vlaneseq
        %v503 = vshrl.u32 %v502, 7
        %v504 = vsub.s32 0, %v503
        %v505 = vrot.slane %v498, %v504
        %v507 = vlaneseq
        %v508 = vand.u32 %v507, 127
        %vm509 = vcmp.lt.s32.totalorder %v508, 8
        %v510 = vsel %vm509, 1, 0
        %v511 = vcvt.s32.f32 %v510
        %s512 = sadd.s32 %s26, 1
        %p513 = scmp.lt.s32.totalorder %s512, 1
        // Predicated region
        $region86: #{tpu_custom_call.1} parent=43 // pred_check
          %p514 = pneg %p513
        $region87: #{tpu_custom_call.1} parent=43 // pred_check_branch
          %516 = sbr.rel (%p514) target = $region89
        $region88: #{tpu_custom_call.1} parent=43 // pred_region
          %s517 = ssub.s32 1, %s252
          %s518 = smul.u32 %s512, 16
          %s519 = smul.u32 %s518, 24
          %s520 = smul.u32 %s25, 528
          %s521 = sadd.s32 %s519, %s520
          %s522 = scalar_lea.vmem %s0, %s521
          %s523 = smul.u32 %s517, 528
          %s524 = scalar_lea.vmem [#allocation2], %s523
          %s525 = scalar_lea.sflag [#allocation3], %s517
          %p527 = scmp.lt.u32.totalorder 22, 8
          %p528 = pneg %p527
          // Predicated region
          $region90: #{tpu_custom_call.1} parent=88 // pred_check
            _
          $region91: #{tpu_custom_call.1} parent=88 // pred_check_branch
            %530 = sbr.rel (%p527) target = $region93
          $region92: #{tpu_custom_call.1} parent=88 // pred_region
            %s588 = sand.u32 22, 7
            %p589 = scmp.eq.s32.totalorder %s588, 0
            %p590 = pneg %p589
            // Predicated region
            $region105: #{tpu_custom_call.1} parent=92 // pred_check
              _
            $region106: #{tpu_custom_call.1} parent=92 // pred_check_branch
              %592 = sbr.rel (%p589) target = $region108
            $region107: #{tpu_custom_call.1} parent=92 // pred_region
              %s593 = sand.u32 22, 7
              %s594 = ssub.s32 22, %s593
              %s595 = scalar_lea.vmem %s522, %s594
              %s596 = ssub.s32 22, %s593
              %s597 = scalar_lea.vmem %s524, %s596 [#allocation2]
              loop: start=0, step=1, limit=1
              $region109: #{tpu_custom_call.1} parent=107 // loop_pre_header
                _
              $region110: #{tpu_custom_call.1} parent=107 // loop_header
                %s599 = sphi 0, %s603
                %p600 = scmp.ge.s32.totalorder %s599, 1
                %s604 = sphi %s522, %s522
                %s605 = sphi %s524, %s524
              $region111: #{tpu_custom_call.1} parent=107 // loop_header_branch
                %602 = sbr.rel (%p600) target = $region115
              $region112: #{tpu_custom_call.1} parent=107 // loop_body
                %v606 = vld [vmem:[%s604] sm:$0xff]
                %607 = vst [vmem:[%s605] sm:$0xff] %v606
                %v608 = vld [vmem:[%s604 + $0x8] sm:$0xff]
                %609 = vst [vmem:[%s605 + $0x8] sm:$0xff] %v608
                %v610 = vld [vmem:[%s604 + $0x18] sm:$0xff]
                %611 = vst [vmem:[%s605 + $0x18] sm:$0xff] %v610
                %v612 = vld [vmem:[%s604 + $0x20] sm:$0xff]
                %613 = vst [vmem:[%s605 + $0x20] sm:$0xff] %v612
                %v614 = vld [vmem:[%s604 + $0x30] sm:$0xff]
                %615 = vst [vmem:[%s605 + $0x30] sm:$0xff] %v614
                %v616 = vld [vmem:[%s604 + $0x38] sm:$0xff]
                %617 = vst [vmem:[%s605 + $0x38] sm:$0xff] %v616
                %v618 = vld [vmem:[%s604 + $0x48] sm:$0xff]
                %619 = vst [vmem:[%s605 + $0x48] sm:$0xff] %v618
                %v620 = vld [vmem:[%s604 + $0x50] sm:$0xff]
                %621 = vst [vmem:[%s605 + $0x50] sm:$0xff] %v620
                %v622 = vld [vmem:[%s604 + $0x60] sm:$0xff]
                %623 = vst [vmem:[%s605 + $0x60] sm:$0xff] %v622
                %v624 = vld [vmem:[%s604 + $0x68] sm:$0xff]
                %625 = vst [vmem:[%s605 + $0x68] sm:$0xff] %v624
                %v626 = vld [vmem:[%s604 + $0x78] sm:$0xff]
                %627 = vst [vmem:[%s605 + $0x78] sm:$0xff] %v626
                %v628 = vld [vmem:[%s604 + $0x80] sm:$0xff]
                %629 = vst [vmem:[%s605 + $0x80] sm:$0xff] %v628
                %v630 = vld [vmem:[%s604 + $0x90] sm:$0xff]
                %631 = vst [vmem:[%s605 + $0x90] sm:$0xff] %v630
                %v632 = vld [vmem:[%s604 + $0x98] sm:$0xff]
                %633 = vst [vmem:[%s605 + $0x98] sm:$0xff] %v632
                %v634 = vld [vmem:[%s604 + $0xa8] sm:$0xff]
                %635 = vst [vmem:[%s605 + $0xa8] sm:$0xff] %v634
                %v636 = vld [vmem:[%s604 + $0xb0] sm:$0xff]
                %637 = vst [vmem:[%s605 + $0xb0] sm:$0xff] %v636
                %v638 = vld [vmem:[%s604 + $0xc0] sm:$0xff]
                %639 = vst [vmem:[%s605 + $0xc0] sm:$0xff] %v638
                %v640 = vld [vmem:[%s604 + $0xc8] sm:$0xff]
                %641 = vst [vmem:[%s605 + $0xc8] sm:$0xff] %v640
                %v642 = vld [vmem:[%s604 + $0xd8] sm:$0xff]
                %643 = vst [vmem:[%s605 + $0xd8] sm:$0xff] %v642
                %v644 = vld [vmem:[%s604 + $0xe0] sm:$0xff]
                %645 = vst [vmem:[%s605 + $0xe0] sm:$0xff] %v644
                %v646 = vld [vmem:[%s604 + $0xf0] sm:$0xff]
                %647 = vst [vmem:[%s605 + $0xf0] sm:$0xff] %v646
                %v648 = vld [vmem:[%s604 + $0xf8] sm:$0xff]
                %649 = vst [vmem:[%s605 + $0xf8] sm:$0xff] %v648
                %v650 = vld [vmem:[%s604 + $0x108] sm:$0xff]
                %651 = vst [vmem:[%s605 + $0x108] sm:$0xff] %v650
                %v652 = vld [vmem:[%s604 + $0x110] sm:$0xff]
                %653 = vst [vmem:[%s605 + $0x110] sm:$0xff] %v652
                %v654 = vld [vmem:[%s604 + $0x120] sm:$0xff]
                %655 = vst [vmem:[%s605 + $0x120] sm:$0xff] %v654
                %v656 = vld [vmem:[%s604 + $0x128] sm:$0xff]
                %657 = vst [vmem:[%s605 + $0x128] sm:$0xff] %v656
                %v658 = vld [vmem:[%s604 + $0x138] sm:$0xff]
                %659 = vst [vmem:[%s605 + $0x138] sm:$0xff] %v658
                %v660 = vld [vmem:[%s604 + $0x140] sm:$0xff]
                %661 = vst [vmem:[%s605 + $0x140] sm:$0xff] %v660
                %v662 = vld [vmem:[%s604 + $0x150] sm:$0xff]
                %663 = vst [vmem:[%s605 + $0x150] sm:$0xff] %v662
                %v664 = vld [vmem:[%s604 + $0x158] sm:$0xff]
                %665 = vst [vmem:[%s605 + $0x158] sm:$0xff] %v664
                %v666 = vld [vmem:[%s604 + $0x168] sm:$0xff]
                %667 = vst [vmem:[%s605 + $0x168] sm:$0xff] %v666
                %v668 = vld [vmem:[%s604 + $0x170] sm:$0xff]
                %669 = vst [vmem:[%s605 + $0x170] sm:$0xff] %v668
                %v670 = vld [vmem:[%s604 + $0x180] sm:$0xff]
                %671 = vst [vmem:[%s605 + $0x180] sm:$0xff] %v670
                %v672 = vld [vmem:[%s604 + $0x188] sm:$0xff]
                %673 = vst [vmem:[%s605 + $0x188] sm:$0xff] %v672
                %v674 = vld [vmem:[%s604 + $0x198] sm:$0xff]
                %675 = vst [vmem:[%s605 + $0x198] sm:$0xff] %v674
                %v676 = vld [vmem:[%s604 + $0x1a0] sm:$0xff]
                %677 = vst [vmem:[%s605 + $0x1a0] sm:$0xff] %v676
                %v678 = vld [vmem:[%s604 + $0x1b0] sm:$0xff]
                %679 = vst [vmem:[%s605 + $0x1b0] sm:$0xff] %v678
                %v680 = vld [vmem:[%s604 + $0x1b8] sm:$0xff]
                %681 = vst [vmem:[%s605 + $0x1b8] sm:$0xff] %v680
                %v682 = vld [vmem:[%s604 + $0x1c8] sm:$0xff]
                %683 = vst [vmem:[%s605 + $0x1c8] sm:$0xff] %v682
                %v684 = vld [vmem:[%s604 + $0x1d0] sm:$0xff]
                %685 = vst [vmem:[%s605 + $0x1d0] sm:$0xff] %v684
                %v686 = vld [vmem:[%s604 + $0x1e0] sm:$0xff]
                %687 = vst [vmem:[%s605 + $0x1e0] sm:$0xff] %v686
                %v688 = vld [vmem:[%s604 + $0x1e8] sm:$0xff]
                %689 = vst [vmem:[%s605 + $0x1e8] sm:$0xff] %v688
                %v690 = vld [vmem:[%s604 + $0x1f8] sm:$0xff]
                %691 = vst [vmem:[%s605 + $0x1f8] sm:$0xff] %v690
                %v692 = vld [vmem:[%s604 + $0x200] sm:$0xff]
                %693 = vst [vmem:[%s605 + $0x200] sm:$0xff] %v692
              $region113: #{tpu_custom_call.1} parent=107 // loop_footer
                %s603 = sadd.s32 1, %s599
              $region114: #{tpu_custom_call.1} parent=107 // loop_footer_branch
                %598 = sbr.rel target = $region110
              $region115: #{tpu_custom_call.1} parent=107 // loop_exit
                _
              %s694 = sshll.u32 1, %s593
              %s695 = ssub.s32 %s694, 1
              loop: start=0, step=1, limit=1
              $region116: #{tpu_custom_call.1} parent=107 // loop_pre_header
                _
              $region117: #{tpu_custom_call.1} parent=107 // loop_header
                %s697 = sphi 0, %s701
                %p698 = scmp.ge.s32.totalorder %s697, 1
                %s702 = sphi %s595, %s595
                %s703 = sphi %s597, %s597
              $region118: #{tpu_custom_call.1} parent=107 // loop_header_branch
                %700 = sbr.rel (%p698) target = $region122
              $region119: #{tpu_custom_call.1} parent=107 // loop_body
                %v704 = vld [vmem:[%s702] sm:%s695]
                %705 = vst [vmem:[%s703] sm:%s695] %v704
                %v706 = vld [vmem:[%s702 + $0x18] sm:%s695]
                %707 = vst [vmem:[%s703 + $0x18] sm:%s695] %v706
                %v708 = vld [vmem:[%s702 + $0x30] sm:%s695]
                %709 = vst [vmem:[%s703 + $0x30] sm:%s695] %v708
                %v710 = vld [vmem:[%s702 + $0x48] sm:%s695]
                %711 = vst [vmem:[%s703 + $0x48] sm:%s695] %v710
                %v712 = vld [vmem:[%s702 + $0x60] sm:%s695]
                %713 = vst [vmem:[%s703 + $0x60] sm:%s695] %v712
                %v714 = vld [vmem:[%s702 + $0x78] sm:%s695]
                %715 = vst [vmem:[%s703 + $0x78] sm:%s695] %v714
                %v716 = vld [vmem:[%s702 + $0x90] sm:%s695]
                %717 = vst [vmem:[%s703 + $0x90] sm:%s695] %v716
                %v718 = vld [vmem:[%s702 + $0xa8] sm:%s695]
                %719 = vst [vmem:[%s703 + $0xa8] sm:%s695] %v718
                %v720 = vld [vmem:[%s702 + $0xc0] sm:%s695]
                %721 = vst [vmem:[%s703 + $0xc0] sm:%s695] %v720
                %v722 = vld [vmem:[%s702 + $0xd8] sm:%s695]
                %723 = vst [vmem:[%s703 + $0xd8] sm:%s695] %v722
                %v724 = vld [vmem:[%s702 + $0xf0] sm:%s695]
                %725 = vst [vmem:[%s703 + $0xf0] sm:%s695] %v724
                %v726 = vld [vmem:[%s702 + $0x108] sm:%s695]
                %727 = vst [vmem:[%s703 + $0x108] sm:%s695] %v726
                %v728 = vld [vmem:[%s702 + $0x120] sm:%s695]
                %729 = vst [vmem:[%s703 + $0x120] sm:%s695] %v728
                %v730 = vld [vmem:[%s702 + $0x138] sm:%s695]
                %731 = vst [vmem:[%s703 + $0x138] sm:%s695] %v730
                %v732 = vld [vmem:[%s702 + $0x150] sm:%s695]
                %733 = vst [vmem:[%s703 + $0x150] sm:%s695] %v732
                %v734 = vld [vmem:[%s702 + $0x168] sm:%s695]
                %735 = vst [vmem:[%s703 + $0x168] sm:%s695] %v734
                %v736 = vld [vmem:[%s702 + $0x180] sm:%s695]
                %737 = vst [vmem:[%s703 + $0x180] sm:%s695] %v736
                %v738 = vld [vmem:[%s702 + $0x198] sm:%s695]
                %739 = vst [vmem:[%s703 + $0x198] sm:%s695] %v738
                %v740 = vld [vmem:[%s702 + $0x1b0] sm:%s695]
                %741 = vst [vmem:[%s703 + $0x1b0] sm:%s695] %v740
                %v742 = vld [vmem:[%s702 + $0x1c8] sm:%s695]
                %743 = vst [vmem:[%s703 + $0x1c8] sm:%s695] %v742
                %v744 = vld [vmem:[%s702 + $0x1e0] sm:%s695]
                %745 = vst [vmem:[%s703 + $0x1e0] sm:%s695] %v744
                %v746 = vld [vmem:[%s702 + $0x1f8] sm:%s695]
                %747 = vst [vmem:[%s703 + $0x1f8] sm:%s695] %v746
              $region120: #{tpu_custom_call.1} parent=107 // loop_footer
                %s701 = sadd.s32 1, %s697
              $region121: #{tpu_custom_call.1} parent=107 // loop_footer_branch
                %696 = sbr.rel target = $region117
              $region122: #{tpu_custom_call.1} parent=107 // loop_exit
                _
            $region108: #{tpu_custom_call.1} parent=92 // pred_fallthru
              _
          $region93: #{tpu_custom_call.1} parent=88 // pred_fallthru
            _
          // Predicated region
          $region94: #{tpu_custom_call.1} parent=88 // pred_check
            %p531 = pneg %p527
          $region95: #{tpu_custom_call.1} parent=88 // pred_check_branch
            %533 = sbr.rel (%p531) target = $region97
          $region96: #{tpu_custom_call.1} parent=88 // pred_region
            %s534 = sshll.u32 1, 22
            %s535 = ssub.s32 %s534, 1
            loop: start=0, step=1, limit=1
            $region98: #{tpu_custom_call.1} parent=96 // loop_pre_header
              _
            $region99: #{tpu_custom_call.1} parent=96 // loop_header
              %s537 = sphi 0, %s541
              %p538 = scmp.ge.s32.totalorder %s537, 1
              %s542 = sphi %s522, %s522
              %s543 = sphi %s524, %s524
            $region100: #{tpu_custom_call.1} parent=96 // loop_header_branch
              %540 = sbr.rel (%p538) target = $region104
            $region101: #{tpu_custom_call.1} parent=96 // loop_body
              %v544 = vld [vmem:[%s542] sm:%s535]
              %545 = vst [vmem:[%s543] sm:%s535] %v544
              %v546 = vld [vmem:[%s542 + $0x18] sm:%s535]
              %547 = vst [vmem:[%s543 + $0x18] sm:%s535] %v546
              %v548 = vld [vmem:[%s542 + $0x30] sm:%s535]
              %549 = vst [vmem:[%s543 + $0x30] sm:%s535] %v548
              %v550 = vld [vmem:[%s542 + $0x48] sm:%s535]
              %551 = vst [vmem:[%s543 + $0x48] sm:%s535] %v550
              %v552 = vld [vmem:[%s542 + $0x60] sm:%s535]
              %553 = vst [vmem:[%s543 + $0x60] sm:%s535] %v552
              %v554 = vld [vmem:[%s542 + $0x78] sm:%s535]
              %555 = vst [vmem:[%s543 + $0x78] sm:%s535] %v554
              %v556 = vld [vmem:[%s542 + $0x90] sm:%s535]
              %557 = vst [vmem:[%s543 + $0x90] sm:%s535] %v556
              %v558 = vld [vmem:[%s542 + $0xa8] sm:%s535]
              %559 = vst [vmem:[%s543 + $0xa8] sm:%s535] %v558
              %v560 = vld [vmem:[%s542 + $0xc0] sm:%s535]
              %561 = vst [vmem:[%s543 + $0xc0] sm:%s535] %v560
              %v562 = vld [vmem:[%s542 + $0xd8] sm:%s535]
              %563 = vst [vmem:[%s543 + $0xd8] sm:%s535] %v562
              %v564 = vld [vmem:[%s542 + $0xf0] sm:%s535]
              %565 = vst [vmem:[%s543 + $0xf0] sm:%s535] %v564
              %v566 = vld [vmem:[%s542 + $0x108] sm:%s535]
              %567 = vst [vmem:[%s543 + $0x108] sm:%s535] %v566
              %v568 = vld [vmem:[%s542 + $0x120] sm:%s535]
              %569 = vst [vmem:[%s543 + $0x120] sm:%s535] %v568
              %v570 = vld [vmem:[%s542 + $0x138] sm:%s535]
              %571 = vst [vmem:[%s543 + $0x138] sm:%s535] %v570
              %v572 = vld [vmem:[%s542 + $0x150] sm:%s535]
              %573 = vst [vmem:[%s543 + $0x150] sm:%s535] %v572
              %v574 = vld [vmem:[%s542 + $0x168] sm:%s535]
              %575 = vst [vmem:[%s543 + $0x168] sm:%s535] %v574
              %v576 = vld [vmem:[%s542 + $0x180] sm:%s535]
              %577 = vst [vmem:[%s543 + $0x180] sm:%s535] %v576
              %v578 = vld [vmem:[%s542 + $0x198] sm:%s535]
              %579 = vst [vmem:[%s543 + $0x198] sm:%s535] %v578
              %v580 = vld [vmem:[%s542 + $0x1b0] sm:%s535]
              %581 = vst [vmem:[%s543 + $0x1b0] sm:%s535] %v580
              %v582 = vld [vmem:[%s542 + $0x1c8] sm:%s535]
              %583 = vst [vmem:[%s543 + $0x1c8] sm:%s535] %v582
              %v584 = vld [vmem:[%s542 + $0x1e0] sm:%s535]
              %585 = vst [vmem:[%s543 + $0x1e0] sm:%s535] %v584
              %v586 = vld [vmem:[%s542 + $0x1f8] sm:%s535]
              %587 = vst [vmem:[%s543 + $0x1f8] sm:%s535] %v586
            $region102: #{tpu_custom_call.1} parent=96 // loop_footer
              %s541 = sadd.s32 1, %s537
            $region103: #{tpu_custom_call.1} parent=96 // loop_footer_branch
              %536 = sbr.rel target = $region99
            $region104: #{tpu_custom_call.1} parent=96 // loop_exit
              _
          $region97: #{tpu_custom_call.1} parent=88 // pred_fallthru
            _
          // Predicated region
          $region123: #{tpu_custom_call.1} parent=88 // pred_check
            _
          $region124: #{tpu_custom_call.1} parent=88 // pred_check_branch
            %750 = sbr.rel (0) target = $region126
          $region125: #{tpu_custom_call.1} parent=88 // pred_region
            %751 = vsyncadd %s525, 7744
          $region126: #{tpu_custom_call.1} parent=88 // pred_fallthru
            _
        $region89: #{tpu_custom_call.1} parent=43 // pred_fallthru
          _
        %s752 = smul.u32 %s26, 16
        %s753 = scalar_lea.sflag [#allocation3], %s252
        %s754 = smul.u32 22, 22
        %s755 = smul.u32 %s754, 1
        %s756 = sshll.u32 %s755, 4
        %757 = dma.done %s753, %s756
        loop: start=0, step=1, limit=2
        $region127: #{tpu_custom_call.1} parent=43 // loop_pre_header
          _
        $region128: #{tpu_custom_call.1} parent=43 // loop_header
          %s759 = sphi 0, %s763
          %p760 = scmp.ge.s32.totalorder %s759, 2
        $region129: #{tpu_custom_call.1} parent=43 // loop_header_branch
          %762 = sbr.rel (%p760) target = $region133
        $region130: #{tpu_custom_call.1} parent=43 // loop_body
          %s764 = smul.u32 %s759, 8
          %s765 = smul.u32 %s764, 24
          %s766 = smul.u32 %s252, 528
          %s767 = sadd.s32 %s765, %s766
          %s768 = scalar_lea.vmem [#allocation2], %s767
          %v769 = vld [vmem:[%s768] sm:$0xff]
          %v770 = vld [vmem:[%s768 + $0x8] sm:$0xff]
          %v771 = vld [vmem:[%s768 + $0x10] sm:$0x3f]
          %v772 = vld [vmem:[%s768 + $0x18] sm:$0xff]
          %v773 = vld [vmem:[%s768 + $0x20] sm:$0xff]
          %v774 = vld [vmem:[%s768 + $0x28] sm:$0x3f]
          %v775 = vld [vmem:[%s768 + $0x30] sm:$0xff]
          %v776 = vld [vmem:[%s768 + $0x38] sm:$0xff]
          %v777 = vld [vmem:[%s768 + $0x40] sm:$0x3f]
          %v778 = vld [vmem:[%s768 + $0x48] sm:$0xff]
          %v779 = vld [vmem:[%s768 + $0x50] sm:$0xff]
          %v780 = vld [vmem:[%s768 + $0x58] sm:$0x3f]
          %v781 = vld [vmem:[%s768 + $0x60] sm:$0xff]
          %v782 = vld [vmem:[%s768 + $0x68] sm:$0xff]
          %v783 = vld [vmem:[%s768 + $0x70] sm:$0x3f]
          %v784 = vld [vmem:[%s768 + $0x78] sm:$0xff]
          %v785 = vld [vmem:[%s768 + $0x80] sm:$0xff]
          %v786 = vld [vmem:[%s768 + $0x88] sm:$0x3f]
          %v787 = vld [vmem:[%s768 + $0x90] sm:$0xff]
          %v788 = vld [vmem:[%s768 + $0x98] sm:$0xff]
          %v789 = vld [vmem:[%s768 + $0xa0] sm:$0x3f]
          %v790 = vld [vmem:[%s768 + $0xa8] sm:$0xff]
          %v791 = vld [vmem:[%s768 + $0xb0] sm:$0xff]
          %v792 = vld [vmem:[%s768 + $0xb8] sm:$0x3f]
          %v793 = vlaneseq
          %v794 = vshrl.u32 %v793, 7
          %v795 = vsub.s32 0, %v794
          %v796 = vrot.slane %v491, %v795
          %v797 = vmul.f32 %v769, %v796
          %v798 = vmul.f32 %v770, %v796
          %v799 = vmul.f32 %v772, %v796
          %v800 = vmul.f32 %v773, %v796
          %v801 = vmul.f32 %v775, %v796
          %v802 = vmul.f32 %v776, %v796
          %v803 = vmul.f32 %v778, %v796
          %v804 = vmul.f32 %v779, %v796
          %v805 = vmul.f32 %v781, %v796
          %v806 = vmul.f32 %v782, %v796
          %v807 = vmul.f32 %v784, %v796
          %v808 = vmul.f32 %v785, %v796
          %v809 = vmul.f32 %v787, %v796
          %v810 = vmul.f32 %v788, %v796
          %v811 = vmul.f32 %v790, %v796
          %v812 = vmul.f32 %v791, %v796
          %v813 = vadd.f32 %v505, %v797
          %v814 = vadd.f32 %v505, %v798
          %v815 = vadd.f32 %v505, %v799
          %v816 = vadd.f32 %v505, %v800
          %v817 = vadd.f32 %v505, %v801
          %v818 = vadd.f32 %v505, %v802
          %v819 = vadd.f32 %v505, %v803
          %v820 = vadd.f32 %v505, %v804
          %v821 = vadd.f32 %v505, %v805
          %v822 = vadd.f32 %v505, %v806
          %v823 = vadd.f32 %v505, %v807
          %v824 = vadd.f32 %v505, %v808
          %v825 = vadd.f32 %v505, %v809
          %v826 = vadd.f32 %v505, %v810
          %v827 = vadd.f32 %v505, %v811
          %v828 = vadd.f32 %v505, %v812
          %v829 = vlaneseq
          %v830 = vshrl.u32 %v829, 7
          %v831 = vsub.s32 1, %v830
          %v832 = vrot.slane %v491, %v831
          %v833 = vmul.f32 %v769, %v832
          %v834 = vmul.f32 %v770, %v832
          %v835 = vmul.f32 %v771, %v832
          %v836 = vmul.f32 %v772, %v832
          %v837 = vmul.f32 %v773, %v832
          %v838 = vmul.f32 %v774, %v832
          %v839 = vmul.f32 %v775, %v832
          %v840 = vmul.f32 %v776, %v832
          %v841 = vmul.f32 %v777, %v832
          %v842 = vmul.f32 %v778, %v832
          %v843 = vmul.f32 %v779, %v832
          %v844 = vmul.f32 %v780, %v832
          %v845 = vmul.f32 %v781, %v832
          %v846 = vmul.f32 %v782, %v832
          %v847 = vmul.f32 %v783, %v832
          %v848 = vmul.f32 %v784, %v832
          %v849 = vmul.f32 %v785, %v832
          %v850 = vmul.f32 %v786, %v832
          %v851 = vmul.f32 %v787, %v832
          %v852 = vmul.f32 %v788, %v832
          %v853 = vmul.f32 %v789, %v832
          %v854 = vmul.f32 %v790, %v832
          %v855 = vmul.f32 %v791, %v832
          %v856 = vmul.f32 %v792, %v832
          %vm881 = vcmask 1046528
          %v882 = vrot.slane %v833, 1
          %v883 = vrot.slane %v834, 1
          %v884 = vsel %vm881, %v882, %v883
          %v885 = vrot.slane %v835, 1
          %v886 = vsel %vm881, %v883, %v885
          %v887 = vrot.slane %v836, 1
          %v888 = vrot.slane %v837, 1
          %v889 = vsel %vm881, %v887, %v888
          %v890 = vrot.slane %v838, 1
          %v891 = vsel %vm881, %v888, %v890
          %v892 = vrot.slane %v839, 1
          %v893 = vrot.slane %v840, 1
          %v894 = vsel %vm881, %v892, %v893
          %v895 = vrot.slane %v841, 1
          %v896 = vsel %vm881, %v893, %v895
          %v897 = vrot.slane %v842, 1
          %v898 = vrot.slane %v843, 1
          %v899 = vsel %vm881, %v897, %v898
          %v900 = vrot.slane %v844, 1
          %v901 = vsel %vm881, %v898, %v900
          %v902 = vrot.slane %v845, 1
          %v903 = vrot.slane %v846, 1
          %v904 = vsel %vm881, %v902, %v903
          %v905 = vrot.slane %v847, 1
          %v906 = vsel %vm881, %v903, %v905
          %v907 = vrot.slane %v848, 1
          %v908 = vrot.slane %v849, 1
          %v909 = vsel %vm881, %v907, %v908
          %v910 = vrot.slane %v850, 1
          %v911 = vsel %vm881, %v908, %v910
          %v912 = vrot.slane %v851, 1
          %v913 = vrot.slane %v852, 1
          %v914 = vsel %vm881, %v912, %v913
          %v915 = vrot.slane %v853, 1
          %v916 = vsel %vm881, %v913, %v915
          %v917 = vrot.slane %v854, 1
          %v918 = vrot.slane %v855, 1
          %v919 = vsel %vm881, %v917, %v918
          %v920 = vrot.slane %v856, 1
          %v921 = vsel %vm881, %v918, %v920
          %v938 = vadd.f32 %v813, %v884
          %v939 = vadd.f32 %v814, %v886
          %v940 = vadd.f32 %v815, %v889
          %v941 = vadd.f32 %v816, %v891
          %v942 = vadd.f32 %v817, %v894
          %v943 = vadd.f32 %v818, %v896
          %v944 = vadd.f32 %v819, %v899
          %v945 = vadd.f32 %v820, %v901
          %v946 = vadd.f32 %v821, %v904
          %v947 = vadd.f32 %v822, %v906
          %v948 = vadd.f32 %v823, %v909
          %v949 = vadd.f32 %v824, %v911
          %v950 = vadd.f32 %v825, %v914
          %v951 = vadd.f32 %v826, %v916
          %v952 = vadd.f32 %v827, %v919
          %v953 = vadd.f32 %v828, %v921
          %v954 = vlaneseq
          %v955 = vshrl.u32 %v954, 7
          %v956 = vsub.s32 2, %v955
          %v957 = vrot.slane %v491, %v956
          %v958 = vmul.f32 %v769, %v957
          %v959 = vmul.f32 %v770, %v957
          %v960 = vmul.f32 %v771, %v957
          %v961 = vmul.f32 %v772, %v957
          %v962 = vmul.f32 %v773, %v957
          %v963 = vmul.f32 %v774, %v957
          %v964 = vmul.f32 %v775, %v957
          %v965 = vmul.f32 %v776, %v957
          %v966 = vmul.f32 %v777, %v957
          %v967 = vmul.f32 %v778, %v957
          %v968 = vmul.f32 %v779, %v957
          %v969 = vmul.f32 %v780, %v957
          %v970 = vmul.f32 %v781, %v957
          %v971 = vmul.f32 %v782, %v957
          %v972 = vmul.f32 %v783, %v957
          %v973 = vmul.f32 %v784, %v957
          %v974 = vmul.f32 %v785, %v957
          %v975 = vmul.f32 %v786, %v957
          %v976 = vmul.f32 %v787, %v957
          %v977 = vmul.f32 %v788, %v957
          %v978 = vmul.f32 %v789, %v957
          %v979 = vmul.f32 %v790, %v957
          %v980 = vmul.f32 %v791, %v957
          %v981 = vmul.f32 %v792, %v957
          %vm1006 = vcmask 1045504
          %v1007 = vrot.slane %v958, 2
          %v1008 = vrot.slane %v959, 2
          %v1009 = vsel %vm1006, %v1007, %v1008
          %v1010 = vrot.slane %v960, 2
          %v1011 = vsel %vm1006, %v1008, %v1010
          %v1012 = vrot.slane %v961, 2
          %v1013 = vrot.slane %v962, 2
          %v1014 = vsel %vm1006, %v1012, %v1013
          %v1015 = vrot.slane %v963, 2
          %v1016 = vsel %vm1006, %v1013, %v1015
          %v1017 = vrot.slane %v964, 2
          %v1018 = vrot.slane %v965, 2
          %v1019 = vsel %vm1006, %v1017, %v1018
          %v1020 = vrot.slane %v966, 2
          %v1021 = vsel %vm1006, %v1018, %v1020
          %v1022 = vrot.slane %v967, 2
          %v1023 = vrot.slane %v968, 2
          %v1024 = vsel %vm1006, %v1022, %v1023
          %v1025 = vrot.slane %v969, 2
          %v1026 = vsel %vm1006, %v1023, %v1025
          %v1027 = vrot.slane %v970, 2
          %v1028 = vrot.slane %v971, 2
          %v1029 = vsel %vm1006, %v1027, %v1028
          %v1030 = vrot.slane %v972, 2
          %v1031 = vsel %vm1006, %v1028, %v1030
          %v1032 = vrot.slane %v973, 2
          %v1033 = vrot.slane %v974, 2
          %v1034 = vsel %vm1006, %v1032, %v1033
          %v1035 = vrot.slane %v975, 2
          %v1036 = vsel %vm1006, %v1033, %v1035
          %v1037 = vrot.slane %v976, 2
          %v1038 = vrot.slane %v977, 2
          %v1039 = vsel %vm1006, %v1037, %v1038
          %v1040 = vrot.slane %v978, 2
          %v1041 = vsel %vm1006, %v1038, %v1040
          %v1042 = vrot.slane %v979, 2
          %v1043 = vrot.slane %v980, 2
          %v1044 = vsel %vm1006, %v1042, %v1043
          %v1045 = vrot.slane %v981, 2
          %v1046 = vsel %vm1006, %v1043, %v1045
          %v1063 = vadd.f32 %v938, %v1009
          %v1064 = vadd.f32 %v939, %v1011
          %v1065 = vadd.f32 %v940, %v1014
          %v1066 = vadd.f32 %v941, %v1016
          %v1067 = vadd.f32 %v942, %v1019
          %v1068 = vadd.f32 %v943, %v1021
          %v1069 = vadd.f32 %v944, %v1024
          %v1070 = vadd.f32 %v945, %v1026
          %v1071 = vadd.f32 %v946, %v1029
          %v1072 = vadd.f32 %v947, %v1031
          %v1073 = vadd.f32 %v948, %v1034
          %v1074 = vadd.f32 %v949, %v1036
          %v1075 = vadd.f32 %v950, %v1039
          %v1076 = vadd.f32 %v951, %v1041
          %v1077 = vadd.f32 %v952, %v1044
          %v1078 = vadd.f32 %v953, %v1046
          %v1079 = vlaneseq
          %v1080 = vshrl.u32 %v1079, 7
          %v1081 = vsub.s32 3, %v1080
          %v1082 = vrot.slane %v491, %v1081
          %v1083 = vmul.f32 %v769, %v1082
          %v1084 = vmul.f32 %v770, %v1082
          %v1085 = vmul.f32 %v771, %v1082
          %v1086 = vmul.f32 %v772, %v1082
          %v1087 = vmul.f32 %v773, %v1082
          %v1088 = vmul.f32 %v774, %v1082
          %v1089 = vmul.f32 %v775, %v1082
          %v1090 = vmul.f32 %v776, %v1082
          %v1091 = vmul.f32 %v777, %v1082
          %v1092 = vmul.f32 %v778, %v1082
          %v1093 = vmul.f32 %v779, %v1082
          %v1094 = vmul.f32 %v780, %v1082
          %v1095 = vmul.f32 %v781, %v1082
          %v1096 = vmul.f32 %v782, %v1082
          %v1097 = vmul.f32 %v783, %v1082
          %v1098 = vmul.f32 %v784, %v1082
          %v1099 = vmul.f32 %v785, %v1082
          %v1100 = vmul.f32 %v786, %v1082
          %v1101 = vmul.f32 %v787, %v1082
          %v1102 = vmul.f32 %v788, %v1082
          %v1103 = vmul.f32 %v789, %v1082
          %v1104 = vmul.f32 %v790, %v1082
          %v1105 = vmul.f32 %v791, %v1082
          %v1106 = vmul.f32 %v792, %v1082
          %vm1131 = vcmask 1044480
          %v1132 = vrot.slane %v1083, 3
          %v1133 = vrot.slane %v1084, 3
          %v1134 = vsel %vm1131, %v1132, %v1133
          %v1135 = vrot.slane %v1085, 3
          %v1136 = vsel %vm1131, %v1133, %v1135
          %v1137 = vrot.slane %v1086, 3
          %v1138 = vrot.slane %v1087, 3
          %v1139 = vsel %vm1131, %v1137, %v1138
          %v1140 = vrot.slane %v1088, 3
          %v1141 = vsel %vm1131, %v1138, %v1140
          %v1142 = vrot.slane %v1089, 3
          %v1143 = vrot.slane %v1090, 3
          %v1144 = vsel %vm1131, %v1142, %v1143
          %v1145 = vrot.slane %v1091, 3
          %v1146 = vsel %vm1131, %v1143, %v1145
          %v1147 = vrot.slane %v1092, 3
          %v1148 = vrot.slane %v1093, 3
          %v1149 = vsel %vm1131, %v1147, %v1148
          %v1150 = vrot.slane %v1094, 3
          %v1151 = vsel %vm1131, %v1148, %v1150
          %v1152 = vrot.slane %v1095, 3
          %v1153 = vrot.slane %v1096, 3
          %v1154 = vsel %vm1131, %v1152, %v1153
          %v1155 = vrot.slane %v1097, 3
          %v1156 = vsel %vm1131, %v1153, %v1155
          %v1157 = vrot.slane %v1098, 3
          %v1158 = vrot.slane %v1099, 3
          %v1159 = vsel %vm1131, %v1157, %v1158
          %v1160 = vrot.slane %v1100, 3
          %v1161 = vsel %vm1131, %v1158, %v1160
          %v1162 = vrot.slane %v1101, 3
          %v1163 = vrot.slane %v1102, 3
          %v1164 = vsel %vm1131, %v1162, %v1163
          %v1165 = vrot.slane %v1103, 3
          %v1166 = vsel %vm1131, %v1163, %v1165
          %v1167 = vrot.slane %v1104, 3
          %v1168 = vrot.slane %v1105, 3
          %v1169 = vsel %vm1131, %v1167, %v1168
          %v1170 = vrot.slane %v1106, 3
          %v1171 = vsel %vm1131, %v1168, %v1170
          %v1188 = vadd.f32 %v1063, %v1134
          %v1189 = vadd.f32 %v1064, %v1136
          %v1190 = vadd.f32 %v1065, %v1139
          %v1191 = vadd.f32 %v1066, %v1141
          %v1192 = vadd.f32 %v1067, %v1144
          %v1193 = vadd.f32 %v1068, %v1146
          %v1194 = vadd.f32 %v1069, %v1149
          %v1195 = vadd.f32 %v1070, %v1151
          %v1196 = vadd.f32 %v1071, %v1154
          %v1197 = vadd.f32 %v1072, %v1156
          %v1198 = vadd.f32 %v1073, %v1159
          %v1199 = vadd.f32 %v1074, %v1161
          %v1200 = vadd.f32 %v1075, %v1164
          %v1201 = vadd.f32 %v1076, %v1166
          %v1202 = vadd.f32 %v1077, %v1169
          %v1203 = vadd.f32 %v1078, %v1171
          %v1204 = vlaneseq
          %v1205 = vshrl.u32 %v1204, 7
          %v1206 = vsub.s32 4, %v1205
          %v1207 = vrot.slane %v491, %v1206
          %v1208 = vmul.f32 %v769, %v1207
          %v1209 = vmul.f32 %v770, %v1207
          %v1210 = vmul.f32 %v771, %v1207
          %v1211 = vmul.f32 %v772, %v1207
          %v1212 = vmul.f32 %v773, %v1207
          %v1213 = vmul.f32 %v774, %v1207
          %v1214 = vmul.f32 %v775, %v1207
          %v1215 = vmul.f32 %v776, %v1207
          %v1216 = vmul.f32 %v777, %v1207
          %v1217 = vmul.f32 %v778, %v1207
          %v1218 = vmul.f32 %v779, %v1207
          %v1219 = vmul.f32 %v780, %v1207
          %v1220 = vmul.f32 %v781, %v1207
          %v1221 = vmul.f32 %v782, %v1207
          %v1222 = vmul.f32 %v783, %v1207
          %v1223 = vmul.f32 %v784, %v1207
          %v1224 = vmul.f32 %v785, %v1207
          %v1225 = vmul.f32 %v786, %v1207
          %v1226 = vmul.f32 %v787, %v1207
          %v1227 = vmul.f32 %v788, %v1207
          %v1228 = vmul.f32 %v789, %v1207
          %v1229 = vmul.f32 %v790, %v1207
          %v1230 = vmul.f32 %v791, %v1207
          %v1231 = vmul.f32 %v792, %v1207
          %vm1256 = vcmask 1043456
          %v1257 = vrot.slane %v1208, 4
          %v1258 = vrot.slane %v1209, 4
          %v1259 = vsel %vm1256, %v1257, %v1258
          %v1260 = vrot.slane %v1210, 4
          %v1261 = vsel %vm1256, %v1258, %v1260
          %v1262 = vrot.slane %v1211, 4
          %v1263 = vrot.slane %v1212, 4
          %v1264 = vsel %vm1256, %v1262, %v1263
          %v1265 = vrot.slane %v1213, 4
          %v1266 = vsel %vm1256, %v1263, %v1265
          %v1267 = vrot.slane %v1214, 4
          %v1268 = vrot.slane %v1215, 4
          %v1269 = vsel %vm1256, %v1267, %v1268
          %v1270 = vrot.slane %v1216, 4
          %v1271 = vsel %vm1256, %v1268, %v1270
          %v1272 = vrot.slane %v1217, 4
          %v1273 = vrot.slane %v1218, 4
          %v1274 = vsel %vm1256, %v1272, %v1273
          %v1275 = vrot.slane %v1219, 4
          %v1276 = vsel %vm1256, %v1273, %v1275
          %v1277 = vrot.slane %v1220, 4
          %v1278 = vrot.slane %v1221, 4
          %v1279 = vsel %vm1256, %v1277, %v1278
          %v1280 = vrot.slane %v1222, 4
          %v1281 = vsel %vm1256, %v1278, %v1280
          %v1282 = vrot.slane %v1223, 4
          %v1283 = vrot.slane %v1224, 4
          %v1284 = vsel %vm1256, %v1282, %v1283
          %v1285 = vrot.slane %v1225, 4
          %v1286 = vsel %vm1256, %v1283, %v1285
          %v1287 = vrot.slane %v1226, 4
          %v1288 = vrot.slane %v1227, 4
          %v1289 = vsel %vm1256, %v1287, %v1288
          %v1290 = vrot.slane %v1228, 4
          %v1291 = vsel %vm1256, %v1288, %v1290
          %v1292 = vrot.slane %v1229, 4
          %v1293 = vrot.slane %v1230, 4
          %v1294 = vsel %vm1256, %v1292, %v1293
          %v1295 = vrot.slane %v1231, 4
          %v1296 = vsel %vm1256, %v1293, %v1295
          %v1313 = vadd.f32 %v1188, %v1259
          %v1314 = vadd.f32 %v1189, %v1261
          %v1315 = vadd.f32 %v1190, %v1264
          %v1316 = vadd.f32 %v1191, %v1266
          %v1317 = vadd.f32 %v1192, %v1269
          %v1318 = vadd.f32 %v1193, %v1271
          %v1319 = vadd.f32 %v1194, %v1274
          %v1320 = vadd.f32 %v1195, %v1276
          %v1321 = vadd.f32 %v1196, %v1279
          %v1322 = vadd.f32 %v1197, %v1281
          %v1323 = vadd.f32 %v1198, %v1284
          %v1324 = vadd.f32 %v1199, %v1286
          %v1325 = vadd.f32 %v1200, %v1289
          %v1326 = vadd.f32 %v1201, %v1291
          %v1327 = vadd.f32 %v1202, %v1294
          %v1328 = vadd.f32 %v1203, %v1296
          %v1329 = vlaneseq
          %v1330 = vshrl.u32 %v1329, 7
          %v1331 = vsub.s32 5, %v1330
          %v1332 = vrot.slane %v491, %v1331
          %v1333 = vmul.f32 %v769, %v1332
          %v1334 = vmul.f32 %v770, %v1332
          %v1335 = vmul.f32 %v771, %v1332
          %v1336 = vmul.f32 %v772, %v1332
          %v1337 = vmul.f32 %v773, %v1332
          %v1338 = vmul.f32 %v774, %v1332
          %v1339 = vmul.f32 %v775, %v1332
          %v1340 = vmul.f32 %v776, %v1332
          %v1341 = vmul.f32 %v777, %v1332
          %v1342 = vmul.f32 %v778, %v1332
          %v1343 = vmul.f32 %v779, %v1332
          %v1344 = vmul.f32 %v780, %v1332
          %v1345 = vmul.f32 %v781, %v1332
          %v1346 = vmul.f32 %v782, %v1332
          %v1347 = vmul.f32 %v783, %v1332
          %v1348 = vmul.f32 %v784, %v1332
          %v1349 = vmul.f32 %v785, %v1332
          %v1350 = vmul.f32 %v786, %v1332
          %v1351 = vmul.f32 %v787, %v1332
          %v1352 = vmul.f32 %v788, %v1332
          %v1353 = vmul.f32 %v789, %v1332
          %v1354 = vmul.f32 %v790, %v1332
          %v1355 = vmul.f32 %v791, %v1332
          %v1356 = vmul.f32 %v792, %v1332
          %vm1381 = vcmask 1042432
          %v1382 = vrot.slane %v1333, 5
          %v1383 = vrot.slane %v1334, 5
          %v1384 = vsel %vm1381, %v1382, %v1383
          %v1385 = vrot.slane %v1335, 5
          %v1386 = vsel %vm1381, %v1383, %v1385
          %v1387 = vrot.slane %v1336, 5
          %v1388 = vrot.slane %v1337, 5
          %v1389 = vsel %vm1381, %v1387, %v1388
          %v1390 = vrot.slane %v1338, 5
          %v1391 = vsel %vm1381, %v1388, %v1390
          %v1392 = vrot.slane %v1339, 5
          %v1393 = vrot.slane %v1340, 5
          %v1394 = vsel %vm1381, %v1392, %v1393
          %v1395 = vrot.slane %v1341, 5
          %v1396 = vsel %vm1381, %v1393, %v1395
          %v1397 = vrot.slane %v1342, 5
          %v1398 = vrot.slane %v1343, 5
          %v1399 = vsel %vm1381, %v1397, %v1398
          %v1400 = vrot.slane %v1344, 5
          %v1401 = vsel %vm1381, %v1398, %v1400
          %v1402 = vrot.slane %v1345, 5
          %v1403 = vrot.slane %v1346, 5
          %v1404 = vsel %vm1381, %v1402, %v1403
          %v1405 = vrot.slane %v1347, 5
          %v1406 = vsel %vm1381, %v1403, %v1405
          %v1407 = vrot.slane %v1348, 5
          %v1408 = vrot.slane %v1349, 5
          %v1409 = vsel %vm1381, %v1407, %v1408
          %v1410 = vrot.slane %v1350, 5
          %v1411 = vsel %vm1381, %v1408, %v1410
          %v1412 = vrot.slane %v1351, 5
          %v1413 = vrot.slane %v1352, 5
          %v1414 = vsel %vm1381, %v1412, %v1413
          %v1415 = vrot.slane %v1353, 5
          %v1416 = vsel %vm1381, %v1413, %v1415
          %v1417 = vrot.slane %v1354, 5
          %v1418 = vrot.slane %v1355, 5
          %v1419 = vsel %vm1381, %v1417, %v1418
          %v1420 = vrot.slane %v1356, 5
          %v1421 = vsel %vm1381, %v1418, %v1420
          %v1438 = vadd.f32 %v1313, %v1384
          %v1439 = vadd.f32 %v1314, %v1386
          %v1440 = vadd.f32 %v1315, %v1389
          %v1441 = vadd.f32 %v1316, %v1391
          %v1442 = vadd.f32 %v1317, %v1394
          %v1443 = vadd.f32 %v1318, %v1396
          %v1444 = vadd.f32 %v1319, %v1399
          %v1445 = vadd.f32 %v1320, %v1401
          %v1446 = vadd.f32 %v1321, %v1404
          %v1447 = vadd.f32 %v1322, %v1406
          %v1448 = vadd.f32 %v1323, %v1409
          %v1449 = vadd.f32 %v1324, %v1411
          %v1450 = vadd.f32 %v1325, %v1414
          %v1451 = vadd.f32 %v1326, %v1416
          %v1452 = vadd.f32 %v1327, %v1419
          %v1453 = vadd.f32 %v1328, %v1421
          %v1454 = vlaneseq
          %v1455 = vshrl.u32 %v1454, 7
          %v1456 = vsub.s32 6, %v1455
          %v1457 = vrot.slane %v491, %v1456
          %v1458 = vmul.f32 %v769, %v1457
          %v1459 = vmul.f32 %v770, %v1457
          %v1460 = vmul.f32 %v771, %v1457
          %v1461 = vmul.f32 %v772, %v1457
          %v1462 = vmul.f32 %v773, %v1457
          %v1463 = vmul.f32 %v774, %v1457
          %v1464 = vmul.f32 %v775, %v1457
          %v1465 = vmul.f32 %v776, %v1457
          %v1466 = vmul.f32 %v777, %v1457
          %v1467 = vmul.f32 %v778, %v1457
          %v1468 = vmul.f32 %v779, %v1457
          %v1469 = vmul.f32 %v780, %v1457
          %v1470 = vmul.f32 %v781, %v1457
          %v1471 = vmul.f32 %v782, %v1457
          %v1472 = vmul.f32 %v783, %v1457
          %v1473 = vmul.f32 %v784, %v1457
          %v1474 = vmul.f32 %v785, %v1457
          %v1475 = vmul.f32 %v786, %v1457
          %v1476 = vmul.f32 %v787, %v1457
          %v1477 = vmul.f32 %v788, %v1457
          %v1478 = vmul.f32 %v789, %v1457
          %v1479 = vmul.f32 %v790, %v1457
          %v1480 = vmul.f32 %v791, %v1457
          %v1481 = vmul.f32 %v792, %v1457
          %vm1506 = vcmask 1041408
          %v1507 = vrot.slane %v1458, 6
          %v1508 = vrot.slane %v1459, 6
          %v1509 = vsel %vm1506, %v1507, %v1508
          %v1510 = vrot.slane %v1460, 6
          %v1511 = vsel %vm1506, %v1508, %v1510
          %v1512 = vrot.slane %v1461, 6
          %v1513 = vrot.slane %v1462, 6
          %v1514 = vsel %vm1506, %v1512, %v1513
          %v1515 = vrot.slane %v1463, 6
          %v1516 = vsel %vm1506, %v1513, %v1515
          %v1517 = vrot.slane %v1464, 6
          %v1518 = vrot.slane %v1465, 6
          %v1519 = vsel %vm1506, %v1517, %v1518
          %v1520 = vrot.slane %v1466, 6
          %v1521 = vsel %vm1506, %v1518, %v1520
          %v1522 = vrot.slane %v1467, 6
          %v1523 = vrot.slane %v1468, 6
          %v1524 = vsel %vm1506, %v1522, %v1523
          %v1525 = vrot.slane %v1469, 6
          %v1526 = vsel %vm1506, %v1523, %v1525
          %v1527 = vrot.slane %v1470, 6
          %v1528 = vrot.slane %v1471, 6
          %v1529 = vsel %vm1506, %v1527, %v1528
          %v1530 = vrot.slane %v1472, 6
          %v1531 = vsel %vm1506, %v1528, %v1530
          %v1532 = vrot.slane %v1473, 6
          %v1533 = vrot.slane %v1474, 6
          %v1534 = vsel %vm1506, %v1532, %v1533
          %v1535 = vrot.slane %v1475, 6
          %v1536 = vsel %vm1506, %v1533, %v1535
          %v1537 = vrot.slane %v1476, 6
          %v1538 = vrot.slane %v1477, 6
          %v1539 = vsel %vm1506, %v1537, %v1538
          %v1540 = vrot.slane %v1478, 6
          %v1541 = vsel %vm1506, %v1538, %v1540
          %v1542 = vrot.slane %v1479, 6
          %v1543 = vrot.slane %v1480, 6
          %v1544 = vsel %vm1506, %v1542, %v1543
          %v1545 = vrot.slane %v1481, 6
          %v1546 = vsel %vm1506, %v1543, %v1545
          %v1563 = vadd.f32 %v1438, %v1509
          %v1564 = vadd.f32 %v1439, %v1511
          %v1565 = vadd.f32 %v1440, %v1514
          %v1566 = vadd.f32 %v1441, %v1516
          %v1567 = vadd.f32 %v1442, %v1519
          %v1568 = vadd.f32 %v1443, %v1521
          %v1569 = vadd.f32 %v1444, %v1524
          %v1570 = vadd.f32 %v1445, %v1526
          %v1571 = vadd.f32 %v1446, %v1529
          %v1572 = vadd.f32 %v1447, %v1531
          %v1573 = vadd.f32 %v1448, %v1534
          %v1574 = vadd.f32 %v1449, %v1536
          %v1575 = vadd.f32 %v1450, %v1539
          %v1576 = vadd.f32 %v1451, %v1541
          %v1577 = vadd.f32 %v1452, %v1544
          %v1578 = vadd.f32 %v1453, %v1546
          %s1579 = sadd.s32 %s764, 1
          %s1580 = smul.u32 %s1579, 24
          %s1581 = sadd.s32 %s1580, %s766
          %s1582 = scalar_lea.vmem [#allocation2], %s1581
          %v1583 = vld [vmem:[%s1582] sm:$0xff]
          %v1584 = vld [vmem:[%s1582 + $0x8] sm:$0xff]
          %v1585 = vld [vmem:[%s1582 + $0x10] sm:$0x3f]
          %v1586 = vld [vmem:[%s1582 + $0x18] sm:$0xff]
          %v1587 = vld [vmem:[%s1582 + $0x20] sm:$0xff]
          %v1588 = vld [vmem:[%s1582 + $0x28] sm:$0x3f]
          %v1589 = vld [vmem:[%s1582 + $0x30] sm:$0xff]
          %v1590 = vld [vmem:[%s1582 + $0x38] sm:$0xff]
          %v1591 = vld [vmem:[%s1582 + $0x40] sm:$0x3f]
          %v1592 = vld [vmem:[%s1582 + $0x48] sm:$0xff]
          %v1593 = vld [vmem:[%s1582 + $0x50] sm:$0xff]
          %v1594 = vld [vmem:[%s1582 + $0x58] sm:$0x3f]
          %v1595 = vld [vmem:[%s1582 + $0x60] sm:$0xff]
          %v1596 = vld [vmem:[%s1582 + $0x68] sm:$0xff]
          %v1597 = vld [vmem:[%s1582 + $0x70] sm:$0x3f]
          %v1598 = vld [vmem:[%s1582 + $0x78] sm:$0xff]
          %v1599 = vld [vmem:[%s1582 + $0x80] sm:$0xff]
          %v1600 = vld [vmem:[%s1582 + $0x88] sm:$0x3f]
          %v1601 = vld [vmem:[%s1582 + $0x90] sm:$0xff]
          %v1602 = vld [vmem:[%s1582 + $0x98] sm:$0xff]
          %v1603 = vld [vmem:[%s1582 + $0xa0] sm:$0x3f]
          %v1604 = vld [vmem:[%s1582 + $0xa8] sm:$0xff]
          %v1605 = vld [vmem:[%s1582 + $0xb0] sm:$0xff]
          %v1606 = vld [vmem:[%s1582 + $0xb8] sm:$0x3f]
          %v1607 = vlaneseq
          %v1608 = vshrl.u32 %v1607, 7
          %v1609 = vsub.s32 7, %v1608
          %v1610 = vrot.slane %v491, %v1609
          %v1611 = vmul.f32 %v1583, %v1610
          %v1612 = vmul.f32 %v1584, %v1610
          %v1613 = vmul.f32 %v1586, %v1610
          %v1614 = vmul.f32 %v1587, %v1610
          %v1615 = vmul.f32 %v1589, %v1610
          %v1616 = vmul.f32 %v1590, %v1610
          %v1617 = vmul.f32 %v1592, %v1610
          %v1618 = vmul.f32 %v1593, %v1610
          %v1619 = vmul.f32 %v1595, %v1610
          %v1620 = vmul.f32 %v1596, %v1610
          %v1621 = vmul.f32 %v1598, %v1610
          %v1622 = vmul.f32 %v1599, %v1610
          %v1623 = vmul.f32 %v1601, %v1610
          %v1624 = vmul.f32 %v1602, %v1610
          %v1625 = vmul.f32 %v1604, %v1610
          %v1626 = vmul.f32 %v1605, %v1610
          %v1627 = vadd.f32 %v1563, %v1611
          %v1628 = vadd.f32 %v1564, %v1612
          %v1629 = vadd.f32 %v1565, %v1613
          %v1630 = vadd.f32 %v1566, %v1614
          %v1631 = vadd.f32 %v1567, %v1615
          %v1632 = vadd.f32 %v1568, %v1616
          %v1633 = vadd.f32 %v1569, %v1617
          %v1634 = vadd.f32 %v1570, %v1618
          %v1635 = vadd.f32 %v1571, %v1619
          %v1636 = vadd.f32 %v1572, %v1620
          %v1637 = vadd.f32 %v1573, %v1621
          %v1638 = vadd.f32 %v1574, %v1622
          %v1639 = vadd.f32 %v1575, %v1623
          %v1640 = vadd.f32 %v1576, %v1624
          %v1641 = vadd.f32 %v1577, %v1625
          %v1642 = vadd.f32 %v1578, %v1626
          %v1643 = vlaneseq
          %v1644 = vshrl.u32 %v1643, 7
          %v1645 = vsub.s32 0, %v1644
          %v1646 = vrot.slane %v492, %v1645
          %v1647 = vmul.f32 %v1583, %v1646
          %v1648 = vmul.f32 %v1584, %v1646
          %v1649 = vmul.f32 %v1585, %v1646
          %v1650 = vmul.f32 %v1586, %v1646
          %v1651 = vmul.f32 %v1587, %v1646
          %v1652 = vmul.f32 %v1588, %v1646
          %v1653 = vmul.f32 %v1589, %v1646
          %v1654 = vmul.f32 %v1590, %v1646
          %v1655 = vmul.f32 %v1591, %v1646
          %v1656 = vmul.f32 %v1592, %v1646
          %v1657 = vmul.f32 %v1593, %v1646
          %v1658 = vmul.f32 %v1594, %v1646
          %v1659 = vmul.f32 %v1595, %v1646
          %v1660 = vmul.f32 %v1596, %v1646
          %v1661 = vmul.f32 %v1597, %v1646
          %v1662 = vmul.f32 %v1598, %v1646
          %v1663 = vmul.f32 %v1599, %v1646
          %v1664 = vmul.f32 %v1600, %v1646
          %v1665 = vmul.f32 %v1601, %v1646
          %v1666 = vmul.f32 %v1602, %v1646
          %v1667 = vmul.f32 %v1603, %v1646
          %v1668 = vmul.f32 %v1604, %v1646
          %v1669 = vmul.f32 %v1605, %v1646
          %v1670 = vmul.f32 %v1606, %v1646
          %v1695 = vrot.slane %v1647, 1
          %v1696 = vrot.slane %v1648, 1
          %v1697 = vsel %vm881, %v1695, %v1696
          %v1698 = vrot.slane %v1649, 1
          %v1699 = vsel %vm881, %v1696, %v1698
          %v1700 = vrot.slane %v1650, 1
          %v1701 = vrot.slane %v1651, 1
          %v1702 = vsel %vm881, %v1700, %v1701
          %v1703 = vrot.slane %v1652, 1
          %v1704 = vsel %vm881, %v1701, %v1703
          %v1705 = vrot.slane %v1653, 1
          %v1706 = vrot.slane %v1654, 1
          %v1707 = vsel %vm881, %v1705, %v1706
          %v1708 = vrot.slane %v1655, 1
          %v1709 = vsel %vm881, %v1706, %v1708
          %v1710 = vrot.slane %v1656, 1
          %v1711 = vrot.slane %v1657, 1
          %v1712 = vsel %vm881, %v1710, %v1711
          %v1713 = vrot.slane %v1658, 1
          %v1714 = vsel %vm881, %v1711, %v1713
          %v1715 = vrot.slane %v1659, 1
          %v1716 = vrot.slane %v1660, 1
          %v1717 = vsel %vm881, %v1715, %v1716
          %v1718 = vrot.slane %v1661, 1
          %v1719 = vsel %vm881, %v1716, %v1718
          %v1720 = vrot.slane %v1662, 1
          %v1721 = vrot.slane %v1663, 1
          %v1722 = vsel %vm881, %v1720, %v1721
          %v1723 = vrot.slane %v1664, 1
          %v1724 = vsel %vm881, %v1721, %v1723
          %v1725 = vrot.slane %v1665, 1
          %v1726 = vrot.slane %v1666, 1
          %v1727 = vsel %vm881, %v1725, %v1726
          %v1728 = vrot.slane %v1667, 1
          %v1729 = vsel %vm881, %v1726, %v1728
          %v1730 = vrot.slane %v1668, 1
          %v1731 = vrot.slane %v1669, 1
          %v1732 = vsel %vm881, %v1730, %v1731
          %v1733 = vrot.slane %v1670, 1
          %v1734 = vsel %vm881, %v1731, %v1733
          %v1751 = vadd.f32 %v1627, %v1697
          %v1752 = vadd.f32 %v1628, %v1699
          %v1753 = vadd.f32 %v1629, %v1702
          %v1754 = vadd.f32 %v1630, %v1704
          %v1755 = vadd.f32 %v1631, %v1707
          %v1756 = vadd.f32 %v1632, %v1709
          %v1757 = vadd.f32 %v1633, %v1712
          %v1758 = vadd.f32 %v1634, %v1714
          %v1759 = vadd.f32 %v1635, %v1717
          %v1760 = vadd.f32 %v1636, %v1719
          %v1761 = vadd.f32 %v1637, %v1722
          %v1762 = vadd.f32 %v1638, %v1724
          %v1763 = vadd.f32 %v1639, %v1727
          %v1764 = vadd.f32 %v1640, %v1729
          %v1765 = vadd.f32 %v1641, %v1732
          %v1766 = vadd.f32 %v1642, %v1734
          %v1767 = vlaneseq
          %v1768 = vshrl.u32 %v1767, 7
          %v1769 = vsub.s32 1, %v1768
          %v1770 = vrot.slane %v492, %v1769
          %v1771 = vmul.f32 %v1583, %v1770
          %v1772 = vmul.f32 %v1584, %v1770
          %v1773 = vmul.f32 %v1585, %v1770
          %v1774 = vmul.f32 %v1586, %v1770
          %v1775 = vmul.f32 %v1587, %v1770
          %v1776 = vmul.f32 %v1588, %v1770
          %v1777 = vmul.f32 %v1589, %v1770
          %v1778 = vmul.f32 %v1590, %v1770
          %v1779 = vmul.f32 %v1591, %v1770
          %v1780 = vmul.f32 %v1592, %v1770
          %v1781 = vmul.f32 %v1593, %v1770
          %v1782 = vmul.f32 %v1594, %v1770
          %v1783 = vmul.f32 %v1595, %v1770
          %v1784 = vmul.f32 %v1596, %v1770
          %v1785 = vmul.f32 %v1597, %v1770
          %v1786 = vmul.f32 %v1598, %v1770
          %v1787 = vmul.f32 %v1599, %v1770
          %v1788 = vmul.f32 %v1600, %v1770
          %v1789 = vmul.f32 %v1601, %v1770
          %v1790 = vmul.f32 %v1602, %v1770
          %v1791 = vmul.f32 %v1603, %v1770
          %v1792 = vmul.f32 %v1604, %v1770
          %v1793 = vmul.f32 %v1605, %v1770
          %v1794 = vmul.f32 %v1606, %v1770
          %v1819 = vrot.slane %v1771, 2
          %v1820 = vrot.slane %v1772, 2
          %v1821 = vsel %vm1006, %v1819, %v1820
          %v1822 = vrot.slane %v1773, 2
          %v1823 = vsel %vm1006, %v1820, %v1822
          %v1824 = vrot.slane %v1774, 2
          %v1825 = vrot.slane %v1775, 2
          %v1826 = vsel %vm1006, %v1824, %v1825
          %v1827 = vrot.slane %v1776, 2
          %v1828 = vsel %vm1006, %v1825, %v1827
          %v1829 = vrot.slane %v1777, 2
          %v1830 = vrot.slane %v1778, 2
          %v1831 = vsel %vm1006, %v1829, %v1830
          %v1832 = vrot.slane %v1779, 2
          %v1833 = vsel %vm1006, %v1830, %v1832
          %v1834 = vrot.slane %v1780, 2
          %v1835 = vrot.slane %v1781, 2
          %v1836 = vsel %vm1006, %v1834, %v1835
          %v1837 = vrot.slane %v1782, 2
          %v1838 = vsel %vm1006, %v1835, %v1837
          %v1839 = vrot.slane %v1783, 2
          %v1840 = vrot.slane %v1784, 2
          %v1841 = vsel %vm1006, %v1839, %v1840
          %v1842 = vrot.slane %v1785, 2
          %v1843 = vsel %vm1006, %v1840, %v1842
          %v1844 = vrot.slane %v1786, 2
          %v1845 = vrot.slane %v1787, 2
          %v1846 = vsel %vm1006, %v1844, %v1845
          %v1847 = vrot.slane %v1788, 2
          %v1848 = vsel %vm1006, %v1845, %v1847
          %v1849 = vrot.slane %v1789, 2
          %v1850 = vrot.slane %v1790, 2
          %v1851 = vsel %vm1006, %v1849, %v1850
          %v1852 = vrot.slane %v1791, 2
          %v1853 = vsel %vm1006, %v1850, %v1852
          %v1854 = vrot.slane %v1792, 2
          %v1855 = vrot.slane %v1793, 2
          %v1856 = vsel %vm1006, %v1854, %v1855
          %v1857 = vrot.slane %v1794, 2
          %v1858 = vsel %vm1006, %v1855, %v1857
          %v1875 = vadd.f32 %v1751, %v1821
          %v1876 = vadd.f32 %v1752, %v1823
          %v1877 = vadd.f32 %v1753, %v1826
          %v1878 = vadd.f32 %v1754, %v1828
          %v1879 = vadd.f32 %v1755, %v1831
          %v1880 = vadd.f32 %v1756, %v1833
          %v1881 = vadd.f32 %v1757, %v1836
          %v1882 = vadd.f32 %v1758, %v1838
          %v1883 = vadd.f32 %v1759, %v1841
          %v1884 = vadd.f32 %v1760, %v1843
          %v1885 = vadd.f32 %v1761, %v1846
          %v1886 = vadd.f32 %v1762, %v1848
          %v1887 = vadd.f32 %v1763, %v1851
          %v1888 = vadd.f32 %v1764, %v1853
          %v1889 = vadd.f32 %v1765, %v1856
          %v1890 = vadd.f32 %v1766, %v1858
          %v1891 = vlaneseq
          %v1892 = vshrl.u32 %v1891, 7
          %v1893 = vsub.s32 2, %v1892
          %v1894 = vrot.slane %v492, %v1893
          %v1895 = vmul.f32 %v1583, %v1894
          %v1896 = vmul.f32 %v1584, %v1894
          %v1897 = vmul.f32 %v1585, %v1894
          %v1898 = vmul.f32 %v1586, %v1894
          %v1899 = vmul.f32 %v1587, %v1894
          %v1900 = vmul.f32 %v1588, %v1894
          %v1901 = vmul.f32 %v1589, %v1894
          %v1902 = vmul.f32 %v1590, %v1894
          %v1903 = vmul.f32 %v1591, %v1894
          %v1904 = vmul.f32 %v1592, %v1894
          %v1905 = vmul.f32 %v1593, %v1894
          %v1906 = vmul.f32 %v1594, %v1894
          %v1907 = vmul.f32 %v1595, %v1894
          %v1908 = vmul.f32 %v1596, %v1894
          %v1909 = vmul.f32 %v1597, %v1894
          %v1910 = vmul.f32 %v1598, %v1894
          %v1911 = vmul.f32 %v1599, %v1894
          %v1912 = vmul.f32 %v1600, %v1894
          %v1913 = vmul.f32 %v1601, %v1894
          %v1914 = vmul.f32 %v1602, %v1894
          %v1915 = vmul.f32 %v1603, %v1894
          %v1916 = vmul.f32 %v1604, %v1894
          %v1917 = vmul.f32 %v1605, %v1894
          %v1918 = vmul.f32 %v1606, %v1894
          %v1943 = vrot.slane %v1895, 3
          %v1944 = vrot.slane %v1896, 3
          %v1945 = vsel %vm1131, %v1943, %v1944
          %v1946 = vrot.slane %v1897, 3
          %v1947 = vsel %vm1131, %v1944, %v1946
          %v1948 = vrot.slane %v1898, 3
          %v1949 = vrot.slane %v1899, 3
          %v1950 = vsel %vm1131, %v1948, %v1949
          %v1951 = vrot.slane %v1900, 3
          %v1952 = vsel %vm1131, %v1949, %v1951
          %v1953 = vrot.slane %v1901, 3
          %v1954 = vrot.slane %v1902, 3
          %v1955 = vsel %vm1131, %v1953, %v1954
          %v1956 = vrot.slane %v1903, 3
          %v1957 = vsel %vm1131, %v1954, %v1956
          %v1958 = vrot.slane %v1904, 3
          %v1959 = vrot.slane %v1905, 3
          %v1960 = vsel %vm1131, %v1958, %v1959
          %v1961 = vrot.slane %v1906, 3
          %v1962 = vsel %vm1131, %v1959, %v1961
          %v1963 = vrot.slane %v1907, 3
          %v1964 = vrot.slane %v1908, 3
          %v1965 = vsel %vm1131, %v1963, %v1964
          %v1966 = vrot.slane %v1909, 3
          %v1967 = vsel %vm1131, %v1964, %v1966
          %v1968 = vrot.slane %v1910, 3
          %v1969 = vrot.slane %v1911, 3
          %v1970 = vsel %vm1131, %v1968, %v1969
          %v1971 = vrot.slane %v1912, 3
          %v1972 = vsel %vm1131, %v1969, %v1971
          %v1973 = vrot.slane %v1913, 3
          %v1974 = vrot.slane %v1914, 3
          %v1975 = vsel %vm1131, %v1973, %v1974
          %v1976 = vrot.slane %v1915, 3
          %v1977 = vsel %vm1131, %v1974, %v1976
          %v1978 = vrot.slane %v1916, 3
          %v1979 = vrot.slane %v1917, 3
          %v1980 = vsel %vm1131, %v1978, %v1979
          %v1981 = vrot.slane %v1918, 3
          %v1982 = vsel %vm1131, %v1979, %v1981
          %v1999 = vadd.f32 %v1875, %v1945
          %v2000 = vadd.f32 %v1876, %v1947
          %v2001 = vadd.f32 %v1877, %v1950
          %v2002 = vadd.f32 %v1878, %v1952
          %v2003 = vadd.f32 %v1879, %v1955
          %v2004 = vadd.f32 %v1880, %v1957
          %v2005 = vadd.f32 %v1881, %v1960
          %v2006 = vadd.f32 %v1882, %v1962
          %v2007 = vadd.f32 %v1883, %v1965
          %v2008 = vadd.f32 %v1884, %v1967
          %v2009 = vadd.f32 %v1885, %v1970
          %v2010 = vadd.f32 %v1886, %v1972
          %v2011 = vadd.f32 %v1887, %v1975
          %v2012 = vadd.f32 %v1888, %v1977
          %v2013 = vadd.f32 %v1889, %v1980
          %v2014 = vadd.f32 %v1890, %v1982
          %v2015 = vlaneseq
          %v2016 = vshrl.u32 %v2015, 7
          %v2017 = vsub.s32 3, %v2016
          %v2018 = vrot.slane %v492, %v2017
          %v2019 = vmul.f32 %v1583, %v2018
          %v2020 = vmul.f32 %v1584, %v2018
          %v2021 = vmul.f32 %v1585, %v2018
          %v2022 = vmul.f32 %v1586, %v2018
          %v2023 = vmul.f32 %v1587, %v2018
          %v2024 = vmul.f32 %v1588, %v2018
          %v2025 = vmul.f32 %v1589, %v2018
          %v2026 = vmul.f32 %v1590, %v2018
          %v2027 = vmul.f32 %v1591, %v2018
          %v2028 = vmul.f32 %v1592, %v2018
          %v2029 = vmul.f32 %v1593, %v2018
          %v2030 = vmul.f32 %v1594, %v2018
          %v2031 = vmul.f32 %v1595, %v2018
          %v2032 = vmul.f32 %v1596, %v2018
          %v2033 = vmul.f32 %v1597, %v2018
          %v2034 = vmul.f32 %v1598, %v2018
          %v2035 = vmul.f32 %v1599, %v2018
          %v2036 = vmul.f32 %v1600, %v2018
          %v2037 = vmul.f32 %v1601, %v2018
          %v2038 = vmul.f32 %v1602, %v2018
          %v2039 = vmul.f32 %v1603, %v2018
          %v2040 = vmul.f32 %v1604, %v2018
          %v2041 = vmul.f32 %v1605, %v2018
          %v2042 = vmul.f32 %v1606, %v2018
          %v2067 = vrot.slane %v2019, 4
          %v2068 = vrot.slane %v2020, 4
          %v2069 = vsel %vm1256, %v2067, %v2068
          %v2070 = vrot.slane %v2021, 4
          %v2071 = vsel %vm1256, %v2068, %v2070
          %v2072 = vrot.slane %v2022, 4
          %v2073 = vrot.slane %v2023, 4
          %v2074 = vsel %vm1256, %v2072, %v2073
          %v2075 = vrot.slane %v2024, 4
          %v2076 = vsel %vm1256, %v2073, %v2075
          %v2077 = vrot.slane %v2025, 4
          %v2078 = vrot.slane %v2026, 4
          %v2079 = vsel %vm1256, %v2077, %v2078
          %v2080 = vrot.slane %v2027, 4
          %v2081 = vsel %vm1256, %v2078, %v2080
          %v2082 = vrot.slane %v2028, 4
          %v2083 = vrot.slane %v2029, 4
          %v2084 = vsel %vm1256, %v2082, %v2083
          %v2085 = vrot.slane %v2030, 4
          %v2086 = vsel %vm1256, %v2083, %v2085
          %v2087 = vrot.slane %v2031, 4
          %v2088 = vrot.slane %v2032, 4
          %v2089 = vsel %vm1256, %v2087, %v2088
          %v2090 = vrot.slane %v2033, 4
          %v2091 = vsel %vm1256, %v2088, %v2090
          %v2092 = vrot.slane %v2034, 4
          %v2093 = vrot.slane %v2035, 4
          %v2094 = vsel %vm1256, %v2092, %v2093
          %v2095 = vrot.slane %v2036, 4
          %v2096 = vsel %vm1256, %v2093, %v2095
          %v2097 = vrot.slane %v2037, 4
          %v2098 = vrot.slane %v2038, 4
          %v2099 = vsel %vm1256, %v2097, %v2098
          %v2100 = vrot.slane %v2039, 4
          %v2101 = vsel %vm1256, %v2098, %v2100
          %v2102 = vrot.slane %v2040, 4
          %v2103 = vrot.slane %v2041, 4
          %v2104 = vsel %vm1256, %v2102, %v2103
          %v2105 = vrot.slane %v2042, 4
          %v2106 = vsel %vm1256, %v2103, %v2105
          %v2123 = vadd.f32 %v1999, %v2069
          %v2124 = vadd.f32 %v2000, %v2071
          %v2125 = vadd.f32 %v2001, %v2074
          %v2126 = vadd.f32 %v2002, %v2076
          %v2127 = vadd.f32 %v2003, %v2079
          %v2128 = vadd.f32 %v2004, %v2081
          %v2129 = vadd.f32 %v2005, %v2084
          %v2130 = vadd.f32 %v2006, %v2086
          %v2131 = vadd.f32 %v2007, %v2089
          %v2132 = vadd.f32 %v2008, %v2091
          %v2133 = vadd.f32 %v2009, %v2094
          %v2134 = vadd.f32 %v2010, %v2096
          %v2135 = vadd.f32 %v2011, %v2099
          %v2136 = vadd.f32 %v2012, %v2101
          %v2137 = vadd.f32 %v2013, %v2104
          %v2138 = vadd.f32 %v2014, %v2106
          %v2139 = vlaneseq
          %v2140 = vshrl.u32 %v2139, 7
          %v2141 = vsub.s32 4, %v2140
          %v2142 = vrot.slane %v492, %v2141
          %v2143 = vmul.f32 %v1583, %v2142
          %v2144 = vmul.f32 %v1584, %v2142
          %v2145 = vmul.f32 %v1585, %v2142
          %v2146 = vmul.f32 %v1586, %v2142
          %v2147 = vmul.f32 %v1587, %v2142
          %v2148 = vmul.f32 %v1588, %v2142
          %v2149 = vmul.f32 %v1589, %v2142
          %v2150 = vmul.f32 %v1590, %v2142
          %v2151 = vmul.f32 %v1591, %v2142
          %v2152 = vmul.f32 %v1592, %v2142
          %v2153 = vmul.f32 %v1593, %v2142
          %v2154 = vmul.f32 %v1594, %v2142
          %v2155 = vmul.f32 %v1595, %v2142
          %v2156 = vmul.f32 %v1596, %v2142
          %v2157 = vmul.f32 %v1597, %v2142
          %v2158 = vmul.f32 %v1598, %v2142
          %v2159 = vmul.f32 %v1599, %v2142
          %v2160 = vmul.f32 %v1600, %v2142
          %v2161 = vmul.f32 %v1601, %v2142
          %v2162 = vmul.f32 %v1602, %v2142
          %v2163 = vmul.f32 %v1603, %v2142
          %v2164 = vmul.f32 %v1604, %v2142
          %v2165 = vmul.f32 %v1605, %v2142
          %v2166 = vmul.f32 %v1606, %v2142
          %v2191 = vrot.slane %v2143, 5
          %v2192 = vrot.slane %v2144, 5
          %v2193 = vsel %vm1381, %v2191, %v2192
          %v2194 = vrot.slane %v2145, 5
          %v2195 = vsel %vm1381, %v2192, %v2194
          %v2196 = vrot.slane %v2146, 5
          %v2197 = vrot.slane %v2147, 5
          %v2198 = vsel %vm1381, %v2196, %v2197
          %v2199 = vrot.slane %v2148, 5
          %v2200 = vsel %vm1381, %v2197, %v2199
          %v2201 = vrot.slane %v2149, 5
          %v2202 = vrot.slane %v2150, 5
          %v2203 = vsel %vm1381, %v2201, %v2202
          %v2204 = vrot.slane %v2151, 5
          %v2205 = vsel %vm1381, %v2202, %v2204
          %v2206 = vrot.slane %v2152, 5
          %v2207 = vrot.slane %v2153, 5
          %v2208 = vsel %vm1381, %v2206, %v2207
          %v2209 = vrot.slane %v2154, 5
          %v2210 = vsel %vm1381, %v2207, %v2209
          %v2211 = vrot.slane %v2155, 5
          %v2212 = vrot.slane %v2156, 5
          %v2213 = vsel %vm1381, %v2211, %v2212
          %v2214 = vrot.slane %v2157, 5
          %v2215 = vsel %vm1381, %v2212, %v2214
          %v2216 = vrot.slane %v2158, 5
          %v2217 = vrot.slane %v2159, 5
          %v2218 = vsel %vm1381, %v2216, %v2217
          %v2219 = vrot.slane %v2160, 5
          %v2220 = vsel %vm1381, %v2217, %v2219
          %v2221 = vrot.slane %v2161, 5
          %v2222 = vrot.slane %v2162, 5
          %v2223 = vsel %vm1381, %v2221, %v2222
          %v2224 = vrot.slane %v2163, 5
          %v2225 = vsel %vm1381, %v2222, %v2224
          %v2226 = vrot.slane %v2164, 5
          %v2227 = vrot.slane %v2165, 5
          %v2228 = vsel %vm1381, %v2226, %v2227
          %v2229 = vrot.slane %v2166, 5
          %v2230 = vsel %vm1381, %v2227, %v2229
          %v2247 = vadd.f32 %v2123, %v2193
          %v2248 = vadd.f32 %v2124, %v2195
          %v2249 = vadd.f32 %v2125, %v2198
          %v2250 = vadd.f32 %v2126, %v2200
          %v2251 = vadd.f32 %v2127, %v2203
          %v2252 = vadd.f32 %v2128, %v2205
          %v2253 = vadd.f32 %v2129, %v2208
          %v2254 = vadd.f32 %v2130, %v2210
          %v2255 = vadd.f32 %v2131, %v2213
          %v2256 = vadd.f32 %v2132, %v2215
          %v2257 = vadd.f32 %v2133, %v2218
          %v2258 = vadd.f32 %v2134, %v2220
          %v2259 = vadd.f32 %v2135, %v2223
          %v2260 = vadd.f32 %v2136, %v2225
          %v2261 = vadd.f32 %v2137, %v2228
          %v2262 = vadd.f32 %v2138, %v2230
          %v2263 = vlaneseq
          %v2264 = vshrl.u32 %v2263, 7
          %v2265 = vsub.s32 5, %v2264
          %v2266 = vrot.slane %v492, %v2265
          %v2267 = vmul.f32 %v1583, %v2266
          %v2268 = vmul.f32 %v1584, %v2266
          %v2269 = vmul.f32 %v1585, %v2266
          %v2270 = vmul.f32 %v1586, %v2266
          %v2271 = vmul.f32 %v1587, %v2266
          %v2272 = vmul.f32 %v1588, %v2266
          %v2273 = vmul.f32 %v1589, %v2266
          %v2274 = vmul.f32 %v1590, %v2266
          %v2275 = vmul.f32 %v1591, %v2266
          %v2276 = vmul.f32 %v1592, %v2266
          %v2277 = vmul.f32 %v1593, %v2266
          %v2278 = vmul.f32 %v1594, %v2266
          %v2279 = vmul.f32 %v1595, %v2266
          %v2280 = vmul.f32 %v1596, %v2266
          %v2281 = vmul.f32 %v1597, %v2266
          %v2282 = vmul.f32 %v1598, %v2266
          %v2283 = vmul.f32 %v1599, %v2266
          %v2284 = vmul.f32 %v1600, %v2266
          %v2285 = vmul.f32 %v1601, %v2266
          %v2286 = vmul.f32 %v1602, %v2266
          %v2287 = vmul.f32 %v1603, %v2266
          %v2288 = vmul.f32 %v1604, %v2266
          %v2289 = vmul.f32 %v1605, %v2266
          %v2290 = vmul.f32 %v1606, %v2266
          %v2315 = vrot.slane %v2267, 6
          %v2316 = vrot.slane %v2268, 6
          %v2317 = vsel %vm1506, %v2315, %v2316
          %v2318 = vrot.slane %v2269, 6
          %v2319 = vsel %vm1506, %v2316, %v2318
          %v2320 = vrot.slane %v2270, 6
          %v2321 = vrot.slane %v2271, 6
          %v2322 = vsel %vm1506, %v2320, %v2321
          %v2323 = vrot.slane %v2272, 6
          %v2324 = vsel %vm1506, %v2321, %v2323
          %v2325 = vrot.slane %v2273, 6
          %v2326 = vrot.slane %v2274, 6
          %v2327 = vsel %vm1506, %v2325, %v2326
          %v2328 = vrot.slane %v2275, 6
          %v2329 = vsel %vm1506, %v2326, %v2328
          %v2330 = vrot.slane %v2276, 6
          %v2331 = vrot.slane %v2277, 6
          %v2332 = vsel %vm1506, %v2330, %v2331
          %v2333 = vrot.slane %v2278, 6
          %v2334 = vsel %vm1506, %v2331, %v2333
          %v2335 = vrot.slane %v2279, 6
          %v2336 = vrot.slane %v2280, 6
          %v2337 = vsel %vm1506, %v2335, %v2336
          %v2338 = vrot.slane %v2281, 6
          %v2339 = vsel %vm1506, %v2336, %v2338
          %v2340 = vrot.slane %v2282, 6
          %v2341 = vrot.slane %v2283, 6
          %v2342 = vsel %vm1506, %v2340, %v2341
          %v2343 = vrot.slane %v2284, 6
          %v2344 = vsel %vm1506, %v2341, %v2343
          %v2345 = vrot.slane %v2285, 6
          %v2346 = vrot.slane %v2286, 6
          %v2347 = vsel %vm1506, %v2345, %v2346
          %v2348 = vrot.slane %v2287, 6
          %v2349 = vsel %vm1506, %v2346, %v2348
          %v2350 = vrot.slane %v2288, 6
          %v2351 = vrot.slane %v2289, 6
          %v2352 = vsel %vm1506, %v2350, %v2351
          %v2353 = vrot.slane %v2290, 6
          %v2354 = vsel %vm1506, %v2351, %v2353
          %v2371 = vadd.f32 %v2247, %v2317
          %v2372 = vadd.f32 %v2248, %v2319
          %v2373 = vadd.f32 %v2249, %v2322
          %v2374 = vadd.f32 %v2250, %v2324
          %v2375 = vadd.f32 %v2251, %v2327
          %v2376 = vadd.f32 %v2252, %v2329
          %v2377 = vadd.f32 %v2253, %v2332
          %v2378 = vadd.f32 %v2254, %v2334
          %v2379 = vadd.f32 %v2255, %v2337
          %v2380 = vadd.f32 %v2256, %v2339
          %v2381 = vadd.f32 %v2257, %v2342
          %v2382 = vadd.f32 %v2258, %v2344
          %v2383 = vadd.f32 %v2259, %v2347
          %v2384 = vadd.f32 %v2260, %v2349
          %v2385 = vadd.f32 %v2261, %v2352
          %v2386 = vadd.f32 %v2262, %v2354
          %s2387 = sadd.s32 %s764, 2
          %s2388 = smul.u32 %s2387, 24
          %s2389 = sadd.s32 %s2388, %s766
          %s2390 = scalar_lea.vmem [#allocation2], %s2389
          %v2391 = vld [vmem:[%s2390] sm:$0xff]
          %v2392 = vld [vmem:[%s2390 + $0x8] sm:$0xff]
          %v2393 = vld [vmem:[%s2390 + $0x10] sm:$0x3f]
          %v2394 = vld [vmem:[%s2390 + $0x18] sm:$0xff]
          %v2395 = vld [vmem:[%s2390 + $0x20] sm:$0xff]
          %v2396 = vld [vmem:[%s2390 + $0x28] sm:$0x3f]
          %v2397 = vld [vmem:[%s2390 + $0x30] sm:$0xff]
          %v2398 = vld [vmem:[%s2390 + $0x38] sm:$0xff]
          %v2399 = vld [vmem:[%s2390 + $0x40] sm:$0x3f]
          %v2400 = vld [vmem:[%s2390 + $0x48] sm:$0xff]
          %v2401 = vld [vmem:[%s2390 + $0x50] sm:$0xff]
          %v2402 = vld [vmem:[%s2390 + $0x58] sm:$0x3f]
          %v2403 = vld [vmem:[%s2390 + $0x60] sm:$0xff]
          %v2404 = vld [vmem:[%s2390 + $0x68] sm:$0xff]
          %v2405 = vld [vmem:[%s2390 + $0x70] sm:$0x3f]
          %v2406 = vld [vmem:[%s2390 + $0x78] sm:$0xff]
          %v2407 = vld [vmem:[%s2390 + $0x80] sm:$0xff]
          %v2408 = vld [vmem:[%s2390 + $0x88] sm:$0x3f]
          %v2409 = vld [vmem:[%s2390 + $0x90] sm:$0xff]
          %v2410 = vld [vmem:[%s2390 + $0x98] sm:$0xff]
          %v2411 = vld [vmem:[%s2390 + $0xa0] sm:$0x3f]
          %v2412 = vld [vmem:[%s2390 + $0xa8] sm:$0xff]
          %v2413 = vld [vmem:[%s2390 + $0xb0] sm:$0xff]
          %v2414 = vld [vmem:[%s2390 + $0xb8] sm:$0x3f]
          %v2415 = vlaneseq
          %v2416 = vshrl.u32 %v2415, 7
          %v2417 = vsub.s32 6, %v2416
          %v2418 = vrot.slane %v492, %v2417
          %v2419 = vmul.f32 %v2391, %v2418
          %v2420 = vmul.f32 %v2392, %v2418
          %v2421 = vmul.f32 %v2394, %v2418
          %v2422 = vmul.f32 %v2395, %v2418
          %v2423 = vmul.f32 %v2397, %v2418
          %v2424 = vmul.f32 %v2398, %v2418
          %v2425 = vmul.f32 %v2400, %v2418
          %v2426 = vmul.f32 %v2401, %v2418
          %v2427 = vmul.f32 %v2403, %v2418
          %v2428 = vmul.f32 %v2404, %v2418
          %v2429 = vmul.f32 %v2406, %v2418
          %v2430 = vmul.f32 %v2407, %v2418
          %v2431 = vmul.f32 %v2409, %v2418
          %v2432 = vmul.f32 %v2410, %v2418
          %v2433 = vmul.f32 %v2412, %v2418
          %v2434 = vmul.f32 %v2413, %v2418
          %v2435 = vadd.f32 %v2371, %v2419
          %v2436 = vadd.f32 %v2372, %v2420
          %v2437 = vadd.f32 %v2373, %v2421
          %v2438 = vadd.f32 %v2374, %v2422
          %v2439 = vadd.f32 %v2375, %v2423
          %v2440 = vadd.f32 %v2376, %v2424
          %v2441 = vadd.f32 %v2377, %v2425
          %v2442 = vadd.f32 %v2378, %v2426
          %v2443 = vadd.f32 %v2379, %v2427
          %v2444 = vadd.f32 %v2380, %v2428
          %v2445 = vadd.f32 %v2381, %v2429
          %v2446 = vadd.f32 %v2382, %v2430
          %v2447 = vadd.f32 %v2383, %v2431
          %v2448 = vadd.f32 %v2384, %v2432
          %v2449 = vadd.f32 %v2385, %v2433
          %v2450 = vadd.f32 %v2386, %v2434
          %v2451 = vlaneseq
          %v2452 = vshrl.u32 %v2451, 7
          %v2453 = vsub.s32 7, %v2452
          %v2454 = vrot.slane %v492, %v2453
          %v2455 = vmul.f32 %v2391, %v2454
          %v2456 = vmul.f32 %v2392, %v2454
          %v2457 = vmul.f32 %v2393, %v2454
          %v2458 = vmul.f32 %v2394, %v2454
          %v2459 = vmul.f32 %v2395, %v2454
          %v2460 = vmul.f32 %v2396, %v2454
          %v2461 = vmul.f32 %v2397, %v2454
          %v2462 = vmul.f32 %v2398, %v2454
          %v2463 = vmul.f32 %v2399, %v2454
          %v2464 = vmul.f32 %v2400, %v2454
          %v2465 = vmul.f32 %v2401, %v2454
          %v2466 = vmul.f32 %v2402, %v2454
          %v2467 = vmul.f32 %v2403, %v2454
          %v2468 = vmul.f32 %v2404, %v2454
          %v2469 = vmul.f32 %v2405, %v2454
          %v2470 = vmul.f32 %v2406, %v2454
          %v2471 = vmul.f32 %v2407, %v2454
          %v2472 = vmul.f32 %v2408, %v2454
          %v2473 = vmul.f32 %v2409, %v2454
          %v2474 = vmul.f32 %v2410, %v2454
          %v2475 = vmul.f32 %v2411, %v2454
          %v2476 = vmul.f32 %v2412, %v2454
          %v2477 = vmul.f32 %v2413, %v2454
          %v2478 = vmul.f32 %v2414, %v2454
          %v2503 = vrot.slane %v2455, 1
          %v2504 = vrot.slane %v2456, 1
          %v2505 = vsel %vm881, %v2503, %v2504
          %v2506 = vrot.slane %v2457, 1
          %v2507 = vsel %vm881, %v2504, %v2506
          %v2508 = vrot.slane %v2458, 1
          %v2509 = vrot.slane %v2459, 1
          %v2510 = vsel %vm881, %v2508, %v2509
          %v2511 = vrot.slane %v2460, 1
          %v2512 = vsel %vm881, %v2509, %v2511
          %v2513 = vrot.slane %v2461, 1
          %v2514 = vrot.slane %v2462, 1
          %v2515 = vsel %vm881, %v2513, %v2514
          %v2516 = vrot.slane %v2463, 1
          %v2517 = vsel %vm881, %v2514, %v2516
          %v2518 = vrot.slane %v2464, 1
          %v2519 = vrot.slane %v2465, 1
          %v2520 = vsel %vm881, %v2518, %v2519
          %v2521 = vrot.slane %v2466, 1
          %v2522 = vsel %vm881, %v2519, %v2521
          %v2523 = vrot.slane %v2467, 1
          %v2524 = vrot.slane %v2468, 1
          %v2525 = vsel %vm881, %v2523, %v2524
          %v2526 = vrot.slane %v2469, 1
          %v2527 = vsel %vm881, %v2524, %v2526
          %v2528 = vrot.slane %v2470, 1
          %v2529 = vrot.slane %v2471, 1
          %v2530 = vsel %vm881, %v2528, %v2529
          %v2531 = vrot.slane %v2472, 1
          %v2532 = vsel %vm881, %v2529, %v2531
          %v2533 = vrot.slane %v2473, 1
          %v2534 = vrot.slane %v2474, 1
          %v2535 = vsel %vm881, %v2533, %v2534
          %v2536 = vrot.slane %v2475, 1
          %v2537 = vsel %vm881, %v2534, %v2536
          %v2538 = vrot.slane %v2476, 1
          %v2539 = vrot.slane %v2477, 1
          %v2540 = vsel %vm881, %v2538, %v2539
          %v2541 = vrot.slane %v2478, 1
          %v2542 = vsel %vm881, %v2539, %v2541
          %v2559 = vadd.f32 %v2435, %v2505
          %v2560 = vadd.f32 %v2436, %v2507
          %v2561 = vadd.f32 %v2437, %v2510
          %v2562 = vadd.f32 %v2438, %v2512
          %v2563 = vadd.f32 %v2439, %v2515
          %v2564 = vadd.f32 %v2440, %v2517
          %v2565 = vadd.f32 %v2441, %v2520
          %v2566 = vadd.f32 %v2442, %v2522
          %v2567 = vadd.f32 %v2443, %v2525
          %v2568 = vadd.f32 %v2444, %v2527
          %v2569 = vadd.f32 %v2445, %v2530
          %v2570 = vadd.f32 %v2446, %v2532
          %v2571 = vadd.f32 %v2447, %v2535
          %v2572 = vadd.f32 %v2448, %v2537
          %v2573 = vadd.f32 %v2449, %v2540
          %v2574 = vadd.f32 %v2450, %v2542
          %v2575 = vlaneseq
          %v2576 = vshrl.u32 %v2575, 7
          %v2577 = vsub.s32 0, %v2576
          %v2578 = vrot.slane %v493, %v2577
          %v2579 = vmul.f32 %v2391, %v2578
          %v2580 = vmul.f32 %v2392, %v2578
          %v2581 = vmul.f32 %v2393, %v2578
          %v2582 = vmul.f32 %v2394, %v2578
          %v2583 = vmul.f32 %v2395, %v2578
          %v2584 = vmul.f32 %v2396, %v2578
          %v2585 = vmul.f32 %v2397, %v2578
          %v2586 = vmul.f32 %v2398, %v2578
          %v2587 = vmul.f32 %v2399, %v2578
          %v2588 = vmul.f32 %v2400, %v2578
          %v2589 = vmul.f32 %v2401, %v2578
          %v2590 = vmul.f32 %v2402, %v2578
          %v2591 = vmul.f32 %v2403, %v2578
          %v2592 = vmul.f32 %v2404, %v2578
          %v2593 = vmul.f32 %v2405, %v2578
          %v2594 = vmul.f32 %v2406, %v2578
          %v2595 = vmul.f32 %v2407, %v2578
          %v2596 = vmul.f32 %v2408, %v2578
          %v2597 = vmul.f32 %v2409, %v2578
          %v2598 = vmul.f32 %v2410, %v2578
          %v2599 = vmul.f32 %v2411, %v2578
          %v2600 = vmul.f32 %v2412, %v2578
          %v2601 = vmul.f32 %v2413, %v2578
          %v2602 = vmul.f32 %v2414, %v2578
          %v2627 = vrot.slane %v2579, 2
          %v2628 = vrot.slane %v2580, 2
          %v2629 = vsel %vm1006, %v2627, %v2628
          %v2630 = vrot.slane %v2581, 2
          %v2631 = vsel %vm1006, %v2628, %v2630
          %v2632 = vrot.slane %v2582, 2
          %v2633 = vrot.slane %v2583, 2
          %v2634 = vsel %vm1006, %v2632, %v2633
          %v2635 = vrot.slane %v2584, 2
          %v2636 = vsel %vm1006, %v2633, %v2635
          %v2637 = vrot.slane %v2585, 2
          %v2638 = vrot.slane %v2586, 2
          %v2639 = vsel %vm1006, %v2637, %v2638
          %v2640 = vrot.slane %v2587, 2
          %v2641 = vsel %vm1006, %v2638, %v2640
          %v2642 = vrot.slane %v2588, 2
          %v2643 = vrot.slane %v2589, 2
          %v2644 = vsel %vm1006, %v2642, %v2643
          %v2645 = vrot.slane %v2590, 2
          %v2646 = vsel %vm1006, %v2643, %v2645
          %v2647 = vrot.slane %v2591, 2
          %v2648 = vrot.slane %v2592, 2
          %v2649 = vsel %vm1006, %v2647, %v2648
          %v2650 = vrot.slane %v2593, 2
          %v2651 = vsel %vm1006, %v2648, %v2650
          %v2652 = vrot.slane %v2594, 2
          %v2653 = vrot.slane %v2595, 2
          %v2654 = vsel %vm1006, %v2652, %v2653
          %v2655 = vrot.slane %v2596, 2
          %v2656 = vsel %vm1006, %v2653, %v2655
          %v2657 = vrot.slane %v2597, 2
          %v2658 = vrot.slane %v2598, 2
          %v2659 = vsel %vm1006, %v2657, %v2658
          %v2660 = vrot.slane %v2599, 2
          %v2661 = vsel %vm1006, %v2658, %v2660
          %v2662 = vrot.slane %v2600, 2
          %v2663 = vrot.slane %v2601, 2
          %v2664 = vsel %vm1006, %v2662, %v2663
          %v2665 = vrot.slane %v2602, 2
          %v2666 = vsel %vm1006, %v2663, %v2665
          %v2683 = vadd.f32 %v2559, %v2629
          %v2684 = vadd.f32 %v2560, %v2631
          %v2685 = vadd.f32 %v2561, %v2634
          %v2686 = vadd.f32 %v2562, %v2636
          %v2687 = vadd.f32 %v2563, %v2639
          %v2688 = vadd.f32 %v2564, %v2641
          %v2689 = vadd.f32 %v2565, %v2644
          %v2690 = vadd.f32 %v2566, %v2646
          %v2691 = vadd.f32 %v2567, %v2649
          %v2692 = vadd.f32 %v2568, %v2651
          %v2693 = vadd.f32 %v2569, %v2654
          %v2694 = vadd.f32 %v2570, %v2656
          %v2695 = vadd.f32 %v2571, %v2659
          %v2696 = vadd.f32 %v2572, %v2661
          %v2697 = vadd.f32 %v2573, %v2664
          %v2698 = vadd.f32 %v2574, %v2666
          %v2699 = vlaneseq
          %v2700 = vshrl.u32 %v2699, 7
          %v2701 = vsub.s32 1, %v2700
          %v2702 = vrot.slane %v493, %v2701
          %v2703 = vmul.f32 %v2391, %v2702
          %v2704 = vmul.f32 %v2392, %v2702
          %v2705 = vmul.f32 %v2393, %v2702
          %v2706 = vmul.f32 %v2394, %v2702
          %v2707 = vmul.f32 %v2395, %v2702
          %v2708 = vmul.f32 %v2396, %v2702
          %v2709 = vmul.f32 %v2397, %v2702
          %v2710 = vmul.f32 %v2398, %v2702
          %v2711 = vmul.f32 %v2399, %v2702
          %v2712 = vmul.f32 %v2400, %v2702
          %v2713 = vmul.f32 %v2401, %v2702
          %v2714 = vmul.f32 %v2402, %v2702
          %v2715 = vmul.f32 %v2403, %v2702
          %v2716 = vmul.f32 %v2404, %v2702
          %v2717 = vmul.f32 %v2405, %v2702
          %v2718 = vmul.f32 %v2406, %v2702
          %v2719 = vmul.f32 %v2407, %v2702
          %v2720 = vmul.f32 %v2408, %v2702
          %v2721 = vmul.f32 %v2409, %v2702
          %v2722 = vmul.f32 %v2410, %v2702
          %v2723 = vmul.f32 %v2411, %v2702
          %v2724 = vmul.f32 %v2412, %v2702
          %v2725 = vmul.f32 %v2413, %v2702
          %v2726 = vmul.f32 %v2414, %v2702
          %v2751 = vrot.slane %v2703, 3
          %v2752 = vrot.slane %v2704, 3
          %v2753 = vsel %vm1131, %v2751, %v2752
          %v2754 = vrot.slane %v2705, 3
          %v2755 = vsel %vm1131, %v2752, %v2754
          %v2756 = vrot.slane %v2706, 3
          %v2757 = vrot.slane %v2707, 3
          %v2758 = vsel %vm1131, %v2756, %v2757
          %v2759 = vrot.slane %v2708, 3
          %v2760 = vsel %vm1131, %v2757, %v2759
          %v2761 = vrot.slane %v2709, 3
          %v2762 = vrot.slane %v2710, 3
          %v2763 = vsel %vm1131, %v2761, %v2762
          %v2764 = vrot.slane %v2711, 3
          %v2765 = vsel %vm1131, %v2762, %v2764
          %v2766 = vrot.slane %v2712, 3
          %v2767 = vrot.slane %v2713, 3
          %v2768 = vsel %vm1131, %v2766, %v2767
          %v2769 = vrot.slane %v2714, 3
          %v2770 = vsel %vm1131, %v2767, %v2769
          %v2771 = vrot.slane %v2715, 3
          %v2772 = vrot.slane %v2716, 3
          %v2773 = vsel %vm1131, %v2771, %v2772
          %v2774 = vrot.slane %v2717, 3
          %v2775 = vsel %vm1131, %v2772, %v2774
          %v2776 = vrot.slane %v2718, 3
          %v2777 = vrot.slane %v2719, 3
          %v2778 = vsel %vm1131, %v2776, %v2777
          %v2779 = vrot.slane %v2720, 3
          %v2780 = vsel %vm1131, %v2777, %v2779
          %v2781 = vrot.slane %v2721, 3
          %v2782 = vrot.slane %v2722, 3
          %v2783 = vsel %vm1131, %v2781, %v2782
          %v2784 = vrot.slane %v2723, 3
          %v2785 = vsel %vm1131, %v2782, %v2784
          %v2786 = vrot.slane %v2724, 3
          %v2787 = vrot.slane %v2725, 3
          %v2788 = vsel %vm1131, %v2786, %v2787
          %v2789 = vrot.slane %v2726, 3
          %v2790 = vsel %vm1131, %v2787, %v2789
          %v2807 = vadd.f32 %v2683, %v2753
          %v2808 = vadd.f32 %v2684, %v2755
          %v2809 = vadd.f32 %v2685, %v2758
          %v2810 = vadd.f32 %v2686, %v2760
          %v2811 = vadd.f32 %v2687, %v2763
          %v2812 = vadd.f32 %v2688, %v2765
          %v2813 = vadd.f32 %v2689, %v2768
          %v2814 = vadd.f32 %v2690, %v2770
          %v2815 = vadd.f32 %v2691, %v2773
          %v2816 = vadd.f32 %v2692, %v2775
          %v2817 = vadd.f32 %v2693, %v2778
          %v2818 = vadd.f32 %v2694, %v2780
          %v2819 = vadd.f32 %v2695, %v2783
          %v2820 = vadd.f32 %v2696, %v2785
          %v2821 = vadd.f32 %v2697, %v2788
          %v2822 = vadd.f32 %v2698, %v2790
          %v2823 = vlaneseq
          %v2824 = vshrl.u32 %v2823, 7
          %v2825 = vsub.s32 2, %v2824
          %v2826 = vrot.slane %v493, %v2825
          %v2827 = vmul.f32 %v2391, %v2826
          %v2828 = vmul.f32 %v2392, %v2826
          %v2829 = vmul.f32 %v2393, %v2826
          %v2830 = vmul.f32 %v2394, %v2826
          %v2831 = vmul.f32 %v2395, %v2826
          %v2832 = vmul.f32 %v2396, %v2826
          %v2833 = vmul.f32 %v2397, %v2826
          %v2834 = vmul.f32 %v2398, %v2826
          %v2835 = vmul.f32 %v2399, %v2826
          %v2836 = vmul.f32 %v2400, %v2826
          %v2837 = vmul.f32 %v2401, %v2826
          %v2838 = vmul.f32 %v2402, %v2826
          %v2839 = vmul.f32 %v2403, %v2826
          %v2840 = vmul.f32 %v2404, %v2826
          %v2841 = vmul.f32 %v2405, %v2826
          %v2842 = vmul.f32 %v2406, %v2826
          %v2843 = vmul.f32 %v2407, %v2826
          %v2844 = vmul.f32 %v2408, %v2826
          %v2845 = vmul.f32 %v2409, %v2826
          %v2846 = vmul.f32 %v2410, %v2826
          %v2847 = vmul.f32 %v2411, %v2826
          %v2848 = vmul.f32 %v2412, %v2826
          %v2849 = vmul.f32 %v2413, %v2826
          %v2850 = vmul.f32 %v2414, %v2826
          %v2875 = vrot.slane %v2827, 4
          %v2876 = vrot.slane %v2828, 4
          %v2877 = vsel %vm1256, %v2875, %v2876
          %v2878 = vrot.slane %v2829, 4
          %v2879 = vsel %vm1256, %v2876, %v2878
          %v2880 = vrot.slane %v2830, 4
          %v2881 = vrot.slane %v2831, 4
          %v2882 = vsel %vm1256, %v2880, %v2881
          %v2883 = vrot.slane %v2832, 4
          %v2884 = vsel %vm1256, %v2881, %v2883
          %v2885 = vrot.slane %v2833, 4
          %v2886 = vrot.slane %v2834, 4
          %v2887 = vsel %vm1256, %v2885, %v2886
          %v2888 = vrot.slane %v2835, 4
          %v2889 = vsel %vm1256, %v2886, %v2888
          %v2890 = vrot.slane %v2836, 4
          %v2891 = vrot.slane %v2837, 4
          %v2892 = vsel %vm1256, %v2890, %v2891
          %v2893 = vrot.slane %v2838, 4
          %v2894 = vsel %vm1256, %v2891, %v2893
          %v2895 = vrot.slane %v2839, 4
          %v2896 = vrot.slane %v2840, 4
          %v2897 = vsel %vm1256, %v2895, %v2896
          %v2898 = vrot.slane %v2841, 4
          %v2899 = vsel %vm1256, %v2896, %v2898
          %v2900 = vrot.slane %v2842, 4
          %v2901 = vrot.slane %v2843, 4
          %v2902 = vsel %vm1256, %v2900, %v2901
          %v2903 = vrot.slane %v2844, 4
          %v2904 = vsel %vm1256, %v2901, %v2903
          %v2905 = vrot.slane %v2845, 4
          %v2906 = vrot.slane %v2846, 4
          %v2907 = vsel %vm1256, %v2905, %v2906
          %v2908 = vrot.slane %v2847, 4
          %v2909 = vsel %vm1256, %v2906, %v2908
          %v2910 = vrot.slane %v2848, 4
          %v2911 = vrot.slane %v2849, 4
          %v2912 = vsel %vm1256, %v2910, %v2911
          %v2913 = vrot.slane %v2850, 4
          %v2914 = vsel %vm1256, %v2911, %v2913
          %v2931 = vadd.f32 %v2807, %v2877
          %v2932 = vadd.f32 %v2808, %v2879
          %v2933 = vadd.f32 %v2809, %v2882
          %v2934 = vadd.f32 %v2810, %v2884
          %v2935 = vadd.f32 %v2811, %v2887
          %v2936 = vadd.f32 %v2812, %v2889
          %v2937 = vadd.f32 %v2813, %v2892
          %v2938 = vadd.f32 %v2814, %v2894
          %v2939 = vadd.f32 %v2815, %v2897
          %v2940 = vadd.f32 %v2816, %v2899
          %v2941 = vadd.f32 %v2817, %v2902
          %v2942 = vadd.f32 %v2818, %v2904
          %v2943 = vadd.f32 %v2819, %v2907
          %v2944 = vadd.f32 %v2820, %v2909
          %v2945 = vadd.f32 %v2821, %v2912
          %v2946 = vadd.f32 %v2822, %v2914
          %v2947 = vlaneseq
          %v2948 = vshrl.u32 %v2947, 7
          %v2949 = vsub.s32 3, %v2948
          %v2950 = vrot.slane %v493, %v2949
          %v2951 = vmul.f32 %v2391, %v2950
          %v2952 = vmul.f32 %v2392, %v2950
          %v2953 = vmul.f32 %v2393, %v2950
          %v2954 = vmul.f32 %v2394, %v2950
          %v2955 = vmul.f32 %v2395, %v2950
          %v2956 = vmul.f32 %v2396, %v2950
          %v2957 = vmul.f32 %v2397, %v2950
          %v2958 = vmul.f32 %v2398, %v2950
          %v2959 = vmul.f32 %v2399, %v2950
          %v2960 = vmul.f32 %v2400, %v2950
          %v2961 = vmul.f32 %v2401, %v2950
          %v2962 = vmul.f32 %v2402, %v2950
          %v2963 = vmul.f32 %v2403, %v2950
          %v2964 = vmul.f32 %v2404, %v2950
          %v2965 = vmul.f32 %v2405, %v2950
          %v2966 = vmul.f32 %v2406, %v2950
          %v2967 = vmul.f32 %v2407, %v2950
          %v2968 = vmul.f32 %v2408, %v2950
          %v2969 = vmul.f32 %v2409, %v2950
          %v2970 = vmul.f32 %v2410, %v2950
          %v2971 = vmul.f32 %v2411, %v2950
          %v2972 = vmul.f32 %v2412, %v2950
          %v2973 = vmul.f32 %v2413, %v2950
          %v2974 = vmul.f32 %v2414, %v2950
          %v2999 = vrot.slane %v2951, 5
          %v3000 = vrot.slane %v2952, 5
          %v3001 = vsel %vm1381, %v2999, %v3000
          %v3002 = vrot.slane %v2953, 5
          %v3003 = vsel %vm1381, %v3000, %v3002
          %v3004 = vrot.slane %v2954, 5
          %v3005 = vrot.slane %v2955, 5
          %v3006 = vsel %vm1381, %v3004, %v3005
          %v3007 = vrot.slane %v2956, 5
          %v3008 = vsel %vm1381, %v3005, %v3007
          %v3009 = vrot.slane %v2957, 5
          %v3010 = vrot.slane %v2958, 5
          %v3011 = vsel %vm1381, %v3009, %v3010
          %v3012 = vrot.slane %v2959, 5
          %v3013 = vsel %vm1381, %v3010, %v3012
          %v3014 = vrot.slane %v2960, 5
          %v3015 = vrot.slane %v2961, 5
          %v3016 = vsel %vm1381, %v3014, %v3015
          %v3017 = vrot.slane %v2962, 5
          %v3018 = vsel %vm1381, %v3015, %v3017
          %v3019 = vrot.slane %v2963, 5
          %v3020 = vrot.slane %v2964, 5
          %v3021 = vsel %vm1381, %v3019, %v3020
          %v3022 = vrot.slane %v2965, 5
          %v3023 = vsel %vm1381, %v3020, %v3022
          %v3024 = vrot.slane %v2966, 5
          %v3025 = vrot.slane %v2967, 5
          %v3026 = vsel %vm1381, %v3024, %v3025
          %v3027 = vrot.slane %v2968, 5
          %v3028 = vsel %vm1381, %v3025, %v3027
          %v3029 = vrot.slane %v2969, 5
          %v3030 = vrot.slane %v2970, 5
          %v3031 = vsel %vm1381, %v3029, %v3030
          %v3032 = vrot.slane %v2971, 5
          %v3033 = vsel %vm1381, %v3030, %v3032
          %v3034 = vrot.slane %v2972, 5
          %v3035 = vrot.slane %v2973, 5
          %v3036 = vsel %vm1381, %v3034, %v3035
          %v3037 = vrot.slane %v2974, 5
          %v3038 = vsel %vm1381, %v3035, %v3037
          %v3055 = vadd.f32 %v2931, %v3001
          %v3056 = vadd.f32 %v2932, %v3003
          %v3057 = vadd.f32 %v2933, %v3006
          %v3058 = vadd.f32 %v2934, %v3008
          %v3059 = vadd.f32 %v2935, %v3011
          %v3060 = vadd.f32 %v2936, %v3013
          %v3061 = vadd.f32 %v2937, %v3016
          %v3062 = vadd.f32 %v2938, %v3018
          %v3063 = vadd.f32 %v2939, %v3021
          %v3064 = vadd.f32 %v2940, %v3023
          %v3065 = vadd.f32 %v2941, %v3026
          %v3066 = vadd.f32 %v2942, %v3028
          %v3067 = vadd.f32 %v2943, %v3031
          %v3068 = vadd.f32 %v2944, %v3033
          %v3069 = vadd.f32 %v2945, %v3036
          %v3070 = vadd.f32 %v2946, %v3038
          %v3071 = vlaneseq
          %v3072 = vshrl.u32 %v3071, 7
          %v3073 = vsub.s32 4, %v3072
          %v3074 = vrot.slane %v493, %v3073
          %v3075 = vmul.f32 %v2391, %v3074
          %v3076 = vmul.f32 %v2392, %v3074
          %v3077 = vmul.f32 %v2393, %v3074
          %v3078 = vmul.f32 %v2394, %v3074
          %v3079 = vmul.f32 %v2395, %v3074
          %v3080 = vmul.f32 %v2396, %v3074
          %v3081 = vmul.f32 %v2397, %v3074
          %v3082 = vmul.f32 %v2398, %v3074
          %v3083 = vmul.f32 %v2399, %v3074
          %v3084 = vmul.f32 %v2400, %v3074
          %v3085 = vmul.f32 %v2401, %v3074
          %v3086 = vmul.f32 %v2402, %v3074
          %v3087 = vmul.f32 %v2403, %v3074
          %v3088 = vmul.f32 %v2404, %v3074
          %v3089 = vmul.f32 %v2405, %v3074
          %v3090 = vmul.f32 %v2406, %v3074
          %v3091 = vmul.f32 %v2407, %v3074
          %v3092 = vmul.f32 %v2408, %v3074
          %v3093 = vmul.f32 %v2409, %v3074
          %v3094 = vmul.f32 %v2410, %v3074
          %v3095 = vmul.f32 %v2411, %v3074
          %v3096 = vmul.f32 %v2412, %v3074
          %v3097 = vmul.f32 %v2413, %v3074
          %v3098 = vmul.f32 %v2414, %v3074
          %v3123 = vrot.slane %v3075, 6
          %v3124 = vrot.slane %v3076, 6
          %v3125 = vsel %vm1506, %v3123, %v3124
          %v3126 = vrot.slane %v3077, 6
          %v3127 = vsel %vm1506, %v3124, %v3126
          %v3128 = vrot.slane %v3078, 6
          %v3129 = vrot.slane %v3079, 6
          %v3130 = vsel %vm1506, %v3128, %v3129
          %v3131 = vrot.slane %v3080, 6
          %v3132 = vsel %vm1506, %v3129, %v3131
          %v3133 = vrot.slane %v3081, 6
          %v3134 = vrot.slane %v3082, 6
          %v3135 = vsel %vm1506, %v3133, %v3134
          %v3136 = vrot.slane %v3083, 6
          %v3137 = vsel %vm1506, %v3134, %v3136
          %v3138 = vrot.slane %v3084, 6
          %v3139 = vrot.slane %v3085, 6
          %v3140 = vsel %vm1506, %v3138, %v3139
          %v3141 = vrot.slane %v3086, 6
          %v3142 = vsel %vm1506, %v3139, %v3141
          %v3143 = vrot.slane %v3087, 6
          %v3144 = vrot.slane %v3088, 6
          %v3145 = vsel %vm1506, %v3143, %v3144
          %v3146 = vrot.slane %v3089, 6
          %v3147 = vsel %vm1506, %v3144, %v3146
          %v3148 = vrot.slane %v3090, 6
          %v3149 = vrot.slane %v3091, 6
          %v3150 = vsel %vm1506, %v3148, %v3149
          %v3151 = vrot.slane %v3092, 6
          %v3152 = vsel %vm1506, %v3149, %v3151
          %v3153 = vrot.slane %v3093, 6
          %v3154 = vrot.slane %v3094, 6
          %v3155 = vsel %vm1506, %v3153, %v3154
          %v3156 = vrot.slane %v3095, 6
          %v3157 = vsel %vm1506, %v3154, %v3156
          %v3158 = vrot.slane %v3096, 6
          %v3159 = vrot.slane %v3097, 6
          %v3160 = vsel %vm1506, %v3158, %v3159
          %v3161 = vrot.slane %v3098, 6
          %v3162 = vsel %vm1506, %v3159, %v3161
          %v3179 = vadd.f32 %v3055, %v3125
          %v3180 = vadd.f32 %v3056, %v3127
          %v3181 = vadd.f32 %v3057, %v3130
          %v3182 = vadd.f32 %v3058, %v3132
          %v3183 = vadd.f32 %v3059, %v3135
          %v3184 = vadd.f32 %v3060, %v3137
          %v3185 = vadd.f32 %v3061, %v3140
          %v3186 = vadd.f32 %v3062, %v3142
          %v3187 = vadd.f32 %v3063, %v3145
          %v3188 = vadd.f32 %v3064, %v3147
          %v3189 = vadd.f32 %v3065, %v3150
          %v3190 = vadd.f32 %v3066, %v3152
          %v3191 = vadd.f32 %v3067, %v3155
          %v3192 = vadd.f32 %v3068, %v3157
          %v3193 = vadd.f32 %v3069, %v3160
          %v3194 = vadd.f32 %v3070, %v3162
          %s3195 = sadd.s32 %s764, 3
          %s3196 = smul.u32 %s3195, 24
          %s3197 = sadd.s32 %s3196, %s766
          %s3198 = scalar_lea.vmem [#allocation2], %s3197
          %v3199 = vld [vmem:[%s3198] sm:$0xff]
          %v3200 = vld [vmem:[%s3198 + $0x8] sm:$0xff]
          %v3201 = vld [vmem:[%s3198 + $0x10] sm:$0x3f]
          %v3202 = vld [vmem:[%s3198 + $0x18] sm:$0xff]
          %v3203 = vld [vmem:[%s3198 + $0x20] sm:$0xff]
          %v3204 = vld [vmem:[%s3198 + $0x28] sm:$0x3f]
          %v3205 = vld [vmem:[%s3198 + $0x30] sm:$0xff]
          %v3206 = vld [vmem:[%s3198 + $0x38] sm:$0xff]
          %v3207 = vld [vmem:[%s3198 + $0x40] sm:$0x3f]
          %v3208 = vld [vmem:[%s3198 + $0x48] sm:$0xff]
          %v3209 = vld [vmem:[%s3198 + $0x50] sm:$0xff]
          %v3210 = vld [vmem:[%s3198 + $0x58] sm:$0x3f]
          %v3211 = vld [vmem:[%s3198 + $0x60] sm:$0xff]
          %v3212 = vld [vmem:[%s3198 + $0x68] sm:$0xff]
          %v3213 = vld [vmem:[%s3198 + $0x70] sm:$0x3f]
          %v3214 = vld [vmem:[%s3198 + $0x78] sm:$0xff]
          %v3215 = vld [vmem:[%s3198 + $0x80] sm:$0xff]
          %v3216 = vld [vmem:[%s3198 + $0x88] sm:$0x3f]
          %v3217 = vld [vmem:[%s3198 + $0x90] sm:$0xff]
          %v3218 = vld [vmem:[%s3198 + $0x98] sm:$0xff]
          %v3219 = vld [vmem:[%s3198 + $0xa0] sm:$0x3f]
          %v3220 = vld [vmem:[%s3198 + $0xa8] sm:$0xff]
          %v3221 = vld [vmem:[%s3198 + $0xb0] sm:$0xff]
          %v3222 = vld [vmem:[%s3198 + $0xb8] sm:$0x3f]
          %v3223 = vlaneseq
          %v3224 = vshrl.u32 %v3223, 7
          %v3225 = vsub.s32 5, %v3224
          %v3226 = vrot.slane %v493, %v3225
          %v3227 = vmul.f32 %v3199, %v3226
          %v3228 = vmul.f32 %v3200, %v3226
          %v3229 = vmul.f32 %v3202, %v3226
          %v3230 = vmul.f32 %v3203, %v3226
          %v3231 = vmul.f32 %v3205, %v3226
          %v3232 = vmul.f32 %v3206, %v3226
          %v3233 = vmul.f32 %v3208, %v3226
          %v3234 = vmul.f32 %v3209, %v3226
          %v3235 = vmul.f32 %v3211, %v3226
          %v3236 = vmul.f32 %v3212, %v3226
          %v3237 = vmul.f32 %v3214, %v3226
          %v3238 = vmul.f32 %v3215, %v3226
          %v3239 = vmul.f32 %v3217, %v3226
          %v3240 = vmul.f32 %v3218, %v3226
          %v3241 = vmul.f32 %v3220, %v3226
          %v3242 = vmul.f32 %v3221, %v3226
          %v3243 = vadd.f32 %v3179, %v3227
          %v3244 = vadd.f32 %v3180, %v3228
          %v3245 = vadd.f32 %v3181, %v3229
          %v3246 = vadd.f32 %v3182, %v3230
          %v3247 = vadd.f32 %v3183, %v3231
          %v3248 = vadd.f32 %v3184, %v3232
          %v3249 = vadd.f32 %v3185, %v3233
          %v3250 = vadd.f32 %v3186, %v3234
          %v3251 = vadd.f32 %v3187, %v3235
          %v3252 = vadd.f32 %v3188, %v3236
          %v3253 = vadd.f32 %v3189, %v3237
          %v3254 = vadd.f32 %v3190, %v3238
          %v3255 = vadd.f32 %v3191, %v3239
          %v3256 = vadd.f32 %v3192, %v3240
          %v3257 = vadd.f32 %v3193, %v3241
          %v3258 = vadd.f32 %v3194, %v3242
          %v3259 = vlaneseq
          %v3260 = vshrl.u32 %v3259, 7
          %v3261 = vsub.s32 6, %v3260
          %v3262 = vrot.slane %v493, %v3261
          %v3263 = vmul.f32 %v3199, %v3262
          %v3264 = vmul.f32 %v3200, %v3262
          %v3265 = vmul.f32 %v3201, %v3262
          %v3266 = vmul.f32 %v3202, %v3262
          %v3267 = vmul.f32 %v3203, %v3262
          %v3268 = vmul.f32 %v3204, %v3262
          %v3269 = vmul.f32 %v3205, %v3262
          %v3270 = vmul.f32 %v3206, %v3262
          %v3271 = vmul.f32 %v3207, %v3262
          %v3272 = vmul.f32 %v3208, %v3262
          %v3273 = vmul.f32 %v3209, %v3262
          %v3274 = vmul.f32 %v3210, %v3262
          %v3275 = vmul.f32 %v3211, %v3262
          %v3276 = vmul.f32 %v3212, %v3262
          %v3277 = vmul.f32 %v3213, %v3262
          %v3278 = vmul.f32 %v3214, %v3262
          %v3279 = vmul.f32 %v3215, %v3262
          %v3280 = vmul.f32 %v3216, %v3262
          %v3281 = vmul.f32 %v3217, %v3262
          %v3282 = vmul.f32 %v3218, %v3262
          %v3283 = vmul.f32 %v3219, %v3262
          %v3284 = vmul.f32 %v3220, %v3262
          %v3285 = vmul.f32 %v3221, %v3262
          %v3286 = vmul.f32 %v3222, %v3262
          %v3311 = vrot.slane %v3263, 1
          %v3312 = vrot.slane %v3264, 1
          %v3313 = vsel %vm881, %v3311, %v3312
          %v3314 = vrot.slane %v3265, 1
          %v3315 = vsel %vm881, %v3312, %v3314
          %v3316 = vrot.slane %v3266, 1
          %v3317 = vrot.slane %v3267, 1
          %v3318 = vsel %vm881, %v3316, %v3317
          %v3319 = vrot.slane %v3268, 1
          %v3320 = vsel %vm881, %v3317, %v3319
          %v3321 = vrot.slane %v3269, 1
          %v3322 = vrot.slane %v3270, 1
          %v3323 = vsel %vm881, %v3321, %v3322
          %v3324 = vrot.slane %v3271, 1
          %v3325 = vsel %vm881, %v3322, %v3324
          %v3326 = vrot.slane %v3272, 1
          %v3327 = vrot.slane %v3273, 1
          %v3328 = vsel %vm881, %v3326, %v3327
          %v3329 = vrot.slane %v3274, 1
          %v3330 = vsel %vm881, %v3327, %v3329
          %v3331 = vrot.slane %v3275, 1
          %v3332 = vrot.slane %v3276, 1
          %v3333 = vsel %vm881, %v3331, %v3332
          %v3334 = vrot.slane %v3277, 1
          %v3335 = vsel %vm881, %v3332, %v3334
          %v3336 = vrot.slane %v3278, 1
          %v3337 = vrot.slane %v3279, 1
          %v3338 = vsel %vm881, %v3336, %v3337
          %v3339 = vrot.slane %v3280, 1
          %v3340 = vsel %vm881, %v3337, %v3339
          %v3341 = vrot.slane %v3281, 1
          %v3342 = vrot.slane %v3282, 1
          %v3343 = vsel %vm881, %v3341, %v3342
          %v3344 = vrot.slane %v3283, 1
          %v3345 = vsel %vm881, %v3342, %v3344
          %v3346 = vrot.slane %v3284, 1
          %v3347 = vrot.slane %v3285, 1
          %v3348 = vsel %vm881, %v3346, %v3347
          %v3349 = vrot.slane %v3286, 1
          %v3350 = vsel %vm881, %v3347, %v3349
          %v3367 = vadd.f32 %v3243, %v3313
          %v3368 = vadd.f32 %v3244, %v3315
          %v3369 = vadd.f32 %v3245, %v3318
          %v3370 = vadd.f32 %v3246, %v3320
          %v3371 = vadd.f32 %v3247, %v3323
          %v3372 = vadd.f32 %v3248, %v3325
          %v3373 = vadd.f32 %v3249, %v3328
          %v3374 = vadd.f32 %v3250, %v3330
          %v3375 = vadd.f32 %v3251, %v3333
          %v3376 = vadd.f32 %v3252, %v3335
          %v3377 = vadd.f32 %v3253, %v3338
          %v3378 = vadd.f32 %v3254, %v3340
          %v3379 = vadd.f32 %v3255, %v3343
          %v3380 = vadd.f32 %v3256, %v3345
          %v3381 = vadd.f32 %v3257, %v3348
          %v3382 = vadd.f32 %v3258, %v3350
          %v3383 = vlaneseq
          %v3384 = vshrl.u32 %v3383, 7
          %v3385 = vsub.s32 7, %v3384
          %v3386 = vrot.slane %v493, %v3385
          %v3387 = vmul.f32 %v3199, %v3386
          %v3388 = vmul.f32 %v3200, %v3386
          %v3389 = vmul.f32 %v3201, %v3386
          %v3390 = vmul.f32 %v3202, %v3386
          %v3391 = vmul.f32 %v3203, %v3386
          %v3392 = vmul.f32 %v3204, %v3386
          %v3393 = vmul.f32 %v3205, %v3386
          %v3394 = vmul.f32 %v3206, %v3386
          %v3395 = vmul.f32 %v3207, %v3386
          %v3396 = vmul.f32 %v3208, %v3386
          %v3397 = vmul.f32 %v3209, %v3386
          %v3398 = vmul.f32 %v3210, %v3386
          %v3399 = vmul.f32 %v3211, %v3386
          %v3400 = vmul.f32 %v3212, %v3386
          %v3401 = vmul.f32 %v3213, %v3386
          %v3402 = vmul.f32 %v3214, %v3386
          %v3403 = vmul.f32 %v3215, %v3386
          %v3404 = vmul.f32 %v3216, %v3386
          %v3405 = vmul.f32 %v3217, %v3386
          %v3406 = vmul.f32 %v3218, %v3386
          %v3407 = vmul.f32 %v3219, %v3386
          %v3408 = vmul.f32 %v3220, %v3386
          %v3409 = vmul.f32 %v3221, %v3386
          %v3410 = vmul.f32 %v3222, %v3386
          %v3435 = vrot.slane %v3387, 2
          %v3436 = vrot.slane %v3388, 2
          %v3437 = vsel %vm1006, %v3435, %v3436
          %v3438 = vrot.slane %v3389, 2
          %v3439 = vsel %vm1006, %v3436, %v3438
          %v3440 = vrot.slane %v3390, 2
          %v3441 = vrot.slane %v3391, 2
          %v3442 = vsel %vm1006, %v3440, %v3441
          %v3443 = vrot.slane %v3392, 2
          %v3444 = vsel %vm1006, %v3441, %v3443
          %v3445 = vrot.slane %v3393, 2
          %v3446 = vrot.slane %v3394, 2
          %v3447 = vsel %vm1006, %v3445, %v3446
          %v3448 = vrot.slane %v3395, 2
          %v3449 = vsel %vm1006, %v3446, %v3448
          %v3450 = vrot.slane %v3396, 2
          %v3451 = vrot.slane %v3397, 2
          %v3452 = vsel %vm1006, %v3450, %v3451
          %v3453 = vrot.slane %v3398, 2
          %v3454 = vsel %vm1006, %v3451, %v3453
          %v3455 = vrot.slane %v3399, 2
          %v3456 = vrot.slane %v3400, 2
          %v3457 = vsel %vm1006, %v3455, %v3456
          %v3458 = vrot.slane %v3401, 2
          %v3459 = vsel %vm1006, %v3456, %v3458
          %v3460 = vrot.slane %v3402, 2
          %v3461 = vrot.slane %v3403, 2
          %v3462 = vsel %vm1006, %v3460, %v3461
          %v3463 = vrot.slane %v3404, 2
          %v3464 = vsel %vm1006, %v3461, %v3463
          %v3465 = vrot.slane %v3405, 2
          %v3466 = vrot.slane %v3406, 2
          %v3467 = vsel %vm1006, %v3465, %v3466
          %v3468 = vrot.slane %v3407, 2
          %v3469 = vsel %vm1006, %v3466, %v3468
          %v3470 = vrot.slane %v3408, 2
          %v3471 = vrot.slane %v3409, 2
          %v3472 = vsel %vm1006, %v3470, %v3471
          %v3473 = vrot.slane %v3410, 2
          %v3474 = vsel %vm1006, %v3471, %v3473
          %v3491 = vadd.f32 %v3367, %v3437
          %v3492 = vadd.f32 %v3368, %v3439
          %v3493 = vadd.f32 %v3369, %v3442
          %v3494 = vadd.f32 %v3370, %v3444
          %v3495 = vadd.f32 %v3371, %v3447
          %v3496 = vadd.f32 %v3372, %v3449
          %v3497 = vadd.f32 %v3373, %v3452
          %v3498 = vadd.f32 %v3374, %v3454
          %v3499 = vadd.f32 %v3375, %v3457
          %v3500 = vadd.f32 %v3376, %v3459
          %v3501 = vadd.f32 %v3377, %v3462
          %v3502 = vadd.f32 %v3378, %v3464
          %v3503 = vadd.f32 %v3379, %v3467
          %v3504 = vadd.f32 %v3380, %v3469
          %v3505 = vadd.f32 %v3381, %v3472
          %v3506 = vadd.f32 %v3382, %v3474
          %v3507 = vlaneseq
          %v3508 = vshrl.u32 %v3507, 7
          %v3509 = vsub.s32 0, %v3508
          %v3510 = vrot.slane %v494, %v3509
          %v3511 = vmul.f32 %v3199, %v3510
          %v3512 = vmul.f32 %v3200, %v3510
          %v3513 = vmul.f32 %v3201, %v3510
          %v3514 = vmul.f32 %v3202, %v3510
          %v3515 = vmul.f32 %v3203, %v3510
          %v3516 = vmul.f32 %v3204, %v3510
          %v3517 = vmul.f32 %v3205, %v3510
          %v3518 = vmul.f32 %v3206, %v3510
          %v3519 = vmul.f32 %v3207, %v3510
          %v3520 = vmul.f32 %v3208, %v3510
          %v3521 = vmul.f32 %v3209, %v3510
          %v3522 = vmul.f32 %v3210, %v3510
          %v3523 = vmul.f32 %v3211, %v3510
          %v3524 = vmul.f32 %v3212, %v3510
          %v3525 = vmul.f32 %v3213, %v3510
          %v3526 = vmul.f32 %v3214, %v3510
          %v3527 = vmul.f32 %v3215, %v3510
          %v3528 = vmul.f32 %v3216, %v3510
          %v3529 = vmul.f32 %v3217, %v3510
          %v3530 = vmul.f32 %v3218, %v3510
          %v3531 = vmul.f32 %v3219, %v3510
          %v3532 = vmul.f32 %v3220, %v3510
          %v3533 = vmul.f32 %v3221, %v3510
          %v3534 = vmul.f32 %v3222, %v3510
          %v3559 = vrot.slane %v3511, 3
          %v3560 = vrot.slane %v3512, 3
          %v3561 = vsel %vm1131, %v3559, %v3560
          %v3562 = vrot.slane %v3513, 3
          %v3563 = vsel %vm1131, %v3560, %v3562
          %v3564 = vrot.slane %v3514, 3
          %v3565 = vrot.slane %v3515, 3
          %v3566 = vsel %vm1131, %v3564, %v3565
          %v3567 = vrot.slane %v3516, 3
          %v3568 = vsel %vm1131, %v3565, %v3567
          %v3569 = vrot.slane %v3517, 3
          %v3570 = vrot.slane %v3518, 3
          %v3571 = vsel %vm1131, %v3569, %v3570
          %v3572 = vrot.slane %v3519, 3
          %v3573 = vsel %vm1131, %v3570, %v3572
          %v3574 = vrot.slane %v3520, 3
          %v3575 = vrot.slane %v3521, 3
          %v3576 = vsel %vm1131, %v3574, %v3575
          %v3577 = vrot.slane %v3522, 3
          %v3578 = vsel %vm1131, %v3575, %v3577
          %v3579 = vrot.slane %v3523, 3
          %v3580 = vrot.slane %v3524, 3
          %v3581 = vsel %vm1131, %v3579, %v3580
          %v3582 = vrot.slane %v3525, 3
          %v3583 = vsel %vm1131, %v3580, %v3582
          %v3584 = vrot.slane %v3526, 3
          %v3585 = vrot.slane %v3527, 3
          %v3586 = vsel %vm1131, %v3584, %v3585
          %v3587 = vrot.slane %v3528, 3
          %v3588 = vsel %vm1131, %v3585, %v3587
          %v3589 = vrot.slane %v3529, 3
          %v3590 = vrot.slane %v3530, 3
          %v3591 = vsel %vm1131, %v3589, %v3590
          %v3592 = vrot.slane %v3531, 3
          %v3593 = vsel %vm1131, %v3590, %v3592
          %v3594 = vrot.slane %v3532, 3
          %v3595 = vrot.slane %v3533, 3
          %v3596 = vsel %vm1131, %v3594, %v3595
          %v3597 = vrot.slane %v3534, 3
          %v3598 = vsel %vm1131, %v3595, %v3597
          %v3615 = vadd.f32 %v3491, %v3561
          %v3616 = vadd.f32 %v3492, %v3563
          %v3617 = vadd.f32 %v3493, %v3566
          %v3618 = vadd.f32 %v3494, %v3568
          %v3619 = vadd.f32 %v3495, %v3571
          %v3620 = vadd.f32 %v3496, %v3573
          %v3621 = vadd.f32 %v3497, %v3576
          %v3622 = vadd.f32 %v3498, %v3578
          %v3623 = vadd.f32 %v3499, %v3581
          %v3624 = vadd.f32 %v3500, %v3583
          %v3625 = vadd.f32 %v3501, %v3586
          %v3626 = vadd.f32 %v3502, %v3588
          %v3627 = vadd.f32 %v3503, %v3591
          %v3628 = vadd.f32 %v3504, %v3593
          %v3629 = vadd.f32 %v3505, %v3596
          %v3630 = vadd.f32 %v3506, %v3598
          %v3631 = vlaneseq
          %v3632 = vshrl.u32 %v3631, 7
          %v3633 = vsub.s32 1, %v3632
          %v3634 = vrot.slane %v494, %v3633
          %v3635 = vmul.f32 %v3199, %v3634
          %v3636 = vmul.f32 %v3200, %v3634
          %v3637 = vmul.f32 %v3201, %v3634
          %v3638 = vmul.f32 %v3202, %v3634
          %v3639 = vmul.f32 %v3203, %v3634
          %v3640 = vmul.f32 %v3204, %v3634
          %v3641 = vmul.f32 %v3205, %v3634
          %v3642 = vmul.f32 %v3206, %v3634
          %v3643 = vmul.f32 %v3207, %v3634
          %v3644 = vmul.f32 %v3208, %v3634
          %v3645 = vmul.f32 %v3209, %v3634
          %v3646 = vmul.f32 %v3210, %v3634
          %v3647 = vmul.f32 %v3211, %v3634
          %v3648 = vmul.f32 %v3212, %v3634
          %v3649 = vmul.f32 %v3213, %v3634
          %v3650 = vmul.f32 %v3214, %v3634
          %v3651 = vmul.f32 %v3215, %v3634
          %v3652 = vmul.f32 %v3216, %v3634
          %v3653 = vmul.f32 %v3217, %v3634
          %v3654 = vmul.f32 %v3218, %v3634
          %v3655 = vmul.f32 %v3219, %v3634
          %v3656 = vmul.f32 %v3220, %v3634
          %v3657 = vmul.f32 %v3221, %v3634
          %v3658 = vmul.f32 %v3222, %v3634
          %v3683 = vrot.slane %v3635, 4
          %v3684 = vrot.slane %v3636, 4
          %v3685 = vsel %vm1256, %v3683, %v3684
          %v3686 = vrot.slane %v3637, 4
          %v3687 = vsel %vm1256, %v3684, %v3686
          %v3688 = vrot.slane %v3638, 4
          %v3689 = vrot.slane %v3639, 4
          %v3690 = vsel %vm1256, %v3688, %v3689
          %v3691 = vrot.slane %v3640, 4
          %v3692 = vsel %vm1256, %v3689, %v3691
          %v3693 = vrot.slane %v3641, 4
          %v3694 = vrot.slane %v3642, 4
          %v3695 = vsel %vm1256, %v3693, %v3694
          %v3696 = vrot.slane %v3643, 4
          %v3697 = vsel %vm1256, %v3694, %v3696
          %v3698 = vrot.slane %v3644, 4
          %v3699 = vrot.slane %v3645, 4
          %v3700 = vsel %vm1256, %v3698, %v3699
          %v3701 = vrot.slane %v3646, 4
          %v3702 = vsel %vm1256, %v3699, %v3701
          %v3703 = vrot.slane %v3647, 4
          %v3704 = vrot.slane %v3648, 4
          %v3705 = vsel %vm1256, %v3703, %v3704
          %v3706 = vrot.slane %v3649, 4
          %v3707 = vsel %vm1256, %v3704, %v3706
          %v3708 = vrot.slane %v3650, 4
          %v3709 = vrot.slane %v3651, 4
          %v3710 = vsel %vm1256, %v3708, %v3709
          %v3711 = vrot.slane %v3652, 4
          %v3712 = vsel %vm1256, %v3709, %v3711
          %v3713 = vrot.slane %v3653, 4
          %v3714 = vrot.slane %v3654, 4
          %v3715 = vsel %vm1256, %v3713, %v3714
          %v3716 = vrot.slane %v3655, 4
          %v3717 = vsel %vm1256, %v3714, %v3716
          %v3718 = vrot.slane %v3656, 4
          %v3719 = vrot.slane %v3657, 4
          %v3720 = vsel %vm1256, %v3718, %v3719
          %v3721 = vrot.slane %v3658, 4
          %v3722 = vsel %vm1256, %v3719, %v3721
          %v3739 = vadd.f32 %v3615, %v3685
          %v3740 = vadd.f32 %v3616, %v3687
          %v3741 = vadd.f32 %v3617, %v3690
          %v3742 = vadd.f32 %v3618, %v3692
          %v3743 = vadd.f32 %v3619, %v3695
          %v3744 = vadd.f32 %v3620, %v3697
          %v3745 = vadd.f32 %v3621, %v3700
          %v3746 = vadd.f32 %v3622, %v3702
          %v3747 = vadd.f32 %v3623, %v3705
          %v3748 = vadd.f32 %v3624, %v3707
          %v3749 = vadd.f32 %v3625, %v3710
          %v3750 = vadd.f32 %v3626, %v3712
          %v3751 = vadd.f32 %v3627, %v3715
          %v3752 = vadd.f32 %v3628, %v3717
          %v3753 = vadd.f32 %v3629, %v3720
          %v3754 = vadd.f32 %v3630, %v3722
          %v3755 = vlaneseq
          %v3756 = vshrl.u32 %v3755, 7
          %v3757 = vsub.s32 2, %v3756
          %v3758 = vrot.slane %v494, %v3757
          %v3759 = vmul.f32 %v3199, %v3758
          %v3760 = vmul.f32 %v3200, %v3758
          %v3761 = vmul.f32 %v3201, %v3758
          %v3762 = vmul.f32 %v3202, %v3758
          %v3763 = vmul.f32 %v3203, %v3758
          %v3764 = vmul.f32 %v3204, %v3758
          %v3765 = vmul.f32 %v3205, %v3758
          %v3766 = vmul.f32 %v3206, %v3758
          %v3767 = vmul.f32 %v3207, %v3758
          %v3768 = vmul.f32 %v3208, %v3758
          %v3769 = vmul.f32 %v3209, %v3758
          %v3770 = vmul.f32 %v3210, %v3758
          %v3771 = vmul.f32 %v3211, %v3758
          %v3772 = vmul.f32 %v3212, %v3758
          %v3773 = vmul.f32 %v3213, %v3758
          %v3774 = vmul.f32 %v3214, %v3758
          %v3775 = vmul.f32 %v3215, %v3758
          %v3776 = vmul.f32 %v3216, %v3758
          %v3777 = vmul.f32 %v3217, %v3758
          %v3778 = vmul.f32 %v3218, %v3758
          %v3779 = vmul.f32 %v3219, %v3758
          %v3780 = vmul.f32 %v3220, %v3758
          %v3781 = vmul.f32 %v3221, %v3758
          %v3782 = vmul.f32 %v3222, %v3758
          %v3807 = vrot.slane %v3759, 5
          %v3808 = vrot.slane %v3760, 5
          %v3809 = vsel %vm1381, %v3807, %v3808
          %v3810 = vrot.slane %v3761, 5
          %v3811 = vsel %vm1381, %v3808, %v3810
          %v3812 = vrot.slane %v3762, 5
          %v3813 = vrot.slane %v3763, 5
          %v3814 = vsel %vm1381, %v3812, %v3813
          %v3815 = vrot.slane %v3764, 5
          %v3816 = vsel %vm1381, %v3813, %v3815
          %v3817 = vrot.slane %v3765, 5
          %v3818 = vrot.slane %v3766, 5
          %v3819 = vsel %vm1381, %v3817, %v3818
          %v3820 = vrot.slane %v3767, 5
          %v3821 = vsel %vm1381, %v3818, %v3820
          %v3822 = vrot.slane %v3768, 5
          %v3823 = vrot.slane %v3769, 5
          %v3824 = vsel %vm1381, %v3822, %v3823
          %v3825 = vrot.slane %v3770, 5
          %v3826 = vsel %vm1381, %v3823, %v3825
          %v3827 = vrot.slane %v3771, 5
          %v3828 = vrot.slane %v3772, 5
          %v3829 = vsel %vm1381, %v3827, %v3828
          %v3830 = vrot.slane %v3773, 5
          %v3831 = vsel %vm1381, %v3828, %v3830
          %v3832 = vrot.slane %v3774, 5
          %v3833 = vrot.slane %v3775, 5
          %v3834 = vsel %vm1381, %v3832, %v3833
          %v3835 = vrot.slane %v3776, 5
          %v3836 = vsel %vm1381, %v3833, %v3835
          %v3837 = vrot.slane %v3777, 5
          %v3838 = vrot.slane %v3778, 5
          %v3839 = vsel %vm1381, %v3837, %v3838
          %v3840 = vrot.slane %v3779, 5
          %v3841 = vsel %vm1381, %v3838, %v3840
          %v3842 = vrot.slane %v3780, 5
          %v3843 = vrot.slane %v3781, 5
          %v3844 = vsel %vm1381, %v3842, %v3843
          %v3845 = vrot.slane %v3782, 5
          %v3846 = vsel %vm1381, %v3843, %v3845
          %v3863 = vadd.f32 %v3739, %v3809
          %v3864 = vadd.f32 %v3740, %v3811
          %v3865 = vadd.f32 %v3741, %v3814
          %v3866 = vadd.f32 %v3742, %v3816
          %v3867 = vadd.f32 %v3743, %v3819
          %v3868 = vadd.f32 %v3744, %v3821
          %v3869 = vadd.f32 %v3745, %v3824
          %v3870 = vadd.f32 %v3746, %v3826
          %v3871 = vadd.f32 %v3747, %v3829
          %v3872 = vadd.f32 %v3748, %v3831
          %v3873 = vadd.f32 %v3749, %v3834
          %v3874 = vadd.f32 %v3750, %v3836
          %v3875 = vadd.f32 %v3751, %v3839
          %v3876 = vadd.f32 %v3752, %v3841
          %v3877 = vadd.f32 %v3753, %v3844
          %v3878 = vadd.f32 %v3754, %v3846
          %v3879 = vlaneseq
          %v3880 = vshrl.u32 %v3879, 7
          %v3881 = vsub.s32 3, %v3880
          %v3882 = vrot.slane %v494, %v3881
          %v3883 = vmul.f32 %v3199, %v3882
          %v3884 = vmul.f32 %v3200, %v3882
          %v3885 = vmul.f32 %v3201, %v3882
          %v3886 = vmul.f32 %v3202, %v3882
          %v3887 = vmul.f32 %v3203, %v3882
          %v3888 = vmul.f32 %v3204, %v3882
          %v3889 = vmul.f32 %v3205, %v3882
          %v3890 = vmul.f32 %v3206, %v3882
          %v3891 = vmul.f32 %v3207, %v3882
          %v3892 = vmul.f32 %v3208, %v3882
          %v3893 = vmul.f32 %v3209, %v3882
          %v3894 = vmul.f32 %v3210, %v3882
          %v3895 = vmul.f32 %v3211, %v3882
          %v3896 = vmul.f32 %v3212, %v3882
          %v3897 = vmul.f32 %v3213, %v3882
          %v3898 = vmul.f32 %v3214, %v3882
          %v3899 = vmul.f32 %v3215, %v3882
          %v3900 = vmul.f32 %v3216, %v3882
          %v3901 = vmul.f32 %v3217, %v3882
          %v3902 = vmul.f32 %v3218, %v3882
          %v3903 = vmul.f32 %v3219, %v3882
          %v3904 = vmul.f32 %v3220, %v3882
          %v3905 = vmul.f32 %v3221, %v3882
          %v3906 = vmul.f32 %v3222, %v3882
          %v3931 = vrot.slane %v3883, 6
          %v3932 = vrot.slane %v3884, 6
          %v3933 = vsel %vm1506, %v3931, %v3932
          %v3934 = vrot.slane %v3885, 6
          %v3935 = vsel %vm1506, %v3932, %v3934
          %v3936 = vrot.slane %v3886, 6
          %v3937 = vrot.slane %v3887, 6
          %v3938 = vsel %vm1506, %v3936, %v3937
          %v3939 = vrot.slane %v3888, 6
          %v3940 = vsel %vm1506, %v3937, %v3939
          %v3941 = vrot.slane %v3889, 6
          %v3942 = vrot.slane %v3890, 6
          %v3943 = vsel %vm1506, %v3941, %v3942
          %v3944 = vrot.slane %v3891, 6
          %v3945 = vsel %vm1506, %v3942, %v3944
          %v3946 = vrot.slane %v3892, 6
          %v3947 = vrot.slane %v3893, 6
          %v3948 = vsel %vm1506, %v3946, %v3947
          %v3949 = vrot.slane %v3894, 6
          %v3950 = vsel %vm1506, %v3947, %v3949
          %v3951 = vrot.slane %v3895, 6
          %v3952 = vrot.slane %v3896, 6
          %v3953 = vsel %vm1506, %v3951, %v3952
          %v3954 = vrot.slane %v3897, 6
          %v3955 = vsel %vm1506, %v3952, %v3954
          %v3956 = vrot.slane %v3898, 6
          %v3957 = vrot.slane %v3899, 6
          %v3958 = vsel %vm1506, %v3956, %v3957
          %v3959 = vrot.slane %v3900, 6
          %v3960 = vsel %vm1506, %v3957, %v3959
          %v3961 = vrot.slane %v3901, 6
          %v3962 = vrot.slane %v3902, 6
          %v3963 = vsel %vm1506, %v3961, %v3962
          %v3964 = vrot.slane %v3903, 6
          %v3965 = vsel %vm1506, %v3962, %v3964
          %v3966 = vrot.slane %v3904, 6
          %v3967 = vrot.slane %v3905, 6
          %v3968 = vsel %vm1506, %v3966, %v3967
          %v3969 = vrot.slane %v3906, 6
          %v3970 = vsel %vm1506, %v3967, %v3969
          %v3987 = vadd.f32 %v3863, %v3933
          %v3988 = vadd.f32 %v3864, %v3935
          %v3989 = vadd.f32 %v3865, %v3938
          %v3990 = vadd.f32 %v3866, %v3940
          %v3991 = vadd.f32 %v3867, %v3943
          %v3992 = vadd.f32 %v3868, %v3945
          %v3993 = vadd.f32 %v3869, %v3948
          %v3994 = vadd.f32 %v3870, %v3950
          %v3995 = vadd.f32 %v3871, %v3953
          %v3996 = vadd.f32 %v3872, %v3955
          %v3997 = vadd.f32 %v3873, %v3958
          %v3998 = vadd.f32 %v3874, %v3960
          %v3999 = vadd.f32 %v3875, %v3963
          %v4000 = vadd.f32 %v3876, %v3965
          %v4001 = vadd.f32 %v3877, %v3968
          %v4002 = vadd.f32 %v3878, %v3970
          %s4003 = sadd.s32 %s764, 4
          %s4004 = smul.u32 %s4003, 24
          %s4005 = sadd.s32 %s4004, %s766
          %s4006 = scalar_lea.vmem [#allocation2], %s4005
          %v4007 = vld [vmem:[%s4006] sm:$0xff]
          %v4008 = vld [vmem:[%s4006 + $0x8] sm:$0xff]
          %v4009 = vld [vmem:[%s4006 + $0x10] sm:$0x3f]
          %v4010 = vld [vmem:[%s4006 + $0x18] sm:$0xff]
          %v4011 = vld [vmem:[%s4006 + $0x20] sm:$0xff]
          %v4012 = vld [vmem:[%s4006 + $0x28] sm:$0x3f]
          %v4013 = vld [vmem:[%s4006 + $0x30] sm:$0xff]
          %v4014 = vld [vmem:[%s4006 + $0x38] sm:$0xff]
          %v4015 = vld [vmem:[%s4006 + $0x40] sm:$0x3f]
          %v4016 = vld [vmem:[%s4006 + $0x48] sm:$0xff]
          %v4017 = vld [vmem:[%s4006 + $0x50] sm:$0xff]
          %v4018 = vld [vmem:[%s4006 + $0x58] sm:$0x3f]
          %v4019 = vld [vmem:[%s4006 + $0x60] sm:$0xff]
          %v4020 = vld [vmem:[%s4006 + $0x68] sm:$0xff]
          %v4021 = vld [vmem:[%s4006 + $0x70] sm:$0x3f]
          %v4022 = vld [vmem:[%s4006 + $0x78] sm:$0xff]
          %v4023 = vld [vmem:[%s4006 + $0x80] sm:$0xff]
          %v4024 = vld [vmem:[%s4006 + $0x88] sm:$0x3f]
          %v4025 = vld [vmem:[%s4006 + $0x90] sm:$0xff]
          %v4026 = vld [vmem:[%s4006 + $0x98] sm:$0xff]
          %v4027 = vld [vmem:[%s4006 + $0xa0] sm:$0x3f]
          %v4028 = vld [vmem:[%s4006 + $0xa8] sm:$0xff]
          %v4029 = vld [vmem:[%s4006 + $0xb0] sm:$0xff]
          %v4030 = vld [vmem:[%s4006 + $0xb8] sm:$0x3f]
          %v4031 = vlaneseq
          %v4032 = vshrl.u32 %v4031, 7
          %v4033 = vsub.s32 4, %v4032
          %v4034 = vrot.slane %v494, %v4033
          %v4035 = vmul.f32 %v4007, %v4034
          %v4036 = vmul.f32 %v4008, %v4034
          %v4037 = vmul.f32 %v4010, %v4034
          %v4038 = vmul.f32 %v4011, %v4034
          %v4039 = vmul.f32 %v4013, %v4034
          %v4040 = vmul.f32 %v4014, %v4034
          %v4041 = vmul.f32 %v4016, %v4034
          %v4042 = vmul.f32 %v4017, %v4034
          %v4043 = vmul.f32 %v4019, %v4034
          %v4044 = vmul.f32 %v4020, %v4034
          %v4045 = vmul.f32 %v4022, %v4034
          %v4046 = vmul.f32 %v4023, %v4034
          %v4047 = vmul.f32 %v4025, %v4034
          %v4048 = vmul.f32 %v4026, %v4034
          %v4049 = vmul.f32 %v4028, %v4034
          %v4050 = vmul.f32 %v4029, %v4034
          %v4051 = vadd.f32 %v3987, %v4035
          %v4052 = vadd.f32 %v3988, %v4036
          %v4053 = vadd.f32 %v3989, %v4037
          %v4054 = vadd.f32 %v3990, %v4038
          %v4055 = vadd.f32 %v3991, %v4039
          %v4056 = vadd.f32 %v3992, %v4040
          %v4057 = vadd.f32 %v3993, %v4041
          %v4058 = vadd.f32 %v3994, %v4042
          %v4059 = vadd.f32 %v3995, %v4043
          %v4060 = vadd.f32 %v3996, %v4044
          %v4061 = vadd.f32 %v3997, %v4045
          %v4062 = vadd.f32 %v3998, %v4046
          %v4063 = vadd.f32 %v3999, %v4047
          %v4064 = vadd.f32 %v4000, %v4048
          %v4065 = vadd.f32 %v4001, %v4049
          %v4066 = vadd.f32 %v4002, %v4050
          %v4067 = vlaneseq
          %v4068 = vshrl.u32 %v4067, 7
          %v4069 = vsub.s32 5, %v4068
          %v4070 = vrot.slane %v494, %v4069
          %v4071 = vmul.f32 %v4007, %v4070
          %v4072 = vmul.f32 %v4008, %v4070
          %v4073 = vmul.f32 %v4009, %v4070
          %v4074 = vmul.f32 %v4010, %v4070
          %v4075 = vmul.f32 %v4011, %v4070
          %v4076 = vmul.f32 %v4012, %v4070
          %v4077 = vmul.f32 %v4013, %v4070
          %v4078 = vmul.f32 %v4014, %v4070
          %v4079 = vmul.f32 %v4015, %v4070
          %v4080 = vmul.f32 %v4016, %v4070
          %v4081 = vmul.f32 %v4017, %v4070
          %v4082 = vmul.f32 %v4018, %v4070
          %v4083 = vmul.f32 %v4019, %v4070
          %v4084 = vmul.f32 %v4020, %v4070
          %v4085 = vmul.f32 %v4021, %v4070
          %v4086 = vmul.f32 %v4022, %v4070
          %v4087 = vmul.f32 %v4023, %v4070
          %v4088 = vmul.f32 %v4024, %v4070
          %v4089 = vmul.f32 %v4025, %v4070
          %v4090 = vmul.f32 %v4026, %v4070
          %v4091 = vmul.f32 %v4027, %v4070
          %v4092 = vmul.f32 %v4028, %v4070
          %v4093 = vmul.f32 %v4029, %v4070
          %v4094 = vmul.f32 %v4030, %v4070
          %v4119 = vrot.slane %v4071, 1
          %v4120 = vrot.slane %v4072, 1
          %v4121 = vsel %vm881, %v4119, %v4120
          %v4122 = vrot.slane %v4073, 1
          %v4123 = vsel %vm881, %v4120, %v4122
          %v4124 = vrot.slane %v4074, 1
          %v4125 = vrot.slane %v4075, 1
          %v4126 = vsel %vm881, %v4124, %v4125
          %v4127 = vrot.slane %v4076, 1
          %v4128 = vsel %vm881, %v4125, %v4127
          %v4129 = vrot.slane %v4077, 1
          %v4130 = vrot.slane %v4078, 1
          %v4131 = vsel %vm881, %v4129, %v4130
          %v4132 = vrot.slane %v4079, 1
          %v4133 = vsel %vm881, %v4130, %v4132
          %v4134 = vrot.slane %v4080, 1
          %v4135 = vrot.slane %v4081, 1
          %v4136 = vsel %vm881, %v4134, %v4135
          %v4137 = vrot.slane %v4082, 1
          %v4138 = vsel %vm881, %v4135, %v4137
          %v4139 = vrot.slane %v4083, 1
          %v4140 = vrot.slane %v4084, 1
          %v4141 = vsel %vm881, %v4139, %v4140
          %v4142 = vrot.slane %v4085, 1
          %v4143 = vsel %vm881, %v4140, %v4142
          %v4144 = vrot.slane %v4086, 1
          %v4145 = vrot.slane %v4087, 1
          %v4146 = vsel %vm881, %v4144, %v4145
          %v4147 = vrot.slane %v4088, 1
          %v4148 = vsel %vm881, %v4145, %v4147
          %v4149 = vrot.slane %v4089, 1
          %v4150 = vrot.slane %v4090, 1
          %v4151 = vsel %vm881, %v4149, %v4150
          %v4152 = vrot.slane %v4091, 1
          %v4153 = vsel %vm881, %v4150, %v4152
          %v4154 = vrot.slane %v4092, 1
          %v4155 = vrot.slane %v4093, 1
          %v4156 = vsel %vm881, %v4154, %v4155
          %v4157 = vrot.slane %v4094, 1
          %v4158 = vsel %vm881, %v4155, %v4157
          %v4175 = vadd.f32 %v4051, %v4121
          %v4176 = vadd.f32 %v4052, %v4123
          %v4177 = vadd.f32 %v4053, %v4126
          %v4178 = vadd.f32 %v4054, %v4128
          %v4179 = vadd.f32 %v4055, %v4131
          %v4180 = vadd.f32 %v4056, %v4133
          %v4181 = vadd.f32 %v4057, %v4136
          %v4182 = vadd.f32 %v4058, %v4138
          %v4183 = vadd.f32 %v4059, %v4141
          %v4184 = vadd.f32 %v4060, %v4143
          %v4185 = vadd.f32 %v4061, %v4146
          %v4186 = vadd.f32 %v4062, %v4148
          %v4187 = vadd.f32 %v4063, %v4151
          %v4188 = vadd.f32 %v4064, %v4153
          %v4189 = vadd.f32 %v4065, %v4156
          %v4190 = vadd.f32 %v4066, %v4158
          %v4191 = vlaneseq
          %v4192 = vshrl.u32 %v4191, 7
          %v4193 = vsub.s32 6, %v4192
          %v4194 = vrot.slane %v494, %v4193
          %v4195 = vmul.f32 %v4007, %v4194
          %v4196 = vmul.f32 %v4008, %v4194
          %v4197 = vmul.f32 %v4009, %v4194
          %v4198 = vmul.f32 %v4010, %v4194
          %v4199 = vmul.f32 %v4011, %v4194
          %v4200 = vmul.f32 %v4012, %v4194
          %v4201 = vmul.f32 %v4013, %v4194
          %v4202 = vmul.f32 %v4014, %v4194
          %v4203 = vmul.f32 %v4015, %v4194
          %v4204 = vmul.f32 %v4016, %v4194
          %v4205 = vmul.f32 %v4017, %v4194
          %v4206 = vmul.f32 %v4018, %v4194
          %v4207 = vmul.f32 %v4019, %v4194
          %v4208 = vmul.f32 %v4020, %v4194
          %v4209 = vmul.f32 %v4021, %v4194
          %v4210 = vmul.f32 %v4022, %v4194
          %v4211 = vmul.f32 %v4023, %v4194
          %v4212 = vmul.f32 %v4024, %v4194
          %v4213 = vmul.f32 %v4025, %v4194
          %v4214 = vmul.f32 %v4026, %v4194
          %v4215 = vmul.f32 %v4027, %v4194
          %v4216 = vmul.f32 %v4028, %v4194
          %v4217 = vmul.f32 %v4029, %v4194
          %v4218 = vmul.f32 %v4030, %v4194
          %v4243 = vrot.slane %v4195, 2
          %v4244 = vrot.slane %v4196, 2
          %v4245 = vsel %vm1006, %v4243, %v4244
          %v4246 = vrot.slane %v4197, 2
          %v4247 = vsel %vm1006, %v4244, %v4246
          %v4248 = vrot.slane %v4198, 2
          %v4249 = vrot.slane %v4199, 2
          %v4250 = vsel %vm1006, %v4248, %v4249
          %v4251 = vrot.slane %v4200, 2
          %v4252 = vsel %vm1006, %v4249, %v4251
          %v4253 = vrot.slane %v4201, 2
          %v4254 = vrot.slane %v4202, 2
          %v4255 = vsel %vm1006, %v4253, %v4254
          %v4256 = vrot.slane %v4203, 2
          %v4257 = vsel %vm1006, %v4254, %v4256
          %v4258 = vrot.slane %v4204, 2
          %v4259 = vrot.slane %v4205, 2
          %v4260 = vsel %vm1006, %v4258, %v4259
          %v4261 = vrot.slane %v4206, 2
          %v4262 = vsel %vm1006, %v4259, %v4261
          %v4263 = vrot.slane %v4207, 2
          %v4264 = vrot.slane %v4208, 2
          %v4265 = vsel %vm1006, %v4263, %v4264
          %v4266 = vrot.slane %v4209, 2
          %v4267 = vsel %vm1006, %v4264, %v4266
          %v4268 = vrot.slane %v4210, 2
          %v4269 = vrot.slane %v4211, 2
          %v4270 = vsel %vm1006, %v4268, %v4269
          %v4271 = vrot.slane %v4212, 2
          %v4272 = vsel %vm1006, %v4269, %v4271
          %v4273 = vrot.slane %v4213, 2
          %v4274 = vrot.slane %v4214, 2
          %v4275 = vsel %vm1006, %v4273, %v4274
          %v4276 = vrot.slane %v4215, 2
          %v4277 = vsel %vm1006, %v4274, %v4276
          %v4278 = vrot.slane %v4216, 2
          %v4279 = vrot.slane %v4217, 2
          %v4280 = vsel %vm1006, %v4278, %v4279
          %v4281 = vrot.slane %v4218, 2
          %v4282 = vsel %vm1006, %v4279, %v4281
          %v4299 = vadd.f32 %v4175, %v4245
          %v4300 = vadd.f32 %v4176, %v4247
          %v4301 = vadd.f32 %v4177, %v4250
          %v4302 = vadd.f32 %v4178, %v4252
          %v4303 = vadd.f32 %v4179, %v4255
          %v4304 = vadd.f32 %v4180, %v4257
          %v4305 = vadd.f32 %v4181, %v4260
          %v4306 = vadd.f32 %v4182, %v4262
          %v4307 = vadd.f32 %v4183, %v4265
          %v4308 = vadd.f32 %v4184, %v4267
          %v4309 = vadd.f32 %v4185, %v4270
          %v4310 = vadd.f32 %v4186, %v4272
          %v4311 = vadd.f32 %v4187, %v4275
          %v4312 = vadd.f32 %v4188, %v4277
          %v4313 = vadd.f32 %v4189, %v4280
          %v4314 = vadd.f32 %v4190, %v4282
          %v4315 = vlaneseq
          %v4316 = vshrl.u32 %v4315, 7
          %v4317 = vsub.s32 7, %v4316
          %v4318 = vrot.slane %v494, %v4317
          %v4319 = vmul.f32 %v4007, %v4318
          %v4320 = vmul.f32 %v4008, %v4318
          %v4321 = vmul.f32 %v4009, %v4318
          %v4322 = vmul.f32 %v4010, %v4318
          %v4323 = vmul.f32 %v4011, %v4318
          %v4324 = vmul.f32 %v4012, %v4318
          %v4325 = vmul.f32 %v4013, %v4318
          %v4326 = vmul.f32 %v4014, %v4318
          %v4327 = vmul.f32 %v4015, %v4318
          %v4328 = vmul.f32 %v4016, %v4318
          %v4329 = vmul.f32 %v4017, %v4318
          %v4330 = vmul.f32 %v4018, %v4318
          %v4331 = vmul.f32 %v4019, %v4318
          %v4332 = vmul.f32 %v4020, %v4318
          %v4333 = vmul.f32 %v4021, %v4318
          %v4334 = vmul.f32 %v4022, %v4318
          %v4335 = vmul.f32 %v4023, %v4318
          %v4336 = vmul.f32 %v4024, %v4318
          %v4337 = vmul.f32 %v4025, %v4318
          %v4338 = vmul.f32 %v4026, %v4318
          %v4339 = vmul.f32 %v4027, %v4318
          %v4340 = vmul.f32 %v4028, %v4318
          %v4341 = vmul.f32 %v4029, %v4318
          %v4342 = vmul.f32 %v4030, %v4318
          %v4367 = vrot.slane %v4319, 3
          %v4368 = vrot.slane %v4320, 3
          %v4369 = vsel %vm1131, %v4367, %v4368
          %v4370 = vrot.slane %v4321, 3
          %v4371 = vsel %vm1131, %v4368, %v4370
          %v4372 = vrot.slane %v4322, 3
          %v4373 = vrot.slane %v4323, 3
          %v4374 = vsel %vm1131, %v4372, %v4373
          %v4375 = vrot.slane %v4324, 3
          %v4376 = vsel %vm1131, %v4373, %v4375
          %v4377 = vrot.slane %v4325, 3
          %v4378 = vrot.slane %v4326, 3
          %v4379 = vsel %vm1131, %v4377, %v4378
          %v4380 = vrot.slane %v4327, 3
          %v4381 = vsel %vm1131, %v4378, %v4380
          %v4382 = vrot.slane %v4328, 3
          %v4383 = vrot.slane %v4329, 3
          %v4384 = vsel %vm1131, %v4382, %v4383
          %v4385 = vrot.slane %v4330, 3
          %v4386 = vsel %vm1131, %v4383, %v4385
          %v4387 = vrot.slane %v4331, 3
          %v4388 = vrot.slane %v4332, 3
          %v4389 = vsel %vm1131, %v4387, %v4388
          %v4390 = vrot.slane %v4333, 3
          %v4391 = vsel %vm1131, %v4388, %v4390
          %v4392 = vrot.slane %v4334, 3
          %v4393 = vrot.slane %v4335, 3
          %v4394 = vsel %vm1131, %v4392, %v4393
          %v4395 = vrot.slane %v4336, 3
          %v4396 = vsel %vm1131, %v4393, %v4395
          %v4397 = vrot.slane %v4337, 3
          %v4398 = vrot.slane %v4338, 3
          %v4399 = vsel %vm1131, %v4397, %v4398
          %v4400 = vrot.slane %v4339, 3
          %v4401 = vsel %vm1131, %v4398, %v4400
          %v4402 = vrot.slane %v4340, 3
          %v4403 = vrot.slane %v4341, 3
          %v4404 = vsel %vm1131, %v4402, %v4403
          %v4405 = vrot.slane %v4342, 3
          %v4406 = vsel %vm1131, %v4403, %v4405
          %v4423 = vadd.f32 %v4299, %v4369
          %v4424 = vadd.f32 %v4300, %v4371
          %v4425 = vadd.f32 %v4301, %v4374
          %v4426 = vadd.f32 %v4302, %v4376
          %v4427 = vadd.f32 %v4303, %v4379
          %v4428 = vadd.f32 %v4304, %v4381
          %v4429 = vadd.f32 %v4305, %v4384
          %v4430 = vadd.f32 %v4306, %v4386
          %v4431 = vadd.f32 %v4307, %v4389
          %v4432 = vadd.f32 %v4308, %v4391
          %v4433 = vadd.f32 %v4309, %v4394
          %v4434 = vadd.f32 %v4310, %v4396
          %v4435 = vadd.f32 %v4311, %v4399
          %v4436 = vadd.f32 %v4312, %v4401
          %v4437 = vadd.f32 %v4313, %v4404
          %v4438 = vadd.f32 %v4314, %v4406
          %v4439 = vlaneseq
          %v4440 = vshrl.u32 %v4439, 7
          %v4441 = vsub.s32 0, %v4440
          %v4442 = vrot.slane %v495, %v4441
          %v4443 = vmul.f32 %v4007, %v4442
          %v4444 = vmul.f32 %v4008, %v4442
          %v4445 = vmul.f32 %v4009, %v4442
          %v4446 = vmul.f32 %v4010, %v4442
          %v4447 = vmul.f32 %v4011, %v4442
          %v4448 = vmul.f32 %v4012, %v4442
          %v4449 = vmul.f32 %v4013, %v4442
          %v4450 = vmul.f32 %v4014, %v4442
          %v4451 = vmul.f32 %v4015, %v4442
          %v4452 = vmul.f32 %v4016, %v4442
          %v4453 = vmul.f32 %v4017, %v4442
          %v4454 = vmul.f32 %v4018, %v4442
          %v4455 = vmul.f32 %v4019, %v4442
          %v4456 = vmul.f32 %v4020, %v4442
          %v4457 = vmul.f32 %v4021, %v4442
          %v4458 = vmul.f32 %v4022, %v4442
          %v4459 = vmul.f32 %v4023, %v4442
          %v4460 = vmul.f32 %v4024, %v4442
          %v4461 = vmul.f32 %v4025, %v4442
          %v4462 = vmul.f32 %v4026, %v4442
          %v4463 = vmul.f32 %v4027, %v4442
          %v4464 = vmul.f32 %v4028, %v4442
          %v4465 = vmul.f32 %v4029, %v4442
          %v4466 = vmul.f32 %v4030, %v4442
          %v4491 = vrot.slane %v4443, 4
          %v4492 = vrot.slane %v4444, 4
          %v4493 = vsel %vm1256, %v4491, %v4492
          %v4494 = vrot.slane %v4445, 4
          %v4495 = vsel %vm1256, %v4492, %v4494
          %v4496 = vrot.slane %v4446, 4
          %v4497 = vrot.slane %v4447, 4
          %v4498 = vsel %vm1256, %v4496, %v4497
          %v4499 = vrot.slane %v4448, 4
          %v4500 = vsel %vm1256, %v4497, %v4499
          %v4501 = vrot.slane %v4449, 4
          %v4502 = vrot.slane %v4450, 4
          %v4503 = vsel %vm1256, %v4501, %v4502
          %v4504 = vrot.slane %v4451, 4
          %v4505 = vsel %vm1256, %v4502, %v4504
          %v4506 = vrot.slane %v4452, 4
          %v4507 = vrot.slane %v4453, 4
          %v4508 = vsel %vm1256, %v4506, %v4507
          %v4509 = vrot.slane %v4454, 4
          %v4510 = vsel %vm1256, %v4507, %v4509
          %v4511 = vrot.slane %v4455, 4
          %v4512 = vrot.slane %v4456, 4
          %v4513 = vsel %vm1256, %v4511, %v4512
          %v4514 = vrot.slane %v4457, 4
          %v4515 = vsel %vm1256, %v4512, %v4514
          %v4516 = vrot.slane %v4458, 4
          %v4517 = vrot.slane %v4459, 4
          %v4518 = vsel %vm1256, %v4516, %v4517
          %v4519 = vrot.slane %v4460, 4
          %v4520 = vsel %vm1256, %v4517, %v4519
          %v4521 = vrot.slane %v4461, 4
          %v4522 = vrot.slane %v4462, 4
          %v4523 = vsel %vm1256, %v4521, %v4522
          %v4524 = vrot.slane %v4463, 4
          %v4525 = vsel %vm1256, %v4522, %v4524
          %v4526 = vrot.slane %v4464, 4
          %v4527 = vrot.slane %v4465, 4
          %v4528 = vsel %vm1256, %v4526, %v4527
          %v4529 = vrot.slane %v4466, 4
          %v4530 = vsel %vm1256, %v4527, %v4529
          %v4547 = vadd.f32 %v4423, %v4493
          %v4548 = vadd.f32 %v4424, %v4495
          %v4549 = vadd.f32 %v4425, %v4498
          %v4550 = vadd.f32 %v4426, %v4500
          %v4551 = vadd.f32 %v4427, %v4503
          %v4552 = vadd.f32 %v4428, %v4505
          %v4553 = vadd.f32 %v4429, %v4508
          %v4554 = vadd.f32 %v4430, %v4510
          %v4555 = vadd.f32 %v4431, %v4513
          %v4556 = vadd.f32 %v4432, %v4515
          %v4557 = vadd.f32 %v4433, %v4518
          %v4558 = vadd.f32 %v4434, %v4520
          %v4559 = vadd.f32 %v4435, %v4523
          %v4560 = vadd.f32 %v4436, %v4525
          %v4561 = vadd.f32 %v4437, %v4528
          %v4562 = vadd.f32 %v4438, %v4530
          %v4563 = vlaneseq
          %v4564 = vshrl.u32 %v4563, 7
          %v4565 = vsub.s32 1, %v4564
          %v4566 = vrot.slane %v495, %v4565
          %v4567 = vmul.f32 %v4007, %v4566
          %v4568 = vmul.f32 %v4008, %v4566
          %v4569 = vmul.f32 %v4009, %v4566
          %v4570 = vmul.f32 %v4010, %v4566
          %v4571 = vmul.f32 %v4011, %v4566
          %v4572 = vmul.f32 %v4012, %v4566
          %v4573 = vmul.f32 %v4013, %v4566
          %v4574 = vmul.f32 %v4014, %v4566
          %v4575 = vmul.f32 %v4015, %v4566
          %v4576 = vmul.f32 %v4016, %v4566
          %v4577 = vmul.f32 %v4017, %v4566
          %v4578 = vmul.f32 %v4018, %v4566
          %v4579 = vmul.f32 %v4019, %v4566
          %v4580 = vmul.f32 %v4020, %v4566
          %v4581 = vmul.f32 %v4021, %v4566
          %v4582 = vmul.f32 %v4022, %v4566
          %v4583 = vmul.f32 %v4023, %v4566
          %v4584 = vmul.f32 %v4024, %v4566
          %v4585 = vmul.f32 %v4025, %v4566
          %v4586 = vmul.f32 %v4026, %v4566
          %v4587 = vmul.f32 %v4027, %v4566
          %v4588 = vmul.f32 %v4028, %v4566
          %v4589 = vmul.f32 %v4029, %v4566
          %v4590 = vmul.f32 %v4030, %v4566
          %v4615 = vrot.slane %v4567, 5
          %v4616 = vrot.slane %v4568, 5
          %v4617 = vsel %vm1381, %v4615, %v4616
          %v4618 = vrot.slane %v4569, 5
          %v4619 = vsel %vm1381, %v4616, %v4618
          %v4620 = vrot.slane %v4570, 5
          %v4621 = vrot.slane %v4571, 5
          %v4622 = vsel %vm1381, %v4620, %v4621
          %v4623 = vrot.slane %v4572, 5
          %v4624 = vsel %vm1381, %v4621, %v4623
          %v4625 = vrot.slane %v4573, 5
          %v4626 = vrot.slane %v4574, 5
          %v4627 = vsel %vm1381, %v4625, %v4626
          %v4628 = vrot.slane %v4575, 5
          %v4629 = vsel %vm1381, %v4626, %v4628
          %v4630 = vrot.slane %v4576, 5
          %v4631 = vrot.slane %v4577, 5
          %v4632 = vsel %vm1381, %v4630, %v4631
          %v4633 = vrot.slane %v4578, 5
          %v4634 = vsel %vm1381, %v4631, %v4633
          %v4635 = vrot.slane %v4579, 5
          %v4636 = vrot.slane %v4580, 5
          %v4637 = vsel %vm1381, %v4635, %v4636
          %v4638 = vrot.slane %v4581, 5
          %v4639 = vsel %vm1381, %v4636, %v4638
          %v4640 = vrot.slane %v4582, 5
          %v4641 = vrot.slane %v4583, 5
          %v4642 = vsel %vm1381, %v4640, %v4641
          %v4643 = vrot.slane %v4584, 5
          %v4644 = vsel %vm1381, %v4641, %v4643
          %v4645 = vrot.slane %v4585, 5
          %v4646 = vrot.slane %v4586, 5
          %v4647 = vsel %vm1381, %v4645, %v4646
          %v4648 = vrot.slane %v4587, 5
          %v4649 = vsel %vm1381, %v4646, %v4648
          %v4650 = vrot.slane %v4588, 5
          %v4651 = vrot.slane %v4589, 5
          %v4652 = vsel %vm1381, %v4650, %v4651
          %v4653 = vrot.slane %v4590, 5
          %v4654 = vsel %vm1381, %v4651, %v4653
          %v4671 = vadd.f32 %v4547, %v4617
          %v4672 = vadd.f32 %v4548, %v4619
          %v4673 = vadd.f32 %v4549, %v4622
          %v4674 = vadd.f32 %v4550, %v4624
          %v4675 = vadd.f32 %v4551, %v4627
          %v4676 = vadd.f32 %v4552, %v4629
          %v4677 = vadd.f32 %v4553, %v4632
          %v4678 = vadd.f32 %v4554, %v4634
          %v4679 = vadd.f32 %v4555, %v4637
          %v4680 = vadd.f32 %v4556, %v4639
          %v4681 = vadd.f32 %v4557, %v4642
          %v4682 = vadd.f32 %v4558, %v4644
          %v4683 = vadd.f32 %v4559, %v4647
          %v4684 = vadd.f32 %v4560, %v4649
          %v4685 = vadd.f32 %v4561, %v4652
          %v4686 = vadd.f32 %v4562, %v4654
          %v4687 = vlaneseq
          %v4688 = vshrl.u32 %v4687, 7
          %v4689 = vsub.s32 2, %v4688
          %v4690 = vrot.slane %v495, %v4689
          %v4691 = vmul.f32 %v4007, %v4690
          %v4692 = vmul.f32 %v4008, %v4690
          %v4693 = vmul.f32 %v4009, %v4690
          %v4694 = vmul.f32 %v4010, %v4690
          %v4695 = vmul.f32 %v4011, %v4690
          %v4696 = vmul.f32 %v4012, %v4690
          %v4697 = vmul.f32 %v4013, %v4690
          %v4698 = vmul.f32 %v4014, %v4690
          %v4699 = vmul.f32 %v4015, %v4690
          %v4700 = vmul.f32 %v4016, %v4690
          %v4701 = vmul.f32 %v4017, %v4690
          %v4702 = vmul.f32 %v4018, %v4690
          %v4703 = vmul.f32 %v4019, %v4690
          %v4704 = vmul.f32 %v4020, %v4690
          %v4705 = vmul.f32 %v4021, %v4690
          %v4706 = vmul.f32 %v4022, %v4690
          %v4707 = vmul.f32 %v4023, %v4690
          %v4708 = vmul.f32 %v4024, %v4690
          %v4709 = vmul.f32 %v4025, %v4690
          %v4710 = vmul.f32 %v4026, %v4690
          %v4711 = vmul.f32 %v4027, %v4690
          %v4712 = vmul.f32 %v4028, %v4690
          %v4713 = vmul.f32 %v4029, %v4690
          %v4714 = vmul.f32 %v4030, %v4690
          %v4739 = vrot.slane %v4691, 6
          %v4740 = vrot.slane %v4692, 6
          %v4741 = vsel %vm1506, %v4739, %v4740
          %v4742 = vrot.slane %v4693, 6
          %v4743 = vsel %vm1506, %v4740, %v4742
          %v4744 = vrot.slane %v4694, 6
          %v4745 = vrot.slane %v4695, 6
          %v4746 = vsel %vm1506, %v4744, %v4745
          %v4747 = vrot.slane %v4696, 6
          %v4748 = vsel %vm1506, %v4745, %v4747
          %v4749 = vrot.slane %v4697, 6
          %v4750 = vrot.slane %v4698, 6
          %v4751 = vsel %vm1506, %v4749, %v4750
          %v4752 = vrot.slane %v4699, 6
          %v4753 = vsel %vm1506, %v4750, %v4752
          %v4754 = vrot.slane %v4700, 6
          %v4755 = vrot.slane %v4701, 6
          %v4756 = vsel %vm1506, %v4754, %v4755
          %v4757 = vrot.slane %v4702, 6
          %v4758 = vsel %vm1506, %v4755, %v4757
          %v4759 = vrot.slane %v4703, 6
          %v4760 = vrot.slane %v4704, 6
          %v4761 = vsel %vm1506, %v4759, %v4760
          %v4762 = vrot.slane %v4705, 6
          %v4763 = vsel %vm1506, %v4760, %v4762
          %v4764 = vrot.slane %v4706, 6
          %v4765 = vrot.slane %v4707, 6
          %v4766 = vsel %vm1506, %v4764, %v4765
          %v4767 = vrot.slane %v4708, 6
          %v4768 = vsel %vm1506, %v4765, %v4767
          %v4769 = vrot.slane %v4709, 6
          %v4770 = vrot.slane %v4710, 6
          %v4771 = vsel %vm1506, %v4769, %v4770
          %v4772 = vrot.slane %v4711, 6
          %v4773 = vsel %vm1506, %v4770, %v4772
          %v4774 = vrot.slane %v4712, 6
          %v4775 = vrot.slane %v4713, 6
          %v4776 = vsel %vm1506, %v4774, %v4775
          %v4777 = vrot.slane %v4714, 6
          %v4778 = vsel %vm1506, %v4775, %v4777
          %v4795 = vadd.f32 %v4671, %v4741
          %v4796 = vadd.f32 %v4672, %v4743
          %v4797 = vadd.f32 %v4673, %v4746
          %v4798 = vadd.f32 %v4674, %v4748
          %v4799 = vadd.f32 %v4675, %v4751
          %v4800 = vadd.f32 %v4676, %v4753
          %v4801 = vadd.f32 %v4677, %v4756
          %v4802 = vadd.f32 %v4678, %v4758
          %v4803 = vadd.f32 %v4679, %v4761
          %v4804 = vadd.f32 %v4680, %v4763
          %v4805 = vadd.f32 %v4681, %v4766
          %v4806 = vadd.f32 %v4682, %v4768
          %v4807 = vadd.f32 %v4683, %v4771
          %v4808 = vadd.f32 %v4684, %v4773
          %v4809 = vadd.f32 %v4685, %v4776
          %v4810 = vadd.f32 %v4686, %v4778
          %s4811 = sadd.s32 %s764, 5
          %s4812 = smul.u32 %s4811, 24
          %s4813 = sadd.s32 %s4812, %s766
          %s4814 = scalar_lea.vmem [#allocation2], %s4813
          %v4815 = vld [vmem:[%s4814] sm:$0xff]
          %v4816 = vld [vmem:[%s4814 + $0x8] sm:$0xff]
          %v4817 = vld [vmem:[%s4814 + $0x10] sm:$0x3f]
          %v4818 = vld [vmem:[%s4814 + $0x18] sm:$0xff]
          %v4819 = vld [vmem:[%s4814 + $0x20] sm:$0xff]
          %v4820 = vld [vmem:[%s4814 + $0x28] sm:$0x3f]
          %v4821 = vld [vmem:[%s4814 + $0x30] sm:$0xff]
          %v4822 = vld [vmem:[%s4814 + $0x38] sm:$0xff]
          %v4823 = vld [vmem:[%s4814 + $0x40] sm:$0x3f]
          %v4824 = vld [vmem:[%s4814 + $0x48] sm:$0xff]
          %v4825 = vld [vmem:[%s4814 + $0x50] sm:$0xff]
          %v4826 = vld [vmem:[%s4814 + $0x58] sm:$0x3f]
          %v4827 = vld [vmem:[%s4814 + $0x60] sm:$0xff]
          %v4828 = vld [vmem:[%s4814 + $0x68] sm:$0xff]
          %v4829 = vld [vmem:[%s4814 + $0x70] sm:$0x3f]
          %v4830 = vld [vmem:[%s4814 + $0x78] sm:$0xff]
          %v4831 = vld [vmem:[%s4814 + $0x80] sm:$0xff]
          %v4832 = vld [vmem:[%s4814 + $0x88] sm:$0x3f]
          %v4833 = vld [vmem:[%s4814 + $0x90] sm:$0xff]
          %v4834 = vld [vmem:[%s4814 + $0x98] sm:$0xff]
          %v4835 = vld [vmem:[%s4814 + $0xa0] sm:$0x3f]
          %v4836 = vld [vmem:[%s4814 + $0xa8] sm:$0xff]
          %v4837 = vld [vmem:[%s4814 + $0xb0] sm:$0xff]
          %v4838 = vld [vmem:[%s4814 + $0xb8] sm:$0x3f]
          %v4839 = vlaneseq
          %v4840 = vshrl.u32 %v4839, 7
          %v4841 = vsub.s32 3, %v4840
          %v4842 = vrot.slane %v495, %v4841
          %v4843 = vmul.f32 %v4815, %v4842
          %v4844 = vmul.f32 %v4816, %v4842
          %v4845 = vmul.f32 %v4818, %v4842
          %v4846 = vmul.f32 %v4819, %v4842
          %v4847 = vmul.f32 %v4821, %v4842
          %v4848 = vmul.f32 %v4822, %v4842
          %v4849 = vmul.f32 %v4824, %v4842
          %v4850 = vmul.f32 %v4825, %v4842
          %v4851 = vmul.f32 %v4827, %v4842
          %v4852 = vmul.f32 %v4828, %v4842
          %v4853 = vmul.f32 %v4830, %v4842
          %v4854 = vmul.f32 %v4831, %v4842
          %v4855 = vmul.f32 %v4833, %v4842
          %v4856 = vmul.f32 %v4834, %v4842
          %v4857 = vmul.f32 %v4836, %v4842
          %v4858 = vmul.f32 %v4837, %v4842
          %v4859 = vadd.f32 %v4795, %v4843
          %v4860 = vadd.f32 %v4796, %v4844
          %v4861 = vadd.f32 %v4797, %v4845
          %v4862 = vadd.f32 %v4798, %v4846
          %v4863 = vadd.f32 %v4799, %v4847
          %v4864 = vadd.f32 %v4800, %v4848
          %v4865 = vadd.f32 %v4801, %v4849
          %v4866 = vadd.f32 %v4802, %v4850
          %v4867 = vadd.f32 %v4803, %v4851
          %v4868 = vadd.f32 %v4804, %v4852
          %v4869 = vadd.f32 %v4805, %v4853
          %v4870 = vadd.f32 %v4806, %v4854
          %v4871 = vadd.f32 %v4807, %v4855
          %v4872 = vadd.f32 %v4808, %v4856
          %v4873 = vadd.f32 %v4809, %v4857
          %v4874 = vadd.f32 %v4810, %v4858
          %v4875 = vlaneseq
          %v4876 = vshrl.u32 %v4875, 7
          %v4877 = vsub.s32 4, %v4876
          %v4878 = vrot.slane %v495, %v4877
          %v4879 = vmul.f32 %v4815, %v4878
          %v4880 = vmul.f32 %v4816, %v4878
          %v4881 = vmul.f32 %v4817, %v4878
          %v4882 = vmul.f32 %v4818, %v4878
          %v4883 = vmul.f32 %v4819, %v4878
          %v4884 = vmul.f32 %v4820, %v4878
          %v4885 = vmul.f32 %v4821, %v4878
          %v4886 = vmul.f32 %v4822, %v4878
          %v4887 = vmul.f32 %v4823, %v4878
          %v4888 = vmul.f32 %v4824, %v4878
          %v4889 = vmul.f32 %v4825, %v4878
          %v4890 = vmul.f32 %v4826, %v4878
          %v4891 = vmul.f32 %v4827, %v4878
          %v4892 = vmul.f32 %v4828, %v4878
          %v4893 = vmul.f32 %v4829, %v4878
          %v4894 = vmul.f32 %v4830, %v4878
          %v4895 = vmul.f32 %v4831, %v4878
          %v4896 = vmul.f32 %v4832, %v4878
          %v4897 = vmul.f32 %v4833, %v4878
          %v4898 = vmul.f32 %v4834, %v4878
          %v4899 = vmul.f32 %v4835, %v4878
          %v4900 = vmul.f32 %v4836, %v4878
          %v4901 = vmul.f32 %v4837, %v4878
          %v4902 = vmul.f32 %v4838, %v4878
          %v4927 = vrot.slane %v4879, 1
          %v4928 = vrot.slane %v4880, 1
          %v4929 = vsel %vm881, %v4927, %v4928
          %v4930 = vrot.slane %v4881, 1
          %v4931 = vsel %vm881, %v4928, %v4930
          %v4932 = vrot.slane %v4882, 1
          %v4933 = vrot.slane %v4883, 1
          %v4934 = vsel %vm881, %v4932, %v4933
          %v4935 = vrot.slane %v4884, 1
          %v4936 = vsel %vm881, %v4933, %v4935
          %v4937 = vrot.slane %v4885, 1
          %v4938 = vrot.slane %v4886, 1
          %v4939 = vsel %vm881, %v4937, %v4938
          %v4940 = vrot.slane %v4887, 1
          %v4941 = vsel %vm881, %v4938, %v4940
          %v4942 = vrot.slane %v4888, 1
          %v4943 = vrot.slane %v4889, 1
          %v4944 = vsel %vm881, %v4942, %v4943
          %v4945 = vrot.slane %v4890, 1
          %v4946 = vsel %vm881, %v4943, %v4945
          %v4947 = vrot.slane %v4891, 1
          %v4948 = vrot.slane %v4892, 1
          %v4949 = vsel %vm881, %v4947, %v4948
          %v4950 = vrot.slane %v4893, 1
          %v4951 = vsel %vm881, %v4948, %v4950
          %v4952 = vrot.slane %v4894, 1
          %v4953 = vrot.slane %v4895, 1
          %v4954 = vsel %vm881, %v4952, %v4953
          %v4955 = vrot.slane %v4896, 1
          %v4956 = vsel %vm881, %v4953, %v4955
          %v4957 = vrot.slane %v4897, 1
          %v4958 = vrot.slane %v4898, 1
          %v4959 = vsel %vm881, %v4957, %v4958
          %v4960 = vrot.slane %v4899, 1
          %v4961 = vsel %vm881, %v4958, %v4960
          %v4962 = vrot.slane %v4900, 1
          %v4963 = vrot.slane %v4901, 1
          %v4964 = vsel %vm881, %v4962, %v4963
          %v4965 = vrot.slane %v4902, 1
          %v4966 = vsel %vm881, %v4963, %v4965
          %v4983 = vadd.f32 %v4859, %v4929
          %v4984 = vadd.f32 %v4860, %v4931
          %v4985 = vadd.f32 %v4861, %v4934
          %v4986 = vadd.f32 %v4862, %v4936
          %v4987 = vadd.f32 %v4863, %v4939
          %v4988 = vadd.f32 %v4864, %v4941
          %v4989 = vadd.f32 %v4865, %v4944
          %v4990 = vadd.f32 %v4866, %v4946
          %v4991 = vadd.f32 %v4867, %v4949
          %v4992 = vadd.f32 %v4868, %v4951
          %v4993 = vadd.f32 %v4869, %v4954
          %v4994 = vadd.f32 %v4870, %v4956
          %v4995 = vadd.f32 %v4871, %v4959
          %v4996 = vadd.f32 %v4872, %v4961
          %v4997 = vadd.f32 %v4873, %v4964
          %v4998 = vadd.f32 %v4874, %v4966
          %v4999 = vlaneseq
          %v5000 = vshrl.u32 %v4999, 7
          %v5001 = vsub.s32 5, %v5000
          %v5002 = vrot.slane %v495, %v5001
          %v5003 = vmul.f32 %v4815, %v5002
          %v5004 = vmul.f32 %v4816, %v5002
          %v5005 = vmul.f32 %v4817, %v5002
          %v5006 = vmul.f32 %v4818, %v5002
          %v5007 = vmul.f32 %v4819, %v5002
          %v5008 = vmul.f32 %v4820, %v5002
          %v5009 = vmul.f32 %v4821, %v5002
          %v5010 = vmul.f32 %v4822, %v5002
          %v5011 = vmul.f32 %v4823, %v5002
          %v5012 = vmul.f32 %v4824, %v5002
          %v5013 = vmul.f32 %v4825, %v5002
          %v5014 = vmul.f32 %v4826, %v5002
          %v5015 = vmul.f32 %v4827, %v5002
          %v5016 = vmul.f32 %v4828, %v5002
          %v5017 = vmul.f32 %v4829, %v5002
          %v5018 = vmul.f32 %v4830, %v5002
          %v5019 = vmul.f32 %v4831, %v5002
          %v5020 = vmul.f32 %v4832, %v5002
          %v5021 = vmul.f32 %v4833, %v5002
          %v5022 = vmul.f32 %v4834, %v5002
          %v5023 = vmul.f32 %v4835, %v5002
          %v5024 = vmul.f32 %v4836, %v5002
          %v5025 = vmul.f32 %v4837, %v5002
          %v5026 = vmul.f32 %v4838, %v5002
          %v5051 = vrot.slane %v5003, 2
          %v5052 = vrot.slane %v5004, 2
          %v5053 = vsel %vm1006, %v5051, %v5052
          %v5054 = vrot.slane %v5005, 2
          %v5055 = vsel %vm1006, %v5052, %v5054
          %v5056 = vrot.slane %v5006, 2
          %v5057 = vrot.slane %v5007, 2
          %v5058 = vsel %vm1006, %v5056, %v5057
          %v5059 = vrot.slane %v5008, 2
          %v5060 = vsel %vm1006, %v5057, %v5059
          %v5061 = vrot.slane %v5009, 2
          %v5062 = vrot.slane %v5010, 2
          %v5063 = vsel %vm1006, %v5061, %v5062
          %v5064 = vrot.slane %v5011, 2
          %v5065 = vsel %vm1006, %v5062, %v5064
          %v5066 = vrot.slane %v5012, 2
          %v5067 = vrot.slane %v5013, 2
          %v5068 = vsel %vm1006, %v5066, %v5067
          %v5069 = vrot.slane %v5014, 2
          %v5070 = vsel %vm1006, %v5067, %v5069
          %v5071 = vrot.slane %v5015, 2
          %v5072 = vrot.slane %v5016, 2
          %v5073 = vsel %vm1006, %v5071, %v5072
          %v5074 = vrot.slane %v5017, 2
          %v5075 = vsel %vm1006, %v5072, %v5074
          %v5076 = vrot.slane %v5018, 2
          %v5077 = vrot.slane %v5019, 2
          %v5078 = vsel %vm1006, %v5076, %v5077
          %v5079 = vrot.slane %v5020, 2
          %v5080 = vsel %vm1006, %v5077, %v5079
          %v5081 = vrot.slane %v5021, 2
          %v5082 = vrot.slane %v5022, 2
          %v5083 = vsel %vm1006, %v5081, %v5082
          %v5084 = vrot.slane %v5023, 2
          %v5085 = vsel %vm1006, %v5082, %v5084
          %v5086 = vrot.slane %v5024, 2
          %v5087 = vrot.slane %v5025, 2
          %v5088 = vsel %vm1006, %v5086, %v5087
          %v5089 = vrot.slane %v5026, 2
          %v5090 = vsel %vm1006, %v5087, %v5089
          %v5107 = vadd.f32 %v4983, %v5053
          %v5108 = vadd.f32 %v4984, %v5055
          %v5109 = vadd.f32 %v4985, %v5058
          %v5110 = vadd.f32 %v4986, %v5060
          %v5111 = vadd.f32 %v4987, %v5063
          %v5112 = vadd.f32 %v4988, %v5065
          %v5113 = vadd.f32 %v4989, %v5068
          %v5114 = vadd.f32 %v4990, %v5070
          %v5115 = vadd.f32 %v4991, %v5073
          %v5116 = vadd.f32 %v4992, %v5075
          %v5117 = vadd.f32 %v4993, %v5078
          %v5118 = vadd.f32 %v4994, %v5080
          %v5119 = vadd.f32 %v4995, %v5083
          %v5120 = vadd.f32 %v4996, %v5085
          %v5121 = vadd.f32 %v4997, %v5088
          %v5122 = vadd.f32 %v4998, %v5090
          %v5123 = vlaneseq
          %v5124 = vshrl.u32 %v5123, 7
          %v5125 = vsub.s32 6, %v5124
          %v5126 = vrot.slane %v495, %v5125
          %v5127 = vmul.f32 %v4815, %v5126
          %v5128 = vmul.f32 %v4816, %v5126
          %v5129 = vmul.f32 %v4817, %v5126
          %v5130 = vmul.f32 %v4818, %v5126
          %v5131 = vmul.f32 %v4819, %v5126
          %v5132 = vmul.f32 %v4820, %v5126
          %v5133 = vmul.f32 %v4821, %v5126
          %v5134 = vmul.f32 %v4822, %v5126
          %v5135 = vmul.f32 %v4823, %v5126
          %v5136 = vmul.f32 %v4824, %v5126
          %v5137 = vmul.f32 %v4825, %v5126
          %v5138 = vmul.f32 %v4826, %v5126
          %v5139 = vmul.f32 %v4827, %v5126
          %v5140 = vmul.f32 %v4828, %v5126
          %v5141 = vmul.f32 %v4829, %v5126
          %v5142 = vmul.f32 %v4830, %v5126
          %v5143 = vmul.f32 %v4831, %v5126
          %v5144 = vmul.f32 %v4832, %v5126
          %v5145 = vmul.f32 %v4833, %v5126
          %v5146 = vmul.f32 %v4834, %v5126
          %v5147 = vmul.f32 %v4835, %v5126
          %v5148 = vmul.f32 %v4836, %v5126
          %v5149 = vmul.f32 %v4837, %v5126
          %v5150 = vmul.f32 %v4838, %v5126
          %v5175 = vrot.slane %v5127, 3
          %v5176 = vrot.slane %v5128, 3
          %v5177 = vsel %vm1131, %v5175, %v5176
          %v5178 = vrot.slane %v5129, 3
          %v5179 = vsel %vm1131, %v5176, %v5178
          %v5180 = vrot.slane %v5130, 3
          %v5181 = vrot.slane %v5131, 3
          %v5182 = vsel %vm1131, %v5180, %v5181
          %v5183 = vrot.slane %v5132, 3
          %v5184 = vsel %vm1131, %v5181, %v5183
          %v5185 = vrot.slane %v5133, 3
          %v5186 = vrot.slane %v5134, 3
          %v5187 = vsel %vm1131, %v5185, %v5186
          %v5188 = vrot.slane %v5135, 3
          %v5189 = vsel %vm1131, %v5186, %v5188
          %v5190 = vrot.slane %v5136, 3
          %v5191 = vrot.slane %v5137, 3
          %v5192 = vsel %vm1131, %v5190, %v5191
          %v5193 = vrot.slane %v5138, 3
          %v5194 = vsel %vm1131, %v5191, %v5193
          %v5195 = vrot.slane %v5139, 3
          %v5196 = vrot.slane %v5140, 3
          %v5197 = vsel %vm1131, %v5195, %v5196
          %v5198 = vrot.slane %v5141, 3
          %v5199 = vsel %vm1131, %v5196, %v5198
          %v5200 = vrot.slane %v5142, 3
          %v5201 = vrot.slane %v5143, 3
          %v5202 = vsel %vm1131, %v5200, %v5201
          %v5203 = vrot.slane %v5144, 3
          %v5204 = vsel %vm1131, %v5201, %v5203
          %v5205 = vrot.slane %v5145, 3
          %v5206 = vrot.slane %v5146, 3
          %v5207 = vsel %vm1131, %v5205, %v5206
          %v5208 = vrot.slane %v5147, 3
          %v5209 = vsel %vm1131, %v5206, %v5208
          %v5210 = vrot.slane %v5148, 3
          %v5211 = vrot.slane %v5149, 3
          %v5212 = vsel %vm1131, %v5210, %v5211
          %v5213 = vrot.slane %v5150, 3
          %v5214 = vsel %vm1131, %v5211, %v5213
          %v5231 = vadd.f32 %v5107, %v5177
          %v5232 = vadd.f32 %v5108, %v5179
          %v5233 = vadd.f32 %v5109, %v5182
          %v5234 = vadd.f32 %v5110, %v5184
          %v5235 = vadd.f32 %v5111, %v5187
          %v5236 = vadd.f32 %v5112, %v5189
          %v5237 = vadd.f32 %v5113, %v5192
          %v5238 = vadd.f32 %v5114, %v5194
          %v5239 = vadd.f32 %v5115, %v5197
          %v5240 = vadd.f32 %v5116, %v5199
          %v5241 = vadd.f32 %v5117, %v5202
          %v5242 = vadd.f32 %v5118, %v5204
          %v5243 = vadd.f32 %v5119, %v5207
          %v5244 = vadd.f32 %v5120, %v5209
          %v5245 = vadd.f32 %v5121, %v5212
          %v5246 = vadd.f32 %v5122, %v5214
          %v5247 = vlaneseq
          %v5248 = vshrl.u32 %v5247, 7
          %v5249 = vsub.s32 7, %v5248
          %v5250 = vrot.slane %v495, %v5249
          %v5251 = vmul.f32 %v4815, %v5250
          %v5252 = vmul.f32 %v4816, %v5250
          %v5253 = vmul.f32 %v4817, %v5250
          %v5254 = vmul.f32 %v4818, %v5250
          %v5255 = vmul.f32 %v4819, %v5250
          %v5256 = vmul.f32 %v4820, %v5250
          %v5257 = vmul.f32 %v4821, %v5250
          %v5258 = vmul.f32 %v4822, %v5250
          %v5259 = vmul.f32 %v4823, %v5250
          %v5260 = vmul.f32 %v4824, %v5250
          %v5261 = vmul.f32 %v4825, %v5250
          %v5262 = vmul.f32 %v4826, %v5250
          %v5263 = vmul.f32 %v4827, %v5250
          %v5264 = vmul.f32 %v4828, %v5250
          %v5265 = vmul.f32 %v4829, %v5250
          %v5266 = vmul.f32 %v4830, %v5250
          %v5267 = vmul.f32 %v4831, %v5250
          %v5268 = vmul.f32 %v4832, %v5250
          %v5269 = vmul.f32 %v4833, %v5250
          %v5270 = vmul.f32 %v4834, %v5250
          %v5271 = vmul.f32 %v4835, %v5250
          %v5272 = vmul.f32 %v4836, %v5250
          %v5273 = vmul.f32 %v4837, %v5250
          %v5274 = vmul.f32 %v4838, %v5250
          %v5299 = vrot.slane %v5251, 4
          %v5300 = vrot.slane %v5252, 4
          %v5301 = vsel %vm1256, %v5299, %v5300
          %v5302 = vrot.slane %v5253, 4
          %v5303 = vsel %vm1256, %v5300, %v5302
          %v5304 = vrot.slane %v5254, 4
          %v5305 = vrot.slane %v5255, 4
          %v5306 = vsel %vm1256, %v5304, %v5305
          %v5307 = vrot.slane %v5256, 4
          %v5308 = vsel %vm1256, %v5305, %v5307
          %v5309 = vrot.slane %v5257, 4
          %v5310 = vrot.slane %v5258, 4
          %v5311 = vsel %vm1256, %v5309, %v5310
          %v5312 = vrot.slane %v5259, 4
          %v5313 = vsel %vm1256, %v5310, %v5312
          %v5314 = vrot.slane %v5260, 4
          %v5315 = vrot.slane %v5261, 4
          %v5316 = vsel %vm1256, %v5314, %v5315
          %v5317 = vrot.slane %v5262, 4
          %v5318 = vsel %vm1256, %v5315, %v5317
          %v5319 = vrot.slane %v5263, 4
          %v5320 = vrot.slane %v5264, 4
          %v5321 = vsel %vm1256, %v5319, %v5320
          %v5322 = vrot.slane %v5265, 4
          %v5323 = vsel %vm1256, %v5320, %v5322
          %v5324 = vrot.slane %v5266, 4
          %v5325 = vrot.slane %v5267, 4
          %v5326 = vsel %vm1256, %v5324, %v5325
          %v5327 = vrot.slane %v5268, 4
          %v5328 = vsel %vm1256, %v5325, %v5327
          %v5329 = vrot.slane %v5269, 4
          %v5330 = vrot.slane %v5270, 4
          %v5331 = vsel %vm1256, %v5329, %v5330
          %v5332 = vrot.slane %v5271, 4
          %v5333 = vsel %vm1256, %v5330, %v5332
          %v5334 = vrot.slane %v5272, 4
          %v5335 = vrot.slane %v5273, 4
          %v5336 = vsel %vm1256, %v5334, %v5335
          %v5337 = vrot.slane %v5274, 4
          %v5338 = vsel %vm1256, %v5335, %v5337
          %v5355 = vadd.f32 %v5231, %v5301
          %v5356 = vadd.f32 %v5232, %v5303
          %v5357 = vadd.f32 %v5233, %v5306
          %v5358 = vadd.f32 %v5234, %v5308
          %v5359 = vadd.f32 %v5235, %v5311
          %v5360 = vadd.f32 %v5236, %v5313
          %v5361 = vadd.f32 %v5237, %v5316
          %v5362 = vadd.f32 %v5238, %v5318
          %v5363 = vadd.f32 %v5239, %v5321
          %v5364 = vadd.f32 %v5240, %v5323
          %v5365 = vadd.f32 %v5241, %v5326
          %v5366 = vadd.f32 %v5242, %v5328
          %v5367 = vadd.f32 %v5243, %v5331
          %v5368 = vadd.f32 %v5244, %v5333
          %v5369 = vadd.f32 %v5245, %v5336
          %v5370 = vadd.f32 %v5246, %v5338
          %v5371 = vlaneseq
          %v5372 = vshrl.u32 %v5371, 7
          %v5373 = vsub.s32 0, %v5372
          %v5374 = vrot.slane %v496, %v5373
          %v5375 = vmul.f32 %v4815, %v5374
          %v5376 = vmul.f32 %v4816, %v5374
          %v5377 = vmul.f32 %v4817, %v5374
          %v5378 = vmul.f32 %v4818, %v5374
          %v5379 = vmul.f32 %v4819, %v5374
          %v5380 = vmul.f32 %v4820, %v5374
          %v5381 = vmul.f32 %v4821, %v5374
          %v5382 = vmul.f32 %v4822, %v5374
          %v5383 = vmul.f32 %v4823, %v5374
          %v5384 = vmul.f32 %v4824, %v5374
          %v5385 = vmul.f32 %v4825, %v5374
          %v5386 = vmul.f32 %v4826, %v5374
          %v5387 = vmul.f32 %v4827, %v5374
          %v5388 = vmul.f32 %v4828, %v5374
          %v5389 = vmul.f32 %v4829, %v5374
          %v5390 = vmul.f32 %v4830, %v5374
          %v5391 = vmul.f32 %v4831, %v5374
          %v5392 = vmul.f32 %v4832, %v5374
          %v5393 = vmul.f32 %v4833, %v5374
          %v5394 = vmul.f32 %v4834, %v5374
          %v5395 = vmul.f32 %v4835, %v5374
          %v5396 = vmul.f32 %v4836, %v5374
          %v5397 = vmul.f32 %v4837, %v5374
          %v5398 = vmul.f32 %v4838, %v5374
          %v5423 = vrot.slane %v5375, 5
          %v5424 = vrot.slane %v5376, 5
          %v5425 = vsel %vm1381, %v5423, %v5424
          %v5426 = vrot.slane %v5377, 5
          %v5427 = vsel %vm1381, %v5424, %v5426
          %v5428 = vrot.slane %v5378, 5
          %v5429 = vrot.slane %v5379, 5
          %v5430 = vsel %vm1381, %v5428, %v5429
          %v5431 = vrot.slane %v5380, 5
          %v5432 = vsel %vm1381, %v5429, %v5431
          %v5433 = vrot.slane %v5381, 5
          %v5434 = vrot.slane %v5382, 5
          %v5435 = vsel %vm1381, %v5433, %v5434
          %v5436 = vrot.slane %v5383, 5
          %v5437 = vsel %vm1381, %v5434, %v5436
          %v5438 = vrot.slane %v5384, 5
          %v5439 = vrot.slane %v5385, 5
          %v5440 = vsel %vm1381, %v5438, %v5439
          %v5441 = vrot.slane %v5386, 5
          %v5442 = vsel %vm1381, %v5439, %v5441
          %v5443 = vrot.slane %v5387, 5
          %v5444 = vrot.slane %v5388, 5
          %v5445 = vsel %vm1381, %v5443, %v5444
          %v5446 = vrot.slane %v5389, 5
          %v5447 = vsel %vm1381, %v5444, %v5446
          %v5448 = vrot.slane %v5390, 5
          %v5449 = vrot.slane %v5391, 5
          %v5450 = vsel %vm1381, %v5448, %v5449
          %v5451 = vrot.slane %v5392, 5
          %v5452 = vsel %vm1381, %v5449, %v5451
          %v5453 = vrot.slane %v5393, 5
          %v5454 = vrot.slane %v5394, 5
          %v5455 = vsel %vm1381, %v5453, %v5454
          %v5456 = vrot.slane %v5395, 5
          %v5457 = vsel %vm1381, %v5454, %v5456
          %v5458 = vrot.slane %v5396, 5
          %v5459 = vrot.slane %v5397, 5
          %v5460 = vsel %vm1381, %v5458, %v5459
          %v5461 = vrot.slane %v5398, 5
          %v5462 = vsel %vm1381, %v5459, %v5461
          %v5479 = vadd.f32 %v5355, %v5425
          %v5480 = vadd.f32 %v5356, %v5427
          %v5481 = vadd.f32 %v5357, %v5430
          %v5482 = vadd.f32 %v5358, %v5432
          %v5483 = vadd.f32 %v5359, %v5435
          %v5484 = vadd.f32 %v5360, %v5437
          %v5485 = vadd.f32 %v5361, %v5440
          %v5486 = vadd.f32 %v5362, %v5442
          %v5487 = vadd.f32 %v5363, %v5445
          %v5488 = vadd.f32 %v5364, %v5447
          %v5489 = vadd.f32 %v5365, %v5450
          %v5490 = vadd.f32 %v5366, %v5452
          %v5491 = vadd.f32 %v5367, %v5455
          %v5492 = vadd.f32 %v5368, %v5457
          %v5493 = vadd.f32 %v5369, %v5460
          %v5494 = vadd.f32 %v5370, %v5462
          %v5495 = vlaneseq
          %v5496 = vshrl.u32 %v5495, 7
          %v5497 = vsub.s32 1, %v5496
          %v5498 = vrot.slane %v496, %v5497
          %v5499 = vmul.f32 %v4815, %v5498
          %v5500 = vmul.f32 %v4816, %v5498
          %v5501 = vmul.f32 %v4817, %v5498
          %v5502 = vmul.f32 %v4818, %v5498
          %v5503 = vmul.f32 %v4819, %v5498
          %v5504 = vmul.f32 %v4820, %v5498
          %v5505 = vmul.f32 %v4821, %v5498
          %v5506 = vmul.f32 %v4822, %v5498
          %v5507 = vmul.f32 %v4823, %v5498
          %v5508 = vmul.f32 %v4824, %v5498
          %v5509 = vmul.f32 %v4825, %v5498
          %v5510 = vmul.f32 %v4826, %v5498
          %v5511 = vmul.f32 %v4827, %v5498
          %v5512 = vmul.f32 %v4828, %v5498
          %v5513 = vmul.f32 %v4829, %v5498
          %v5514 = vmul.f32 %v4830, %v5498
          %v5515 = vmul.f32 %v4831, %v5498
          %v5516 = vmul.f32 %v4832, %v5498
          %v5517 = vmul.f32 %v4833, %v5498
          %v5518 = vmul.f32 %v4834, %v5498
          %v5519 = vmul.f32 %v4835, %v5498
          %v5520 = vmul.f32 %v4836, %v5498
          %v5521 = vmul.f32 %v4837, %v5498
          %v5522 = vmul.f32 %v4838, %v5498
          %v5547 = vrot.slane %v5499, 6
          %v5548 = vrot.slane %v5500, 6
          %v5549 = vsel %vm1506, %v5547, %v5548
          %v5550 = vrot.slane %v5501, 6
          %v5551 = vsel %vm1506, %v5548, %v5550
          %v5552 = vrot.slane %v5502, 6
          %v5553 = vrot.slane %v5503, 6
          %v5554 = vsel %vm1506, %v5552, %v5553
          %v5555 = vrot.slane %v5504, 6
          %v5556 = vsel %vm1506, %v5553, %v5555
          %v5557 = vrot.slane %v5505, 6
          %v5558 = vrot.slane %v5506, 6
          %v5559 = vsel %vm1506, %v5557, %v5558
          %v5560 = vrot.slane %v5507, 6
          %v5561 = vsel %vm1506, %v5558, %v5560
          %v5562 = vrot.slane %v5508, 6
          %v5563 = vrot.slane %v5509, 6
          %v5564 = vsel %vm1506, %v5562, %v5563
          %v5565 = vrot.slane %v5510, 6
          %v5566 = vsel %vm1506, %v5563, %v5565
          %v5567 = vrot.slane %v5511, 6
          %v5568 = vrot.slane %v5512, 6
          %v5569 = vsel %vm1506, %v5567, %v5568
          %v5570 = vrot.slane %v5513, 6
          %v5571 = vsel %vm1506, %v5568, %v5570
          %v5572 = vrot.slane %v5514, 6
          %v5573 = vrot.slane %v5515, 6
          %v5574 = vsel %vm1506, %v5572, %v5573
          %v5575 = vrot.slane %v5516, 6
          %v5576 = vsel %vm1506, %v5573, %v5575
          %v5577 = vrot.slane %v5517, 6
          %v5578 = vrot.slane %v5518, 6
          %v5579 = vsel %vm1506, %v5577, %v5578
          %v5580 = vrot.slane %v5519, 6
          %v5581 = vsel %vm1506, %v5578, %v5580
          %v5582 = vrot.slane %v5520, 6
          %v5583 = vrot.slane %v5521, 6
          %v5584 = vsel %vm1506, %v5582, %v5583
          %v5585 = vrot.slane %v5522, 6
          %v5586 = vsel %vm1506, %v5583, %v5585
          %v5603 = vadd.f32 %v5479, %v5549
          %v5604 = vadd.f32 %v5480, %v5551
          %v5605 = vadd.f32 %v5481, %v5554
          %v5606 = vadd.f32 %v5482, %v5556
          %v5607 = vadd.f32 %v5483, %v5559
          %v5608 = vadd.f32 %v5484, %v5561
          %v5609 = vadd.f32 %v5485, %v5564
          %v5610 = vadd.f32 %v5486, %v5566
          %v5611 = vadd.f32 %v5487, %v5569
          %v5612 = vadd.f32 %v5488, %v5571
          %v5613 = vadd.f32 %v5489, %v5574
          %v5614 = vadd.f32 %v5490, %v5576
          %v5615 = vadd.f32 %v5491, %v5579
          %v5616 = vadd.f32 %v5492, %v5581
          %v5617 = vadd.f32 %v5493, %v5584
          %v5618 = vadd.f32 %v5494, %v5586
          %s5619 = sadd.s32 %s764, 6
          %s5620 = smul.u32 %s5619, 24
          %s5621 = sadd.s32 %s5620, %s766
          %s5622 = scalar_lea.vmem [#allocation2], %s5621
          %v5623 = vld [vmem:[%s5622] sm:$0xff]
          %v5624 = vld [vmem:[%s5622 + $0x8] sm:$0xff]
          %v5625 = vld [vmem:[%s5622 + $0x10] sm:$0x3f]
          %v5626 = vld [vmem:[%s5622 + $0x18] sm:$0xff]
          %v5627 = vld [vmem:[%s5622 + $0x20] sm:$0xff]
          %v5628 = vld [vmem:[%s5622 + $0x28] sm:$0x3f]
          %v5629 = vld [vmem:[%s5622 + $0x30] sm:$0xff]
          %v5630 = vld [vmem:[%s5622 + $0x38] sm:$0xff]
          %v5631 = vld [vmem:[%s5622 + $0x40] sm:$0x3f]
          %v5632 = vld [vmem:[%s5622 + $0x48] sm:$0xff]
          %v5633 = vld [vmem:[%s5622 + $0x50] sm:$0xff]
          %v5634 = vld [vmem:[%s5622 + $0x58] sm:$0x3f]
          %v5635 = vld [vmem:[%s5622 + $0x60] sm:$0xff]
          %v5636 = vld [vmem:[%s5622 + $0x68] sm:$0xff]
          %v5637 = vld [vmem:[%s5622 + $0x70] sm:$0x3f]
          %v5638 = vld [vmem:[%s5622 + $0x78] sm:$0xff]
          %v5639 = vld [vmem:[%s5622 + $0x80] sm:$0xff]
          %v5640 = vld [vmem:[%s5622 + $0x88] sm:$0x3f]
          %v5641 = vld [vmem:[%s5622 + $0x90] sm:$0xff]
          %v5642 = vld [vmem:[%s5622 + $0x98] sm:$0xff]
          %v5643 = vld [vmem:[%s5622 + $0xa0] sm:$0x3f]
          %v5644 = vld [vmem:[%s5622 + $0xa8] sm:$0xff]
          %v5645 = vld [vmem:[%s5622 + $0xb0] sm:$0xff]
          %v5646 = vld [vmem:[%s5622 + $0xb8] sm:$0x3f]
          %v5647 = vlaneseq
          %v5648 = vshrl.u32 %v5647, 7
          %v5649 = vsub.s32 2, %v5648
          %v5650 = vrot.slane %v496, %v5649
          %v5651 = vmul.f32 %v5623, %v5650
          %v5652 = vmul.f32 %v5624, %v5650
          %v5653 = vmul.f32 %v5626, %v5650
          %v5654 = vmul.f32 %v5627, %v5650
          %v5655 = vmul.f32 %v5629, %v5650
          %v5656 = vmul.f32 %v5630, %v5650
          %v5657 = vmul.f32 %v5632, %v5650
          %v5658 = vmul.f32 %v5633, %v5650
          %v5659 = vmul.f32 %v5635, %v5650
          %v5660 = vmul.f32 %v5636, %v5650
          %v5661 = vmul.f32 %v5638, %v5650
          %v5662 = vmul.f32 %v5639, %v5650
          %v5663 = vmul.f32 %v5641, %v5650
          %v5664 = vmul.f32 %v5642, %v5650
          %v5665 = vmul.f32 %v5644, %v5650
          %v5666 = vmul.f32 %v5645, %v5650
          %v5667 = vadd.f32 %v5603, %v5651
          %v5668 = vadd.f32 %v5604, %v5652
          %v5669 = vadd.f32 %v5605, %v5653
          %v5670 = vadd.f32 %v5606, %v5654
          %v5671 = vadd.f32 %v5607, %v5655
          %v5672 = vadd.f32 %v5608, %v5656
          %v5673 = vadd.f32 %v5609, %v5657
          %v5674 = vadd.f32 %v5610, %v5658
          %v5675 = vadd.f32 %v5611, %v5659
          %v5676 = vadd.f32 %v5612, %v5660
          %v5677 = vadd.f32 %v5613, %v5661
          %v5678 = vadd.f32 %v5614, %v5662
          %v5679 = vadd.f32 %v5615, %v5663
          %v5680 = vadd.f32 %v5616, %v5664
          %v5681 = vadd.f32 %v5617, %v5665
          %v5682 = vadd.f32 %v5618, %v5666
          %v5683 = vlaneseq
          %v5684 = vshrl.u32 %v5683, 7
          %v5685 = vsub.s32 3, %v5684
          %v5686 = vrot.slane %v496, %v5685
          %v5687 = vmul.f32 %v5623, %v5686
          %v5688 = vmul.f32 %v5624, %v5686
          %v5689 = vmul.f32 %v5625, %v5686
          %v5690 = vmul.f32 %v5626, %v5686
          %v5691 = vmul.f32 %v5627, %v5686
          %v5692 = vmul.f32 %v5628, %v5686
          %v5693 = vmul.f32 %v5629, %v5686
          %v5694 = vmul.f32 %v5630, %v5686
          %v5695 = vmul.f32 %v5631, %v5686
          %v5696 = vmul.f32 %v5632, %v5686
          %v5697 = vmul.f32 %v5633, %v5686
          %v5698 = vmul.f32 %v5634, %v5686
          %v5699 = vmul.f32 %v5635, %v5686
          %v5700 = vmul.f32 %v5636, %v5686
          %v5701 = vmul.f32 %v5637, %v5686
          %v5702 = vmul.f32 %v5638, %v5686
          %v5703 = vmul.f32 %v5639, %v5686
          %v5704 = vmul.f32 %v5640, %v5686
          %v5705 = vmul.f32 %v5641, %v5686
          %v5706 = vmul.f32 %v5642, %v5686
          %v5707 = vmul.f32 %v5643, %v5686
          %v5708 = vmul.f32 %v5644, %v5686
          %v5709 = vmul.f32 %v5645, %v5686
          %v5710 = vmul.f32 %v5646, %v5686
          %v5735 = vrot.slane %v5687, 1
          %v5736 = vrot.slane %v5688, 1
          %v5737 = vsel %vm881, %v5735, %v5736
          %v5738 = vrot.slane %v5689, 1
          %v5739 = vsel %vm881, %v5736, %v5738
          %v5740 = vrot.slane %v5690, 1
          %v5741 = vrot.slane %v5691, 1
          %v5742 = vsel %vm881, %v5740, %v5741
          %v5743 = vrot.slane %v5692, 1
          %v5744 = vsel %vm881, %v5741, %v5743
          %v5745 = vrot.slane %v5693, 1
          %v5746 = vrot.slane %v5694, 1
          %v5747 = vsel %vm881, %v5745, %v5746
          %v5748 = vrot.slane %v5695, 1
          %v5749 = vsel %vm881, %v5746, %v5748
          %v5750 = vrot.slane %v5696, 1
          %v5751 = vrot.slane %v5697, 1
          %v5752 = vsel %vm881, %v5750, %v5751
          %v5753 = vrot.slane %v5698, 1
          %v5754 = vsel %vm881, %v5751, %v5753
          %v5755 = vrot.slane %v5699, 1
          %v5756 = vrot.slane %v5700, 1
          %v5757 = vsel %vm881, %v5755, %v5756
          %v5758 = vrot.slane %v5701, 1
          %v5759 = vsel %vm881, %v5756, %v5758
          %v5760 = vrot.slane %v5702, 1
          %v5761 = vrot.slane %v5703, 1
          %v5762 = vsel %vm881, %v5760, %v5761
          %v5763 = vrot.slane %v5704, 1
          %v5764 = vsel %vm881, %v5761, %v5763
          %v5765 = vrot.slane %v5705, 1
          %v5766 = vrot.slane %v5706, 1
          %v5767 = vsel %vm881, %v5765, %v5766
          %v5768 = vrot.slane %v5707, 1
          %v5769 = vsel %vm881, %v5766, %v5768
          %v5770 = vrot.slane %v5708, 1
          %v5771 = vrot.slane %v5709, 1
          %v5772 = vsel %vm881, %v5770, %v5771
          %v5773 = vrot.slane %v5710, 1
          %v5774 = vsel %vm881, %v5771, %v5773
          %v5791 = vadd.f32 %v5667, %v5737
          %v5792 = vadd.f32 %v5668, %v5739
          %v5793 = vadd.f32 %v5669, %v5742
          %v5794 = vadd.f32 %v5670, %v5744
          %v5795 = vadd.f32 %v5671, %v5747
          %v5796 = vadd.f32 %v5672, %v5749
          %v5797 = vadd.f32 %v5673, %v5752
          %v5798 = vadd.f32 %v5674, %v5754
          %v5799 = vadd.f32 %v5675, %v5757
          %v5800 = vadd.f32 %v5676, %v5759
          %v5801 = vadd.f32 %v5677, %v5762
          %v5802 = vadd.f32 %v5678, %v5764
          %v5803 = vadd.f32 %v5679, %v5767
          %v5804 = vadd.f32 %v5680, %v5769
          %v5805 = vadd.f32 %v5681, %v5772
          %v5806 = vadd.f32 %v5682, %v5774
          %v5807 = vlaneseq
          %v5808 = vshrl.u32 %v5807, 7
          %v5809 = vsub.s32 4, %v5808
          %v5810 = vrot.slane %v496, %v5809
          %v5811 = vmul.f32 %v5623, %v5810
          %v5812 = vmul.f32 %v5624, %v5810
          %v5813 = vmul.f32 %v5625, %v5810
          %v5814 = vmul.f32 %v5626, %v5810
          %v5815 = vmul.f32 %v5627, %v5810
          %v5816 = vmul.f32 %v5628, %v5810
          %v5817 = vmul.f32 %v5629, %v5810
          %v5818 = vmul.f32 %v5630, %v5810
          %v5819 = vmul.f32 %v5631, %v5810
          %v5820 = vmul.f32 %v5632, %v5810
          %v5821 = vmul.f32 %v5633, %v5810
          %v5822 = vmul.f32 %v5634, %v5810
          %v5823 = vmul.f32 %v5635, %v5810
          %v5824 = vmul.f32 %v5636, %v5810
          %v5825 = vmul.f32 %v5637, %v5810
          %v5826 = vmul.f32 %v5638, %v5810
          %v5827 = vmul.f32 %v5639, %v5810
          %v5828 = vmul.f32 %v5640, %v5810
          %v5829 = vmul.f32 %v5641, %v5810
          %v5830 = vmul.f32 %v5642, %v5810
          %v5831 = vmul.f32 %v5643, %v5810
          %v5832 = vmul.f32 %v5644, %v5810
          %v5833 = vmul.f32 %v5645, %v5810
          %v5834 = vmul.f32 %v5646, %v5810
          %v5859 = vrot.slane %v5811, 2
          %v5860 = vrot.slane %v5812, 2
          %v5861 = vsel %vm1006, %v5859, %v5860
          %v5862 = vrot.slane %v5813, 2
          %v5863 = vsel %vm1006, %v5860, %v5862
          %v5864 = vrot.slane %v5814, 2
          %v5865 = vrot.slane %v5815, 2
          %v5866 = vsel %vm1006, %v5864, %v5865
          %v5867 = vrot.slane %v5816, 2
          %v5868 = vsel %vm1006, %v5865, %v5867
          %v5869 = vrot.slane %v5817, 2
          %v5870 = vrot.slane %v5818, 2
          %v5871 = vsel %vm1006, %v5869, %v5870
          %v5872 = vrot.slane %v5819, 2
          %v5873 = vsel %vm1006, %v5870, %v5872
          %v5874 = vrot.slane %v5820, 2
          %v5875 = vrot.slane %v5821, 2
          %v5876 = vsel %vm1006, %v5874, %v5875
          %v5877 = vrot.slane %v5822, 2
          %v5878 = vsel %vm1006, %v5875, %v5877
          %v5879 = vrot.slane %v5823, 2
          %v5880 = vrot.slane %v5824, 2
          %v5881 = vsel %vm1006, %v5879, %v5880
          %v5882 = vrot.slane %v5825, 2
          %v5883 = vsel %vm1006, %v5880, %v5882
          %v5884 = vrot.slane %v5826, 2
          %v5885 = vrot.slane %v5827, 2
          %v5886 = vsel %vm1006, %v5884, %v5885
          %v5887 = vrot.slane %v5828, 2
          %v5888 = vsel %vm1006, %v5885, %v5887
          %v5889 = vrot.slane %v5829, 2
          %v5890 = vrot.slane %v5830, 2
          %v5891 = vsel %vm1006, %v5889, %v5890
          %v5892 = vrot.slane %v5831, 2
          %v5893 = vsel %vm1006, %v5890, %v5892
          %v5894 = vrot.slane %v5832, 2
          %v5895 = vrot.slane %v5833, 2
          %v5896 = vsel %vm1006, %v5894, %v5895
          %v5897 = vrot.slane %v5834, 2
          %v5898 = vsel %vm1006, %v5895, %v5897
          %v5915 = vadd.f32 %v5791, %v5861
          %v5916 = vadd.f32 %v5792, %v5863
          %v5917 = vadd.f32 %v5793, %v5866
          %v5918 = vadd.f32 %v5794, %v5868
          %v5919 = vadd.f32 %v5795, %v5871
          %v5920 = vadd.f32 %v5796, %v5873
          %v5921 = vadd.f32 %v5797, %v5876
          %v5922 = vadd.f32 %v5798, %v5878
          %v5923 = vadd.f32 %v5799, %v5881
          %v5924 = vadd.f32 %v5800, %v5883
          %v5925 = vadd.f32 %v5801, %v5886
          %v5926 = vadd.f32 %v5802, %v5888
          %v5927 = vadd.f32 %v5803, %v5891
          %v5928 = vadd.f32 %v5804, %v5893
          %v5929 = vadd.f32 %v5805, %v5896
          %v5930 = vadd.f32 %v5806, %v5898
          %v5931 = vlaneseq
          %v5932 = vshrl.u32 %v5931, 7
          %v5933 = vsub.s32 5, %v5932
          %v5934 = vrot.slane %v496, %v5933
          %v5935 = vmul.f32 %v5623, %v5934
          %v5936 = vmul.f32 %v5624, %v5934
          %v5937 = vmul.f32 %v5625, %v5934
          %v5938 = vmul.f32 %v5626, %v5934
          %v5939 = vmul.f32 %v5627, %v5934
          %v5940 = vmul.f32 %v5628, %v5934
          %v5941 = vmul.f32 %v5629, %v5934
          %v5942 = vmul.f32 %v5630, %v5934
          %v5943 = vmul.f32 %v5631, %v5934
          %v5944 = vmul.f32 %v5632, %v5934
          %v5945 = vmul.f32 %v5633, %v5934
          %v5946 = vmul.f32 %v5634, %v5934
          %v5947 = vmul.f32 %v5635, %v5934
          %v5948 = vmul.f32 %v5636, %v5934
          %v5949 = vmul.f32 %v5637, %v5934
          %v5950 = vmul.f32 %v5638, %v5934
          %v5951 = vmul.f32 %v5639, %v5934
          %v5952 = vmul.f32 %v5640, %v5934
          %v5953 = vmul.f32 %v5641, %v5934
          %v5954 = vmul.f32 %v5642, %v5934
          %v5955 = vmul.f32 %v5643, %v5934
          %v5956 = vmul.f32 %v5644, %v5934
          %v5957 = vmul.f32 %v5645, %v5934
          %v5958 = vmul.f32 %v5646, %v5934
          %v5983 = vrot.slane %v5935, 3
          %v5984 = vrot.slane %v5936, 3
          %v5985 = vsel %vm1131, %v5983, %v5984
          %v5986 = vrot.slane %v5937, 3
          %v5987 = vsel %vm1131, %v5984, %v5986
          %v5988 = vrot.slane %v5938, 3
          %v5989 = vrot.slane %v5939, 3
          %v5990 = vsel %vm1131, %v5988, %v5989
          %v5991 = vrot.slane %v5940, 3
          %v5992 = vsel %vm1131, %v5989, %v5991
          %v5993 = vrot.slane %v5941, 3
          %v5994 = vrot.slane %v5942, 3
          %v5995 = vsel %vm1131, %v5993, %v5994
          %v5996 = vrot.slane %v5943, 3
          %v5997 = vsel %vm1131, %v5994, %v5996
          %v5998 = vrot.slane %v5944, 3
          %v5999 = vrot.slane %v5945, 3
          %v6000 = vsel %vm1131, %v5998, %v5999
          %v6001 = vrot.slane %v5946, 3
          %v6002 = vsel %vm1131, %v5999, %v6001
          %v6003 = vrot.slane %v5947, 3
          %v6004 = vrot.slane %v5948, 3
          %v6005 = vsel %vm1131, %v6003, %v6004
          %v6006 = vrot.slane %v5949, 3
          %v6007 = vsel %vm1131, %v6004, %v6006
          %v6008 = vrot.slane %v5950, 3
          %v6009 = vrot.slane %v5951, 3
          %v6010 = vsel %vm1131, %v6008, %v6009
          %v6011 = vrot.slane %v5952, 3
          %v6012 = vsel %vm1131, %v6009, %v6011
          %v6013 = vrot.slane %v5953, 3
          %v6014 = vrot.slane %v5954, 3
          %v6015 = vsel %vm1131, %v6013, %v6014
          %v6016 = vrot.slane %v5955, 3
          %v6017 = vsel %vm1131, %v6014, %v6016
          %v6018 = vrot.slane %v5956, 3
          %v6019 = vrot.slane %v5957, 3
          %v6020 = vsel %vm1131, %v6018, %v6019
          %v6021 = vrot.slane %v5958, 3
          %v6022 = vsel %vm1131, %v6019, %v6021
          %v6039 = vadd.f32 %v5915, %v5985
          %v6040 = vadd.f32 %v5916, %v5987
          %v6041 = vadd.f32 %v5917, %v5990
          %v6042 = vadd.f32 %v5918, %v5992
          %v6043 = vadd.f32 %v5919, %v5995
          %v6044 = vadd.f32 %v5920, %v5997
          %v6045 = vadd.f32 %v5921, %v6000
          %v6046 = vadd.f32 %v5922, %v6002
          %v6047 = vadd.f32 %v5923, %v6005
          %v6048 = vadd.f32 %v5924, %v6007
          %v6049 = vadd.f32 %v5925, %v6010
          %v6050 = vadd.f32 %v5926, %v6012
          %v6051 = vadd.f32 %v5927, %v6015
          %v6052 = vadd.f32 %v5928, %v6017
          %v6053 = vadd.f32 %v5929, %v6020
          %v6054 = vadd.f32 %v5930, %v6022
          %v6055 = vlaneseq
          %v6056 = vshrl.u32 %v6055, 7
          %v6057 = vsub.s32 6, %v6056
          %v6058 = vrot.slane %v496, %v6057
          %v6059 = vmul.f32 %v5623, %v6058
          %v6060 = vmul.f32 %v5624, %v6058
          %v6061 = vmul.f32 %v5625, %v6058
          %v6062 = vmul.f32 %v5626, %v6058
          %v6063 = vmul.f32 %v5627, %v6058
          %v6064 = vmul.f32 %v5628, %v6058
          %v6065 = vmul.f32 %v5629, %v6058
          %v6066 = vmul.f32 %v5630, %v6058
          %v6067 = vmul.f32 %v5631, %v6058
          %v6068 = vmul.f32 %v5632, %v6058
          %v6069 = vmul.f32 %v5633, %v6058
          %v6070 = vmul.f32 %v5634, %v6058
          %v6071 = vmul.f32 %v5635, %v6058
          %v6072 = vmul.f32 %v5636, %v6058
          %v6073 = vmul.f32 %v5637, %v6058
          %v6074 = vmul.f32 %v5638, %v6058
          %v6075 = vmul.f32 %v5639, %v6058
          %v6076 = vmul.f32 %v5640, %v6058
          %v6077 = vmul.f32 %v5641, %v6058
          %v6078 = vmul.f32 %v5642, %v6058
          %v6079 = vmul.f32 %v5643, %v6058
          %v6080 = vmul.f32 %v5644, %v6058
          %v6081 = vmul.f32 %v5645, %v6058
          %v6082 = vmul.f32 %v5646, %v6058
          %v6107 = vrot.slane %v6059, 4
          %v6108 = vrot.slane %v6060, 4
          %v6109 = vsel %vm1256, %v6107, %v6108
          %v6110 = vrot.slane %v6061, 4
          %v6111 = vsel %vm1256, %v6108, %v6110
          %v6112 = vrot.slane %v6062, 4
          %v6113 = vrot.slane %v6063, 4
          %v6114 = vsel %vm1256, %v6112, %v6113
          %v6115 = vrot.slane %v6064, 4
          %v6116 = vsel %vm1256, %v6113, %v6115
          %v6117 = vrot.slane %v6065, 4
          %v6118 = vrot.slane %v6066, 4
          %v6119 = vsel %vm1256, %v6117, %v6118
          %v6120 = vrot.slane %v6067, 4
          %v6121 = vsel %vm1256, %v6118, %v6120
          %v6122 = vrot.slane %v6068, 4
          %v6123 = vrot.slane %v6069, 4
          %v6124 = vsel %vm1256, %v6122, %v6123
          %v6125 = vrot.slane %v6070, 4
          %v6126 = vsel %vm1256, %v6123, %v6125
          %v6127 = vrot.slane %v6071, 4
          %v6128 = vrot.slane %v6072, 4
          %v6129 = vsel %vm1256, %v6127, %v6128
          %v6130 = vrot.slane %v6073, 4
          %v6131 = vsel %vm1256, %v6128, %v6130
          %v6132 = vrot.slane %v6074, 4
          %v6133 = vrot.slane %v6075, 4
          %v6134 = vsel %vm1256, %v6132, %v6133
          %v6135 = vrot.slane %v6076, 4
          %v6136 = vsel %vm1256, %v6133, %v6135
          %v6137 = vrot.slane %v6077, 4
          %v6138 = vrot.slane %v6078, 4
          %v6139 = vsel %vm1256, %v6137, %v6138
          %v6140 = vrot.slane %v6079, 4
          %v6141 = vsel %vm1256, %v6138, %v6140
          %v6142 = vrot.slane %v6080, 4
          %v6143 = vrot.slane %v6081, 4
          %v6144 = vsel %vm1256, %v6142, %v6143
          %v6145 = vrot.slane %v6082, 4
          %v6146 = vsel %vm1256, %v6143, %v6145
          %v6163 = vadd.f32 %v6039, %v6109
          %v6164 = vadd.f32 %v6040, %v6111
          %v6165 = vadd.f32 %v6041, %v6114
          %v6166 = vadd.f32 %v6042, %v6116
          %v6167 = vadd.f32 %v6043, %v6119
          %v6168 = vadd.f32 %v6044, %v6121
          %v6169 = vadd.f32 %v6045, %v6124
          %v6170 = vadd.f32 %v6046, %v6126
          %v6171 = vadd.f32 %v6047, %v6129
          %v6172 = vadd.f32 %v6048, %v6131
          %v6173 = vadd.f32 %v6049, %v6134
          %v6174 = vadd.f32 %v6050, %v6136
          %v6175 = vadd.f32 %v6051, %v6139
          %v6176 = vadd.f32 %v6052, %v6141
          %v6177 = vadd.f32 %v6053, %v6144
          %v6178 = vadd.f32 %v6054, %v6146
          %v6179 = vlaneseq
          %v6180 = vshrl.u32 %v6179, 7
          %v6181 = vsub.s32 7, %v6180
          %v6182 = vrot.slane %v496, %v6181
          %v6183 = vmul.f32 %v5623, %v6182
          %v6184 = vmul.f32 %v5624, %v6182
          %v6185 = vmul.f32 %v5625, %v6182
          %v6186 = vmul.f32 %v5626, %v6182
          %v6187 = vmul.f32 %v5627, %v6182
          %v6188 = vmul.f32 %v5628, %v6182
          %v6189 = vmul.f32 %v5629, %v6182
          %v6190 = vmul.f32 %v5630, %v6182
          %v6191 = vmul.f32 %v5631, %v6182
          %v6192 = vmul.f32 %v5632, %v6182
          %v6193 = vmul.f32 %v5633, %v6182
          %v6194 = vmul.f32 %v5634, %v6182
          %v6195 = vmul.f32 %v5635, %v6182
          %v6196 = vmul.f32 %v5636, %v6182
          %v6197 = vmul.f32 %v5637, %v6182
          %v6198 = vmul.f32 %v5638, %v6182
          %v6199 = vmul.f32 %v5639, %v6182
          %v6200 = vmul.f32 %v5640, %v6182
          %v6201 = vmul.f32 %v5641, %v6182
          %v6202 = vmul.f32 %v5642, %v6182
          %v6203 = vmul.f32 %v5643, %v6182
          %v6204 = vmul.f32 %v5644, %v6182
          %v6205 = vmul.f32 %v5645, %v6182
          %v6206 = vmul.f32 %v5646, %v6182
          %v6231 = vrot.slane %v6183, 5
          %v6232 = vrot.slane %v6184, 5
          %v6233 = vsel %vm1381, %v6231, %v6232
          %v6234 = vrot.slane %v6185, 5
          %v6235 = vsel %vm1381, %v6232, %v6234
          %v6236 = vrot.slane %v6186, 5
          %v6237 = vrot.slane %v6187, 5
          %v6238 = vsel %vm1381, %v6236, %v6237
          %v6239 = vrot.slane %v6188, 5
          %v6240 = vsel %vm1381, %v6237, %v6239
          %v6241 = vrot.slane %v6189, 5
          %v6242 = vrot.slane %v6190, 5
          %v6243 = vsel %vm1381, %v6241, %v6242
          %v6244 = vrot.slane %v6191, 5
          %v6245 = vsel %vm1381, %v6242, %v6244
          %v6246 = vrot.slane %v6192, 5
          %v6247 = vrot.slane %v6193, 5
          %v6248 = vsel %vm1381, %v6246, %v6247
          %v6249 = vrot.slane %v6194, 5
          %v6250 = vsel %vm1381, %v6247, %v6249
          %v6251 = vrot.slane %v6195, 5
          %v6252 = vrot.slane %v6196, 5
          %v6253 = vsel %vm1381, %v6251, %v6252
          %v6254 = vrot.slane %v6197, 5
          %v6255 = vsel %vm1381, %v6252, %v6254
          %v6256 = vrot.slane %v6198, 5
          %v6257 = vrot.slane %v6199, 5
          %v6258 = vsel %vm1381, %v6256, %v6257
          %v6259 = vrot.slane %v6200, 5
          %v6260 = vsel %vm1381, %v6257, %v6259
          %v6261 = vrot.slane %v6201, 5
          %v6262 = vrot.slane %v6202, 5
          %v6263 = vsel %vm1381, %v6261, %v6262
          %v6264 = vrot.slane %v6203, 5
          %v6265 = vsel %vm1381, %v6262, %v6264
          %v6266 = vrot.slane %v6204, 5
          %v6267 = vrot.slane %v6205, 5
          %v6268 = vsel %vm1381, %v6266, %v6267
          %v6269 = vrot.slane %v6206, 5
          %v6270 = vsel %vm1381, %v6267, %v6269
          %v6287 = vadd.f32 %v6163, %v6233
          %v6288 = vadd.f32 %v6164, %v6235
          %v6289 = vadd.f32 %v6165, %v6238
          %v6290 = vadd.f32 %v6166, %v6240
          %v6291 = vadd.f32 %v6167, %v6243
          %v6292 = vadd.f32 %v6168, %v6245
          %v6293 = vadd.f32 %v6169, %v6248
          %v6294 = vadd.f32 %v6170, %v6250
          %v6295 = vadd.f32 %v6171, %v6253
          %v6296 = vadd.f32 %v6172, %v6255
          %v6297 = vadd.f32 %v6173, %v6258
          %v6298 = vadd.f32 %v6174, %v6260
          %v6299 = vadd.f32 %v6175, %v6263
          %v6300 = vadd.f32 %v6176, %v6265
          %v6301 = vadd.f32 %v6177, %v6268
          %v6302 = vadd.f32 %v6178, %v6270
          %v6303 = vlaneseq
          %v6304 = vshrl.u32 %v6303, 7
          %v6305 = vsub.s32 0, %v6304
          %v6306 = vrot.slane %v497, %v6305
          %v6307 = vmul.f32 %v5623, %v6306
          %v6308 = vmul.f32 %v5624, %v6306
          %v6309 = vmul.f32 %v5625, %v6306
          %v6310 = vmul.f32 %v5626, %v6306
          %v6311 = vmul.f32 %v5627, %v6306
          %v6312 = vmul.f32 %v5628, %v6306
          %v6313 = vmul.f32 %v5629, %v6306
          %v6314 = vmul.f32 %v5630, %v6306
          %v6315 = vmul.f32 %v5631, %v6306
          %v6316 = vmul.f32 %v5632, %v6306
          %v6317 = vmul.f32 %v5633, %v6306
          %v6318 = vmul.f32 %v5634, %v6306
          %v6319 = vmul.f32 %v5635, %v6306
          %v6320 = vmul.f32 %v5636, %v6306
          %v6321 = vmul.f32 %v5637, %v6306
          %v6322 = vmul.f32 %v5638, %v6306
          %v6323 = vmul.f32 %v5639, %v6306
          %v6324 = vmul.f32 %v5640, %v6306
          %v6325 = vmul.f32 %v5641, %v6306
          %v6326 = vmul.f32 %v5642, %v6306
          %v6327 = vmul.f32 %v5643, %v6306
          %v6328 = vmul.f32 %v5644, %v6306
          %v6329 = vmul.f32 %v5645, %v6306
          %v6330 = vmul.f32 %v5646, %v6306
          %v6355 = vrot.slane %v6307, 6
          %v6356 = vrot.slane %v6308, 6
          %v6357 = vsel %vm1506, %v6355, %v6356
          %v6358 = vrot.slane %v6309, 6
          %v6359 = vsel %vm1506, %v6356, %v6358
          %v6360 = vrot.slane %v6310, 6
          %v6361 = vrot.slane %v6311, 6
          %v6362 = vsel %vm1506, %v6360, %v6361
          %v6363 = vrot.slane %v6312, 6
          %v6364 = vsel %vm1506, %v6361, %v6363
          %v6365 = vrot.slane %v6313, 6
          %v6366 = vrot.slane %v6314, 6
          %v6367 = vsel %vm1506, %v6365, %v6366
          %v6368 = vrot.slane %v6315, 6
          %v6369 = vsel %vm1506, %v6366, %v6368
          %v6370 = vrot.slane %v6316, 6
          %v6371 = vrot.slane %v6317, 6
          %v6372 = vsel %vm1506, %v6370, %v6371
          %v6373 = vrot.slane %v6318, 6
          %v6374 = vsel %vm1506, %v6371, %v6373
          %v6375 = vrot.slane %v6319, 6
          %v6376 = vrot.slane %v6320, 6
          %v6377 = vsel %vm1506, %v6375, %v6376
          %v6378 = vrot.slane %v6321, 6
          %v6379 = vsel %vm1506, %v6376, %v6378
          %v6380 = vrot.slane %v6322, 6
          %v6381 = vrot.slane %v6323, 6
          %v6382 = vsel %vm1506, %v6380, %v6381
          %v6383 = vrot.slane %v6324, 6
          %v6384 = vsel %vm1506, %v6381, %v6383
          %v6385 = vrot.slane %v6325, 6
          %v6386 = vrot.slane %v6326, 6
          %v6387 = vsel %vm1506, %v6385, %v6386
          %v6388 = vrot.slane %v6327, 6
          %v6389 = vsel %vm1506, %v6386, %v6388
          %v6390 = vrot.slane %v6328, 6
          %v6391 = vrot.slane %v6329, 6
          %v6392 = vsel %vm1506, %v6390, %v6391
          %v6393 = vrot.slane %v6330, 6
          %v6394 = vsel %vm1506, %v6391, %v6393
          %v6411 = vadd.f32 %v6287, %v6357
          %v6412 = vadd.f32 %v6288, %v6359
          %v6413 = vadd.f32 %v6289, %v6362
          %v6414 = vadd.f32 %v6290, %v6364
          %v6415 = vadd.f32 %v6291, %v6367
          %v6416 = vadd.f32 %v6292, %v6369
          %v6417 = vadd.f32 %v6293, %v6372
          %v6418 = vadd.f32 %v6294, %v6374
          %v6419 = vadd.f32 %v6295, %v6377
          %v6420 = vadd.f32 %v6296, %v6379
          %v6421 = vadd.f32 %v6297, %v6382
          %v6422 = vadd.f32 %v6298, %v6384
          %v6423 = vadd.f32 %v6299, %v6387
          %v6424 = vadd.f32 %v6300, %v6389
          %v6425 = vadd.f32 %v6301, %v6392
          %v6426 = vadd.f32 %v6302, %v6394
          %6427 = vadd.xlane.f32.xlu0 %v6411
          %v6428 = vpop.xlane.xlu0 %6427
          %6429 = vadd.xlane.f32.xlu0 %v6412
          %v6430 = vpop.xlane.xlu0 %6429
          %6431 = vadd.xlane.f32.xlu0 %v6413
          %v6432 = vpop.xlane.xlu0 %6431
          %6433 = vadd.xlane.f32.xlu0 %v6414
          %v6434 = vpop.xlane.xlu0 %6433
          %6435 = vadd.xlane.f32.xlu0 %v6415
          %v6436 = vpop.xlane.xlu0 %6435
          %6437 = vadd.xlane.f32.xlu0 %v6416
          %v6438 = vpop.xlane.xlu0 %6437
          %6439 = vadd.xlane.f32.xlu0 %v6417
          %v6440 = vpop.xlane.xlu0 %6439
          %6441 = vadd.xlane.f32.xlu0 %v6418
          %v6442 = vpop.xlane.xlu0 %6441
          %6443 = vadd.xlane.f32.xlu0 %v6419
          %v6444 = vpop.xlane.xlu0 %6443
          %6445 = vadd.xlane.f32.xlu0 %v6420
          %v6446 = vpop.xlane.xlu0 %6445
          %6447 = vadd.xlane.f32.xlu0 %v6421
          %v6448 = vpop.xlane.xlu0 %6447
          %6449 = vadd.xlane.f32.xlu0 %v6422
          %v6450 = vpop.xlane.xlu0 %6449
          %6451 = vadd.xlane.f32.xlu0 %v6423
          %v6452 = vpop.xlane.xlu0 %6451
          %6453 = vadd.xlane.f32.xlu0 %v6424
          %v6454 = vpop.xlane.xlu0 %6453
          %6455 = vadd.xlane.f32.xlu0 %v6425
          %v6456 = vpop.xlane.xlu0 %6455
          %6457 = vadd.xlane.f32.xlu0 %v6426
          %v6458 = vpop.xlane.xlu0 %6457
          %v6459 = vmul.f32 %v6428, 0.125
          %v6460 = vmul.f32 %v6430, 0.125
          %v6461 = vmul.f32 %v6432, 0.125
          %v6462 = vmul.f32 %v6434, 0.125
          %v6463 = vmul.f32 %v6436, 0.125
          %v6464 = vmul.f32 %v6438, 0.125
          %v6465 = vmul.f32 %v6440, 0.125
          %v6466 = vmul.f32 %v6442, 0.125
          %v6467 = vmul.f32 %v6444, 0.125
          %v6468 = vmul.f32 %v6446, 0.125
          %v6469 = vmul.f32 %v6448, 0.125
          %v6470 = vmul.f32 %v6450, 0.125
          %v6471 = vmul.f32 %v6452, 0.125
          %v6472 = vmul.f32 %v6454, 0.125
          %v6473 = vmul.f32 %v6456, 0.125
          %v6474 = vmul.f32 %v6458, 0.125
          %v6475 = vsub.f32 %v6411, %v6459
          %v6476 = vsub.f32 %v6412, %v6460
          %v6477 = vsub.f32 %v6413, %v6461
          %v6478 = vsub.f32 %v6414, %v6462
          %v6479 = vsub.f32 %v6415, %v6463
          %v6480 = vsub.f32 %v6416, %v6464
          %v6481 = vsub.f32 %v6417, %v6465
          %v6482 = vsub.f32 %v6418, %v6466
          %v6483 = vsub.f32 %v6419, %v6467
          %v6484 = vsub.f32 %v6420, %v6468
          %v6485 = vsub.f32 %v6421, %v6469
          %v6486 = vsub.f32 %v6422, %v6470
          %v6487 = vsub.f32 %v6423, %v6471
          %v6488 = vsub.f32 %v6424, %v6472
          %v6489 = vsub.f32 %v6425, %v6473
          %v6490 = vsub.f32 %v6426, %v6474
          %v6491 = vmul.f32 %v6475, %v511
          %v6492 = vmul.f32 %v6476, %v511
          %v6493 = vmul.f32 %v6477, %v511
          %v6494 = vmul.f32 %v6478, %v511
          %v6495 = vmul.f32 %v6479, %v511
          %v6496 = vmul.f32 %v6480, %v511
          %v6497 = vmul.f32 %v6481, %v511
          %v6498 = vmul.f32 %v6482, %v511
          %v6499 = vmul.f32 %v6483, %v511
          %v6500 = vmul.f32 %v6484, %v511
          %v6501 = vmul.f32 %v6485, %v511
          %v6502 = vmul.f32 %v6486, %v511
          %v6503 = vmul.f32 %v6487, %v511
          %v6504 = vmul.f32 %v6488, %v511
          %v6505 = vmul.f32 %v6489, %v511
          %v6506 = vmul.f32 %v6490, %v511
          %v6507 = vmul.f32 %v6491, %v6491
          %v6508 = vmul.f32 %v6492, %v6492
          %v6509 = vmul.f32 %v6493, %v6493
          %v6510 = vmul.f32 %v6494, %v6494
          %v6511 = vmul.f32 %v6495, %v6495
          %v6512 = vmul.f32 %v6496, %v6496
          %v6513 = vmul.f32 %v6497, %v6497
          %v6514 = vmul.f32 %v6498, %v6498
          %v6515 = vmul.f32 %v6499, %v6499
          %v6516 = vmul.f32 %v6500, %v6500
          %v6517 = vmul.f32 %v6501, %v6501
          %v6518 = vmul.f32 %v6502, %v6502
          %v6519 = vmul.f32 %v6503, %v6503
          %v6520 = vmul.f32 %v6504, %v6504
          %v6521 = vmul.f32 %v6505, %v6505
          %v6522 = vmul.f32 %v6506, %v6506
          %6523 = vadd.xlane.f32.xlu0 %v6507
          %v6524 = vpop.xlane.xlu0 %6523
          %6525 = vadd.xlane.f32.xlu0 %v6508
          %v6526 = vpop.xlane.xlu0 %6525
          %6527 = vadd.xlane.f32.xlu0 %v6509
          %v6528 = vpop.xlane.xlu0 %6527
          %6529 = vadd.xlane.f32.xlu0 %v6510
          %v6530 = vpop.xlane.xlu0 %6529
          %6531 = vadd.xlane.f32.xlu0 %v6511
          %v6532 = vpop.xlane.xlu0 %6531
          %6533 = vadd.xlane.f32.xlu0 %v6512
          %v6534 = vpop.xlane.xlu0 %6533
          %6535 = vadd.xlane.f32.xlu0 %v6513
          %v6536 = vpop.xlane.xlu0 %6535
          %6537 = vadd.xlane.f32.xlu0 %v6514
          %v6538 = vpop.xlane.xlu0 %6537
          %6539 = vadd.xlane.f32.xlu0 %v6515
          %v6540 = vpop.xlane.xlu0 %6539
          %6541 = vadd.xlane.f32.xlu0 %v6516
          %v6542 = vpop.xlane.xlu0 %6541
          %6543 = vadd.xlane.f32.xlu0 %v6517
          %v6544 = vpop.xlane.xlu0 %6543
          %6545 = vadd.xlane.f32.xlu0 %v6518
          %v6546 = vpop.xlane.xlu0 %6545
          %6547 = vadd.xlane.f32.xlu0 %v6519
          %v6548 = vpop.xlane.xlu0 %6547
          %6549 = vadd.xlane.f32.xlu0 %v6520
          %v6550 = vpop.xlane.xlu0 %6549
          %6551 = vadd.xlane.f32.xlu0 %v6521
          %v6552 = vpop.xlane.xlu0 %6551
          %6553 = vadd.xlane.f32.xlu0 %v6522
          %v6554 = vpop.xlane.xlu0 %6553
          %v6555 = vmul.f32 %v6524, 0.125
          %v6556 = vmul.f32 %v6526, 0.125
          %v6557 = vmul.f32 %v6528, 0.125
          %v6558 = vmul.f32 %v6530, 0.125
          %v6559 = vmul.f32 %v6532, 0.125
          %v6560 = vmul.f32 %v6534, 0.125
          %v6561 = vmul.f32 %v6536, 0.125
          %v6562 = vmul.f32 %v6538, 0.125
          %v6563 = vmul.f32 %v6540, 0.125
          %v6564 = vmul.f32 %v6542, 0.125
          %v6565 = vmul.f32 %v6544, 0.125
          %v6566 = vmul.f32 %v6546, 0.125
          %v6567 = vmul.f32 %v6548, 0.125
          %v6568 = vmul.f32 %v6550, 0.125
          %v6569 = vmul.f32 %v6552, 0.125
          %v6570 = vmul.f32 %v6554, 0.125
          %v6571 = vadd.f32 %v6555, 1e-06
          %v6572 = vadd.f32 %v6556, 1e-06
          %v6573 = vadd.f32 %v6557, 1e-06
          %v6574 = vadd.f32 %v6558, 1e-06
          %v6575 = vadd.f32 %v6559, 1e-06
          %v6576 = vadd.f32 %v6560, 1e-06
          %v6577 = vadd.f32 %v6561, 1e-06
          %v6578 = vadd.f32 %v6562, 1e-06
          %v6579 = vadd.f32 %v6563, 1e-06
          %v6580 = vadd.f32 %v6564, 1e-06
          %v6581 = vadd.f32 %v6565, 1e-06
          %v6582 = vadd.f32 %v6566, 1e-06
          %v6583 = vadd.f32 %v6567, 1e-06
          %v6584 = vadd.f32 %v6568, 1e-06
          %v6585 = vadd.f32 %v6569, 1e-06
          %v6586 = vadd.f32 %v6570, 1e-06
          %v6587 = vrsqrt.pop %v6571
          %v6588 = vrsqrt.pop %v6572
          %v6589 = vrsqrt.pop %v6573
          %v6590 = vrsqrt.pop %v6574
          %v6591 = vrsqrt.pop %v6575
          %v6592 = vrsqrt.pop %v6576
          %v6593 = vrsqrt.pop %v6577
          %v6594 = vrsqrt.pop %v6578
          %v6595 = vrsqrt.pop %v6579
          %v6596 = vrsqrt.pop %v6580
          %v6597 = vrsqrt.pop %v6581
          %v6598 = vrsqrt.pop %v6582
          %v6599 = vrsqrt.pop %v6583
          %v6600 = vrsqrt.pop %v6584
          %v6601 = vrsqrt.pop %v6585
          %v6602 = vrsqrt.pop %v6586
          %v6603 = vmul.f32 %v6475, %v6587
          %v6604 = vmul.f32 %v6476, %v6588
          %v6605 = vmul.f32 %v6477, %v6589
          %v6606 = vmul.f32 %v6478, %v6590
          %v6607 = vmul.f32 %v6479, %v6591
          %v6608 = vmul.f32 %v6480, %v6592
          %v6609 = vmul.f32 %v6481, %v6593
          %v6610 = vmul.f32 %v6482, %v6594
          %v6611 = vmul.f32 %v6483, %v6595
          %v6612 = vmul.f32 %v6484, %v6596
          %v6613 = vmul.f32 %v6485, %v6597
          %v6614 = vmul.f32 %v6486, %v6598
          %v6615 = vmul.f32 %v6487, %v6599
          %v6616 = vmul.f32 %v6488, %v6600
          %v6617 = vmul.f32 %v6489, %v6601
          %v6618 = vmul.f32 %v6490, %v6602
          %v6619 = vpack.c.bf16 %v6604, %v6603
          %v6620 = vpack.c.bf16 %v6606, %v6605
          %v6621 = vpack.c.bf16 %v6608, %v6607
          %v6622 = vpack.c.bf16 %v6610, %v6609
          %v6623 = vpack.c.bf16 %v6612, %v6611
          %v6624 = vpack.c.bf16 %v6614, %v6613
          %v6625 = vpack.c.bf16 %v6616, %v6615
          %v6626 = vpack.c.bf16 %v6618, %v6617
          %v6627 = vld [vmem:[%s3] sm:$0xff]
          %v6628 = vld [vmem:[%s3 + $0x8] sm:$0xff]
          %v6629 = vld [vmem:[%s3 + $0x10] sm:$0xff]
          %v6630 = vld [vmem:[%s3 + $0x18] sm:$0xff]
          %v6631 = vld [vmem:[%s3 + $0x20] sm:$0xff]
          %v6632 = vld [vmem:[%s3 + $0x28] sm:$0xff]
          %v6633 = vld [vmem:[%s3 + $0x30] sm:$0xff]
          %v6634 = vld [vmem:[%s3 + $0x38] sm:$0xff]
          %v6635 = vld [vmem:[%s3 + $0x40] sm:$0xff]
          %v6636 = vld [vmem:[%s3 + $0x48] sm:$0xff]
          %v6637 = vld [vmem:[%s3 + $0x50] sm:$0xff]
          %v6638 = vld [vmem:[%s3 + $0x58] sm:$0xff]
          %v6639 = vld [vmem:[%s3 + $0x60] sm:$0xff]
          %v6640 = vld [vmem:[%s3 + $0x68] sm:$0xff]
          %v6641 = vld [vmem:[%s3 + $0x70] sm:$0xff]
          %v6642 = vld [vmem:[%s3 + $0x78] sm:$0xff]
          %v6643 = vld [vmem:[%s3 + $0x80] sm:$0xff]
          %v6644 = vld [vmem:[%s3 + $0x88] sm:$0xff]
          %v6645 = vld [vmem:[%s3 + $0x90] sm:$0xff]
          %v6646 = vld [vmem:[%s3 + $0x98] sm:$0xff]
          %v6647 = vld [vmem:[%s3 + $0xa0] sm:$0xff]
          %v6648 = vld [vmem:[%s3 + $0xa8] sm:$0xff]
          %v6649 = vld [vmem:[%s3 + $0xb0] sm:$0xff]
          %v6650 = vld [vmem:[%s3 + $0xb8] sm:$0xff]
          %v6651 = vld [vmem:[%s3 + $0xc0] sm:$0xff]
          %v6652 = vld [vmem:[%s3 + $0xc8] sm:$0xff]
          %v6653 = vld [vmem:[%s3 + $0xd0] sm:$0xff]
          %v6654 = vld [vmem:[%s3 + $0xd8] sm:$0xff]
          %v6655 = vld [vmem:[%s3 + $0xe0] sm:$0xff]
          %v6656 = vld [vmem:[%s3 + $0xe8] sm:$0xff]
          %v6657 = vld [vmem:[%s3 + $0xf0] sm:$0xff]
          %v6658 = vld [vmem:[%s3 + $0xf8] sm:$0xff]
          %v6660 = vlaneseq
          %v6661 = vshrl.u32 %v6660, 7
          %v6662 = vsub.s32 0, %v6661
          %v6663 = vrot.slane %v499, %v6662
          %v6664 = vlaneseq
          %v6665 = vshrl.u32 %v6664, 7
          %v6666 = vsub.s32 1, %v6665
          %v6667 = vrot.slane %v499, %v6666
          %v6668 = vlaneseq
          %v6669 = vshrl.u32 %v6668, 7
          %v6670 = vsub.s32 2, %v6669
          %v6671 = vrot.slane %v499, %v6670
          %v6672 = vlaneseq
          %v6673 = vshrl.u32 %v6672, 7
          %v6674 = vsub.s32 3, %v6673
          %v6675 = vrot.slane %v499, %v6674
          %v6712 = vunpack.c.l.b16 %v6627
          %v6713 = vunpack.c.h.b16 %v6627
          %v6714 = vunpack.c.l.b16 %v6628
          %v6715 = vunpack.c.h.b16 %v6628
          %v6716 = vunpack.c.l.b16 %v6629
          %v6717 = vunpack.c.h.b16 %v6629
          %v6718 = vunpack.c.l.b16 %v6630
          %v6719 = vunpack.c.h.b16 %v6630
          %v6720 = vunpack.c.l.b16 %v6631
          %v6721 = vunpack.c.h.b16 %v6631
          %v6722 = vunpack.c.l.b16 %v6632
          %v6723 = vunpack.c.h.b16 %v6632
          %v6724 = vunpack.c.l.b16 %v6633
          %v6725 = vunpack.c.h.b16 %v6633
          %v6726 = vunpack.c.l.b16 %v6634
          %v6727 = vunpack.c.h.b16 %v6634
          %v6728 = vunpack.c.l.b16 %v6635
          %v6729 = vunpack.c.h.b16 %v6635
          %v6730 = vunpack.c.l.b16 %v6636
          %v6731 = vunpack.c.h.b16 %v6636
          %v6732 = vunpack.c.l.b16 %v6637
          %v6733 = vunpack.c.h.b16 %v6637
          %v6734 = vunpack.c.l.b16 %v6638
          %v6735 = vunpack.c.h.b16 %v6638
          %v6736 = vunpack.c.l.b16 %v6639
          %v6737 = vunpack.c.h.b16 %v6639
          %v6738 = vunpack.c.l.b16 %v6640
          %v6739 = vunpack.c.h.b16 %v6640
          %v6740 = vunpack.c.l.b16 %v6641
          %v6741 = vunpack.c.h.b16 %v6641
          %v6742 = vunpack.c.l.b16 %v6642
          %v6743 = vunpack.c.h.b16 %v6642
          %v6744 = vunpack.c.l.b16 %v6643
          %v6745 = vunpack.c.h.b16 %v6643
          %v6746 = vunpack.c.l.b16 %v6644
          %v6747 = vunpack.c.h.b16 %v6644
          %v6748 = vunpack.c.l.b16 %v6645
          %v6749 = vunpack.c.h.b16 %v6645
          %v6750 = vunpack.c.l.b16 %v6646
          %v6751 = vunpack.c.h.b16 %v6646
          %v6752 = vunpack.c.l.b16 %v6647
          %v6753 = vunpack.c.h.b16 %v6647
          %v6754 = vunpack.c.l.b16 %v6648
          %v6755 = vunpack.c.h.b16 %v6648
          %v6756 = vunpack.c.l.b16 %v6649
          %v6757 = vunpack.c.h.b16 %v6649
          %v6758 = vunpack.c.l.b16 %v6650
          %v6759 = vunpack.c.h.b16 %v6650
          %v6760 = vunpack.c.l.b16 %v6651
          %v6761 = vunpack.c.h.b16 %v6651
          %v6762 = vunpack.c.l.b16 %v6652
          %v6763 = vunpack.c.h.b16 %v6652
          %v6764 = vunpack.c.l.b16 %v6653
          %v6765 = vunpack.c.h.b16 %v6653
          %v6766 = vunpack.c.l.b16 %v6654
          %v6767 = vunpack.c.h.b16 %v6654
          %v6768 = vunpack.c.l.b16 %v6655
          %v6769 = vunpack.c.h.b16 %v6655
          %v6770 = vunpack.c.l.b16 %v6656
          %v6771 = vunpack.c.h.b16 %v6656
          %v6772 = vunpack.c.l.b16 %v6657
          %v6773 = vunpack.c.h.b16 %v6657
          %v6774 = vunpack.c.l.b16 %v6658
          %v6775 = vunpack.c.h.b16 %v6658
          %v6776 = vpack.c.b16 %v6716, %v6712
          %v6777 = vpack.c.b16 %v6717, %v6713
          %v6778 = vpack.c.b16 %v6718, %v6714
          %v6779 = vpack.c.b16 %v6719, %v6715
          %v6780 = vpack.c.b16 %v6724, %v6720
          %v6781 = vpack.c.b16 %v6725, %v6721
          %v6782 = vpack.c.b16 %v6726, %v6722
          %v6783 = vpack.c.b16 %v6727, %v6723
          %v6784 = vpack.c.b16 %v6732, %v6728
          %v6785 = vpack.c.b16 %v6733, %v6729
          %v6786 = vpack.c.b16 %v6734, %v6730
          %v6787 = vpack.c.b16 %v6735, %v6731
          %v6788 = vpack.c.b16 %v6740, %v6736
          %v6789 = vpack.c.b16 %v6741, %v6737
          %v6790 = vpack.c.b16 %v6742, %v6738
          %v6791 = vpack.c.b16 %v6743, %v6739
          %v6792 = vpack.c.b16 %v6748, %v6744
          %v6793 = vpack.c.b16 %v6749, %v6745
          %v6794 = vpack.c.b16 %v6750, %v6746
          %v6795 = vpack.c.b16 %v6751, %v6747
          %v6796 = vpack.c.b16 %v6756, %v6752
          %v6797 = vpack.c.b16 %v6757, %v6753
          %v6798 = vpack.c.b16 %v6758, %v6754
          %v6799 = vpack.c.b16 %v6759, %v6755
          %v6800 = vpack.c.b16 %v6764, %v6760
          %v6801 = vpack.c.b16 %v6765, %v6761
          %v6802 = vpack.c.b16 %v6766, %v6762
          %v6803 = vpack.c.b16 %v6767, %v6763
          %v6804 = vpack.c.b16 %v6772, %v6768
          %v6805 = vpack.c.b16 %v6773, %v6769
          %v6806 = vpack.c.b16 %v6774, %v6770
          %v6807 = vpack.c.b16 %v6775, %v6771
          %6840 = vmatprep.subr.bf16.mxu0 %v6805
          %6841 = vmatpush1.bf16.msra.mxu0 %v6804
          %6842 = vmatprep.subr.bf16.mxu0 %v6801
          %6843 = vmatpush1.bf16.msra.mxu0 %v6800
          %6844 = vmatprep.subr.bf16.mxu0 %v6797
          %6845 = vmatpush1.bf16.msra.mxu0 %v6796
          %6846 = vmatprep.subr.bf16.mxu0 %v6793
          %6847 = vmatpush1.bf16.msra.mxu0 %v6792
          %6848 = vmatprep.subr.bf16.mxu0 %v6789
          %6849 = vmatpush1.bf16.msra.mxu0 %v6788
          %6850 = vmatprep.subr.bf16.mxu0 %v6785
          %6851 = vmatpush1.bf16.msra.mxu0 %v6784
          %6852 = vmatprep.subr.bf16.mxu0 %v6781
          %6853 = vmatpush1.bf16.msra.mxu0 %v6780
          %6854 = vmatprep.subr.bf16.mxu0 %v6777
          %6855 = vmatpush1.bf16.msra.mxu0 %v6776
          %6856 = vmatprep.subr.bf16.mxu0 0
          %6857 = vmatpush2.bf16.msra.mxu0 0
          %6858 = vmatprep.subr.bf16.mxu0 0
          %6859 = vmatpush2.bf16.msra.mxu0 0
          %6860 = vmatprep.subr.bf16.mxu0 0
          %6861 = vmatpush2.bf16.msra.mxu0 0
          %6862 = vmatprep.subr.bf16.mxu0 0
          %6863 = vmatpush2.bf16.msra.mxu0 0
          %6864 = vmatprep.subr.bf16.mxu0 0
          %6865 = vmatpush2.bf16.msra.mxu0 0
          %6866 = vmatprep.subr.bf16.mxu0 0
          %6867 = vmatpush2.bf16.msra.mxu0 0
          %6868 = vmatprep.subr.bf16.mxu0 0
          %6869 = vmatpush2.bf16.msra.mxu0 0
          %6870 = vmatprep.subr.bf16.mxu0 0
          %6871 = vmatpush2.bf16.msra.mxu0 0
          %6872 = vmatprep.mubr.bf16.mxu0 0
          %6873 = vmatmul.mubr.bf16.gmra.mxu0 %v6619
          %v6874 = vpop.f32.mrf.mxu0
          %v6875 = vadd.f32 %v6663, %v6874
          %v6876 = vpop.f32.mrf.mxu0
          %v6877 = vadd.f32 %v6667, %v6876
          %v6878 = vpop.f32.mrf.mxu0
          %v6879 = vadd.f32 %v6663, %v6878
          %v6880 = vpop.f32.mrf.mxu0
          %v6881 = vadd.f32 %v6667, %v6880
          %6882 = vmatprep.mubr.bf16.mxu0 0
          %6883 = vmatmul.mubr.bf16.gmra.mxu0 %v6620
          %v6884 = vpop.f32.mrf.mxu0
          %v6885 = vadd.f32 %v6663, %v6884
          %v6886 = vpop.f32.mrf.mxu0
          %v6887 = vadd.f32 %v6667, %v6886
          %v6888 = vpop.f32.mrf.mxu0
          %v6889 = vadd.f32 %v6663, %v6888
          %v6890 = vpop.f32.mrf.mxu0
          %v6891 = vadd.f32 %v6667, %v6890
          %6892 = vmatprep.mubr.bf16.mxu0 0
          %6893 = vmatmul.mubr.bf16.gmra.mxu0 %v6621
          %v6894 = vpop.f32.mrf.mxu0
          %v6895 = vadd.f32 %v6663, %v6894
          %v6896 = vpop.f32.mrf.mxu0
          %v6897 = vadd.f32 %v6667, %v6896
          %v6898 = vpop.f32.mrf.mxu0
          %v6899 = vadd.f32 %v6663, %v6898
          %v6900 = vpop.f32.mrf.mxu0
          %v6901 = vadd.f32 %v6667, %v6900
          %6902 = vmatprep.mubr.bf16.mxu0 0
          %6903 = vmatmul.mubr.bf16.gmra.mxu0 %v6622
          %v6904 = vpop.f32.mrf.mxu0
          %v6905 = vadd.f32 %v6663, %v6904
          %v6906 = vpop.f32.mrf.mxu0
          %v6907 = vadd.f32 %v6667, %v6906
          %v6908 = vpop.f32.mrf.mxu0
          %v6909 = vadd.f32 %v6663, %v6908
          %v6910 = vpop.f32.mrf.mxu0
          %v6911 = vadd.f32 %v6667, %v6910
          %6912 = vmatprep.mubr.bf16.mxu0 0
          %6913 = vmatmul.mubr.bf16.gmra.mxu0 %v6623
          %v6914 = vpop.f32.mrf.mxu0
          %v6915 = vadd.f32 %v6663, %v6914
          %v6916 = vpop.f32.mrf.mxu0
          %v6917 = vadd.f32 %v6667, %v6916
          %v6918 = vpop.f32.mrf.mxu0
          %v6919 = vadd.f32 %v6663, %v6918
          %v6920 = vpop.f32.mrf.mxu0
          %v6921 = vadd.f32 %v6667, %v6920
          %6922 = vmatprep.mubr.bf16.mxu0 0
          %6923 = vmatmul.mubr.bf16.gmra.mxu0 %v6624
          %v6924 = vpop.f32.mrf.mxu0
          %v6925 = vadd.f32 %v6663, %v6924
          %v6926 = vpop.f32.mrf.mxu0
          %v6927 = vadd.f32 %v6667, %v6926
          %v6928 = vpop.f32.mrf.mxu0
          %v6929 = vadd.f32 %v6663, %v6928
          %v6930 = vpop.f32.mrf.mxu0
          %v6931 = vadd.f32 %v6667, %v6930
          %6932 = vmatprep.mubr.bf16.mxu0 0
          %6933 = vmatmul.mubr.bf16.gmra.mxu0 %v6625
          %v6934 = vpop.f32.mrf.mxu0
          %v6935 = vadd.f32 %v6663, %v6934
          %v6936 = vpop.f32.mrf.mxu0
          %v6937 = vadd.f32 %v6667, %v6936
          %v6938 = vpop.f32.mrf.mxu0
          %v6939 = vadd.f32 %v6663, %v6938
          %v6940 = vpop.f32.mrf.mxu0
          %v6941 = vadd.f32 %v6667, %v6940
          %6942 = vmatprep.mubr.bf16.mxu0 0
          %6943 = vmatmul.mubr.bf16.gmra.mxu0 %v6626
          %v6944 = vpop.f32.mrf.mxu0
          %v6945 = vadd.f32 %v6663, %v6944
          %v6946 = vpop.f32.mrf.mxu0
          %v6947 = vadd.f32 %v6667, %v6946
          %v6948 = vpop.f32.mrf.mxu0
          %v6949 = vadd.f32 %v6663, %v6948
          %v6950 = vpop.f32.mrf.mxu0
          %v6951 = vadd.f32 %v6667, %v6950
          %6952 = vdwg.mxu0
          %6953 = vmatprep.subr.bf16.mxu0 %v6807
          %6954 = vmatpush1.bf16.msra.mxu0 %v6806
          %6955 = vmatprep.subr.bf16.mxu0 %v6803
          %6956 = vmatpush1.bf16.msra.mxu0 %v6802
          %6957 = vmatprep.subr.bf16.mxu0 %v6799
          %6958 = vmatpush1.bf16.msra.mxu0 %v6798
          %6959 = vmatprep.subr.bf16.mxu0 %v6795
          %6960 = vmatpush1.bf16.msra.mxu0 %v6794
          %6961 = vmatprep.subr.bf16.mxu0 %v6791
          %6962 = vmatpush1.bf16.msra.mxu0 %v6790
          %6963 = vmatprep.subr.bf16.mxu0 %v6787
          %6964 = vmatpush1.bf16.msra.mxu0 %v6786
          %6965 = vmatprep.subr.bf16.mxu0 %v6783
          %6966 = vmatpush1.bf16.msra.mxu0 %v6782
          %6967 = vmatprep.subr.bf16.mxu0 %v6779
          %6968 = vmatpush1.bf16.msra.mxu0 %v6778
          %6969 = vmatprep.subr.bf16.mxu0 0
          %6970 = vmatpush2.bf16.msra.mxu0 0
          %6971 = vmatprep.subr.bf16.mxu0 0
          %6972 = vmatpush2.bf16.msra.mxu0 0
          %6973 = vmatprep.subr.bf16.mxu0 0
          %6974 = vmatpush2.bf16.msra.mxu0 0
          %6975 = vmatprep.subr.bf16.mxu0 0
          %6976 = vmatpush2.bf16.msra.mxu0 0
          %6977 = vmatprep.subr.bf16.mxu0 0
          %6978 = vmatpush2.bf16.msra.mxu0 0
          %6979 = vmatprep.subr.bf16.mxu0 0
          %6980 = vmatpush2.bf16.msra.mxu0 0
          %6981 = vmatprep.subr.bf16.mxu0 0
          %6982 = vmatpush2.bf16.msra.mxu0 0
          %6983 = vmatprep.subr.bf16.mxu0 0
          %6984 = vmatpush2.bf16.msra.mxu0 0
          %6985 = vmatprep.mubr.bf16.mxu0 0
          %6986 = vmatmul.mubr.bf16.gmra.mxu0 %v6619
          %v6987 = vpop.f32.mrf.mxu0
          %v6988 = vadd.f32 %v6671, %v6987
          %v6989 = vpop.f32.mrf.mxu0
          %v6990 = vadd.f32 %v6675, %v6989
          %v6991 = vpop.f32.mrf.mxu0
          %v6992 = vadd.f32 %v6671, %v6991
          %v6993 = vpop.f32.mrf.mxu0
          %v6994 = vadd.f32 %v6675, %v6993
          %6995 = vmatprep.mubr.bf16.mxu0 0
          %6996 = vmatmul.mubr.bf16.gmra.mxu0 %v6620
          %v6997 = vpop.f32.mrf.mxu0
          %v6998 = vadd.f32 %v6671, %v6997
          %v6999 = vpop.f32.mrf.mxu0
          %v7000 = vadd.f32 %v6675, %v6999
          %v7001 = vpop.f32.mrf.mxu0
          %v7002 = vadd.f32 %v6671, %v7001
          %v7003 = vpop.f32.mrf.mxu0
          %v7004 = vadd.f32 %v6675, %v7003
          %7005 = vmatprep.mubr.bf16.mxu0 0
          %7006 = vmatmul.mubr.bf16.gmra.mxu0 %v6621
          %v7007 = vpop.f32.mrf.mxu0
          %v7008 = vadd.f32 %v6671, %v7007
          %v7009 = vpop.f32.mrf.mxu0
          %v7010 = vadd.f32 %v6675, %v7009
          %v7011 = vpop.f32.mrf.mxu0
          %v7012 = vadd.f32 %v6671, %v7011
          %v7013 = vpop.f32.mrf.mxu0
          %v7014 = vadd.f32 %v6675, %v7013
          %7015 = vmatprep.mubr.bf16.mxu0 0
          %7016 = vmatmul.mubr.bf16.gmra.mxu0 %v6622
          %v7017 = vpop.f32.mrf.mxu0
          %v7018 = vadd.f32 %v6671, %v7017
          %v7019 = vpop.f32.mrf.mxu0
          %v7020 = vadd.f32 %v6675, %v7019
          %v7021 = vpop.f32.mrf.mxu0
          %v7022 = vadd.f32 %v6671, %v7021
          %v7023 = vpop.f32.mrf.mxu0
          %v7024 = vadd.f32 %v6675, %v7023
          %7025 = vmatprep.mubr.bf16.mxu0 0
          %7026 = vmatmul.mubr.bf16.gmra.mxu0 %v6623
          %v7027 = vpop.f32.mrf.mxu0
          %v7028 = vadd.f32 %v6671, %v7027
          %v7029 = vpop.f32.mrf.mxu0
          %v7030 = vadd.f32 %v6675, %v7029
          %v7031 = vpop.f32.mrf.mxu0
          %v7032 = vadd.f32 %v6671, %v7031
          %v7033 = vpop.f32.mrf.mxu0
          %v7034 = vadd.f32 %v6675, %v7033
          %7035 = vmatprep.mubr.bf16.mxu0 0
          %7036 = vmatmul.mubr.bf16.gmra.mxu0 %v6624
          %v7037 = vpop.f32.mrf.mxu0
          %v7038 = vadd.f32 %v6671, %v7037
          %v7039 = vpop.f32.mrf.mxu0
          %v7040 = vadd.f32 %v6675, %v7039
          %v7041 = vpop.f32.mrf.mxu0
          %v7042 = vadd.f32 %v6671, %v7041
          %v7043 = vpop.f32.mrf.mxu0
          %v7044 = vadd.f32 %v6675, %v7043
          %7045 = vmatprep.mubr.bf16.mxu0 0
          %7046 = vmatmul.mubr.bf16.gmra.mxu0 %v6625
          %v7047 = vpop.f32.mrf.mxu0
          %v7048 = vadd.f32 %v6671, %v7047
          %v7049 = vpop.f32.mrf.mxu0
          %v7050 = vadd.f32 %v6675, %v7049
          %v7051 = vpop.f32.mrf.mxu0
          %v7052 = vadd.f32 %v6671, %v7051
          %v7053 = vpop.f32.mrf.mxu0
          %v7054 = vadd.f32 %v6675, %v7053
          %7055 = vmatprep.mubr.bf16.mxu0 0
          %7056 = vmatmul.mubr.bf16.gmra.mxu0 %v6626
          %v7057 = vpop.f32.mrf.mxu0
          %v7058 = vadd.f32 %v6671, %v7057
          %v7059 = vpop.f32.mrf.mxu0
          %v7060 = vadd.f32 %v6675, %v7059
          %v7061 = vpop.f32.mrf.mxu0
          %v7062 = vadd.f32 %v6671, %v7061
          %v7063 = vpop.f32.mrf.mxu0
          %v7064 = vadd.f32 %v6675, %v7063
          %7065 = vdwg.mxu0
          %v7066 = vmul.f32 %v6875, 0.5
          %v7067 = vmul.f32 %v6877, 0.5
          %v7068 = vmul.f32 %v6988, 0.5
          %v7069 = vmul.f32 %v6990, 0.5
          %v7070 = vmul.f32 %v6879, 0.5
          %v7071 = vmul.f32 %v6881, 0.5
          %v7072 = vmul.f32 %v6992, 0.5
          %v7073 = vmul.f32 %v6994, 0.5
          %v7074 = vmul.f32 %v6885, 0.5
          %v7075 = vmul.f32 %v6887, 0.5
          %v7076 = vmul.f32 %v6998, 0.5
          %v7077 = vmul.f32 %v7000, 0.5
          %v7078 = vmul.f32 %v6889, 0.5
          %v7079 = vmul.f32 %v6891, 0.5
          %v7080 = vmul.f32 %v7002, 0.5
          %v7081 = vmul.f32 %v7004, 0.5
          %v7082 = vmul.f32 %v6895, 0.5
          %v7083 = vmul.f32 %v6897, 0.5
          %v7084 = vmul.f32 %v7008, 0.5
          %v7085 = vmul.f32 %v7010, 0.5
          %v7086 = vmul.f32 %v6899, 0.5
          %v7087 = vmul.f32 %v6901, 0.5
          %v7088 = vmul.f32 %v7012, 0.5
          %v7089 = vmul.f32 %v7014, 0.5
          %v7090 = vmul.f32 %v6905, 0.5
          %v7091 = vmul.f32 %v6907, 0.5
          %v7092 = vmul.f32 %v7018, 0.5
          %v7093 = vmul.f32 %v7020, 0.5
          %v7094 = vmul.f32 %v6909, 0.5
          %v7095 = vmul.f32 %v6911, 0.5
          %v7096 = vmul.f32 %v7022, 0.5
          %v7097 = vmul.f32 %v7024, 0.5
          %v7098 = vmul.f32 %v6915, 0.5
          %v7099 = vmul.f32 %v6917, 0.5
          %v7100 = vmul.f32 %v7028, 0.5
          %v7101 = vmul.f32 %v7030, 0.5
          %v7102 = vmul.f32 %v6919, 0.5
          %v7103 = vmul.f32 %v6921, 0.5
          %v7104 = vmul.f32 %v7032, 0.5
          %v7105 = vmul.f32 %v7034, 0.5
          %v7106 = vmul.f32 %v6925, 0.5
          %v7107 = vmul.f32 %v6927, 0.5
          %v7108 = vmul.f32 %v7038, 0.5
          %v7109 = vmul.f32 %v7040, 0.5
          %v7110 = vmul.f32 %v6929, 0.5
          %v7111 = vmul.f32 %v6931, 0.5
          %v7112 = vmul.f32 %v7042, 0.5
          %v7113 = vmul.f32 %v7044, 0.5
          %v7114 = vmul.f32 %v6935, 0.5
          %v7115 = vmul.f32 %v6937, 0.5
          %v7116 = vmul.f32 %v7048, 0.5
          %v7117 = vmul.f32 %v7050, 0.5
          %v7118 = vmul.f32 %v6939, 0.5
          %v7119 = vmul.f32 %v6941, 0.5
          %v7120 = vmul.f32 %v7052, 0.5
          %v7121 = vmul.f32 %v7054, 0.5
          %v7122 = vmul.f32 %v6945, 0.5
          %v7123 = vmul.f32 %v6947, 0.5
          %v7124 = vmul.f32 %v7058, 0.5
          %v7125 = vmul.f32 %v7060, 0.5
          %v7126 = vmul.f32 %v6949, 0.5
          %v7127 = vmul.f32 %v6951, 0.5
          %v7128 = vmul.f32 %v7062, 0.5
          %v7129 = vmul.f32 %v7064, 0.5
          %v7130 = vmul.f32 %v6875, 0.70710677
          %v7131 = vmul.f32 %v6877, 0.70710677
          %v7132 = vmul.f32 %v6988, 0.70710677
          %v7133 = vmul.f32 %v6990, 0.70710677
          %v7134 = vmul.f32 %v6879, 0.70710677
          %v7135 = vmul.f32 %v6881, 0.70710677
          %v7136 = vmul.f32 %v6992, 0.70710677
          %v7137 = vmul.f32 %v6994, 0.70710677
          %v7138 = vmul.f32 %v6885, 0.70710677
          %v7139 = vmul.f32 %v6887, 0.70710677
          %v7140 = vmul.f32 %v6998, 0.70710677
          %v7141 = vmul.f32 %v7000, 0.70710677
          %v7142 = vmul.f32 %v6889, 0.70710677
          %v7143 = vmul.f32 %v6891, 0.70710677
          %v7144 = vmul.f32 %v7002, 0.70710677
          %v7145 = vmul.f32 %v7004, 0.70710677
          %v7146 = vmul.f32 %v6895, 0.70710677
          %v7147 = vmul.f32 %v6897, 0.70710677
          %v7148 = vmul.f32 %v7008, 0.70710677
          %v7149 = vmul.f32 %v7010, 0.70710677
          %v7150 = vmul.f32 %v6899, 0.70710677
          %v7151 = vmul.f32 %v6901, 0.70710677
          %v7152 = vmul.f32 %v7012, 0.70710677
          %v7153 = vmul.f32 %v7014, 0.70710677
          %v7154 = vmul.f32 %v6905, 0.70710677
          %v7155 = vmul.f32 %v6907, 0.70710677
          %v7156 = vmul.f32 %v7018, 0.70710677
          %v7157 = vmul.f32 %v7020, 0.70710677
          %v7158 = vmul.f32 %v6909, 0.70710677
          %v7159 = vmul.f32 %v6911, 0.70710677
          %v7160 = vmul.f32 %v7022, 0.70710677
          %v7161 = vmul.f32 %v7024, 0.70710677
          %v7162 = vmul.f32 %v6915, 0.70710677
          %v7163 = vmul.f32 %v6917, 0.70710677
          %v7164 = vmul.f32 %v7028, 0.70710677
          %v7165 = vmul.f32 %v7030, 0.70710677
          %v7166 = vmul.f32 %v6919, 0.70710677
          %v7167 = vmul.f32 %v6921, 0.70710677
          %v7168 = vmul.f32 %v7032, 0.70710677
          %v7169 = vmul.f32 %v7034, 0.70710677
          %v7170 = vmul.f32 %v6925, 0.70710677
          %v7171 = vmul.f32 %v6927, 0.70710677
          %v7172 = vmul.f32 %v7038, 0.70710677
          %v7173 = vmul.f32 %v7040, 0.70710677
          %v7174 = vmul.f32 %v6929, 0.70710677
          %v7175 = vmul.f32 %v6931, 0.70710677
          %v7176 = vmul.f32 %v7042, 0.70710677
          %v7177 = vmul.f32 %v7044, 0.70710677
          %v7178 = vmul.f32 %v6935, 0.70710677
          %v7179 = vmul.f32 %v6937, 0.70710677
          %v7180 = vmul.f32 %v7048, 0.70710677
          %v7181 = vmul.f32 %v7050, 0.70710677
          %v7182 = vmul.f32 %v6939, 0.70710677
          %v7183 = vmul.f32 %v6941, 0.70710677
          %v7184 = vmul.f32 %v7052, 0.70710677
          %v7185 = vmul.f32 %v7054, 0.70710677
          %v7186 = vmul.f32 %v6945, 0.70710677
          %v7187 = vmul.f32 %v6947, 0.70710677
          %v7188 = vmul.f32 %v7058, 0.70710677
          %v7189 = vmul.f32 %v7060, 0.70710677
          %v7190 = vmul.f32 %v6949, 0.70710677
          %v7191 = vmul.f32 %v6951, 0.70710677
          %v7192 = vmul.f32 %v7062, 0.70710677
          %v7193 = vmul.f32 %v7064, 0.70710677
          %v7194 = verf.f32.pop %v7130
          %v7195 = verf.f32.pop %v7131
          %v7196 = verf.f32.pop %v7132
          %v7197 = verf.f32.pop %v7133
          %v7198 = verf.f32.pop %v7134
          %v7199 = verf.f32.pop %v7135
          %v7200 = verf.f32.pop %v7136
          %v7201 = verf.f32.pop %v7137
          %v7202 = verf.f32.pop %v7138
          %v7203 = verf.f32.pop %v7139
          %v7204 = verf.f32.pop %v7140
          %v7205 = verf.f32.pop %v7141
          %v7206 = verf.f32.pop %v7142
          %v7207 = verf.f32.pop %v7143
          %v7208 = verf.f32.pop %v7144
          %v7209 = verf.f32.pop %v7145
          %v7210 = verf.f32.pop %v7146
          %v7211 = verf.f32.pop %v7147
          %v7212 = verf.f32.pop %v7148
          %v7213 = verf.f32.pop %v7149
          %v7214 = verf.f32.pop %v7150
          %v7215 = verf.f32.pop %v7151
          %v7216 = verf.f32.pop %v7152
          %v7217 = verf.f32.pop %v7153
          %v7218 = verf.f32.pop %v7154
          %v7219 = verf.f32.pop %v7155
          %v7220 = verf.f32.pop %v7156
          %v7221 = verf.f32.pop %v7157
          %v7222 = verf.f32.pop %v7158
          %v7223 = verf.f32.pop %v7159
          %v7224 = verf.f32.pop %v7160
          %v7225 = verf.f32.pop %v7161
          %v7226 = verf.f32.pop %v7162
          %v7227 = verf.f32.pop %v7163
          %v7228 = verf.f32.pop %v7164
          %v7229 = verf.f32.pop %v7165
          %v7230 = verf.f32.pop %v7166
          %v7231 = verf.f32.pop %v7167
          %v7232 = verf.f32.pop %v7168
          %v7233 = verf.f32.pop %v7169
          %v7234 = verf.f32.pop %v7170
          %v7235 = verf.f32.pop %v7171
          %v7236 = verf.f32.pop %v7172
          %v7237 = verf.f32.pop %v7173
          %v7238 = verf.f32.pop %v7174
          %v7239 = verf.f32.pop %v7175
          %v7240 = verf.f32.pop %v7176
          %v7241 = verf.f32.pop %v7177
          %v7242 = verf.f32.pop %v7178
          %v7243 = verf.f32.pop %v7179
          %v7244 = verf.f32.pop %v7180
          %v7245 = verf.f32.pop %v7181
          %v7246 = verf.f32.pop %v7182
          %v7247 = verf.f32.pop %v7183
          %v7248 = verf.f32.pop %v7184
          %v7249 = verf.f32.pop %v7185
          %v7250 = verf.f32.pop %v7186
          %v7251 = verf.f32.pop %v7187
          %v7252 = verf.f32.pop %v7188
          %v7253 = verf.f32.pop %v7189
          %v7254 = verf.f32.pop %v7190
          %v7255 = verf.f32.pop %v7191
          %v7256 = verf.f32.pop %v7192
          %v7257 = verf.f32.pop %v7193
          %v7258 = vadd.f32 %v7194, 1.0
          %v7259 = vadd.f32 %v7195, 1.0
          %v7260 = vadd.f32 %v7196, 1.0
          %v7261 = vadd.f32 %v7197, 1.0
          %v7262 = vadd.f32 %v7198, 1.0
          %v7263 = vadd.f32 %v7199, 1.0
          %v7264 = vadd.f32 %v7200, 1.0
          %v7265 = vadd.f32 %v7201, 1.0
          %v7266 = vadd.f32 %v7202, 1.0
          %v7267 = vadd.f32 %v7203, 1.0
          %v7268 = vadd.f32 %v7204, 1.0
          %v7269 = vadd.f32 %v7205, 1.0
          %v7270 = vadd.f32 %v7206, 1.0
          %v7271 = vadd.f32 %v7207, 1.0
          %v7272 = vadd.f32 %v7208, 1.0
          %v7273 = vadd.f32 %v7209, 1.0
          %v7274 = vadd.f32 %v7210, 1.0
          %v7275 = vadd.f32 %v7211, 1.0
          %v7276 = vadd.f32 %v7212, 1.0
          %v7277 = vadd.f32 %v7213, 1.0
          %v7278 = vadd.f32 %v7214, 1.0
          %v7279 = vadd.f32 %v7215, 1.0
          %v7280 = vadd.f32 %v7216, 1.0
          %v7281 = vadd.f32 %v7217, 1.0
          %v7282 = vadd.f32 %v7218, 1.0
          %v7283 = vadd.f32 %v7219, 1.0
          %v7284 = vadd.f32 %v7220, 1.0
          %v7285 = vadd.f32 %v7221, 1.0
          %v7286 = vadd.f32 %v7222, 1.0
          %v7287 = vadd.f32 %v7223, 1.0
          %v7288 = vadd.f32 %v7224, 1.0
          %v7289 = vadd.f32 %v7225, 1.0
          %v7290 = vadd.f32 %v7226, 1.0
          %v7291 = vadd.f32 %v7227, 1.0
          %v7292 = vadd.f32 %v7228, 1.0
          %v7293 = vadd.f32 %v7229, 1.0
          %v7294 = vadd.f32 %v7230, 1.0
          %v7295 = vadd.f32 %v7231, 1.0
          %v7296 = vadd.f32 %v7232, 1.0
          %v7297 = vadd.f32 %v7233, 1.0
          %v7298 = vadd.f32 %v7234, 1.0
          %v7299 = vadd.f32 %v7235, 1.0
          %v7300 = vadd.f32 %v7236, 1.0
          %v7301 = vadd.f32 %v7237, 1.0
          %v7302 = vadd.f32 %v7238, 1.0
          %v7303 = vadd.f32 %v7239, 1.0
          %v7304 = vadd.f32 %v7240, 1.0
          %v7305 = vadd.f32 %v7241, 1.0
          %v7306 = vadd.f32 %v7242, 1.0
          %v7307 = vadd.f32 %v7243, 1.0
          %v7308 = vadd.f32 %v7244, 1.0
          %v7309 = vadd.f32 %v7245, 1.0
          %v7310 = vadd.f32 %v7246, 1.0
          %v7311 = vadd.f32 %v7247, 1.0
          %v7312 = vadd.f32 %v7248, 1.0
          %v7313 = vadd.f32 %v7249, 1.0
          %v7314 = vadd.f32 %v7250, 1.0
          %v7315 = vadd.f32 %v7251, 1.0
          %v7316 = vadd.f32 %v7252, 1.0
          %v7317 = vadd.f32 %v7253, 1.0
          %v7318 = vadd.f32 %v7254, 1.0
          %v7319 = vadd.f32 %v7255, 1.0
          %v7320 = vadd.f32 %v7256, 1.0
          %v7321 = vadd.f32 %v7257, 1.0
          %v7322 = vmul.f32 %v7066, %v7258
          %v7323 = vmul.f32 %v7067, %v7259
          %v7324 = vmul.f32 %v7068, %v7260
          %v7325 = vmul.f32 %v7069, %v7261
          %v7326 = vmul.f32 %v7070, %v7262
          %v7327 = vmul.f32 %v7071, %v7263
          %v7328 = vmul.f32 %v7072, %v7264
          %v7329 = vmul.f32 %v7073, %v7265
          %v7330 = vmul.f32 %v7074, %v7266
          %v7331 = vmul.f32 %v7075, %v7267
          %v7332 = vmul.f32 %v7076, %v7268
          %v7333 = vmul.f32 %v7077, %v7269
          %v7334 = vmul.f32 %v7078, %v7270
          %v7335 = vmul.f32 %v7079, %v7271
          %v7336 = vmul.f32 %v7080, %v7272
          %v7337 = vmul.f32 %v7081, %v7273
          %v7338 = vmul.f32 %v7082, %v7274
          %v7339 = vmul.f32 %v7083, %v7275
          %v7340 = vmul.f32 %v7084, %v7276
          %v7341 = vmul.f32 %v7085, %v7277
          %v7342 = vmul.f32 %v7086, %v7278
          %v7343 = vmul.f32 %v7087, %v7279
          %v7344 = vmul.f32 %v7088, %v7280
          %v7345 = vmul.f32 %v7089, %v7281
          %v7346 = vmul.f32 %v7090, %v7282
          %v7347 = vmul.f32 %v7091, %v7283
          %v7348 = vmul.f32 %v7092, %v7284
          %v7349 = vmul.f32 %v7093, %v7285
          %v7350 = vmul.f32 %v7094, %v7286
          %v7351 = vmul.f32 %v7095, %v7287
          %v7352 = vmul.f32 %v7096, %v7288
          %v7353 = vmul.f32 %v7097, %v7289
          %v7354 = vmul.f32 %v7098, %v7290
          %v7355 = vmul.f32 %v7099, %v7291
          %v7356 = vmul.f32 %v7100, %v7292
          %v7357 = vmul.f32 %v7101, %v7293
          %v7358 = vmul.f32 %v7102, %v7294
          %v7359 = vmul.f32 %v7103, %v7295
          %v7360 = vmul.f32 %v7104, %v7296
          %v7361 = vmul.f32 %v7105, %v7297
          %v7362 = vmul.f32 %v7106, %v7298
          %v7363 = vmul.f32 %v7107, %v7299
          %v7364 = vmul.f32 %v7108, %v7300
          %v7365 = vmul.f32 %v7109, %v7301
          %v7366 = vmul.f32 %v7110, %v7302
          %v7367 = vmul.f32 %v7111, %v7303
          %v7368 = vmul.f32 %v7112, %v7304
          %v7369 = vmul.f32 %v7113, %v7305
          %v7370 = vmul.f32 %v7114, %v7306
          %v7371 = vmul.f32 %v7115, %v7307
          %v7372 = vmul.f32 %v7116, %v7308
          %v7373 = vmul.f32 %v7117, %v7309
          %v7374 = vmul.f32 %v7118, %v7310
          %v7375 = vmul.f32 %v7119, %v7311
          %v7376 = vmul.f32 %v7120, %v7312
          %v7377 = vmul.f32 %v7121, %v7313
          %v7378 = vmul.f32 %v7122, %v7314
          %v7379 = vmul.f32 %v7123, %v7315
          %v7380 = vmul.f32 %v7124, %v7316
          %v7381 = vmul.f32 %v7125, %v7317
          %v7382 = vmul.f32 %v7126, %v7318
          %v7383 = vmul.f32 %v7127, %v7319
          %v7384 = vmul.f32 %v7128, %v7320
          %v7385 = vmul.f32 %v7129, %v7321
          %v7386 = vpack.c.bf16 %v7326, %v7322
          %v7387 = vpack.c.bf16 %v7327, %v7323
          %v7388 = vpack.c.bf16 %v7328, %v7324
          %v7389 = vpack.c.bf16 %v7329, %v7325
          %v7390 = vpack.c.bf16 %v7334, %v7330
          %v7391 = vpack.c.bf16 %v7335, %v7331
          %v7392 = vpack.c.bf16 %v7336, %v7332
          %v7393 = vpack.c.bf16 %v7337, %v7333
          %v7394 = vpack.c.bf16 %v7342, %v7338
          %v7395 = vpack.c.bf16 %v7343, %v7339
          %v7396 = vpack.c.bf16 %v7344, %v7340
          %v7397 = vpack.c.bf16 %v7345, %v7341
          %v7398 = vpack.c.bf16 %v7350, %v7346
          %v7399 = vpack.c.bf16 %v7351, %v7347
          %v7400 = vpack.c.bf16 %v7352, %v7348
          %v7401 = vpack.c.bf16 %v7353, %v7349
          %v7402 = vpack.c.bf16 %v7358, %v7354
          %v7403 = vpack.c.bf16 %v7359, %v7355
          %v7404 = vpack.c.bf16 %v7360, %v7356
          %v7405 = vpack.c.bf16 %v7361, %v7357
          %v7406 = vpack.c.bf16 %v7366, %v7362
          %v7407 = vpack.c.bf16 %v7367, %v7363
          %v7408 = vpack.c.bf16 %v7368, %v7364
          %v7409 = vpack.c.bf16 %v7369, %v7365
          %v7410 = vpack.c.bf16 %v7374, %v7370
          %v7411 = vpack.c.bf16 %v7375, %v7371
          %v7412 = vpack.c.bf16 %v7376, %v7372
          %v7413 = vpack.c.bf16 %v7377, %v7373
          %v7414 = vpack.c.bf16 %v7382, %v7378
          %v7415 = vpack.c.bf16 %v7383, %v7379
          %v7416 = vpack.c.bf16 %v7384, %v7380
          %v7417 = vpack.c.bf16 %v7385, %v7381
          %v7418 = vld [vmem:[%s5] sm:$0xf]
          %v7419 = vld [vmem:[%s5 + $0x4] sm:$0xf]
          %v7420 = vld [vmem:[%s5 + $0x8] sm:$0xf]
          %v7421 = vld [vmem:[%s5 + $0xc] sm:$0xf]
          %v7422 = vld [vmem:[%s5 + $0x10] sm:$0xf]
          %v7423 = vld [vmem:[%s5 + $0x14] sm:$0xf]
          %v7424 = vld [vmem:[%s5 + $0x18] sm:$0xf]
          %v7425 = vld [vmem:[%s5 + $0x1c] sm:$0xf]
          %v7426 = vld [vmem:[%s5 + $0x20] sm:$0xf]
          %v7427 = vld [vmem:[%s5 + $0x24] sm:$0xf]
          %v7428 = vld [vmem:[%s5 + $0x28] sm:$0xf]
          %v7429 = vld [vmem:[%s5 + $0x2c] sm:$0xf]
          %v7430 = vld [vmem:[%s5 + $0x30] sm:$0xf]
          %v7431 = vld [vmem:[%s5 + $0x34] sm:$0xf]
          %v7432 = vld [vmem:[%s5 + $0x38] sm:$0xf]
          %v7433 = vld [vmem:[%s5 + $0x3c] sm:$0xf]
          %v7434 = vld [vmem:[%s5 + $0x40] sm:$0xf]
          %v7435 = vld [vmem:[%s5 + $0x44] sm:$0xf]
          %v7436 = vld [vmem:[%s5 + $0x48] sm:$0xf]
          %v7437 = vld [vmem:[%s5 + $0x4c] sm:$0xf]
          %v7438 = vld [vmem:[%s5 + $0x50] sm:$0xf]
          %v7439 = vld [vmem:[%s5 + $0x54] sm:$0xf]
          %v7440 = vld [vmem:[%s5 + $0x58] sm:$0xf]
          %v7441 = vld [vmem:[%s5 + $0x5c] sm:$0xf]
          %v7442 = vld [vmem:[%s5 + $0x60] sm:$0xf]
          %v7443 = vld [vmem:[%s5 + $0x64] sm:$0xf]
          %v7444 = vld [vmem:[%s5 + $0x68] sm:$0xf]
          %v7445 = vld [vmem:[%s5 + $0x6c] sm:$0xf]
          %v7446 = vld [vmem:[%s5 + $0x70] sm:$0xf]
          %v7447 = vld [vmem:[%s5 + $0x74] sm:$0xf]
          %v7448 = vld [vmem:[%s5 + $0x78] sm:$0xf]
          %v7449 = vld [vmem:[%s5 + $0x7c] sm:$0xf]
          %v7450 = vld [vmem:[%s5 + $0x80] sm:$0xf]
          %v7451 = vld [vmem:[%s5 + $0x84] sm:$0xf]
          %v7452 = vld [vmem:[%s5 + $0x88] sm:$0xf]
          %v7453 = vld [vmem:[%s5 + $0x8c] sm:$0xf]
          %v7454 = vld [vmem:[%s5 + $0x90] sm:$0xf]
          %v7455 = vld [vmem:[%s5 + $0x94] sm:$0xf]
          %v7456 = vld [vmem:[%s5 + $0x98] sm:$0xf]
          %v7457 = vld [vmem:[%s5 + $0x9c] sm:$0xf]
          %v7458 = vld [vmem:[%s5 + $0xa0] sm:$0xf]
          %v7459 = vld [vmem:[%s5 + $0xa4] sm:$0xf]
          %v7460 = vld [vmem:[%s5 + $0xa8] sm:$0xf]
          %v7461 = vld [vmem:[%s5 + $0xac] sm:$0xf]
          %v7462 = vld [vmem:[%s5 + $0xb0] sm:$0xf]
          %v7463 = vld [vmem:[%s5 + $0xb4] sm:$0xf]
          %v7464 = vld [vmem:[%s5 + $0xb8] sm:$0xf]
          %v7465 = vld [vmem:[%s5 + $0xbc] sm:$0xf]
          %v7466 = vld [vmem:[%s5 + $0xc0] sm:$0xf]
          %v7467 = vld [vmem:[%s5 + $0xc4] sm:$0xf]
          %v7468 = vld [vmem:[%s5 + $0xc8] sm:$0xf]
          %v7469 = vld [vmem:[%s5 + $0xcc] sm:$0xf]
          %v7470 = vld [vmem:[%s5 + $0xd0] sm:$0xf]
          %v7471 = vld [vmem:[%s5 + $0xd4] sm:$0xf]
          %v7472 = vld [vmem:[%s5 + $0xd8] sm:$0xf]
          %v7473 = vld [vmem:[%s5 + $0xdc] sm:$0xf]
          %v7474 = vld [vmem:[%s5 + $0xe0] sm:$0xf]
          %v7475 = vld [vmem:[%s5 + $0xe4] sm:$0xf]
          %v7476 = vld [vmem:[%s5 + $0xe8] sm:$0xf]
          %v7477 = vld [vmem:[%s5 + $0xec] sm:$0xf]
          %v7478 = vld [vmem:[%s5 + $0xf0] sm:$0xf]
          %v7479 = vld [vmem:[%s5 + $0xf4] sm:$0xf]
          %v7480 = vld [vmem:[%s5 + $0xf8] sm:$0xf]
          %v7481 = vld [vmem:[%s5 + $0xfc] sm:$0xf]
          %v7483 = vlaneseq
          %v7484 = vshrl.u32 %v7483, 7
          %v7485 = vsub.s32 0, %v7484
          %v7486 = vrot.slane %v500, %v7485
          %v7552 = vunpack.c.l.b16 %v7418
          %v7553 = vunpack.c.l.b16 %v7419
          %v7554 = vunpack.c.l.b16 %v7420
          %v7555 = vunpack.c.l.b16 %v7421
          %v7556 = vunpack.c.l.b16 %v7422
          %v7557 = vunpack.c.l.b16 %v7423
          %v7558 = vunpack.c.l.b16 %v7424
          %v7559 = vunpack.c.l.b16 %v7425
          %v7560 = vunpack.c.l.b16 %v7426
          %v7561 = vunpack.c.l.b16 %v7427
          %v7562 = vunpack.c.l.b16 %v7428
          %v7563 = vunpack.c.l.b16 %v7429
          %v7564 = vunpack.c.l.b16 %v7430
          %v7565 = vunpack.c.l.b16 %v7431
          %v7566 = vunpack.c.l.b16 %v7432
          %v7567 = vunpack.c.l.b16 %v7433
          %v7568 = vunpack.c.l.b16 %v7434
          %v7569 = vunpack.c.l.b16 %v7435
          %v7570 = vunpack.c.l.b16 %v7436
          %v7571 = vunpack.c.l.b16 %v7437
          %v7572 = vunpack.c.l.b16 %v7438
          %v7573 = vunpack.c.l.b16 %v7439
          %v7574 = vunpack.c.l.b16 %v7440
          %v7575 = vunpack.c.l.b16 %v7441
          %v7576 = vunpack.c.l.b16 %v7442
          %v7577 = vunpack.c.l.b16 %v7443
          %v7578 = vunpack.c.l.b16 %v7444
          %v7579 = vunpack.c.l.b16 %v7445
          %v7580 = vunpack.c.l.b16 %v7446
          %v7581 = vunpack.c.l.b16 %v7447
          %v7582 = vunpack.c.l.b16 %v7448
          %v7583 = vunpack.c.l.b16 %v7449
          %v7584 = vunpack.c.l.b16 %v7450
          %v7585 = vunpack.c.l.b16 %v7451
          %v7586 = vunpack.c.l.b16 %v7452
          %v7587 = vunpack.c.l.b16 %v7453
          %v7588 = vunpack.c.l.b16 %v7454
          %v7589 = vunpack.c.l.b16 %v7455
          %v7590 = vunpack.c.l.b16 %v7456
          %v7591 = vunpack.c.l.b16 %v7457
          %v7592 = vunpack.c.l.b16 %v7458
          %v7593 = vunpack.c.l.b16 %v7459
          %v7594 = vunpack.c.l.b16 %v7460
          %v7595 = vunpack.c.l.b16 %v7461
          %v7596 = vunpack.c.l.b16 %v7462
          %v7597 = vunpack.c.l.b16 %v7463
          %v7598 = vunpack.c.l.b16 %v7464
          %v7599 = vunpack.c.l.b16 %v7465
          %v7600 = vunpack.c.l.b16 %v7466
          %v7601 = vunpack.c.l.b16 %v7467
          %v7602 = vunpack.c.l.b16 %v7468
          %v7603 = vunpack.c.l.b16 %v7469
          %v7604 = vunpack.c.l.b16 %v7470
          %v7605 = vunpack.c.l.b16 %v7471
          %v7606 = vunpack.c.l.b16 %v7472
          %v7607 = vunpack.c.l.b16 %v7473
          %v7608 = vunpack.c.l.b16 %v7474
          %v7609 = vunpack.c.l.b16 %v7475
          %v7610 = vunpack.c.l.b16 %v7476
          %v7611 = vunpack.c.l.b16 %v7477
          %v7612 = vunpack.c.l.b16 %v7478
          %v7613 = vunpack.c.l.b16 %v7479
          %v7614 = vunpack.c.l.b16 %v7480
          %v7615 = vunpack.c.l.b16 %v7481
          %v7616 = vpack.c.b16 %v7553, %v7552
          %v7617 = vpack.c.b16 %v7555, %v7554
          %v7618 = vpack.c.b16 %v7557, %v7556
          %v7619 = vpack.c.b16 %v7559, %v7558
          %v7620 = vpack.c.b16 %v7561, %v7560
          %v7621 = vpack.c.b16 %v7563, %v7562
          %v7622 = vpack.c.b16 %v7565, %v7564
          %v7623 = vpack.c.b16 %v7567, %v7566
          %v7624 = vpack.c.b16 %v7569, %v7568
          %v7625 = vpack.c.b16 %v7571, %v7570
          %v7626 = vpack.c.b16 %v7573, %v7572
          %v7627 = vpack.c.b16 %v7575, %v7574
          %v7628 = vpack.c.b16 %v7577, %v7576
          %v7629 = vpack.c.b16 %v7579, %v7578
          %v7630 = vpack.c.b16 %v7581, %v7580
          %v7631 = vpack.c.b16 %v7583, %v7582
          %v7632 = vpack.c.b16 %v7585, %v7584
          %v7633 = vpack.c.b16 %v7587, %v7586
          %v7634 = vpack.c.b16 %v7589, %v7588
          %v7635 = vpack.c.b16 %v7591, %v7590
          %v7636 = vpack.c.b16 %v7593, %v7592
          %v7637 = vpack.c.b16 %v7595, %v7594
          %v7638 = vpack.c.b16 %v7597, %v7596
          %v7639 = vpack.c.b16 %v7599, %v7598
          %v7640 = vpack.c.b16 %v7601, %v7600
          %v7641 = vpack.c.b16 %v7603, %v7602
          %v7642 = vpack.c.b16 %v7605, %v7604
          %v7643 = vpack.c.b16 %v7607, %v7606
          %v7644 = vpack.c.b16 %v7609, %v7608
          %v7645 = vpack.c.b16 %v7611, %v7610
          %v7646 = vpack.c.b16 %v7613, %v7612
          %v7647 = vpack.c.b16 %v7615, %v7614
          %7680 = vmatprep.subr.bf16.mxu0 0
          %7681 = vmatpush1.bf16.msra.mxu0 %v7623
          %7682 = vmatprep.subr.bf16.mxu0 0
          %7683 = vmatpush1.bf16.msra.mxu0 %v7622
          %7684 = vmatprep.subr.bf16.mxu0 0
          %7685 = vmatpush1.bf16.msra.mxu0 %v7621
          %7686 = vmatprep.subr.bf16.mxu0 0
          %7687 = vmatpush1.bf16.msra.mxu0 %v7620
          %7688 = vmatprep.subr.bf16.mxu0 0
          %7689 = vmatpush1.bf16.msra.mxu0 %v7619
          %7690 = vmatprep.subr.bf16.mxu0 0
          %7691 = vmatpush1.bf16.msra.mxu0 %v7618
          %7692 = vmatprep.subr.bf16.mxu0 0
          %7693 = vmatpush1.bf16.msra.mxu0 %v7617
          %7694 = vmatprep.subr.bf16.mxu0 0
          %7695 = vmatpush1.bf16.msra.mxu0 %v7616
          %7696 = vmatprep.subr.bf16.mxu0 0
          %7697 = vmatpush2.bf16.msra.mxu0 %v7631
          %7698 = vmatprep.subr.bf16.mxu0 0
          %7699 = vmatpush2.bf16.msra.mxu0 %v7630
          %7700 = vmatprep.subr.bf16.mxu0 0
          %7701 = vmatpush2.bf16.msra.mxu0 %v7629
          %7702 = vmatprep.subr.bf16.mxu0 0
          %7703 = vmatpush2.bf16.msra.mxu0 %v7628
          %7704 = vmatprep.subr.bf16.mxu0 0
          %7705 = vmatpush2.bf16.msra.mxu0 %v7627
          %7706 = vmatprep.subr.bf16.mxu0 0
          %7707 = vmatpush2.bf16.msra.mxu0 %v7626
          %7708 = vmatprep.subr.bf16.mxu0 0
          %7709 = vmatpush2.bf16.msra.mxu0 %v7625
          %7710 = vmatprep.subr.bf16.mxu0 0
          %7711 = vmatpush2.bf16.msra.mxu0 %v7624
          %7712 = vmatprep.mubr.bf16.mxu0 %v7387
          %7713 = vmatmul.mubr.bf16.gmra.mxu0 %v7386
          %v7714 = vpop.f32.mrf.mxu0
          %v7715 = vadd.f32 %v7486, %v7714
          %v7716 = vpop.f32.mrf.mxu0
          %v7717 = vpop.f32.mrf.mxu0
          %v7718 = vadd.f32 %v7486, %v7717
          %v7719 = vpop.f32.mrf.mxu0
          %7720 = vmatprep.mubr.bf16.mxu0 %v7391
          %7721 = vmatmul.mubr.bf16.gmra.mxu0 %v7390
          %v7722 = vpop.f32.mrf.mxu0
          %v7723 = vadd.f32 %v7486, %v7722
          %v7724 = vpop.f32.mrf.mxu0
          %v7725 = vpop.f32.mrf.mxu0
          %v7726 = vadd.f32 %v7486, %v7725
          %v7727 = vpop.f32.mrf.mxu0
          %7728 = vmatprep.mubr.bf16.mxu0 %v7395
          %7729 = vmatmul.mubr.bf16.gmra.mxu0 %v7394
          %v7730 = vpop.f32.mrf.mxu0
          %v7731 = vadd.f32 %v7486, %v7730
          %v7732 = vpop.f32.mrf.mxu0
          %v7733 = vpop.f32.mrf.mxu0
          %v7734 = vadd.f32 %v7486, %v7733
          %v7735 = vpop.f32.mrf.mxu0
          %7736 = vmatprep.mubr.bf16.mxu0 %v7399
          %7737 = vmatmul.mubr.bf16.gmra.mxu0 %v7398
          %v7738 = vpop.f32.mrf.mxu0
          %v7739 = vadd.f32 %v7486, %v7738
          %v7740 = vpop.f32.mrf.mxu0
          %v7741 = vpop.f32.mrf.mxu0
          %v7742 = vadd.f32 %v7486, %v7741
          %v7743 = vpop.f32.mrf.mxu0
          %7744 = vmatprep.mubr.bf16.mxu0 %v7403
          %7745 = vmatmul.mubr.bf16.gmra.mxu0 %v7402
          %v7746 = vpop.f32.mrf.mxu0
          %v7747 = vadd.f32 %v7486, %v7746
          %v7748 = vpop.f32.mrf.mxu0
          %v7749 = vpop.f32.mrf.mxu0
          %v7750 = vadd.f32 %v7486, %v7749
          %v7751 = vpop.f32.mrf.mxu0
          %7752 = vmatprep.mubr.bf16.mxu0 %v7407
          %7753 = vmatmul.mubr.bf16.gmra.mxu0 %v7406
          %v7754 = vpop.f32.mrf.mxu0
          %v7755 = vadd.f32 %v7486, %v7754
          %v7756 = vpop.f32.mrf.mxu0
          %v7757 = vpop.f32.mrf.mxu0
          %v7758 = vadd.f32 %v7486, %v7757
          %v7759 = vpop.f32.mrf.mxu0
          %7760 = vmatprep.mubr.bf16.mxu0 %v7411
          %7761 = vmatmul.mubr.bf16.gmra.mxu0 %v7410
          %v7762 = vpop.f32.mrf.mxu0
          %v7763 = vadd.f32 %v7486, %v7762
          %v7764 = vpop.f32.mrf.mxu0
          %v7765 = vpop.f32.mrf.mxu0
          %v7766 = vadd.f32 %v7486, %v7765
          %v7767 = vpop.f32.mrf.mxu0
          %7768 = vmatprep.mubr.bf16.mxu0 %v7415
          %7769 = vmatmul.mubr.bf16.gmra.mxu0 %v7414
          %v7770 = vpop.f32.mrf.mxu0
          %v7771 = vadd.f32 %v7486, %v7770
          %v7772 = vpop.f32.mrf.mxu0
          %v7773 = vpop.f32.mrf.mxu0
          %v7774 = vadd.f32 %v7486, %v7773
          %v7775 = vpop.f32.mrf.mxu0
          %7776 = vdwg.mxu0
          %7777 = vmatprep.subr.bf16.mxu0 0
          %7778 = vmatpush1.bf16.msra.mxu0 %v7639
          %7779 = vmatprep.subr.bf16.mxu0 0
          %7780 = vmatpush1.bf16.msra.mxu0 %v7638
          %7781 = vmatprep.subr.bf16.mxu0 0
          %7782 = vmatpush1.bf16.msra.mxu0 %v7637
          %7783 = vmatprep.subr.bf16.mxu0 0
          %7784 = vmatpush1.bf16.msra.mxu0 %v7636
          %7785 = vmatprep.subr.bf16.mxu0 0
          %7786 = vmatpush1.bf16.msra.mxu0 %v7635
          %7787 = vmatprep.subr.bf16.mxu0 0
          %7788 = vmatpush1.bf16.msra.mxu0 %v7634
          %7789 = vmatprep.subr.bf16.mxu0 0
          %7790 = vmatpush1.bf16.msra.mxu0 %v7633
          %7791 = vmatprep.subr.bf16.mxu0 0
          %7792 = vmatpush1.bf16.msra.mxu0 %v7632
          %7793 = vmatprep.subr.bf16.mxu0 0
          %7794 = vmatpush2.bf16.msra.mxu0 %v7647
          %7795 = vmatprep.subr.bf16.mxu0 0
          %7796 = vmatpush2.bf16.msra.mxu0 %v7646
          %7797 = vmatprep.subr.bf16.mxu0 0
          %7798 = vmatpush2.bf16.msra.mxu0 %v7645
          %7799 = vmatprep.subr.bf16.mxu0 0
          %7800 = vmatpush2.bf16.msra.mxu0 %v7644
          %7801 = vmatprep.subr.bf16.mxu0 0
          %7802 = vmatpush2.bf16.msra.mxu0 %v7643
          %7803 = vmatprep.subr.bf16.mxu0 0
          %7804 = vmatpush2.bf16.msra.mxu0 %v7642
          %7805 = vmatprep.subr.bf16.mxu0 0
          %7806 = vmatpush2.bf16.msra.mxu0 %v7641
          %7807 = vmatprep.subr.bf16.mxu0 0
          %7808 = vmatpush2.bf16.msra.mxu0 %v7640
          %7809 = vmatprep.mubr.bf16.mxu0 %v7389
          %7810 = vmatmul.mubr.bf16.gmra.mxu0 %v7388
          %v7811 = vpop.f32.mrf.mxu0
          %v7812 = vadd.f32 %v7715, %v7811
          %v7813 = vpop.f32.mrf.mxu0
          %v7814 = vpop.f32.mrf.mxu0
          %v7815 = vadd.f32 %v7718, %v7814
          %v7816 = vpop.f32.mrf.mxu0
          %7817 = vmatprep.mubr.bf16.mxu0 %v7393
          %7818 = vmatmul.mubr.bf16.gmra.mxu0 %v7392
          %v7819 = vpop.f32.mrf.mxu0
          %v7820 = vadd.f32 %v7723, %v7819
          %v7821 = vpop.f32.mrf.mxu0
          %v7822 = vpop.f32.mrf.mxu0
          %v7823 = vadd.f32 %v7726, %v7822
          %v7824 = vpop.f32.mrf.mxu0
          %7825 = vmatprep.mubr.bf16.mxu0 %v7397
          %7826 = vmatmul.mubr.bf16.gmra.mxu0 %v7396
          %v7827 = vpop.f32.mrf.mxu0
          %v7828 = vadd.f32 %v7731, %v7827
          %v7829 = vpop.f32.mrf.mxu0
          %v7830 = vpop.f32.mrf.mxu0
          %v7831 = vadd.f32 %v7734, %v7830
          %v7832 = vpop.f32.mrf.mxu0
          %7833 = vmatprep.mubr.bf16.mxu0 %v7401
          %7834 = vmatmul.mubr.bf16.gmra.mxu0 %v7400
          %v7835 = vpop.f32.mrf.mxu0
          %v7836 = vadd.f32 %v7739, %v7835
          %v7837 = vpop.f32.mrf.mxu0
          %v7838 = vpop.f32.mrf.mxu0
          %v7839 = vadd.f32 %v7742, %v7838
          %v7840 = vpop.f32.mrf.mxu0
          %7841 = vmatprep.mubr.bf16.mxu0 %v7405
          %7842 = vmatmul.mubr.bf16.gmra.mxu0 %v7404
          %v7843 = vpop.f32.mrf.mxu0
          %v7844 = vadd.f32 %v7747, %v7843
          %v7845 = vpop.f32.mrf.mxu0
          %v7846 = vpop.f32.mrf.mxu0
          %v7847 = vadd.f32 %v7750, %v7846
          %v7848 = vpop.f32.mrf.mxu0
          %7849 = vmatprep.mubr.bf16.mxu0 %v7409
          %7850 = vmatmul.mubr.bf16.gmra.mxu0 %v7408
          %v7851 = vpop.f32.mrf.mxu0
          %v7852 = vadd.f32 %v7755, %v7851
          %v7853 = vpop.f32.mrf.mxu0
          %v7854 = vpop.f32.mrf.mxu0
          %v7855 = vadd.f32 %v7758, %v7854
          %v7856 = vpop.f32.mrf.mxu0
          %7857 = vmatprep.mubr.bf16.mxu0 %v7413
          %7858 = vmatmul.mubr.bf16.gmra.mxu0 %v7412
          %v7859 = vpop.f32.mrf.mxu0
          %v7860 = vadd.f32 %v7763, %v7859
          %v7861 = vpop.f32.mrf.mxu0
          %v7862 = vpop.f32.mrf.mxu0
          %v7863 = vadd.f32 %v7766, %v7862
          %v7864 = vpop.f32.mrf.mxu0
          %7865 = vmatprep.mubr.bf16.mxu0 %v7417
          %7866 = vmatmul.mubr.bf16.gmra.mxu0 %v7416
          %v7867 = vpop.f32.mrf.mxu0
          %v7868 = vadd.f32 %v7771, %v7867
          %v7869 = vpop.f32.mrf.mxu0
          %v7870 = vpop.f32.mrf.mxu0
          %v7871 = vadd.f32 %v7774, %v7870
          %v7872 = vpop.f32.mrf.mxu0
          %7873 = vdwg.mxu0
          %v7874 = vld [vmem:[%s3198 + $0x3] sm:$0xff]
          %v7875 = vld [vmem:[%s3198 + $0xb] sm:$0xff]
          %v7876 = vld [vmem:[%s3198 + $0x1b] sm:$0xff]
          %v7877 = vld [vmem:[%s3198 + $0x23] sm:$0xff]
          %v7878 = vld [vmem:[%s3198 + $0x33] sm:$0xff]
          %v7879 = vld [vmem:[%s3198 + $0x3b] sm:$0xff]
          %v7880 = vld [vmem:[%s3198 + $0x4b] sm:$0xff]
          %v7881 = vld [vmem:[%s3198 + $0x53] sm:$0xff]
          %v7882 = vld [vmem:[%s3198 + $0x63] sm:$0xff]
          %v7883 = vld [vmem:[%s3198 + $0x6b] sm:$0xff]
          %v7884 = vld [vmem:[%s3198 + $0x7b] sm:$0xff]
          %v7885 = vld [vmem:[%s3198 + $0x83] sm:$0xff]
          %v7886 = vld [vmem:[%s3198 + $0x93] sm:$0xff]
          %v7887 = vld [vmem:[%s3198 + $0x9b] sm:$0xff]
          %v7888 = vld [vmem:[%s3198 + $0xab] sm:$0xff]
          %v7889 = vld [vmem:[%s3198 + $0xb3] sm:$0xff]
          %v7890 = vadd.f32 %v7874, %v7812
          %v7891 = vadd.f32 %v7875, %v7815
          %v7892 = vadd.f32 %v7876, %v7820
          %v7893 = vadd.f32 %v7877, %v7823
          %v7894 = vadd.f32 %v7878, %v7828
          %v7895 = vadd.f32 %v7879, %v7831
          %v7896 = vadd.f32 %v7880, %v7836
          %v7897 = vadd.f32 %v7881, %v7839
          %v7898 = vadd.f32 %v7882, %v7844
          %v7899 = vadd.f32 %v7883, %v7847
          %v7900 = vadd.f32 %v7884, %v7852
          %v7901 = vadd.f32 %v7885, %v7855
          %v7902 = vadd.f32 %v7886, %v7860
          %v7903 = vadd.f32 %v7887, %v7863
          %v7904 = vadd.f32 %v7888, %v7868
          %v7905 = vadd.f32 %v7889, %v7871
          %s7906 = smul.u32 %s764, 16
          %s7907 = scalar_lea.vmem %s244, %s7906 [#allocation4]
          %7908 = vst [vmem:[%s7907] sm:$0xff] %v7890
          %7909 = vst [vmem:[%s7907 + $0x8] sm:$0xff] %v7891
          %7910 = vst [vmem:[%s7907 + $0x10] sm:$0xff] %v7892
          %7911 = vst [vmem:[%s7907 + $0x18] sm:$0xff] %v7893
          %7912 = vst [vmem:[%s7907 + $0x20] sm:$0xff] %v7894
          %7913 = vst [vmem:[%s7907 + $0x28] sm:$0xff] %v7895
          %7914 = vst [vmem:[%s7907 + $0x30] sm:$0xff] %v7896
          %7915 = vst [vmem:[%s7907 + $0x38] sm:$0xff] %v7897
          %7916 = vst [vmem:[%s7907 + $0x40] sm:$0xff] %v7898
          %7917 = vst [vmem:[%s7907 + $0x48] sm:$0xff] %v7899
          %7918 = vst [vmem:[%s7907 + $0x50] sm:$0xff] %v7900
          %7919 = vst [vmem:[%s7907 + $0x58] sm:$0xff] %v7901
          %7920 = vst [vmem:[%s7907 + $0x60] sm:$0xff] %v7902
          %7921 = vst [vmem:[%s7907 + $0x68] sm:$0xff] %v7903
          %7922 = vst [vmem:[%s7907 + $0x70] sm:$0xff] %v7904
          %7923 = vst [vmem:[%s7907 + $0x78] sm:$0xff] %v7905
        $region131: #{tpu_custom_call.1} parent=43 // loop_footer
          %s763 = sadd.s32 1, %s759
        $region132: #{tpu_custom_call.1} parent=43 // loop_footer_branch
          %758 = sbr.rel target = $region128
        $region133: #{tpu_custom_call.1} parent=43 // loop_exit
          _
        %s7924 = sand.u32 %s169, 1
        %s7925 = scalar_lea.sflag [#allocation5], %s7924
        %s7926 = sand.u32 %s169, 1
        %s7927 = smul.addr %s7926, 256
        %s7928 = scalar_lea.vmem [#allocation4], %s7927
        // Predicated region
        $region134: #{tpu_custom_call.1} parent=43 // pred_check
          %p7929 = pneg %p179
        $region135: #{tpu_custom_call.1} parent=43 // pred_check_branch
          %7931 = sbr.rel (%p7929) target = $region137
        $region136: #{tpu_custom_call.1} parent=43 // pred_region
          %s7932 = smul.u32 16, %s26
          %s7934 = ssub.s32 4096, 4096
          %7935 = vsyncadd %s7925, %s7934
          %s7936 = smul.addr %s7932, 2
          %s7937 = smul.addr %s25, 32
          %s7938 = sadd.s32 %s7936, %s7937
          %s7939 = smul.addr %s7938, 128
          %s7940 = scalar_lea.hbm %s7, %s7939
          %s7941 = sshll.u32 %s7928, 4
          %s7942 = int_to_ptr.vmem [resolvable:$true] %s7941
          %7947 = dma.vmem_to_hbm [thread:$0]  %s7942, 4096, %s7940, %s7925, 128, 128, 8
        $region137: #{tpu_custom_call.1} parent=43 // pred_fallthru
          _
      $region44: #{tpu_custom_call.1} parent=5 // pred_fallthru
        _
      %p7948 = scmp.le.s32.totalorder 2, %s16
      // Predicated region
      $region138: #{tpu_custom_call.1} parent=5 // pred_check
        %p7949 = pneg %p7948
      $region139: #{tpu_custom_call.1} parent=5 // pred_check_branch
        %7951 = sbr.rel (%p7949) target = $region141
      $region140: #{tpu_custom_call.1} parent=5 // pred_region
        %s7952 = ssub.s32 %s16, 2
        // Predicated region
        $region142: #{tpu_custom_call.1} parent=140 // pred_check
          %p7953 = pneg %p185
        $region143: #{tpu_custom_call.1} parent=140 // pred_check_branch
          %7955 = sbr.rel (%p7953) target = $region145
        $region144: #{tpu_custom_call.1} parent=140 // pred_region
          %s7956 = sand.u32 %s170, 1
          %s7957 = scalar_lea.sflag [#allocation5], %s7956
          %s7958 = sand.u32 %s170, 1
          %s7959 = smul.addr %s7958, 256
          %s7960 = scalar_lea.vmem [#allocation4], %s7959
          %7961 = dma.done %s7957, 4096
        $region145: #{tpu_custom_call.1} parent=140 // pred_fallthru
          _
      $region141: #{tpu_custom_call.1} parent=5 // pred_fallthru
        _
    $region6: #{tpu_custom_call.1} parent=1 // loop_footer
      %s20 = sadd.s32 1, %s16
    $region7: #{tpu_custom_call.1} parent=1 // loop_footer_branch
      %15 = sbr.rel target = $region3
    $region8: #{tpu_custom_call.1} parent=1 // loop_exit
      _
    %7962 = vsyncpa [#allocation5], 1
    %s7963 = scalar_lea.sflag [#allocation5], 1
    %7964 = vsyncpa %s7963, 1
  %7965 = vsyncmov [#allocation3]
  %s7966 = vpop.sfrf %7965
  %p7967 = scmp.eq.s32.totalorder %s7966, 0
  %p7968 = pneg %p7967
  %7970 = shalt.err (%p7968)
  %s7971 = scalar_lea.sflag [#allocation3], 1
  %7972 = vsyncmov %s7971
  %s7973 = vpop.sfrf %7972
  %p7974 = scmp.eq.s32.totalorder %s7973, 0
  %p7975 = pneg %p7974
  %7977 = shalt.err (%p7975)

</llo_original>
